<compile_context>
chip_gen: v7x
topology: tpu7x:2x2x1
jax: 0.10.0
libtpu: 0.0.40
codegen_flags: <defaults>
</compile_context>

<pallas_src>
import jax
import jax.numpy as jnp
from jax.experimental import pallas as pl
from jax.experimental.pallas import tpu as pltpu

# ---------------- problem sizes (small, consistent with the module) ----------
B, N, D = 2, 8, 32          # batch, num_patches (seq), dim
H, DH = 4, 8                # heads, dim_head
INNER = H * DH              # inner_dim = 32
MLP = 64                    # mlp_dim
DEPTH = 2
SCALE = DH ** -0.5          # attention scale; reatten_scale = 1.0
EPS = 1e-5                  # LayerNorm / BatchNorm eps (PyTorch defaults)


def _layernorm(x, g, b):
    mu = jnp.mean(x, axis=-1, keepdims=True)
    var = jnp.mean((x - mu) ** 2, axis=-1, keepdims=True)
    return (x - mu) * jax.lax.rsqrt(var + EPS) * g + b


# ---------------------------- fused Pallas kernel -----------------------------
def fused_kernel(x_ref,
                 a_ln_g_ref, a_ln_b_ref, wq_ref, wk_ref, wv_ref,
                 w_out_ref, b_out_ref,
                 f_ln_g_ref, f_ln_b_ref, w1_ref, b1_ref, w2_ref, b2_ref,
                 conv_w_ref, conv_b_ref, bn_g_ref, bn_b_ref,
                 o_ref):
    # (B, N, D) -> (B*N, D): major-dim merge, free; all projections become
    # single 2-D matmuls with 16 rows.
    x2 = x_ref[...].reshape(B * N, D)

    for l in range(DEPTH):                       # static unroll over layers
        # ---------------- ReAttention block (PreNorm + residual) -------------
        xn = _layernorm(x2, a_ln_g_ref[l], a_ln_b_ref[l])

        attn, vals = [], []
        for h in range(H):                       # static unroll over heads
            # per-head weight blocks are leading-axis views (no lane slicing);
            # SCALE is already folded into wq.
            q = jnp.dot(xn, wq_ref[l, h],
                        preferred_element_type=jnp.float32).reshape(B, N, DH)
            k = jnp.dot(xn, wk_ref[l, h],
                        preferred_element_type=jnp.float32).reshape(B, N, DH)
            v = jnp.dot(xn, wv_ref[l, h],
                        preferred_element_type=jnp.float32).reshape(B, N, DH)
            s = jnp.einsum('bqe,bke->bqk', q, k,
                           preferred_element_type=jnp.float32)
            s = s - jnp.max(s, axis=-1, keepdims=True)
            e = jnp.exp(s)
            attn.append(e / jnp.sum(e, axis=-1, keepdims=True))  # softmax
            vals.append(v)

        y = None                                  # (B*N, D) accumulator
        for g in range(H):
            # 1x1 conv over the head (channel) dimension + bias
            base = (l * H + g) * H
            mixed = conv_b_ref[l * H + g] + conv_w_ref[base + 0] * attn[0]
            for h in range(1, H):
                mixed = mixed + conv_w_ref[base + h] * attn[h]
            # BatchNorm2d (training mode): batch stats over (B, N, N) per head
            m = jnp.mean(mixed)
            var = jnp.mean((mixed - m) ** 2)
            mixed = ((mixed - m) * jax.lax.rsqrt(var + EPS)
                     * bn_g_ref[l * H + g] + bn_b_ref[l * H + g])
            # reatten_scale == 1.0, so no extra scaling
            out_g = jnp.einsum('bqk,bkd->bqd', mixed, vals[g],
                               preferred_element_type=jnp.float32)
            # fold the head-concat into the output projection (accumulate)
            contrib = jnp.dot(out_g.reshape(B * N, DH), w_out_ref[l, g],
                              preferred_element_type=jnp.float32)
            y = contrib if y is None else y + contrib

        x2 = x2 + y + b_out_ref[l]                # residual + out-proj bias

        # ---------------- FeedForward block (PreNorm + residual) -------------
        xn = _layernorm(x2, f_ln_g_ref[l], f_ln_b_ref[l])
        hdn = jnp.dot(xn, w1_ref[l],
                      preferred_element_type=jnp.float32) + b1_ref[l]
        hdn = jnp.maximum(hdn, 0.0)               # ReLU (dropout p=0)
        x2 = x2 + jnp.dot(hdn, w2_ref[l],
                          preferred_element_type=jnp.float32) + b2_ref[l]

    o_ref[...] = x2.reshape(B, N, D).astype(o_ref.dtype)


# ----------------------------- wrapper ----------------------------------------
_VMEM = pl.BlockSpec(memory_space=pltpu.MemorySpace.VMEM)
_SMEM = pl.BlockSpec(memory_space=pltpu.MemorySpace.SMEM)


def transformer_reattention(x, p):
    return pl.pallas_call(
        fused_kernel,
        out_shape=jax.ShapeDtypeStruct(x.shape, x.dtype),
        in_specs=[_VMEM] * 14 + [_SMEM] * 4,
        out_specs=_VMEM,
        input_output_aliases={0: 0},              # reuse x's buffer for output
    )(x,
      p['a_ln_g'], p['a_ln_b'], p['wq'], p['wk'], p['wv'],
      p['w_out'], p['b_out'],
      p['f_ln_g'], p['f_ln_b'], p['w1'], p['b1'], p['w2'], p['b2'],
      p['conv_w'], p['conv_b'], p['bn_g'], p['bn_b'])


# -------- one-time parameter preparation (layout plumbing, outside kernel) ----
def prepare_params(params):
    aps = [p[0] for p in params]
    fps = [p[1] for p in params]

    def head_split(w):          # (D, INNER) -> (H, D, DH)
        return w.reshape(D, H, DH).transpose(1, 0, 2)

    return dict(
        a_ln_g=jnp.stack([ap['ln_g'] for ap in aps]),                 # (L,1,D)
        a_ln_b=jnp.stack([ap['ln_b'] for ap in aps]),
        # fold the attention scale into the Q weights (one-time, at init)
        wq=jnp.stack([head_split(ap['w_qkv'][:, :INNER]) * SCALE
                      for ap in aps]),                                # (L,H,D,DH)
        wk=jnp.stack([head_split(ap['w_qkv'][:, INNER:2 * INNER])
                      for ap in aps]),
        wv=jnp.stack([head_split(ap['w_qkv'][:, 2 * INNER:])
                      for ap in aps]),
        w_out=jnp.stack([ap['w_out'].reshape(H, DH, D) for ap in aps]),  # (L,H,DH,D)
        b_out=jnp.stack([ap['b_out'] for ap in aps]),                 # (L,1,D)
        conv_w=jnp.stack([ap['conv_w'] for ap in aps]).reshape(-1),   # (L*H*H,)
        conv_b=jnp.stack([ap['conv_b'] for ap in aps]).reshape(-1),   # (L*H,)
        bn_g=jnp.stack([ap['bn_g'] for ap in aps]).reshape(-1),       # (L*H,)
        bn_b=jnp.stack([ap['bn_b'] for ap in aps]).reshape(-1),       # (L*H,)
        f_ln_g=jnp.stack([fp['ln_g'] for fp in fps]),                 # (L,1,D)
        f_ln_b=jnp.stack([fp['ln_b'] for fp in fps]),
        w1=jnp.stack([fp['w1'] for fp in fps]),                       # (L,D,MLP)
        b1=jnp.stack([fp['b1'] for fp in fps]),                       # (L,1,MLP)
        w2=jnp.stack([fp['w2'] for fp in fps]),                       # (L,MLP,D)
        b2=jnp.stack([fp['b2'] for fp in fps]),                       # (L,1,D)
    )


# ------------------------ deterministic parameters ----------------------------
def init_params(key):
    def u(k, shape, fan_in):
        bound = fan_in ** -0.5
        return jax.random.uniform(k, shape, jnp.float32, -bound, bound)

    params = []
    for _ in range(DEPTH):
        key, *ks = jax.random.split(key, 10)
        attn_p = dict(
            ln_g=jnp.ones((1, D), jnp.float32),
            ln_b=jnp.zeros((1, D), jnp.float32),
            w_qkv=u(ks[0], (D, 3 * INNER), D),        # Linear(dim, 3*inner, bias=False)
            conv_w=u(ks[1], (H, H), H),               # Conv2d(H, H, 1, 1) weight [:,:,0,0]
            conv_b=u(ks[2], (H,), H),                 # Conv2d bias
            bn_g=jnp.ones((H,), jnp.float32),         # BatchNorm2d affine defaults
            bn_b=jnp.zeros((H,), jnp.float32),
            w_out=u(ks[3], (INNER, D), INNER),        # to_out Linear
            b_out=u(ks[4], (1, D), INNER),
        )
        ff_p = dict(
            ln_g=jnp.ones((1, D), jnp.float32),
            ln_b=jnp.zeros((1, D), jnp.float32),
            w1=u(ks[5], (D, MLP), D),
            b1=u(ks[6], (1, MLP), D),
            w2=u(ks[7], (MLP, D), MLP),
            b2=u(ks[8], (1, D), MLP),
        )
        params.append((attn_p, ff_p))
    return params


# --------------------------- pure-JAX reference --------------------------------
def _reference(x, params):
    def ln(t, g, b):
        mu = jnp.mean(t, axis=-1, keepdims=True)
        var = jnp.mean((t - mu) ** 2, axis=-1, keepdims=True)
        return (t - mu) / jnp.sqrt(var + EPS) * g + b

    for ap, fp in params:
        xn = ln(x, ap['ln_g'][0], ap['ln_b'][0])
        qkv = xn @ ap['w_qkv']
        q, k, v = jnp.split(qkv, 3, axis=-1)
        to_heads = lambda t: t.reshape(B, N, H, DH).transpose(0, 2, 1, 3)
        q, k, v = to_heads(q), to_heads(k), to_heads(v)
        attn = jax.nn.softmax(
            jnp.einsum('bhqd,bhkd->bhqk', q, k) * SCALE, axis=-1)
        mixed = (jnp.einsum('bhqk,gh->bgqk', attn, ap['conv_w'])
                 + ap['conv_b'][None, :, None, None])
        m = jnp.mean(mixed, axis=(0, 2, 3), keepdims=True)
        var = jnp.mean((mixed - m) ** 2, axis=(0, 2, 3), keepdims=True)
        normed = ((mixed - m) / jnp.sqrt(var + EPS)
                  * ap['bn_g'][None, :, None, None]
                  + ap['bn_b'][None, :, None, None])
        out = jnp.einsum('bhqk,bhkd->bhqd', normed, v)
        out = out.transpose(0, 2, 1, 3).reshape(B, N, INNER)
        x = out @ ap['w_out'] + ap['b_out'][0] + x

        xn = ln(x, fp['ln_g'][0], fp['ln_b'][0])
        hdn = jnp.maximum(xn @ fp['w1'] + fp['b1'][0], 0.0)
        x = hdn @ fp['w2'] + fp['b2'][0] + x
    return x


# ------------------------------------ main --------------------------------------
if __name__ == "__main__":
    key = jax.random.PRNGKey(0)
    kx, kp = jax.random.split(key)
    x = jax.random.normal(kx, (B, N, D), dtype=jnp.float32)
    params = init_params(kp)
    prepped = prepare_params(params)

    # compute the reference first (x's buffer may be aliased into the kernel output)
    y_ref = _reference(x, params)

    y = transformer_reattention(x, prepped)
    y = jax.block_until_ready(y)

    err = float(jnp.max(jnp.abs(y - y_ref)))
    assert err < 2e-3, f"max abs error vs reference: {err}"
    print("KERNEL_OK")
</pallas_src>

<mosaic_0001>
module attributes {stable_mosaic.version = 11 : i64} {
  func.func @fused_kernel(%arg0: memref<2x8x32xf32, #tpu.memory_space<vmem>>, %arg1: memref<2x1x32xf32, #tpu.memory_space<vmem>>, %arg2: memref<2x1x32xf32, #tpu.memory_space<vmem>>, %arg3: memref<2x4x32x8xf32, #tpu.memory_space<vmem>>, %arg4: memref<2x4x32x8xf32, #tpu.memory_space<vmem>>, %arg5: memref<2x4x32x8xf32, #tpu.memory_space<vmem>>, %arg6: memref<2x4x8x32xf32, #tpu.memory_space<vmem>>, %arg7: memref<2x1x32xf32, #tpu.memory_space<vmem>>, %arg8: memref<2x1x32xf32, #tpu.memory_space<vmem>>, %arg9: memref<2x1x32xf32, #tpu.memory_space<vmem>>, %arg10: memref<2x32x64xf32, #tpu.memory_space<vmem>>, %arg11: memref<2x1x64xf32, #tpu.memory_space<vmem>>, %arg12: memref<2x64x32xf32, #tpu.memory_space<vmem>>, %arg13: memref<2x1x32xf32, #tpu.memory_space<vmem>>, %arg14: memref<32xf32, #tpu.memory_space<smem>>, %arg15: memref<8xf32, #tpu.memory_space<smem>>, %arg16: memref<8xf32, #tpu.memory_space<smem>>, %arg17: memref<8xf32, #tpu.memory_space<smem>>, %arg18: memref<2x8x32xf32, #tpu.memory_space<vmem>>) attributes {dimension_semantics = [], scalar_prefetch = 0 : i64, scratch_operands = 0 : i64, tpu.core_type = #tpu.core_type<tc>} {
    %c0 = arith.constant 0 : index
    %c0_0 = arith.constant 0 : index
    %c0_1 = arith.constant 0 : index
    %0 = vector.load %arg0[%c0, %c0_0, %c0_1] : memref<2x8x32xf32, #tpu.memory_space<vmem>>, vector<2x8x32xf32>
    %1 = vector.shape_cast %0 : vector<2x8x32xf32> to vector<16x32xf32>
    %c0_2 = arith.constant 0 : index
    %c0_3 = arith.constant 0 : index
    %c0_4 = arith.constant 0 : index
    %2 = vector.load %arg1[%c0_2, %c0_3, %c0_4] : memref<2x1x32xf32, #tpu.memory_space<vmem>>, vector<1x1x32xf32>
    %3 = vector.shape_cast %2 : vector<1x1x32xf32> to vector<1x32xf32>
    %c0_5 = arith.constant 0 : index
    %c0_6 = arith.constant 0 : index
    %c0_7 = arith.constant 0 : index
    %4 = vector.load %arg2[%c0_5, %c0_6, %c0_7] : memref<2x1x32xf32, #tpu.memory_space<vmem>>, vector<1x1x32xf32>
    %5 = vector.shape_cast %4 : vector<1x1x32xf32> to vector<1x32xf32>
    %cst = arith.constant dense<0.000000e+00> : vector<16xf32>
    %6 = vector.multi_reduction <add>, %1, %cst [1] : vector<16x32xf32> to vector<16xf32>
    %7 = vector.shape_cast %6 : vector<16xf32> to vector<16x1xf32>
    %cst_8 = arith.constant 3.200000e+01 : f32
    %8 = vector.broadcast %cst_8 : f32 to vector<16x1xf32>
    %9 = arith.divf %7, %8 : vector<16x1xf32>
    %10 = vector.broadcast %9 : vector<16x1xf32> to vector<16x32xf32>
    %11 = arith.subf %1, %10 : vector<16x32xf32>
    %12 = arith.mulf %11, %11 : vector<16x32xf32>
    %cst_9 = arith.constant dense<0.000000e+00> : vector<16xf32>
    %13 = vector.multi_reduction <add>, %12, %cst_9 [1] : vector<16x32xf32> to vector<16xf32>
    %14 = vector.shape_cast %13 : vector<16xf32> to vector<16x1xf32>
    %cst_10 = arith.constant 3.200000e+01 : f32
    %15 = vector.broadcast %cst_10 : f32 to vector<16x1xf32>
    %16 = arith.divf %14, %15 : vector<16x1xf32>
    %17 = vector.broadcast %9 : vector<16x1xf32> to vector<16x32xf32>
    %18 = arith.subf %1, %17 : vector<16x32xf32>
    %cst_11 = arith.constant 9.99999974E-6 : f32
    %19 = vector.broadcast %cst_11 : f32 to vector<16x1xf32>
    %20 = arith.addf %16, %19 : vector<16x1xf32>
    %21 = math.rsqrt %20 : vector<16x1xf32>
    %22 = vector.broadcast %21 : vector<16x1xf32> to vector<16x32xf32>
    %23 = arith.mulf %18, %22 : vector<16x32xf32>
    %24 = vector.broadcast %3 : vector<1x32xf32> to vector<16x32xf32>
    %25 = arith.mulf %23, %24 : vector<16x32xf32>
    %26 = vector.broadcast %5 : vector<1x32xf32> to vector<16x32xf32>
    %27 = arith.addf %25, %26 : vector<16x32xf32>
    %c0_12 = arith.constant 0 : index
    %c0_13 = arith.constant 0 : index
    %c0_14 = arith.constant 0 : index
    %c0_15 = arith.constant 0 : index
    %28 = vector.load %arg3[%c0_12, %c0_13, %c0_14, %c0_15] : memref<2x4x32x8xf32, #tpu.memory_space<vmem>>, vector<1x1x32x8xf32>
    %29 = vector.shape_cast %28 : vector<1x1x32x8xf32> to vector<32x8xf32>
    %cst_16 = arith.constant dense<0.000000e+00> : vector<16x8xf32>
    %30 = tpu.matmul %27, %29, %cst_16 {dimension_numbers = #tpu.dot_dimension_numbers<[1], [0], [0], [1], [0, 0, 1, 1], [], []>} : vector<16x32xf32>, vector<32x8xf32>, vector<16x8xf32> -> vector<16x8xf32>
    %31 = vector.shape_cast %30 : vector<16x8xf32> to vector<2x8x8xf32>
    %c0_17 = arith.constant 0 : index
    %c0_18 = arith.constant 0 : index
    %c0_19 = arith.constant 0 : index
    %c0_20 = arith.constant 0 : index
    %32 = vector.load %arg4[%c0_17, %c0_18, %c0_19, %c0_20] : memref<2x4x32x8xf32, #tpu.memory_space<vmem>>, vector<1x1x32x8xf32>
    %33 = vector.shape_cast %32 : vector<1x1x32x8xf32> to vector<32x8xf32>
    %cst_21 = arith.constant dense<0.000000e+00> : vector<16x8xf32>
    %34 = tpu.matmul %27, %33, %cst_21 {dimension_numbers = #tpu.dot_dimension_numbers<[1], [0], [0], [1], [0, 0, 1, 1], [], []>} : vector<16x32xf32>, vector<32x8xf32>, vector<16x8xf32> -> vector<16x8xf32>
    %35 = vector.shape_cast %34 : vector<16x8xf32> to vector<2x8x8xf32>
    %c0_22 = arith.constant 0 : index
    %c0_23 = arith.constant 0 : index
    %c0_24 = arith.constant 0 : index
    %c0_25 = arith.constant 0 : index
    %36 = vector.load %arg5[%c0_22, %c0_23, %c0_24, %c0_25] : memref<2x4x32x8xf32, #tpu.memory_space<vmem>>, vector<1x1x32x8xf32>
    %37 = vector.shape_cast %36 : vector<1x1x32x8xf32> to vector<32x8xf32>
    %cst_26 = arith.constant dense<0.000000e+00> : vector<16x8xf32>
    %38 = tpu.matmul %27, %37, %cst_26 {dimension_numbers = #tpu.dot_dimension_numbers<[1], [0], [0], [1], [0, 0, 1, 1], [], []>} : vector<16x32xf32>, vector<32x8xf32>, vector<16x8xf32> -> vector<16x8xf32>
    %39 = vector.shape_cast %38 : vector<16x8xf32> to vector<2x8x8xf32>
    "tpu.trace_start"() <{level = 10 : i32, message = "bqe,bke->bqk"}> : () -> ()
    %cst_27 = arith.constant dense<0.000000e+00> : vector<2x8x8xf32>
    %40 = tpu.matmul %31, %35, %cst_27 {dimension_numbers = #tpu.dot_dimension_numbers<[2], [2], [1], [1], [0, 0, 0, 1, 1, 1], [0], [0]>} : vector<2x8x8xf32>, vector<2x8x8xf32>, vector<2x8x8xf32> -> vector<2x8x8xf32>
    "tpu.trace_stop"() : () -> ()
    %cst_28 = arith.constant dense<0xFF800000> : vector<2x8xf32>
    %41 = vector.multi_reduction <maximumf>, %40, %cst_28 [2] : vector<2x8x8xf32> to vector<2x8xf32>
    %42 = vector.shape_cast %41 : vector<2x8xf32> to vector<2x8x1xf32>
    %43 = vector.broadcast %42 : vector<2x8x1xf32> to vector<2x8x8xf32>
    %44 = arith.subf %40, %43 : vector<2x8x8xf32>
    %45 = math.exp %44 : vector<2x8x8xf32>
    %cst_29 = arith.constant dense<0.000000e+00> : vector<2x8xf32>
    %46 = vector.multi_reduction <add>, %45, %cst_29 [2] : vector<2x8x8xf32> to vector<2x8xf32>
    %47 = vector.shape_cast %46 : vector<2x8xf32> to vector<2x8x1xf32>
    %48 = vector.broadcast %47 : vector<2x8x1xf32> to vector<2x8x8xf32>
    %49 = arith.divf %45, %48 : vector<2x8x8xf32>
    %c0_30 = arith.constant 0 : index
    %c1 = arith.constant 1 : index
    %c0_31 = arith.constant 0 : index
    %c0_32 = arith.constant 0 : index
    %50 = vector.load %arg3[%c0_30, %c1, %c0_31, %c0_32] : memref<2x4x32x8xf32, #tpu.memory_space<vmem>>, vector<1x1x32x8xf32>
    %51 = vector.shape_cast %50 : vector<1x1x32x8xf32> to vector<32x8xf32>
    %cst_33 = arith.constant dense<0.000000e+00> : vector<16x8xf32>
    %52 = tpu.matmul %27, %51, %cst_33 {dimension_numbers = #tpu.dot_dimension_numbers<[1], [0], [0], [1], [0, 0, 1, 1], [], []>} : vector<16x32xf32>, vector<32x8xf32>, vector<16x8xf32> -> vector<16x8xf32>
    %53 = vector.shape_cast %52 : vector<16x8xf32> to vector<2x8x8xf32>
    %c0_34 = arith.constant 0 : index
    %c1_35 = arith.constant 1 : index
    %c0_36 = arith.constant 0 : index
    %c0_37 = arith.constant 0 : index
    %54 = vector.load %arg4[%c0_34, %c1_35, %c0_36, %c0_37] : memref<2x4x32x8xf32, #tpu.memory_space<vmem>>, vector<1x1x32x8xf32>
    %55 = vector.shape_cast %54 : vector<1x1x32x8xf32> to vector<32x8xf32>
    %cst_38 = arith.constant dense<0.000000e+00> : vector<16x8xf32>
    %56 = tpu.matmul %27, %55, %cst_38 {dimension_numbers = #tpu.dot_dimension_numbers<[1], [0], [0], [1], [0, 0, 1, 1], [], []>} : vector<16x32xf32>, vector<32x8xf32>, vector<16x8xf32> -> vector<16x8xf32>
    %57 = vector.shape_cast %56 : vector<16x8xf32> to vector<2x8x8xf32>
    %c0_39 = arith.constant 0 : index
    %c1_40 = arith.constant 1 : index
    %c0_41 = arith.constant 0 : index
    %c0_42 = arith.constant 0 : index
    %58 = vector.load %arg5[%c0_39, %c1_40, %c0_41, %c0_42] : memref<2x4x32x8xf32, #tpu.memory_space<vmem>>, vector<1x1x32x8xf32>
    %59 = vector.shape_cast %58 : vector<1x1x32x8xf32> to vector<32x8xf32>
    %cst_43 = arith.constant dense<0.000000e+00> : vector<16x8xf32>
    %60 = tpu.matmul %27, %59, %cst_43 {dimension_numbers = #tpu.dot_dimension_numbers<[1], [0], [0], [1], [0, 0, 1, 1], [], []>} : vector<16x32xf32>, vector<32x8xf32>, vector<16x8xf32> -> vector<16x8xf32>
    %61 = vector.shape_cast %60 : vector<16x8xf32> to vector<2x8x8xf32>
    "tpu.trace_start"() <{level = 10 : i32, message = "bqe,bke->bqk"}> : () -> ()
    %cst_44 = arith.constant dense<0.000000e+00> : vector<2x8x8xf32>
    %62 = tpu.matmul %53, %57, %cst_44 {dimension_numbers = #tpu.dot_dimension_numbers<[2], [2], [1], [1], [0, 0, 0, 1, 1, 1], [0], [0]>} : vector<2x8x8xf32>, vector<2x8x8xf32>, vector<2x8x8xf32> -> vector<2x8x8xf32>
    "tpu.trace_stop"() : () -> ()
    %cst_45 = arith.constant dense<0xFF800000> : vector<2x8xf32>
    %63 = vector.multi_reduction <maximumf>, %62, %cst_45 [2] : vector<2x8x8xf32> to vector<2x8xf32>
    %64 = vector.shape_cast %63 : vector<2x8xf32> to vector<2x8x1xf32>
    %65 = vector.broadcast %64 : vector<2x8x1xf32> to vector<2x8x8xf32>
    %66 = arith.subf %62, %65 : vector<2x8x8xf32>
    %67 = math.exp %66 : vector<2x8x8xf32>
    %cst_46 = arith.constant dense<0.000000e+00> : vector<2x8xf32>
    %68 = vector.multi_reduction <add>, %67, %cst_46 [2] : vector<2x8x8xf32> to vector<2x8xf32>
    %69 = vector.shape_cast %68 : vector<2x8xf32> to vector<2x8x1xf32>
    %70 = vector.broadcast %69 : vector<2x8x1xf32> to vector<2x8x8xf32>
    %71 = arith.divf %67, %70 : vector<2x8x8xf32>
    %c0_47 = arith.constant 0 : index
    %c2 = arith.constant 2 : index
    %c0_48 = arith.constant 0 : index
    %c0_49 = arith.constant 0 : index
    %72 = vector.load %arg3[%c0_47, %c2, %c0_48, %c0_49] : memref<2x4x32x8xf32, #tpu.memory_space<vmem>>, vector<1x1x32x8xf32>
    %73 = vector.shape_cast %72 : vector<1x1x32x8xf32> to vector<32x8xf32>
    %cst_50 = arith.constant dense<0.000000e+00> : vector<16x8xf32>
    %74 = tpu.matmul %27, %73, %cst_50 {dimension_numbers = #tpu.dot_dimension_numbers<[1], [0], [0], [1], [0, 0, 1, 1], [], []>} : vector<16x32xf32>, vector<32x8xf32>, vector<16x8xf32> -> vector<16x8xf32>
    %75 = vector.shape_cast %74 : vector<16x8xf32> to vector<2x8x8xf32>
    %c0_51 = arith.constant 0 : index
    %c2_52 = arith.constant 2 : index
    %c0_53 = arith.constant 0 : index
    %c0_54 = arith.constant 0 : index
    %76 = vector.load %arg4[%c0_51, %c2_52, %c0_53, %c0_54] : memref<2x4x32x8xf32, #tpu.memory_space<vmem>>, vector<1x1x32x8xf32>
    %77 = vector.shape_cast %76 : vector<1x1x32x8xf32> to vector<32x8xf32>
    %cst_55 = arith.constant dense<0.000000e+00> : vector<16x8xf32>
    %78 = tpu.matmul %27, %77, %cst_55 {dimension_numbers = #tpu.dot_dimension_numbers<[1], [0], [0], [1], [0, 0, 1, 1], [], []>} : vector<16x32xf32>, vector<32x8xf32>, vector<16x8xf32> -> vector<16x8xf32>
    %79 = vector.shape_cast %78 : vector<16x8xf32> to vector<2x8x8xf32>
    %c0_56 = arith.constant 0 : index
    %c2_57 = arith.constant 2 : index
    %c0_58 = arith.constant 0 : index
    %c0_59 = arith.constant 0 : index
    %80 = vector.load %arg5[%c0_56, %c2_57, %c0_58, %c0_59] : memref<2x4x32x8xf32, #tpu.memory_space<vmem>>, vector<1x1x32x8xf32>
    %81 = vector.shape_cast %80 : vector<1x1x32x8xf32> to vector<32x8xf32>
    %cst_60 = arith.constant dense<0.000000e+00> : vector<16x8xf32>
    %82 = tpu.matmul %27, %81, %cst_60 {dimension_numbers = #tpu.dot_dimension_numbers<[1], [0], [0], [1], [0, 0, 1, 1], [], []>} : vector<16x32xf32>, vector<32x8xf32>, vector<16x8xf32> -> vector<16x8xf32>
    %83 = vector.shape_cast %82 : vector<16x8xf32> to vector<2x8x8xf32>
    "tpu.trace_start"() <{level = 10 : i32, message = "bqe,bke->bqk"}> : () -> ()
    %cst_61 = arith.constant dense<0.000000e+00> : vector<2x8x8xf32>
    %84 = tpu.matmul %75, %79, %cst_61 {dimension_numbers = #tpu.dot_dimension_numbers<[2], [2], [1], [1], [0, 0, 0, 1, 1, 1], [0], [0]>} : vector<2x8x8xf32>, vector<2x8x8xf32>, vector<2x8x8xf32> -> vector<2x8x8xf32>
    "tpu.trace_stop"() : () -> ()
    %cst_62 = arith.constant dense<0xFF800000> : vector<2x8xf32>
    %85 = vector.multi_reduction <maximumf>, %84, %cst_62 [2] : vector<2x8x8xf32> to vector<2x8xf32>
    %86 = vector.shape_cast %85 : vector<2x8xf32> to vector<2x8x1xf32>
    %87 = vector.broadcast %86 : vector<2x8x1xf32> to vector<2x8x8xf32>
    %88 = arith.subf %84, %87 : vector<2x8x8xf32>
    %89 = math.exp %88 : vector<2x8x8xf32>
    %cst_63 = arith.constant dense<0.000000e+00> : vector<2x8xf32>
    %90 = vector.multi_reduction <add>, %89, %cst_63 [2] : vector<2x8x8xf32> to vector<2x8xf32>
    %91 = vector.shape_cast %90 : vector<2x8xf32> to vector<2x8x1xf32>
    %92 = vector.broadcast %91 : vector<2x8x1xf32> to vector<2x8x8xf32>
    %93 = arith.divf %89, %92 : vector<2x8x8xf32>
    %c0_64 = arith.constant 0 : index
    %c3 = arith.constant 3 : index
    %c0_65 = arith.constant 0 : index
    %c0_66 = arith.constant 0 : index
    %94 = vector.load %arg3[%c0_64, %c3, %c0_65, %c0_66] : memref<2x4x32x8xf32, #tpu.memory_space<vmem>>, vector<1x1x32x8xf32>
    %95 = vector.shape_cast %94 : vector<1x1x32x8xf32> to vector<32x8xf32>
    %cst_67 = arith.constant dense<0.000000e+00> : vector<16x8xf32>
    %96 = tpu.matmul %27, %95, %cst_67 {dimension_numbers = #tpu.dot_dimension_numbers<[1], [0], [0], [1], [0, 0, 1, 1], [], []>} : vector<16x32xf32>, vector<32x8xf32>, vector<16x8xf32> -> vector<16x8xf32>
    %97 = vector.shape_cast %96 : vector<16x8xf32> to vector<2x8x8xf32>
    %c0_68 = arith.constant 0 : index
    %c3_69 = arith.constant 3 : index
    %c0_70 = arith.constant 0 : index
    %c0_71 = arith.constant 0 : index
    %98 = vector.load %arg4[%c0_68, %c3_69, %c0_70, %c0_71] : memref<2x4x32x8xf32, #tpu.memory_space<vmem>>, vector<1x1x32x8xf32>
    %99 = vector.shape_cast %98 : vector<1x1x32x8xf32> to vector<32x8xf32>
    %cst_72 = arith.constant dense<0.000000e+00> : vector<16x8xf32>
    %100 = tpu.matmul %27, %99, %cst_72 {dimension_numbers = #tpu.dot_dimension_numbers<[1], [0], [0], [1], [0, 0, 1, 1], [], []>} : vector<16x32xf32>, vector<32x8xf32>, vector<16x8xf32> -> vector<16x8xf32>
    %101 = vector.shape_cast %100 : vector<16x8xf32> to vector<2x8x8xf32>
    %c0_73 = arith.constant 0 : index
    %c3_74 = arith.constant 3 : index
    %c0_75 = arith.constant 0 : index
    %c0_76 = arith.constant 0 : index
    %102 = vector.load %arg5[%c0_73, %c3_74, %c0_75, %c0_76] : memref<2x4x32x8xf32, #tpu.memory_space<vmem>>, vector<1x1x32x8xf32>
    %103 = vector.shape_cast %102 : vector<1x1x32x8xf32> to vector<32x8xf32>
    %cst_77 = arith.constant dense<0.000000e+00> : vector<16x8xf32>
    %104 = tpu.matmul %27, %103, %cst_77 {dimension_numbers = #tpu.dot_dimension_numbers<[1], [0], [0], [1], [0, 0, 1, 1], [], []>} : vector<16x32xf32>, vector<32x8xf32>, vector<16x8xf32> -> vector<16x8xf32>
    %105 = vector.shape_cast %104 : vector<16x8xf32> to vector<2x8x8xf32>
    "tpu.trace_start"() <{level = 10 : i32, message = "bqe,bke->bqk"}> : () -> ()
    %cst_78 = arith.constant dense<0.000000e+00> : vector<2x8x8xf32>
    %106 = tpu.matmul %97, %101, %cst_78 {dimension_numbers = #tpu.dot_dimension_numbers<[2], [2], [1], [1], [0, 0, 0, 1, 1, 1], [0], [0]>} : vector<2x8x8xf32>, vector<2x8x8xf32>, vector<2x8x8xf32> -> vector<2x8x8xf32>
    "tpu.trace_stop"() : () -> ()
    %cst_79 = arith.constant dense<0xFF800000> : vector<2x8xf32>
    %107 = vector.multi_reduction <maximumf>, %106, %cst_79 [2] : vector<2x8x8xf32> to vector<2x8xf32>
    %108 = vector.shape_cast %107 : vector<2x8xf32> to vector<2x8x1xf32>
    %109 = vector.broadcast %108 : vector<2x8x1xf32> to vector<2x8x8xf32>
    %110 = arith.subf %106, %109 : vector<2x8x8xf32>
    %111 = math.exp %110 : vector<2x8x8xf32>
    %cst_80 = arith.constant dense<0.000000e+00> : vector<2x8xf32>
    %112 = vector.multi_reduction <add>, %111, %cst_80 [2] : vector<2x8x8xf32> to vector<2x8xf32>
    %113 = vector.shape_cast %112 : vector<2x8xf32> to vector<2x8x1xf32>
    %114 = vector.broadcast %113 : vector<2x8x1xf32> to vector<2x8x8xf32>
    %115 = arith.divf %111, %114 : vector<2x8x8xf32>
    %c0_81 = arith.constant 0 : index
    %116 = memref.load %arg15[%c0_81] : memref<8xf32, #tpu.memory_space<smem>>
    %c0_82 = arith.constant 0 : index
    %117 = memref.load %arg14[%c0_82] : memref<32xf32, #tpu.memory_space<smem>>
    %118 = vector.broadcast %117 : f32 to vector<2x8x8xf32>
    %119 = arith.mulf %118, %49 : vector<2x8x8xf32>
    %120 = vector.broadcast %116 : f32 to vector<2x8x8xf32>
    %121 = arith.addf %120, %119 : vector<2x8x8xf32>
    %c1_83 = arith.constant 1 : index
    %122 = memref.load %arg14[%c1_83] : memref<32xf32, #tpu.memory_space<smem>>
    %123 = vector.broadcast %122 : f32 to vector<2x8x8xf32>
    %124 = arith.mulf %123, %71 : vector<2x8x8xf32>
    %125 = arith.addf %121, %124 : vector<2x8x8xf32>
    %c2_84 = arith.constant 2 : index
    %126 = memref.load %arg14[%c2_84] : memref<32xf32, #tpu.memory_space<smem>>
    %127 = vector.broadcast %126 : f32 to vector<2x8x8xf32>
    %128 = arith.mulf %127, %93 : vector<2x8x8xf32>
    %129 = arith.addf %125, %128 : vector<2x8x8xf32>
    %c3_85 = arith.constant 3 : index
    %130 = memref.load %arg14[%c3_85] : memref<32xf32, #tpu.memory_space<smem>>
    %131 = vector.broadcast %130 : f32 to vector<2x8x8xf32>
    %132 = arith.mulf %131, %115 : vector<2x8x8xf32>
    %133 = arith.addf %129, %132 : vector<2x8x8xf32>
    %134 = vector.shape_cast %133 : vector<2x8x8xf32> to vector<1x2x8x8xf32>
    %cst_86 = arith.constant dense<0.000000e+00> : vector<1xf32>
    %135 = vector.multi_reduction <add>, %134, %cst_86 [1, 2, 3] : vector<1x2x8x8xf32> to vector<1xf32>
    %136 = vector.shape_cast %135 : vector<1xf32> to vector<1x1x1x1xf32>
    %137 = vector.extract %136[0, 0, 0, 0] : f32 from vector<1x1x1x1xf32>
    %cst_87 = arith.constant 1.280000e+02 : f32
    %138 = arith.divf %137, %cst_87 : f32
    %139 = vector.broadcast %138 : f32 to vector<2x8x8xf32>
    %140 = arith.subf %133, %139 : vector<2x8x8xf32>
    %141 = arith.mulf %140, %140 : vector<2x8x8xf32>
    %142 = vector.shape_cast %141 : vector<2x8x8xf32> to vector<1x2x8x8xf32>
    %cst_88 = arith.constant dense<0.000000e+00> : vector<1xf32>
    %143 = vector.multi_reduction <add>, %142, %cst_88 [1, 2, 3] : vector<1x2x8x8xf32> to vector<1xf32>
    %144 = vector.shape_cast %143 : vector<1xf32> to vector<1x1x1x1xf32>
    %145 = vector.extract %144[0, 0, 0, 0] : f32 from vector<1x1x1x1xf32>
    %cst_89 = arith.constant 1.280000e+02 : f32
    %146 = arith.divf %145, %cst_89 : f32
    %147 = vector.broadcast %138 : f32 to vector<2x8x8xf32>
    %148 = arith.subf %133, %147 : vector<2x8x8xf32>
    %cst_90 = arith.constant 9.99999974E-6 : f32
    %149 = arith.addf %146, %cst_90 : f32
    %150 = math.rsqrt %149 : f32
    %151 = vector.broadcast %150 : f32 to vector<2x8x8xf32>
    %152 = arith.mulf %148, %151 : vector<2x8x8xf32>
    %c0_91 = arith.constant 0 : index
    %153 = memref.load %arg16[%c0_91] : memref<8xf32, #tpu.memory_space<smem>>
    %154 = vector.broadcast %153 : f32 to vector<2x8x8xf32>
    %155 = arith.mulf %152, %154 : vector<2x8x8xf32>
    %c0_92 = arith.constant 0 : index
    %156 = memref.load %arg17[%c0_92] : memref<8xf32, #tpu.memory_space<smem>>
    %157 = vector.broadcast %156 : f32 to vector<2x8x8xf32>
    %158 = arith.addf %155, %157 : vector<2x8x8xf32>
    "tpu.trace_start"() <{level = 10 : i32, message = "bqk,bkd->bqd"}> : () -> ()
    %cst_93 = arith.constant dense<0.000000e+00> : vector<2x8x8xf32>
    %159 = tpu.matmul %158, %39, %cst_93 {dimension_numbers = #tpu.dot_dimension_numbers<[2], [1], [1], [2], [0, 0, 0, 1, 1, 2], [0], [0]>} : vector<2x8x8xf32>, vector<2x8x8xf32>, vector<2x8x8xf32> -> vector<2x8x8xf32>
    "tpu.trace_stop"() : () -> ()
    %160 = vector.shape_cast %159 : vector<2x8x8xf32> to vector<16x8xf32>
    %c0_94 = arith.constant 0 : index
    %c0_95 = arith.constant 0 : index
    %c0_96 = arith.constant 0 : index
    %c0_97 = arith.constant 0 : index
    %161 = vector.load %arg6[%c0_94, %c0_95, %c0_96, %c0_97] : memref<2x4x8x32xf32, #tpu.memory_space<vmem>>, vector<1x1x8x32xf32>
    %162 = vector.shape_cast %161 : vector<1x1x8x32xf32> to vector<8x32xf32>
    %cst_98 = arith.constant dense<0.000000e+00> : vector<16x32xf32>
    %163 = tpu.matmul %160, %162, %cst_98 {dimension_numbers = #tpu.dot_dimension_numbers<[1], [0], [0], [1], [0, 0, 1, 1], [], []>} : vector<16x8xf32>, vector<8x32xf32>, vector<16x32xf32> -> vector<16x32xf32>
    %c1_99 = arith.constant 1 : index
    %164 = memref.load %arg15[%c1_99] : memref<8xf32, #tpu.memory_space<smem>>
    %c4 = arith.constant 4 : index
    %165 = memref.load %arg14[%c4] : memref<32xf32, #tpu.memory_space<smem>>
    %166 = vector.broadcast %165 : f32 to vector<2x8x8xf32>
    %167 = arith.mulf %166, %49 : vector<2x8x8xf32>
    %168 = vector.broadcast %164 : f32 to vector<2x8x8xf32>
    %169 = arith.addf %168, %167 : vector<2x8x8xf32>
    %c5 = arith.constant 5 : index
    %170 = memref.load %arg14[%c5] : memref<32xf32, #tpu.memory_space<smem>>
    %171 = vector.broadcast %170 : f32 to vector<2x8x8xf32>
    %172 = arith.mulf %171, %71 : vector<2x8x8xf32>
    %173 = arith.addf %169, %172 : vector<2x8x8xf32>
    %c6 = arith.constant 6 : index
    %174 = memref.load %arg14[%c6] : memref<32xf32, #tpu.memory_space<smem>>
    %175 = vector.broadcast %174 : f32 to vector<2x8x8xf32>
    %176 = arith.mulf %175, %93 : vector<2x8x8xf32>
    %177 = arith.addf %173, %176 : vector<2x8x8xf32>
    %c7 = arith.constant 7 : index
    %178 = memref.load %arg14[%c7] : memref<32xf32, #tpu.memory_space<smem>>
    %179 = vector.broadcast %178 : f32 to vector<2x8x8xf32>
    %180 = arith.mulf %179, %115 : vector<2x8x8xf32>
    %181 = arith.addf %177, %180 : vector<2x8x8xf32>
    %182 = vector.shape_cast %181 : vector<2x8x8xf32> to vector<1x2x8x8xf32>
    %cst_100 = arith.constant dense<0.000000e+00> : vector<1xf32>
    %183 = vector.multi_reduction <add>, %182, %cst_100 [1, 2, 3] : vector<1x2x8x8xf32> to vector<1xf32>
    %184 = vector.shape_cast %183 : vector<1xf32> to vector<1x1x1x1xf32>
    %185 = vector.extract %184[0, 0, 0, 0] : f32 from vector<1x1x1x1xf32>
    %cst_101 = arith.constant 1.280000e+02 : f32
    %186 = arith.divf %185, %cst_101 : f32
    %187 = vector.broadcast %186 : f32 to vector<2x8x8xf32>
    %188 = arith.subf %181, %187 : vector<2x8x8xf32>
    %189 = arith.mulf %188, %188 : vector<2x8x8xf32>
    %190 = vector.shape_cast %189 : vector<2x8x8xf32> to vector<1x2x8x8xf32>
    %cst_102 = arith.constant dense<0.000000e+00> : vector<1xf32>
    %191 = vector.multi_reduction <add>, %190, %cst_102 [1, 2, 3] : vector<1x2x8x8xf32> to vector<1xf32>
    %192 = vector.shape_cast %191 : vector<1xf32> to vector<1x1x1x1xf32>
    %193 = vector.extract %192[0, 0, 0, 0] : f32 from vector<1x1x1x1xf32>
    %cst_103 = arith.constant 1.280000e+02 : f32
    %194 = arith.divf %193, %cst_103 : f32
    %195 = vector.broadcast %186 : f32 to vector<2x8x8xf32>
    %196 = arith.subf %181, %195 : vector<2x8x8xf32>
    %cst_104 = arith.constant 9.99999974E-6 : f32
    %197 = arith.addf %194, %cst_104 : f32
    %198 = math.rsqrt %197 : f32
    %199 = vector.broadcast %198 : f32 to vector<2x8x8xf32>
    %200 = arith.mulf %196, %199 : vector<2x8x8xf32>
    %c1_105 = arith.constant 1 : index
    %201 = memref.load %arg16[%c1_105] : memref<8xf32, #tpu.memory_space<smem>>
    %202 = vector.broadcast %201 : f32 to vector<2x8x8xf32>
    %203 = arith.mulf %200, %202 : vector<2x8x8xf32>
    %c1_106 = arith.constant 1 : index
    %204 = memref.load %arg17[%c1_106] : memref<8xf32, #tpu.memory_space<smem>>
    %205 = vector.broadcast %204 : f32 to vector<2x8x8xf32>
    %206 = arith.addf %203, %205 : vector<2x8x8xf32>
    "tpu.trace_start"() <{level = 10 : i32, message = "bqk,bkd->bqd"}> : () -> ()
    %cst_107 = arith.constant dense<0.000000e+00> : vector<2x8x8xf32>
    %207 = tpu.matmul %206, %61, %cst_107 {dimension_numbers = #tpu.dot_dimension_numbers<[2], [1], [1], [2], [0, 0, 0, 1, 1, 2], [0], [0]>} : vector<2x8x8xf32>, vector<2x8x8xf32>, vector<2x8x8xf32> -> vector<2x8x8xf32>
    "tpu.trace_stop"() : () -> ()
    %208 = vector.shape_cast %207 : vector<2x8x8xf32> to vector<16x8xf32>
    %c0_108 = arith.constant 0 : index
    %c1_109 = arith.constant 1 : index
    %c0_110 = arith.constant 0 : index
    %c0_111 = arith.constant 0 : index
    %209 = vector.load %arg6[%c0_108, %c1_109, %c0_110, %c0_111] : memref<2x4x8x32xf32, #tpu.memory_space<vmem>>, vector<1x1x8x32xf32>
    %210 = vector.shape_cast %209 : vector<1x1x8x32xf32> to vector<8x32xf32>
    %cst_112 = arith.constant dense<0.000000e+00> : vector<16x32xf32>
    %211 = tpu.matmul %208, %210, %cst_112 {dimension_numbers = #tpu.dot_dimension_numbers<[1], [0], [0], [1], [0, 0, 1, 1], [], []>} : vector<16x8xf32>, vector<8x32xf32>, vector<16x32xf32> -> vector<16x32xf32>
    %212 = arith.addf %163, %211 : vector<16x32xf32>
    %c2_113 = arith.constant 2 : index
    %213 = memref.load %arg15[%c2_113] : memref<8xf32, #tpu.memory_space<smem>>
    %c8 = arith.constant 8 : index
    %214 = memref.load %arg14[%c8] : memref<32xf32, #tpu.memory_space<smem>>
    %215 = vector.broadcast %214 : f32 to vector<2x8x8xf32>
    %216 = arith.mulf %215, %49 : vector<2x8x8xf32>
    %217 = vector.broadcast %213 : f32 to vector<2x8x8xf32>
    %218 = arith.addf %217, %216 : vector<2x8x8xf32>
    %c9 = arith.constant 9 : index
    %219 = memref.load %arg14[%c9] : memref<32xf32, #tpu.memory_space<smem>>
    %220 = vector.broadcast %219 : f32 to vector<2x8x8xf32>
    %221 = arith.mulf %220, %71 : vector<2x8x8xf32>
    %222 = arith.addf %218, %221 : vector<2x8x8xf32>
    %c10 = arith.constant 10 : index
    %223 = memref.load %arg14[%c10] : memref<32xf32, #tpu.memory_space<smem>>
    %224 = vector.broadcast %223 : f32 to vector<2x8x8xf32>
    %225 = arith.mulf %224, %93 : vector<2x8x8xf32>
    %226 = arith.addf %222, %225 : vector<2x8x8xf32>
    %c11 = arith.constant 11 : index
    %227 = memref.load %arg14[%c11] : memref<32xf32, #tpu.memory_space<smem>>
    %228 = vector.broadcast %227 : f32 to vector<2x8x8xf32>
    %229 = arith.mulf %228, %115 : vector<2x8x8xf32>
    %230 = arith.addf %226, %229 : vector<2x8x8xf32>
    %231 = vector.shape_cast %230 : vector<2x8x8xf32> to vector<1x2x8x8xf32>
    %cst_114 = arith.constant dense<0.000000e+00> : vector<1xf32>
    %232 = vector.multi_reduction <add>, %231, %cst_114 [1, 2, 3] : vector<1x2x8x8xf32> to vector<1xf32>
    %233 = vector.shape_cast %232 : vector<1xf32> to vector<1x1x1x1xf32>
    %234 = vector.extract %233[0, 0, 0, 0] : f32 from vector<1x1x1x1xf32>
    %cst_115 = arith.constant 1.280000e+02 : f32
    %235 = arith.divf %234, %cst_115 : f32
    %236 = vector.broadcast %235 : f32 to vector<2x8x8xf32>
    %237 = arith.subf %230, %236 : vector<2x8x8xf32>
    %238 = arith.mulf %237, %237 : vector<2x8x8xf32>
    %239 = vector.shape_cast %238 : vector<2x8x8xf32> to vector<1x2x8x8xf32>
    %cst_116 = arith.constant dense<0.000000e+00> : vector<1xf32>
    %240 = vector.multi_reduction <add>, %239, %cst_116 [1, 2, 3] : vector<1x2x8x8xf32> to vector<1xf32>
    %241 = vector.shape_cast %240 : vector<1xf32> to vector<1x1x1x1xf32>
    %242 = vector.extract %241[0, 0, 0, 0] : f32 from vector<1x1x1x1xf32>
    %cst_117 = arith.constant 1.280000e+02 : f32
    %243 = arith.divf %242, %cst_117 : f32
    %244 = vector.broadcast %235 : f32 to vector<2x8x8xf32>
    %245 = arith.subf %230, %244 : vector<2x8x8xf32>
    %cst_118 = arith.constant 9.99999974E-6 : f32
    %246 = arith.addf %243, %cst_118 : f32
    %247 = math.rsqrt %246 : f32
    %248 = vector.broadcast %247 : f32 to vector<2x8x8xf32>
    %249 = arith.mulf %245, %248 : vector<2x8x8xf32>
    %c2_119 = arith.constant 2 : index
    %250 = memref.load %arg16[%c2_119] : memref<8xf32, #tpu.memory_space<smem>>
    %251 = vector.broadcast %250 : f32 to vector<2x8x8xf32>
    %252 = arith.mulf %249, %251 : vector<2x8x8xf32>
    %c2_120 = arith.constant 2 : index
    %253 = memref.load %arg17[%c2_120] : memref<8xf32, #tpu.memory_space<smem>>
    %254 = vector.broadcast %253 : f32 to vector<2x8x8xf32>
    %255 = arith.addf %252, %254 : vector<2x8x8xf32>
    "tpu.trace_start"() <{level = 10 : i32, message = "bqk,bkd->bqd"}> : () -> ()
    %cst_121 = arith.constant dense<0.000000e+00> : vector<2x8x8xf32>
    %256 = tpu.matmul %255, %83, %cst_121 {dimension_numbers = #tpu.dot_dimension_numbers<[2], [1], [1], [2], [0, 0, 0, 1, 1, 2], [0], [0]>} : vector<2x8x8xf32>, vector<2x8x8xf32>, vector<2x8x8xf32> -> vector<2x8x8xf32>
    "tpu.trace_stop"() : () -> ()
    %257 = vector.shape_cast %256 : vector<2x8x8xf32> to vector<16x8xf32>
    %c0_122 = arith.constant 0 : index
    %c2_123 = arith.constant 2 : index
    %c0_124 = arith.constant 0 : index
    %c0_125 = arith.constant 0 : index
    %258 = vector.load %arg6[%c0_122, %c2_123, %c0_124, %c0_125] : memref<2x4x8x32xf32, #tpu.memory_space<vmem>>, vector<1x1x8x32xf32>
    %259 = vector.shape_cast %258 : vector<1x1x8x32xf32> to vector<8x32xf32>
    %cst_126 = arith.constant dense<0.000000e+00> : vector<16x32xf32>
    %260 = tpu.matmul %257, %259, %cst_126 {dimension_numbers = #tpu.dot_dimension_numbers<[1], [0], [0], [1], [0, 0, 1, 1], [], []>} : vector<16x8xf32>, vector<8x32xf32>, vector<16x32xf32> -> vector<16x32xf32>
    %261 = arith.addf %212, %260 : vector<16x32xf32>
    %c3_127 = arith.constant 3 : index
    %262 = memref.load %arg15[%c3_127] : memref<8xf32, #tpu.memory_space<smem>>
    %c12 = arith.constant 12 : index
    %263 = memref.load %arg14[%c12] : memref<32xf32, #tpu.memory_space<smem>>
    %264 = vector.broadcast %263 : f32 to vector<2x8x8xf32>
    %265 = arith.mulf %264, %49 : vector<2x8x8xf32>
    %266 = vector.broadcast %262 : f32 to vector<2x8x8xf32>
    %267 = arith.addf %266, %265 : vector<2x8x8xf32>
    %c13 = arith.constant 13 : index
    %268 = memref.load %arg14[%c13] : memref<32xf32, #tpu.memory_space<smem>>
    %269 = vector.broadcast %268 : f32 to vector<2x8x8xf32>
    %270 = arith.mulf %269, %71 : vector<2x8x8xf32>
    %271 = arith.addf %267, %270 : vector<2x8x8xf32>
    %c14 = arith.constant 14 : index
    %272 = memref.load %arg14[%c14] : memref<32xf32, #tpu.memory_space<smem>>
    %273 = vector.broadcast %272 : f32 to vector<2x8x8xf32>
    %274 = arith.mulf %273, %93 : vector<2x8x8xf32>
    %275 = arith.addf %271, %274 : vector<2x8x8xf32>
    %c15 = arith.constant 15 : index
    %276 = memref.load %arg14[%c15] : memref<32xf32, #tpu.memory_space<smem>>
    %277 = vector.broadcast %276 : f32 to vector<2x8x8xf32>
    %278 = arith.mulf %277, %115 : vector<2x8x8xf32>
    %279 = arith.addf %275, %278 : vector<2x8x8xf32>
    %280 = vector.shape_cast %279 : vector<2x8x8xf32> to vector<1x2x8x8xf32>
    %cst_128 = arith.constant dense<0.000000e+00> : vector<1xf32>
    %281 = vector.multi_reduction <add>, %280, %cst_128 [1, 2, 3] : vector<1x2x8x8xf32> to vector<1xf32>
    %282 = vector.shape_cast %281 : vector<1xf32> to vector<1x1x1x1xf32>
    %283 = vector.extract %282[0, 0, 0, 0] : f32 from vector<1x1x1x1xf32>
    %cst_129 = arith.constant 1.280000e+02 : f32
    %284 = arith.divf %283, %cst_129 : f32
    %285 = vector.broadcast %284 : f32 to vector<2x8x8xf32>
    %286 = arith.subf %279, %285 : vector<2x8x8xf32>
    %287 = arith.mulf %286, %286 : vector<2x8x8xf32>
    %288 = vector.shape_cast %287 : vector<2x8x8xf32> to vector<1x2x8x8xf32>
    %cst_130 = arith.constant dense<0.000000e+00> : vector<1xf32>
    %289 = vector.multi_reduction <add>, %288, %cst_130 [1, 2, 3] : vector<1x2x8x8xf32> to vector<1xf32>
    %290 = vector.shape_cast %289 : vector<1xf32> to vector<1x1x1x1xf32>
    %291 = vector.extract %290[0, 0, 0, 0] : f32 from vector<1x1x1x1xf32>
    %cst_131 = arith.constant 1.280000e+02 : f32
    %292 = arith.divf %291, %cst_131 : f32
    %293 = vector.broadcast %284 : f32 to vector<2x8x8xf32>
    %294 = arith.subf %279, %293 : vector<2x8x8xf32>
    %cst_132 = arith.constant 9.99999974E-6 : f32
    %295 = arith.addf %292, %cst_132 : f32
    %296 = math.rsqrt %295 : f32
    %297 = vector.broadcast %296 : f32 to vector<2x8x8xf32>
    %298 = arith.mulf %294, %297 : vector<2x8x8xf32>
    %c3_133 = arith.constant 3 : index
    %299 = memref.load %arg16[%c3_133] : memref<8xf32, #tpu.memory_space<smem>>
    %300 = vector.broadcast %299 : f32 to vector<2x8x8xf32>
    %301 = arith.mulf %298, %300 : vector<2x8x8xf32>
    %c3_134 = arith.constant 3 : index
    %302 = memref.load %arg17[%c3_134] : memref<8xf32, #tpu.memory_space<smem>>
    %303 = vector.broadcast %302 : f32 to vector<2x8x8xf32>
    %304 = arith.addf %301, %303 : vector<2x8x8xf32>
    "tpu.trace_start"() <{level = 10 : i32, message = "bqk,bkd->bqd"}> : () -> ()
    %cst_135 = arith.constant dense<0.000000e+00> : vector<2x8x8xf32>
    %305 = tpu.matmul %304, %105, %cst_135 {dimension_numbers = #tpu.dot_dimension_numbers<[2], [1], [1], [2], [0, 0, 0, 1, 1, 2], [0], [0]>} : vector<2x8x8xf32>, vector<2x8x8xf32>, vector<2x8x8xf32> -> vector<2x8x8xf32>
    "tpu.trace_stop"() : () -> ()
    %306 = vector.shape_cast %305 : vector<2x8x8xf32> to vector<16x8xf32>
    %c0_136 = arith.constant 0 : index
    %c3_137 = arith.constant 3 : index
    %c0_138 = arith.constant 0 : index
    %c0_139 = arith.constant 0 : index
    %307 = vector.load %arg6[%c0_136, %c3_137, %c0_138, %c0_139] : memref<2x4x8x32xf32, #tpu.memory_space<vmem>>, vector<1x1x8x32xf32>
    %308 = vector.shape_cast %307 : vector<1x1x8x32xf32> to vector<8x32xf32>
    %cst_140 = arith.constant dense<0.000000e+00> : vector<16x32xf32>
    %309 = tpu.matmul %306, %308, %cst_140 {dimension_numbers = #tpu.dot_dimension_numbers<[1], [0], [0], [1], [0, 0, 1, 1], [], []>} : vector<16x8xf32>, vector<8x32xf32>, vector<16x32xf32> -> vector<16x32xf32>
    %310 = arith.addf %261, %309 : vector<16x32xf32>
    %311 = arith.addf %1, %310 : vector<16x32xf32>
    %c0_141 = arith.constant 0 : index
    %c0_142 = arith.constant 0 : index
    %c0_143 = arith.constant 0 : index
    %312 = vector.load %arg7[%c0_141, %c0_142, %c0_143] : memref<2x1x32xf32, #tpu.memory_space<vmem>>, vector<1x1x32xf32>
    %313 = vector.shape_cast %312 : vector<1x1x32xf32> to vector<1x32xf32>
    %314 = vector.broadcast %313 : vector<1x32xf32> to vector<16x32xf32>
    %315 = arith.addf %311, %314 : vector<16x32xf32>
    %c0_144 = arith.constant 0 : index
    %c0_145 = arith.constant 0 : index
    %c0_146 = arith.constant 0 : index
    %316 = vector.load %arg8[%c0_144, %c0_145, %c0_146] : memref<2x1x32xf32, #tpu.memory_space<vmem>>, vector<1x1x32xf32>
    %317 = vector.shape_cast %316 : vector<1x1x32xf32> to vector<1x32xf32>
    %c0_147 = arith.constant 0 : index
    %c0_148 = arith.constant 0 : index
    %c0_149 = arith.constant 0 : index
    %318 = vector.load %arg9[%c0_147, %c0_148, %c0_149] : memref<2x1x32xf32, #tpu.memory_space<vmem>>, vector<1x1x32xf32>
    %319 = vector.shape_cast %318 : vector<1x1x32xf32> to vector<1x32xf32>
    %cst_150 = arith.constant dense<0.000000e+00> : vector<16xf32>
    %320 = vector.multi_reduction <add>, %315, %cst_150 [1] : vector<16x32xf32> to vector<16xf32>
    %321 = vector.shape_cast %320 : vector<16xf32> to vector<16x1xf32>
    %cst_151 = arith.constant 3.200000e+01 : f32
    %322 = vector.broadcast %cst_151 : f32 to vector<16x1xf32>
    %323 = arith.divf %321, %322 : vector<16x1xf32>
    %324 = vector.broadcast %323 : vector<16x1xf32> to vector<16x32xf32>
    %325 = arith.subf %315, %324 : vector<16x32xf32>
    %326 = arith.mulf %325, %325 : vector<16x32xf32>
    %cst_152 = arith.constant dense<0.000000e+00> : vector<16xf32>
    %327 = vector.multi_reduction <add>, %326, %cst_152 [1] : vector<16x32xf32> to vector<16xf32>
    %328 = vector.shape_cast %327 : vector<16xf32> to vector<16x1xf32>
    %cst_153 = arith.constant 3.200000e+01 : f32
    %329 = vector.broadcast %cst_153 : f32 to vector<16x1xf32>
    %330 = arith.divf %328, %329 : vector<16x1xf32>
    %331 = vector.broadcast %323 : vector<16x1xf32> to vector<16x32xf32>
    %332 = arith.subf %315, %331 : vector<16x32xf32>
    %cst_154 = arith.constant 9.99999974E-6 : f32
    %333 = vector.broadcast %cst_154 : f32 to vector<16x1xf32>
    %334 = arith.addf %330, %333 : vector<16x1xf32>
    %335 = math.rsqrt %334 : vector<16x1xf32>
    %336 = vector.broadcast %335 : vector<16x1xf32> to vector<16x32xf32>
    %337 = arith.mulf %332, %336 : vector<16x32xf32>
    %338 = vector.broadcast %317 : vector<1x32xf32> to vector<16x32xf32>
    %339 = arith.mulf %337, %338 : vector<16x32xf32>
    %340 = vector.broadcast %319 : vector<1x32xf32> to vector<16x32xf32>
    %341 = arith.addf %339, %340 : vector<16x32xf32>
    %c0_155 = arith.constant 0 : index
    %c0_156 = arith.constant 0 : index
    %c0_157 = arith.constant 0 : index
    %342 = vector.load %arg10[%c0_155, %c0_156, %c0_157] : memref<2x32x64xf32, #tpu.memory_space<vmem>>, vector<1x32x64xf32>
    %343 = vector.shape_cast %342 : vector<1x32x64xf32> to vector<32x64xf32>
    %cst_158 = arith.constant dense<0.000000e+00> : vector<16x64xf32>
    %344 = tpu.matmul %341, %343, %cst_158 {dimension_numbers = #tpu.dot_dimension_numbers<[1], [0], [0], [1], [0, 0, 1, 1], [], []>} : vector<16x32xf32>, vector<32x64xf32>, vector<16x64xf32> -> vector<16x64xf32>
    %c0_159 = arith.constant 0 : index
    %c0_160 = arith.constant 0 : index
    %c0_161 = arith.constant 0 : index
    %345 = vector.load %arg11[%c0_159, %c0_160, %c0_161] : memref<2x1x64xf32, #tpu.memory_space<vmem>>, vector<1x1x64xf32>
    %346 = vector.shape_cast %345 : vector<1x1x64xf32> to vector<1x64xf32>
    %347 = vector.broadcast %346 : vector<1x64xf32> to vector<16x64xf32>
    %348 = arith.addf %344, %347 : vector<16x64xf32>
    %cst_162 = arith.constant 0.000000e+00 : f32
    %349 = vector.broadcast %cst_162 : f32 to vector<16x64xf32>
    %350 = arith.maximumf %348, %349 : vector<16x64xf32>
    %c0_163 = arith.constant 0 : index
    %c0_164 = arith.constant 0 : index
    %c0_165 = arith.constant 0 : index
    %351 = vector.load %arg12[%c0_163, %c0_164, %c0_165] : memref<2x64x32xf32, #tpu.memory_space<vmem>>, vector<1x64x32xf32>
    %352 = vector.shape_cast %351 : vector<1x64x32xf32> to vector<64x32xf32>
    %cst_166 = arith.constant dense<0.000000e+00> : vector<16x32xf32>
    %353 = tpu.matmul %350, %352, %cst_166 {dimension_numbers = #tpu.dot_dimension_numbers<[1], [0], [0], [1], [0, 0, 1, 1], [], []>} : vector<16x64xf32>, vector<64x32xf32>, vector<16x32xf32> -> vector<16x32xf32>
    %354 = arith.addf %315, %353 : vector<16x32xf32>
    %c0_167 = arith.constant 0 : index
    %c0_168 = arith.constant 0 : index
    %c0_169 = arith.constant 0 : index
    %355 = vector.load %arg13[%c0_167, %c0_168, %c0_169] : memref<2x1x32xf32, #tpu.memory_space<vmem>>, vector<1x1x32xf32>
    %356 = vector.shape_cast %355 : vector<1x1x32xf32> to vector<1x32xf32>
    %357 = vector.broadcast %356 : vector<1x32xf32> to vector<16x32xf32>
    %358 = arith.addf %354, %357 : vector<16x32xf32>
    %c1_170 = arith.constant 1 : index
    %c0_171 = arith.constant 0 : index
    %c0_172 = arith.constant 0 : index
    %359 = vector.load %arg1[%c1_170, %c0_171, %c0_172] : memref<2x1x32xf32, #tpu.memory_space<vmem>>, vector<1x1x32xf32>
    %360 = vector.shape_cast %359 : vector<1x1x32xf32> to vector<1x32xf32>
    %c1_173 = arith.constant 1 : index
    %c0_174 = arith.constant 0 : index
    %c0_175 = arith.constant 0 : index
    %361 = vector.load %arg2[%c1_173, %c0_174, %c0_175] : memref<2x1x32xf32, #tpu.memory_space<vmem>>, vector<1x1x32xf32>
    %362 = vector.shape_cast %361 : vector<1x1x32xf32> to vector<1x32xf32>
    %cst_176 = arith.constant dense<0.000000e+00> : vector<16xf32>
    %363 = vector.multi_reduction <add>, %358, %cst_176 [1] : vector<16x32xf32> to vector<16xf32>
    %364 = vector.shape_cast %363 : vector<16xf32> to vector<16x1xf32>
    %cst_177 = arith.constant 3.200000e+01 : f32
    %365 = vector.broadcast %cst_177 : f32 to vector<16x1xf32>
    %366 = arith.divf %364, %365 : vector<16x1xf32>
    %367 = vector.broadcast %366 : vector<16x1xf32> to vector<16x32xf32>
    %368 = arith.subf %358, %367 : vector<16x32xf32>
    %369 = arith.mulf %368, %368 : vector<16x32xf32>
    %cst_178 = arith.constant dense<0.000000e+00> : vector<16xf32>
    %370 = vector.multi_reduction <add>, %369, %cst_178 [1] : vector<16x32xf32> to vector<16xf32>
    %371 = vector.shape_cast %370 : vector<16xf32> to vector<16x1xf32>
    %cst_179 = arith.constant 3.200000e+01 : f32
    %372 = vector.broadcast %cst_179 : f32 to vector<16x1xf32>
    %373 = arith.divf %371, %372 : vector<16x1xf32>
    %374 = vector.broadcast %366 : vector<16x1xf32> to vector<16x32xf32>
    %375 = arith.subf %358, %374 : vector<16x32xf32>
    %cst_180 = arith.constant 9.99999974E-6 : f32
    %376 = vector.broadcast %cst_180 : f32 to vector<16x1xf32>
    %377 = arith.addf %373, %376 : vector<16x1xf32>
    %378 = math.rsqrt %377 : vector<16x1xf32>
    %379 = vector.broadcast %378 : vector<16x1xf32> to vector<16x32xf32>
    %380 = arith.mulf %375, %379 : vector<16x32xf32>
    %381 = vector.broadcast %360 : vector<1x32xf32> to vector<16x32xf32>
    %382 = arith.mulf %380, %381 : vector<16x32xf32>
    %383 = vector.broadcast %362 : vector<1x32xf32> to vector<16x32xf32>
    %384 = arith.addf %382, %383 : vector<16x32xf32>
    %c1_181 = arith.constant 1 : index
    %c0_182 = arith.constant 0 : index
    %c0_183 = arith.constant 0 : index
    %c0_184 = arith.constant 0 : index
    %385 = vector.load %arg3[%c1_181, %c0_182, %c0_183, %c0_184] : memref<2x4x32x8xf32, #tpu.memory_space<vmem>>, vector<1x1x32x8xf32>
    %386 = vector.shape_cast %385 : vector<1x1x32x8xf32> to vector<32x8xf32>
    %cst_185 = arith.constant dense<0.000000e+00> : vector<16x8xf32>
    %387 = tpu.matmul %384, %386, %cst_185 {dimension_numbers = #tpu.dot_dimension_numbers<[1], [0], [0], [1], [0, 0, 1, 1], [], []>} : vector<16x32xf32>, vector<32x8xf32>, vector<16x8xf32> -> vector<16x8xf32>
    %388 = vector.shape_cast %387 : vector<16x8xf32> to vector<2x8x8xf32>
    %c1_186 = arith.constant 1 : index
    %c0_187 = arith.constant 0 : index
    %c0_188 = arith.constant 0 : index
    %c0_189 = arith.constant 0 : index
    %389 = vector.load %arg4[%c1_186, %c0_187, %c0_188, %c0_189] : memref<2x4x32x8xf32, #tpu.memory_space<vmem>>, vector<1x1x32x8xf32>
    %390 = vector.shape_cast %389 : vector<1x1x32x8xf32> to vector<32x8xf32>
    %cst_190 = arith.constant dense<0.000000e+00> : vector<16x8xf32>
    %391 = tpu.matmul %384, %390, %cst_190 {dimension_numbers = #tpu.dot_dimension_numbers<[1], [0], [0], [1], [0, 0, 1, 1], [], []>} : vector<16x32xf32>, vector<32x8xf32>, vector<16x8xf32> -> vector<16x8xf32>
    %392 = vector.shape_cast %391 : vector<16x8xf32> to vector<2x8x8xf32>
    %c1_191 = arith.constant 1 : index
    %c0_192 = arith.constant 0 : index
    %c0_193 = arith.constant 0 : index
    %c0_194 = arith.constant 0 : index
    %393 = vector.load %arg5[%c1_191, %c0_192, %c0_193, %c0_194] : memref<2x4x32x8xf32, #tpu.memory_space<vmem>>, vector<1x1x32x8xf32>
    %394 = vector.shape_cast %393 : vector<1x1x32x8xf32> to vector<32x8xf32>
    %cst_195 = arith.constant dense<0.000000e+00> : vector<16x8xf32>
    %395 = tpu.matmul %384, %394, %cst_195 {dimension_numbers = #tpu.dot_dimension_numbers<[1], [0], [0], [1], [0, 0, 1, 1], [], []>} : vector<16x32xf32>, vector<32x8xf32>, vector<16x8xf32> -> vector<16x8xf32>
    %396 = vector.shape_cast %395 : vector<16x8xf32> to vector<2x8x8xf32>
    "tpu.trace_start"() <{level = 10 : i32, message = "bqe,bke->bqk"}> : () -> ()
    %cst_196 = arith.constant dense<0.000000e+00> : vector<2x8x8xf32>
    %397 = tpu.matmul %388, %392, %cst_196 {dimension_numbers = #tpu.dot_dimension_numbers<[2], [2], [1], [1], [0, 0, 0, 1, 1, 1], [0], [0]>} : vector<2x8x8xf32>, vector<2x8x8xf32>, vector<2x8x8xf32> -> vector<2x8x8xf32>
    "tpu.trace_stop"() : () -> ()
    %cst_197 = arith.constant dense<0xFF800000> : vector<2x8xf32>
    %398 = vector.multi_reduction <maximumf>, %397, %cst_197 [2] : vector<2x8x8xf32> to vector<2x8xf32>
    %399 = vector.shape_cast %398 : vector<2x8xf32> to vector<2x8x1xf32>
    %400 = vector.broadcast %399 : vector<2x8x1xf32> to vector<2x8x8xf32>
    %401 = arith.subf %397, %400 : vector<2x8x8xf32>
    %402 = math.exp %401 : vector<2x8x8xf32>
    %cst_198 = arith.constant dense<0.000000e+00> : vector<2x8xf32>
    %403 = vector.multi_reduction <add>, %402, %cst_198 [2] : vector<2x8x8xf32> to vector<2x8xf32>
    %404 = vector.shape_cast %403 : vector<2x8xf32> to vector<2x8x1xf32>
    %405 = vector.broadcast %404 : vector<2x8x1xf32> to vector<2x8x8xf32>
    %406 = arith.divf %402, %405 : vector<2x8x8xf32>
    %c1_199 = arith.constant 1 : index
    %c1_200 = arith.constant 1 : index
    %c0_201 = arith.constant 0 : index
    %c0_202 = arith.constant 0 : index
    %407 = vector.load %arg3[%c1_199, %c1_200, %c0_201, %c0_202] : memref<2x4x32x8xf32, #tpu.memory_space<vmem>>, vector<1x1x32x8xf32>
    %408 = vector.shape_cast %407 : vector<1x1x32x8xf32> to vector<32x8xf32>
    %cst_203 = arith.constant dense<0.000000e+00> : vector<16x8xf32>
    %409 = tpu.matmul %384, %408, %cst_203 {dimension_numbers = #tpu.dot_dimension_numbers<[1], [0], [0], [1], [0, 0, 1, 1], [], []>} : vector<16x32xf32>, vector<32x8xf32>, vector<16x8xf32> -> vector<16x8xf32>
    %410 = vector.shape_cast %409 : vector<16x8xf32> to vector<2x8x8xf32>
    %c1_204 = arith.constant 1 : index
    %c1_205 = arith.constant 1 : index
    %c0_206 = arith.constant 0 : index
    %c0_207 = arith.constant 0 : index
    %411 = vector.load %arg4[%c1_204, %c1_205, %c0_206, %c0_207] : memref<2x4x32x8xf32, #tpu.memory_space<vmem>>, vector<1x1x32x8xf32>
    %412 = vector.shape_cast %411 : vector<1x1x32x8xf32> to vector<32x8xf32>
    %cst_208 = arith.constant dense<0.000000e+00> : vector<16x8xf32>
    %413 = tpu.matmul %384, %412, %cst_208 {dimension_numbers = #tpu.dot_dimension_numbers<[1], [0], [0], [1], [0, 0, 1, 1], [], []>} : vector<16x32xf32>, vector<32x8xf32>, vector<16x8xf32> -> vector<16x8xf32>
    %414 = vector.shape_cast %413 : vector<16x8xf32> to vector<2x8x8xf32>
    %c1_209 = arith.constant 1 : index
    %c1_210 = arith.constant 1 : index
    %c0_211 = arith.constant 0 : index
    %c0_212 = arith.constant 0 : index
    %415 = vector.load %arg5[%c1_209, %c1_210, %c0_211, %c0_212] : memref<2x4x32x8xf32, #tpu.memory_space<vmem>>, vector<1x1x32x8xf32>
    %416 = vector.shape_cast %415 : vector<1x1x32x8xf32> to vector<32x8xf32>
    %cst_213 = arith.constant dense<0.000000e+00> : vector<16x8xf32>
    %417 = tpu.matmul %384, %416, %cst_213 {dimension_numbers = #tpu.dot_dimension_numbers<[1], [0], [0], [1], [0, 0, 1, 1], [], []>} : vector<16x32xf32>, vector<32x8xf32>, vector<16x8xf32> -> vector<16x8xf32>
    %418 = vector.shape_cast %417 : vector<16x8xf32> to vector<2x8x8xf32>
    "tpu.trace_start"() <{level = 10 : i32, message = "bqe,bke->bqk"}> : () -> ()
    %cst_214 = arith.constant dense<0.000000e+00> : vector<2x8x8xf32>
    %419 = tpu.matmul %410, %414, %cst_214 {dimension_numbers = #tpu.dot_dimension_numbers<[2], [2], [1], [1], [0, 0, 0, 1, 1, 1], [0], [0]>} : vector<2x8x8xf32>, vector<2x8x8xf32>, vector<2x8x8xf32> -> vector<2x8x8xf32>
    "tpu.trace_stop"() : () -> ()
    %cst_215 = arith.constant dense<0xFF800000> : vector<2x8xf32>
    %420 = vector.multi_reduction <maximumf>, %419, %cst_215 [2] : vector<2x8x8xf32> to vector<2x8xf32>
    %421 = vector.shape_cast %420 : vector<2x8xf32> to vector<2x8x1xf32>
    %422 = vector.broadcast %421 : vector<2x8x1xf32> to vector<2x8x8xf32>
    %423 = arith.subf %419, %422 : vector<2x8x8xf32>
    %424 = math.exp %423 : vector<2x8x8xf32>
    %cst_216 = arith.constant dense<0.000000e+00> : vector<2x8xf32>
    %425 = vector.multi_reduction <add>, %424, %cst_216 [2] : vector<2x8x8xf32> to vector<2x8xf32>
    %426 = vector.shape_cast %425 : vector<2x8xf32> to vector<2x8x1xf32>
    %427 = vector.broadcast %426 : vector<2x8x1xf32> to vector<2x8x8xf32>
    %428 = arith.divf %424, %427 : vector<2x8x8xf32>
    %c1_217 = arith.constant 1 : index
    %c2_218 = arith.constant 2 : index
    %c0_219 = arith.constant 0 : index
    %c0_220 = arith.constant 0 : index
    %429 = vector.load %arg3[%c1_217, %c2_218, %c0_219, %c0_220] : memref<2x4x32x8xf32, #tpu.memory_space<vmem>>, vector<1x1x32x8xf32>
    %430 = vector.shape_cast %429 : vector<1x1x32x8xf32> to vector<32x8xf32>
    %cst_221 = arith.constant dense<0.000000e+00> : vector<16x8xf32>
    %431 = tpu.matmul %384, %430, %cst_221 {dimension_numbers = #tpu.dot_dimension_numbers<[1], [0], [0], [1], [0, 0, 1, 1], [], []>} : vector<16x32xf32>, vector<32x8xf32>, vector<16x8xf32> -> vector<16x8xf32>
    %432 = vector.shape_cast %431 : vector<16x8xf32> to vector<2x8x8xf32>
    %c1_222 = arith.constant 1 : index
    %c2_223 = arith.constant 2 : index
    %c0_224 = arith.constant 0 : index
    %c0_225 = arith.constant 0 : index
    %433 = vector.load %arg4[%c1_222, %c2_223, %c0_224, %c0_225] : memref<2x4x32x8xf32, #tpu.memory_space<vmem>>, vector<1x1x32x8xf32>
    %434 = vector.shape_cast %433 : vector<1x1x32x8xf32> to vector<32x8xf32>
    %cst_226 = arith.constant dense<0.000000e+00> : vector<16x8xf32>
    %435 = tpu.matmul %384, %434, %cst_226 {dimension_numbers = #tpu.dot_dimension_numbers<[1], [0], [0], [1], [0, 0, 1, 1], [], []>} : vector<16x32xf32>, vector<32x8xf32>, vector<16x8xf32> -> vector<16x8xf32>
    %436 = vector.shape_cast %435 : vector<16x8xf32> to vector<2x8x8xf32>
    %c1_227 = arith.constant 1 : index
    %c2_228 = arith.constant 2 : index
    %c0_229 = arith.constant 0 : index
    %c0_230 = arith.constant 0 : index
    %437 = vector.load %arg5[%c1_227, %c2_228, %c0_229, %c0_230] : memref<2x4x32x8xf32, #tpu.memory_space<vmem>>, vector<1x1x32x8xf32>
    %438 = vector.shape_cast %437 : vector<1x1x32x8xf32> to vector<32x8xf32>
    %cst_231 = arith.constant dense<0.000000e+00> : vector<16x8xf32>
    %439 = tpu.matmul %384, %438, %cst_231 {dimension_numbers = #tpu.dot_dimension_numbers<[1], [0], [0], [1], [0, 0, 1, 1], [], []>} : vector<16x32xf32>, vector<32x8xf32>, vector<16x8xf32> -> vector<16x8xf32>
    %440 = vector.shape_cast %439 : vector<16x8xf32> to vector<2x8x8xf32>
    "tpu.trace_start"() <{level = 10 : i32, message = "bqe,bke->bqk"}> : () -> ()
    %cst_232 = arith.constant dense<0.000000e+00> : vector<2x8x8xf32>
    %441 = tpu.matmul %432, %436, %cst_232 {dimension_numbers = #tpu.dot_dimension_numbers<[2], [2], [1], [1], [0, 0, 0, 1, 1, 1], [0], [0]>} : vector<2x8x8xf32>, vector<2x8x8xf32>, vector<2x8x8xf32> -> vector<2x8x8xf32>
    "tpu.trace_stop"() : () -> ()
    %cst_233 = arith.constant dense<0xFF800000> : vector<2x8xf32>
    %442 = vector.multi_reduction <maximumf>, %441, %cst_233 [2] : vector<2x8x8xf32> to vector<2x8xf32>
    %443 = vector.shape_cast %442 : vector<2x8xf32> to vector<2x8x1xf32>
    %444 = vector.broadcast %443 : vector<2x8x1xf32> to vector<2x8x8xf32>
    %445 = arith.subf %441, %444 : vector<2x8x8xf32>
    %446 = math.exp %445 : vector<2x8x8xf32>
    %cst_234 = arith.constant dense<0.000000e+00> : vector<2x8xf32>
    %447 = vector.multi_reduction <add>, %446, %cst_234 [2] : vector<2x8x8xf32> to vector<2x8xf32>
    %448 = vector.shape_cast %447 : vector<2x8xf32> to vector<2x8x1xf32>
    %449 = vector.broadcast %448 : vector<2x8x1xf32> to vector<2x8x8xf32>
    %450 = arith.divf %446, %449 : vector<2x8x8xf32>
    %c1_235 = arith.constant 1 : index
    %c3_236 = arith.constant 3 : index
    %c0_237 = arith.constant 0 : index
    %c0_238 = arith.constant 0 : index
    %451 = vector.load %arg3[%c1_235, %c3_236, %c0_237, %c0_238] : memref<2x4x32x8xf32, #tpu.memory_space<vmem>>, vector<1x1x32x8xf32>
    %452 = vector.shape_cast %451 : vector<1x1x32x8xf32> to vector<32x8xf32>
    %cst_239 = arith.constant dense<0.000000e+00> : vector<16x8xf32>
    %453 = tpu.matmul %384, %452, %cst_239 {dimension_numbers = #tpu.dot_dimension_numbers<[1], [0], [0], [1], [0, 0, 1, 1], [], []>} : vector<16x32xf32>, vector<32x8xf32>, vector<16x8xf32> -> vector<16x8xf32>
    %454 = vector.shape_cast %453 : vector<16x8xf32> to vector<2x8x8xf32>
    %c1_240 = arith.constant 1 : index
    %c3_241 = arith.constant 3 : index
    %c0_242 = arith.constant 0 : index
    %c0_243 = arith.constant 0 : index
    %455 = vector.load %arg4[%c1_240, %c3_241, %c0_242, %c0_243] : memref<2x4x32x8xf32, #tpu.memory_space<vmem>>, vector<1x1x32x8xf32>
    %456 = vector.shape_cast %455 : vector<1x1x32x8xf32> to vector<32x8xf32>
    %cst_244 = arith.constant dense<0.000000e+00> : vector<16x8xf32>
    %457 = tpu.matmul %384, %456, %cst_244 {dimension_numbers = #tpu.dot_dimension_numbers<[1], [0], [0], [1], [0, 0, 1, 1], [], []>} : vector<16x32xf32>, vector<32x8xf32>, vector<16x8xf32> -> vector<16x8xf32>
    %458 = vector.shape_cast %457 : vector<16x8xf32> to vector<2x8x8xf32>
    %c1_245 = arith.constant 1 : index
    %c3_246 = arith.constant 3 : index
    %c0_247 = arith.constant 0 : index
    %c0_248 = arith.constant 0 : index
    %459 = vector.load %arg5[%c1_245, %c3_246, %c0_247, %c0_248] : memref<2x4x32x8xf32, #tpu.memory_space<vmem>>, vector<1x1x32x8xf32>
    %460 = vector.shape_cast %459 : vector<1x1x32x8xf32> to vector<32x8xf32>
    %cst_249 = arith.constant dense<0.000000e+00> : vector<16x8xf32>
    %461 = tpu.matmul %384, %460, %cst_249 {dimension_numbers = #tpu.dot_dimension_numbers<[1], [0], [0], [1], [0, 0, 1, 1], [], []>} : vector<16x32xf32>, vector<32x8xf32>, vector<16x8xf32> -> vector<16x8xf32>
    %462 = vector.shape_cast %461 : vector<16x8xf32> to vector<2x8x8xf32>
    "tpu.trace_start"() <{level = 10 : i32, message = "bqe,bke->bqk"}> : () -> ()
    %cst_250 = arith.constant dense<0.000000e+00> : vector<2x8x8xf32>
    %463 = tpu.matmul %454, %458, %cst_250 {dimension_numbers = #tpu.dot_dimension_numbers<[2], [2], [1], [1], [0, 0, 0, 1, 1, 1], [0], [0]>} : vector<2x8x8xf32>, vector<2x8x8xf32>, vector<2x8x8xf32> -> vector<2x8x8xf32>
    "tpu.trace_stop"() : () -> ()
    %cst_251 = arith.constant dense<0xFF800000> : vector<2x8xf32>
    %464 = vector.multi_reduction <maximumf>, %463, %cst_251 [2] : vector<2x8x8xf32> to vector<2x8xf32>
    %465 = vector.shape_cast %464 : vector<2x8xf32> to vector<2x8x1xf32>
    %466 = vector.broadcast %465 : vector<2x8x1xf32> to vector<2x8x8xf32>
    %467 = arith.subf %463, %466 : vector<2x8x8xf32>
    %468 = math.exp %467 : vector<2x8x8xf32>
    %cst_252 = arith.constant dense<0.000000e+00> : vector<2x8xf32>
    %469 = vector.multi_reduction <add>, %468, %cst_252 [2] : vector<2x8x8xf32> to vector<2x8xf32>
    %470 = vector.shape_cast %469 : vector<2x8xf32> to vector<2x8x1xf32>
    %471 = vector.broadcast %470 : vector<2x8x1xf32> to vector<2x8x8xf32>
    %472 = arith.divf %468, %471 : vector<2x8x8xf32>
    %c4_253 = arith.constant 4 : index
    %473 = memref.load %arg15[%c4_253] : memref<8xf32, #tpu.memory_space<smem>>
    %c16 = arith.constant 16 : index
    %474 = memref.load %arg14[%c16] : memref<32xf32, #tpu.memory_space<smem>>
    %475 = vector.broadcast %474 : f32 to vector<2x8x8xf32>
    %476 = arith.mulf %475, %406 : vector<2x8x8xf32>
    %477 = vector.broadcast %473 : f32 to vector<2x8x8xf32>
    %478 = arith.addf %477, %476 : vector<2x8x8xf32>
    %c17 = arith.constant 17 : index
    %479 = memref.load %arg14[%c17] : memref<32xf32, #tpu.memory_space<smem>>
    %480 = vector.broadcast %479 : f32 to vector<2x8x8xf32>
    %481 = arith.mulf %480, %428 : vector<2x8x8xf32>
    %482 = arith.addf %478, %481 : vector<2x8x8xf32>
    %c18 = arith.constant 18 : index
    %483 = memref.load %arg14[%c18] : memref<32xf32, #tpu.memory_space<smem>>
    %484 = vector.broadcast %483 : f32 to vector<2x8x8xf32>
    %485 = arith.mulf %484, %450 : vector<2x8x8xf32>
    %486 = arith.addf %482, %485 : vector<2x8x8xf32>
    %c19 = arith.constant 19 : index
    %487 = memref.load %arg14[%c19] : memref<32xf32, #tpu.memory_space<smem>>
    %488 = vector.broadcast %487 : f32 to vector<2x8x8xf32>
    %489 = arith.mulf %488, %472 : vector<2x8x8xf32>
    %490 = arith.addf %486, %489 : vector<2x8x8xf32>
    %491 = vector.shape_cast %490 : vector<2x8x8xf32> to vector<1x2x8x8xf32>
    %cst_254 = arith.constant dense<0.000000e+00> : vector<1xf32>
    %492 = vector.multi_reduction <add>, %491, %cst_254 [1, 2, 3] : vector<1x2x8x8xf32> to vector<1xf32>
    %493 = vector.shape_cast %492 : vector<1xf32> to vector<1x1x1x1xf32>
    %494 = vector.extract %493[0, 0, 0, 0] : f32 from vector<1x1x1x1xf32>
    %cst_255 = arith.constant 1.280000e+02 : f32
    %495 = arith.divf %494, %cst_255 : f32
    %496 = vector.broadcast %495 : f32 to vector<2x8x8xf32>
    %497 = arith.subf %490, %496 : vector<2x8x8xf32>
    %498 = arith.mulf %497, %497 : vector<2x8x8xf32>
    %499 = vector.shape_cast %498 : vector<2x8x8xf32> to vector<1x2x8x8xf32>
    %cst_256 = arith.constant dense<0.000000e+00> : vector<1xf32>
    %500 = vector.multi_reduction <add>, %499, %cst_256 [1, 2, 3] : vector<1x2x8x8xf32> to vector<1xf32>
    %501 = vector.shape_cast %500 : vector<1xf32> to vector<1x1x1x1xf32>
    %502 = vector.extract %501[0, 0, 0, 0] : f32 from vector<1x1x1x1xf32>
    %cst_257 = arith.constant 1.280000e+02 : f32
    %503 = arith.divf %502, %cst_257 : f32
    %504 = vector.broadcast %495 : f32 to vector<2x8x8xf32>
    %505 = arith.subf %490, %504 : vector<2x8x8xf32>
    %cst_258 = arith.constant 9.99999974E-6 : f32
    %506 = arith.addf %503, %cst_258 : f32
    %507 = math.rsqrt %506 : f32
    %508 = vector.broadcast %507 : f32 to vector<2x8x8xf32>
    %509 = arith.mulf %505, %508 : vector<2x8x8xf32>
    %c4_259 = arith.constant 4 : index
    %510 = memref.load %arg16[%c4_259] : memref<8xf32, #tpu.memory_space<smem>>
    %511 = vector.broadcast %510 : f32 to vector<2x8x8xf32>
    %512 = arith.mulf %509, %511 : vector<2x8x8xf32>
    %c4_260 = arith.constant 4 : index
    %513 = memref.load %arg17[%c4_260] : memref<8xf32, #tpu.memory_space<smem>>
    %514 = vector.broadcast %513 : f32 to vector<2x8x8xf32>
    %515 = arith.addf %512, %514 : vector<2x8x8xf32>
    "tpu.trace_start"() <{level = 10 : i32, message = "bqk,bkd->bqd"}> : () -> ()
    %cst_261 = arith.constant dense<0.000000e+00> : vector<2x8x8xf32>
    %516 = tpu.matmul %515, %396, %cst_261 {dimension_numbers = #tpu.dot_dimension_numbers<[2], [1], [1], [2], [0, 0, 0, 1, 1, 2], [0], [0]>} : vector<2x8x8xf32>, vector<2x8x8xf32>, vector<2x8x8xf32> -> vector<2x8x8xf32>
    "tpu.trace_stop"() : () -> ()
    %517 = vector.shape_cast %516 : vector<2x8x8xf32> to vector<16x8xf32>
    %c1_262 = arith.constant 1 : index
    %c0_263 = arith.constant 0 : index
    %c0_264 = arith.constant 0 : index
    %c0_265 = arith.constant 0 : index
    %518 = vector.load %arg6[%c1_262, %c0_263, %c0_264, %c0_265] : memref<2x4x8x32xf32, #tpu.memory_space<vmem>>, vector<1x1x8x32xf32>
    %519 = vector.shape_cast %518 : vector<1x1x8x32xf32> to vector<8x32xf32>
    %cst_266 = arith.constant dense<0.000000e+00> : vector<16x32xf32>
    %520 = tpu.matmul %517, %519, %cst_266 {dimension_numbers = #tpu.dot_dimension_numbers<[1], [0], [0], [1], [0, 0, 1, 1], [], []>} : vector<16x8xf32>, vector<8x32xf32>, vector<16x32xf32> -> vector<16x32xf32>
    %c5_267 = arith.constant 5 : index
    %521 = memref.load %arg15[%c5_267] : memref<8xf32, #tpu.memory_space<smem>>
    %c20 = arith.constant 20 : index
    %522 = memref.load %arg14[%c20] : memref<32xf32, #tpu.memory_space<smem>>
    %523 = vector.broadcast %522 : f32 to vector<2x8x8xf32>
    %524 = arith.mulf %523, %406 : vector<2x8x8xf32>
    %525 = vector.broadcast %521 : f32 to vector<2x8x8xf32>
    %526 = arith.addf %525, %524 : vector<2x8x8xf32>
    %c21 = arith.constant 21 : index
    %527 = memref.load %arg14[%c21] : memref<32xf32, #tpu.memory_space<smem>>
    %528 = vector.broadcast %527 : f32 to vector<2x8x8xf32>
    %529 = arith.mulf %528, %428 : vector<2x8x8xf32>
    %530 = arith.addf %526, %529 : vector<2x8x8xf32>
    %c22 = arith.constant 22 : index
    %531 = memref.load %arg14[%c22] : memref<32xf32, #tpu.memory_space<smem>>
    %532 = vector.broadcast %531 : f32 to vector<2x8x8xf32>
    %533 = arith.mulf %532, %450 : vector<2x8x8xf32>
    %534 = arith.addf %530, %533 : vector<2x8x8xf32>
    %c23 = arith.constant 23 : index
    %535 = memref.load %arg14[%c23] : memref<32xf32, #tpu.memory_space<smem>>
    %536 = vector.broadcast %535 : f32 to vector<2x8x8xf32>
    %537 = arith.mulf %536, %472 : vector<2x8x8xf32>
    %538 = arith.addf %534, %537 : vector<2x8x8xf32>
    %539 = vector.shape_cast %538 : vector<2x8x8xf32> to vector<1x2x8x8xf32>
    %cst_268 = arith.constant dense<0.000000e+00> : vector<1xf32>
    %540 = vector.multi_reduction <add>, %539, %cst_268 [1, 2, 3] : vector<1x2x8x8xf32> to vector<1xf32>
    %541 = vector.shape_cast %540 : vector<1xf32> to vector<1x1x1x1xf32>
    %542 = vector.extract %541[0, 0, 0, 0] : f32 from vector<1x1x1x1xf32>
    %cst_269 = arith.constant 1.280000e+02 : f32
    %543 = arith.divf %542, %cst_269 : f32
    %544 = vector.broadcast %543 : f32 to vector<2x8x8xf32>
    %545 = arith.subf %538, %544 : vector<2x8x8xf32>
    %546 = arith.mulf %545, %545 : vector<2x8x8xf32>
    %547 = vector.shape_cast %546 : vector<2x8x8xf32> to vector<1x2x8x8xf32>
    %cst_270 = arith.constant dense<0.000000e+00> : vector<1xf32>
    %548 = vector.multi_reduction <add>, %547, %cst_270 [1, 2, 3] : vector<1x2x8x8xf32> to vector<1xf32>
    %549 = vector.shape_cast %548 : vector<1xf32> to vector<1x1x1x1xf32>
    %550 = vector.extract %549[0, 0, 0, 0] : f32 from vector<1x1x1x1xf32>
    %cst_271 = arith.constant 1.280000e+02 : f32
    %551 = arith.divf %550, %cst_271 : f32
    %552 = vector.broadcast %543 : f32 to vector<2x8x8xf32>
    %553 = arith.subf %538, %552 : vector<2x8x8xf32>
    %cst_272 = arith.constant 9.99999974E-6 : f32
    %554 = arith.addf %551, %cst_272 : f32
    %555 = math.rsqrt %554 : f32
    %556 = vector.broadcast %555 : f32 to vector<2x8x8xf32>
    %557 = arith.mulf %553, %556 : vector<2x8x8xf32>
    %c5_273 = arith.constant 5 : index
    %558 = memref.load %arg16[%c5_273] : memref<8xf32, #tpu.memory_space<smem>>
    %559 = vector.broadcast %558 : f32 to vector<2x8x8xf32>
    %560 = arith.mulf %557, %559 : vector<2x8x8xf32>
    %c5_274 = arith.constant 5 : index
    %561 = memref.load %arg17[%c5_274] : memref<8xf32, #tpu.memory_space<smem>>
    %562 = vector.broadcast %561 : f32 to vector<2x8x8xf32>
    %563 = arith.addf %560, %562 : vector<2x8x8xf32>
    "tpu.trace_start"() <{level = 10 : i32, message = "bqk,bkd->bqd"}> : () -> ()
    %cst_275 = arith.constant dense<0.000000e+00> : vector<2x8x8xf32>
    %564 = tpu.matmul %563, %418, %cst_275 {dimension_numbers = #tpu.dot_dimension_numbers<[2], [1], [1], [2], [0, 0, 0, 1, 1, 2], [0], [0]>} : vector<2x8x8xf32>, vector<2x8x8xf32>, vector<2x8x8xf32> -> vector<2x8x8xf32>
    "tpu.trace_stop"() : () -> ()
    %565 = vector.shape_cast %564 : vector<2x8x8xf32> to vector<16x8xf32>
    %c1_276 = arith.constant 1 : index
    %c1_277 = arith.constant 1 : index
    %c0_278 = arith.constant 0 : index
    %c0_279 = arith.constant 0 : index
    %566 = vector.load %arg6[%c1_276, %c1_277, %c0_278, %c0_279] : memref<2x4x8x32xf32, #tpu.memory_space<vmem>>, vector<1x1x8x32xf32>
    %567 = vector.shape_cast %566 : vector<1x1x8x32xf32> to vector<8x32xf32>
    %cst_280 = arith.constant dense<0.000000e+00> : vector<16x32xf32>
    %568 = tpu.matmul %565, %567, %cst_280 {dimension_numbers = #tpu.dot_dimension_numbers<[1], [0], [0], [1], [0, 0, 1, 1], [], []>} : vector<16x8xf32>, vector<8x32xf32>, vector<16x32xf32> -> vector<16x32xf32>
    %569 = arith.addf %520, %568 : vector<16x32xf32>
    %c6_281 = arith.constant 6 : index
    %570 = memref.load %arg15[%c6_281] : memref<8xf32, #tpu.memory_space<smem>>
    %c24 = arith.constant 24 : index
    %571 = memref.load %arg14[%c24] : memref<32xf32, #tpu.memory_space<smem>>
    %572 = vector.broadcast %571 : f32 to vector<2x8x8xf32>
    %573 = arith.mulf %572, %406 : vector<2x8x8xf32>
    %574 = vector.broadcast %570 : f32 to vector<2x8x8xf32>
    %575 = arith.addf %574, %573 : vector<2x8x8xf32>
    %c25 = arith.constant 25 : index
    %576 = memref.load %arg14[%c25] : memref<32xf32, #tpu.memory_space<smem>>
    %577 = vector.broadcast %576 : f32 to vector<2x8x8xf32>
    %578 = arith.mulf %577, %428 : vector<2x8x8xf32>
    %579 = arith.addf %575, %578 : vector<2x8x8xf32>
    %c26 = arith.constant 26 : index
    %580 = memref.load %arg14[%c26] : memref<32xf32, #tpu.memory_space<smem>>
    %581 = vector.broadcast %580 : f32 to vector<2x8x8xf32>
    %582 = arith.mulf %581, %450 : vector<2x8x8xf32>
    %583 = arith.addf %579, %582 : vector<2x8x8xf32>
    %c27 = arith.constant 27 : index
    %584 = memref.load %arg14[%c27] : memref<32xf32, #tpu.memory_space<smem>>
    %585 = vector.broadcast %584 : f32 to vector<2x8x8xf32>
    %586 = arith.mulf %585, %472 : vector<2x8x8xf32>
    %587 = arith.addf %583, %586 : vector<2x8x8xf32>
    %588 = vector.shape_cast %587 : vector<2x8x8xf32> to vector<1x2x8x8xf32>
    %cst_282 = arith.constant dense<0.000000e+00> : vector<1xf32>
    %589 = vector.multi_reduction <add>, %588, %cst_282 [1, 2, 3] : vector<1x2x8x8xf32> to vector<1xf32>
    %590 = vector.shape_cast %589 : vector<1xf32> to vector<1x1x1x1xf32>
    %591 = vector.extract %590[0, 0, 0, 0] : f32 from vector<1x1x1x1xf32>
    %cst_283 = arith.constant 1.280000e+02 : f32
    %592 = arith.divf %591, %cst_283 : f32
    %593 = vector.broadcast %592 : f32 to vector<2x8x8xf32>
    %594 = arith.subf %587, %593 : vector<2x8x8xf32>
    %595 = arith.mulf %594, %594 : vector<2x8x8xf32>
    %596 = vector.shape_cast %595 : vector<2x8x8xf32> to vector<1x2x8x8xf32>
    %cst_284 = arith.constant dense<0.000000e+00> : vector<1xf32>
    %597 = vector.multi_reduction <add>, %596, %cst_284 [1, 2, 3] : vector<1x2x8x8xf32> to vector<1xf32>
    %598 = vector.shape_cast %597 : vector<1xf32> to vector<1x1x1x1xf32>
    %599 = vector.extract %598[0, 0, 0, 0] : f32 from vector<1x1x1x1xf32>
    %cst_285 = arith.constant 1.280000e+02 : f32
    %600 = arith.divf %599, %cst_285 : f32
    %601 = vector.broadcast %592 : f32 to vector<2x8x8xf32>
    %602 = arith.subf %587, %601 : vector<2x8x8xf32>
    %cst_286 = arith.constant 9.99999974E-6 : f32
    %603 = arith.addf %600, %cst_286 : f32
    %604 = math.rsqrt %603 : f32
    %605 = vector.broadcast %604 : f32 to vector<2x8x8xf32>
    %606 = arith.mulf %602, %605 : vector<2x8x8xf32>
    %c6_287 = arith.constant 6 : index
    %607 = memref.load %arg16[%c6_287] : memref<8xf32, #tpu.memory_space<smem>>
    %608 = vector.broadcast %607 : f32 to vector<2x8x8xf32>
    %609 = arith.mulf %606, %608 : vector<2x8x8xf32>
    %c6_288 = arith.constant 6 : index
    %610 = memref.load %arg17[%c6_288] : memref<8xf32, #tpu.memory_space<smem>>
    %611 = vector.broadcast %610 : f32 to vector<2x8x8xf32>
    %612 = arith.addf %609, %611 : vector<2x8x8xf32>
    "tpu.trace_start"() <{level = 10 : i32, message = "bqk,bkd->bqd"}> : () -> ()
    %cst_289 = arith.constant dense<0.000000e+00> : vector<2x8x8xf32>
    %613 = tpu.matmul %612, %440, %cst_289 {dimension_numbers = #tpu.dot_dimension_numbers<[2], [1], [1], [2], [0, 0, 0, 1, 1, 2], [0], [0]>} : vector<2x8x8xf32>, vector<2x8x8xf32>, vector<2x8x8xf32> -> vector<2x8x8xf32>
    "tpu.trace_stop"() : () -> ()
    %614 = vector.shape_cast %613 : vector<2x8x8xf32> to vector<16x8xf32>
    %c1_290 = arith.constant 1 : index
    %c2_291 = arith.constant 2 : index
    %c0_292 = arith.constant 0 : index
    %c0_293 = arith.constant 0 : index
    %615 = vector.load %arg6[%c1_290, %c2_291, %c0_292, %c0_293] : memref<2x4x8x32xf32, #tpu.memory_space<vmem>>, vector<1x1x8x32xf32>
    %616 = vector.shape_cast %615 : vector<1x1x8x32xf32> to vector<8x32xf32>
    %cst_294 = arith.constant dense<0.000000e+00> : vector<16x32xf32>
    %617 = tpu.matmul %614, %616, %cst_294 {dimension_numbers = #tpu.dot_dimension_numbers<[1], [0], [0], [1], [0, 0, 1, 1], [], []>} : vector<16x8xf32>, vector<8x32xf32>, vector<16x32xf32> -> vector<16x32xf32>
    %618 = arith.addf %569, %617 : vector<16x32xf32>
    %c7_295 = arith.constant 7 : index
    %619 = memref.load %arg15[%c7_295] : memref<8xf32, #tpu.memory_space<smem>>
    %c28 = arith.constant 28 : index
    %620 = memref.load %arg14[%c28] : memref<32xf32, #tpu.memory_space<smem>>
    %621 = vector.broadcast %620 : f32 to vector<2x8x8xf32>
    %622 = arith.mulf %621, %406 : vector<2x8x8xf32>
    %623 = vector.broadcast %619 : f32 to vector<2x8x8xf32>
    %624 = arith.addf %623, %622 : vector<2x8x8xf32>
    %c29 = arith.constant 29 : index
    %625 = memref.load %arg14[%c29] : memref<32xf32, #tpu.memory_space<smem>>
    %626 = vector.broadcast %625 : f32 to vector<2x8x8xf32>
    %627 = arith.mulf %626, %428 : vector<2x8x8xf32>
    %628 = arith.addf %624, %627 : vector<2x8x8xf32>
    %c30 = arith.constant 30 : index
    %629 = memref.load %arg14[%c30] : memref<32xf32, #tpu.memory_space<smem>>
    %630 = vector.broadcast %629 : f32 to vector<2x8x8xf32>
    %631 = arith.mulf %630, %450 : vector<2x8x8xf32>
    %632 = arith.addf %628, %631 : vector<2x8x8xf32>
    %c31 = arith.constant 31 : index
    %633 = memref.load %arg14[%c31] : memref<32xf32, #tpu.memory_space<smem>>
    %634 = vector.broadcast %633 : f32 to vector<2x8x8xf32>
    %635 = arith.mulf %634, %472 : vector<2x8x8xf32>
    %636 = arith.addf %632, %635 : vector<2x8x8xf32>
    %637 = vector.shape_cast %636 : vector<2x8x8xf32> to vector<1x2x8x8xf32>
    %cst_296 = arith.constant dense<0.000000e+00> : vector<1xf32>
    %638 = vector.multi_reduction <add>, %637, %cst_296 [1, 2, 3] : vector<1x2x8x8xf32> to vector<1xf32>
    %639 = vector.shape_cast %638 : vector<1xf32> to vector<1x1x1x1xf32>
    %640 = vector.extract %639[0, 0, 0, 0] : f32 from vector<1x1x1x1xf32>
    %cst_297 = arith.constant 1.280000e+02 : f32
    %641 = arith.divf %640, %cst_297 : f32
    %642 = vector.broadcast %641 : f32 to vector<2x8x8xf32>
    %643 = arith.subf %636, %642 : vector<2x8x8xf32>
    %644 = arith.mulf %643, %643 : vector<2x8x8xf32>
    %645 = vector.shape_cast %644 : vector<2x8x8xf32> to vector<1x2x8x8xf32>
    %cst_298 = arith.constant dense<0.000000e+00> : vector<1xf32>
    %646 = vector.multi_reduction <add>, %645, %cst_298 [1, 2, 3] : vector<1x2x8x8xf32> to vector<1xf32>
    %647 = vector.shape_cast %646 : vector<1xf32> to vector<1x1x1x1xf32>
    %648 = vector.extract %647[0, 0, 0, 0] : f32 from vector<1x1x1x1xf32>
    %cst_299 = arith.constant 1.280000e+02 : f32
    %649 = arith.divf %648, %cst_299 : f32
    %650 = vector.broadcast %641 : f32 to vector<2x8x8xf32>
    %651 = arith.subf %636, %650 : vector<2x8x8xf32>
    %cst_300 = arith.constant 9.99999974E-6 : f32
    %652 = arith.addf %649, %cst_300 : f32
    %653 = math.rsqrt %652 : f32
    %654 = vector.broadcast %653 : f32 to vector<2x8x8xf32>
    %655 = arith.mulf %651, %654 : vector<2x8x8xf32>
    %c7_301 = arith.constant 7 : index
    %656 = memref.load %arg16[%c7_301] : memref<8xf32, #tpu.memory_space<smem>>
    %657 = vector.broadcast %656 : f32 to vector<2x8x8xf32>
    %658 = arith.mulf %655, %657 : vector<2x8x8xf32>
    %c7_302 = arith.constant 7 : index
    %659 = memref.load %arg17[%c7_302] : memref<8xf32, #tpu.memory_space<smem>>
    %660 = vector.broadcast %659 : f32 to vector<2x8x8xf32>
    %661 = arith.addf %658, %660 : vector<2x8x8xf32>
    "tpu.trace_start"() <{level = 10 : i32, message = "bqk,bkd->bqd"}> : () -> ()
    %cst_303 = arith.constant dense<0.000000e+00> : vector<2x8x8xf32>
    %662 = tpu.matmul %661, %462, %cst_303 {dimension_numbers = #tpu.dot_dimension_numbers<[2], [1], [1], [2], [0, 0, 0, 1, 1, 2], [0], [0]>} : vector<2x8x8xf32>, vector<2x8x8xf32>, vector<2x8x8xf32> -> vector<2x8x8xf32>
    "tpu.trace_stop"() : () -> ()
    %663 = vector.shape_cast %662 : vector<2x8x8xf32> to vector<16x8xf32>
    %c1_304 = arith.constant 1 : index
    %c3_305 = arith.constant 3 : index
    %c0_306 = arith.constant 0 : index
    %c0_307 = arith.constant 0 : index
    %664 = vector.load %arg6[%c1_304, %c3_305, %c0_306, %c0_307] : memref<2x4x8x32xf32, #tpu.memory_space<vmem>>, vector<1x1x8x32xf32>
    %665 = vector.shape_cast %664 : vector<1x1x8x32xf32> to vector<8x32xf32>
    %cst_308 = arith.constant dense<0.000000e+00> : vector<16x32xf32>
    %666 = tpu.matmul %663, %665, %cst_308 {dimension_numbers = #tpu.dot_dimension_numbers<[1], [0], [0], [1], [0, 0, 1, 1], [], []>} : vector<16x8xf32>, vector<8x32xf32>, vector<16x32xf32> -> vector<16x32xf32>
    %667 = arith.addf %618, %666 : vector<16x32xf32>
    %668 = arith.addf %358, %667 : vector<16x32xf32>
    %c1_309 = arith.constant 1 : index
    %c0_310 = arith.constant 0 : index
    %c0_311 = arith.constant 0 : index
    %669 = vector.load %arg7[%c1_309, %c0_310, %c0_311] : memref<2x1x32xf32, #tpu.memory_space<vmem>>, vector<1x1x32xf32>
    %670 = vector.shape_cast %669 : vector<1x1x32xf32> to vector<1x32xf32>
    %671 = vector.broadcast %670 : vector<1x32xf32> to vector<16x32xf32>
    %672 = arith.addf %668, %671 : vector<16x32xf32>
    %c1_312 = arith.constant 1 : index
    %c0_313 = arith.constant 0 : index
    %c0_314 = arith.constant 0 : index
    %673 = vector.load %arg8[%c1_312, %c0_313, %c0_314] : memref<2x1x32xf32, #tpu.memory_space<vmem>>, vector<1x1x32xf32>
    %674 = vector.shape_cast %673 : vector<1x1x32xf32> to vector<1x32xf32>
    %c1_315 = arith.constant 1 : index
    %c0_316 = arith.constant 0 : index
    %c0_317 = arith.constant 0 : index
    %675 = vector.load %arg9[%c1_315, %c0_316, %c0_317] : memref<2x1x32xf32, #tpu.memory_space<vmem>>, vector<1x1x32xf32>
    %676 = vector.shape_cast %675 : vector<1x1x32xf32> to vector<1x32xf32>
    %cst_318 = arith.constant dense<0.000000e+00> : vector<16xf32>
    %677 = vector.multi_reduction <add>, %672, %cst_318 [1] : vector<16x32xf32> to vector<16xf32>
    %678 = vector.shape_cast %677 : vector<16xf32> to vector<16x1xf32>
    %cst_319 = arith.constant 3.200000e+01 : f32
    %679 = vector.broadcast %cst_319 : f32 to vector<16x1xf32>
    %680 = arith.divf %678, %679 : vector<16x1xf32>
    %681 = vector.broadcast %680 : vector<16x1xf32> to vector<16x32xf32>
    %682 = arith.subf %672, %681 : vector<16x32xf32>
    %683 = arith.mulf %682, %682 : vector<16x32xf32>
    %cst_320 = arith.constant dense<0.000000e+00> : vector<16xf32>
    %684 = vector.multi_reduction <add>, %683, %cst_320 [1] : vector<16x32xf32> to vector<16xf32>
    %685 = vector.shape_cast %684 : vector<16xf32> to vector<16x1xf32>
    %cst_321 = arith.constant 3.200000e+01 : f32
    %686 = vector.broadcast %cst_321 : f32 to vector<16x1xf32>
    %687 = arith.divf %685, %686 : vector<16x1xf32>
    %688 = vector.broadcast %680 : vector<16x1xf32> to vector<16x32xf32>
    %689 = arith.subf %672, %688 : vector<16x32xf32>
    %cst_322 = arith.constant 9.99999974E-6 : f32
    %690 = vector.broadcast %cst_322 : f32 to vector<16x1xf32>
    %691 = arith.addf %687, %690 : vector<16x1xf32>
    %692 = math.rsqrt %691 : vector<16x1xf32>
    %693 = vector.broadcast %692 : vector<16x1xf32> to vector<16x32xf32>
    %694 = arith.mulf %689, %693 : vector<16x32xf32>
    %695 = vector.broadcast %674 : vector<1x32xf32> to vector<16x32xf32>
    %696 = arith.mulf %694, %695 : vector<16x32xf32>
    %697 = vector.broadcast %676 : vector<1x32xf32> to vector<16x32xf32>
    %698 = arith.addf %696, %697 : vector<16x32xf32>
    %c1_323 = arith.constant 1 : index
    %c0_324 = arith.constant 0 : index
    %c0_325 = arith.constant 0 : index
    %699 = vector.load %arg10[%c1_323, %c0_324, %c0_325] : memref<2x32x64xf32, #tpu.memory_space<vmem>>, vector<1x32x64xf32>
    %700 = vector.shape_cast %699 : vector<1x32x64xf32> to vector<32x64xf32>
    %cst_326 = arith.constant dense<0.000000e+00> : vector<16x64xf32>
    %701 = tpu.matmul %698, %700, %cst_326 {dimension_numbers = #tpu.dot_dimension_numbers<[1], [0], [0], [1], [0, 0, 1, 1], [], []>} : vector<16x32xf32>, vector<32x64xf32>, vector<16x64xf32> -> vector<16x64xf32>
    %c1_327 = arith.constant 1 : index
    %c0_328 = arith.constant 0 : index
    %c0_329 = arith.constant 0 : index
    %702 = vector.load %arg11[%c1_327, %c0_328, %c0_329] : memref<2x1x64xf32, #tpu.memory_space<vmem>>, vector<1x1x64xf32>
    %703 = vector.shape_cast %702 : vector<1x1x64xf32> to vector<1x64xf32>
    %704 = vector.broadcast %703 : vector<1x64xf32> to vector<16x64xf32>
    %705 = arith.addf %701, %704 : vector<16x64xf32>
    %cst_330 = arith.constant 0.000000e+00 : f32
    %706 = vector.broadcast %cst_330 : f32 to vector<16x64xf32>
    %707 = arith.maximumf %705, %706 : vector<16x64xf32>
    %c1_331 = arith.constant 1 : index
    %c0_332 = arith.constant 0 : index
    %c0_333 = arith.constant 0 : index
    %708 = vector.load %arg12[%c1_331, %c0_332, %c0_333] : memref<2x64x32xf32, #tpu.memory_space<vmem>>, vector<1x64x32xf32>
    %709 = vector.shape_cast %708 : vector<1x64x32xf32> to vector<64x32xf32>
    %cst_334 = arith.constant dense<0.000000e+00> : vector<16x32xf32>
    %710 = tpu.matmul %707, %709, %cst_334 {dimension_numbers = #tpu.dot_dimension_numbers<[1], [0], [0], [1], [0, 0, 1, 1], [], []>} : vector<16x64xf32>, vector<64x32xf32>, vector<16x32xf32> -> vector<16x32xf32>
    %711 = arith.addf %672, %710 : vector<16x32xf32>
    %c1_335 = arith.constant 1 : index
    %c0_336 = arith.constant 0 : index
    %c0_337 = arith.constant 0 : index
    %712 = vector.load %arg13[%c1_335, %c0_336, %c0_337] : memref<2x1x32xf32, #tpu.memory_space<vmem>>, vector<1x1x32xf32>
    %713 = vector.shape_cast %712 : vector<1x1x32xf32> to vector<1x32xf32>
    %714 = vector.broadcast %713 : vector<1x32xf32> to vector<16x32xf32>
    %715 = arith.addf %711, %714 : vector<16x32xf32>
    %716 = vector.shape_cast %715 : vector<16x32xf32> to vector<2x8x32xf32>
    %c0_338 = arith.constant 0 : index
    %c0_339 = arith.constant 0 : index
    %c0_340 = arith.constant 0 : index
    %717 = vector.load %arg18[%c0_338, %c0_339, %c0_340] : memref<2x8x32xf32, #tpu.memory_space<vmem>>, vector<2x8x32xf32>
    tpu.vector_store %arg18[%c0_338, %c0_339, %c0_340], %716 {strides = array<i32>} : memref<2x8x32xf32, #tpu.memory_space<vmem>>, vector<2x8x32xf32>,
    return
  }
}

</mosaic_0001>

<llo_original>
// kernel: tpu_custom_call.1
$region0: #{tpu_custom_call.1}
  #allocation0 [shape = 'u32[]', space=smem, size = 0x4, offset = 0x4, fixed_abs, tag = 'smem constant byte address 0x4 - core index']
  #allocation1 [shape = 'u32[144,128]{1,0:T(1,128)}', space=vmem, size = 0x12000, scoped, tag = 'internal scratch']
  %s0 = inlined_call_operand.hbm [shape: f32[2,8,32], index: 0, kind: input, shape index: {}, may-alias: {0,18}]
  %s1 = inlined_call_operand.vmem [shape: f32[2,1,32], index: 1, kind: input, shape index: {}]
  %s2 = inlined_call_operand.vmem [shape: f32[2,1,32], index: 2, kind: input, shape index: {}]
  %s3 = inlined_call_operand.vmem [shape: f32[2,4,32,8], index: 3, kind: input, shape index: {}]
  %s4 = inlined_call_operand.vmem [shape: f32[2,4,32,8], index: 4, kind: input, shape index: {}]
  %s5 = inlined_call_operand.vmem [shape: f32[2,4,32,8], index: 5, kind: input, shape index: {}]
  %s6 = inlined_call_operand.vmem [shape: f32[2,4,8,32], index: 6, kind: input, shape index: {}]
  %s7 = inlined_call_operand.vmem [shape: f32[2,1,32], index: 7, kind: input, shape index: {}]
  %s8 = inlined_call_operand.vmem [shape: f32[2,1,32], index: 8, kind: input, shape index: {}]
  %s9 = inlined_call_operand.vmem [shape: f32[2,1,32], index: 9, kind: input, shape index: {}]
  %s10 = inlined_call_operand.vmem [shape: f32[2,32,64], index: 10, kind: input, shape index: {}]
  %s11 = inlined_call_operand.vmem [shape: f32[2,1,64], index: 11, kind: input, shape index: {}]
  %s12 = inlined_call_operand.vmem [shape: f32[2,64,32], index: 12, kind: input, shape index: {}]
  %s13 = inlined_call_operand.vmem [shape: f32[2,1,32], index: 13, kind: input, shape index: {}]
  %s14 = inlined_call_operand.vmem [shape: f32[32], index: 14, kind: input, shape index: {}]
  %s15 = inlined_call_operand.vmem [shape: f32[8], index: 15, kind: input, shape index: {}]
  %s16 = inlined_call_operand.vmem [shape: f32[8], index: 16, kind: input, shape index: {}]
  %s17 = inlined_call_operand.vmem [shape: f32[8], index: 17, kind: input, shape index: {}]
  %s18 = inlined_call_operand.hbm [shape: f32[2,8,32], index: 18, kind: output, shape index: {}, may-alias: {0,18}]
  %s19 = sld [smem:[#allocation0]]
  $region102: #{tpu_custom_call.1} parent=0
    _
  %s21 = ssub.s32 1, %s19
  %s22 = scalar_select 0, %s21, %s19
  $region1: #{tpu_custom_call.1} parent=0
    #allocation2 [shape = 'u8[8192]{0}', space=vmem, size = 0x2000, scoped, tag = 'input window, operand 0, single buffered']
    #allocation3 [shape = 's32[1]{0}', space=sflag, size = 0x4, scoped, tag = 'scoped memory for tpu_custom_call.1']
    #allocation4 [shape = 's32[1]{0}', space=sflag, size = 0x4, scoped, tag = 'scoped memory for tpu_custom_call.1']
    #allocation5 [shape = 's32[1]{0}', space=sflag, size = 0x4, scoped, tag = 'scoped memory for tpu_custom_call.1']
    #allocation6 [shape = 'u8[512]{0}', space=smem, size = 0x200, scoped, tag = 'input window, operand 14, single buffered']
    #allocation7 [shape = 'u8[512]{0}', space=smem, size = 0x200, scoped, tag = 'input window, operand 15, single buffered']
    #allocation8 [shape = 's32[1]{0}', space=sflag, size = 0x4, scoped, tag = 'scoped memory for tpu_custom_call.1']
    #allocation9 [shape = 'u8[512]{0}', space=smem, size = 0x200, scoped, tag = 'input window, operand 16, single buffered']
    #allocation10 [shape = 'u8[512]{0}', space=smem, size = 0x200, scoped, tag = 'input window, operand 17, single buffered']
    #allocation11 [shape = 's32[1]{0}', space=sflag, size = 0x4, scoped, tag = 'scoped memory for tpu_custom_call.1']
    #allocation12 [shape = 'u8[8192]{0}', space=vmem, size = 0x2000, scoped, tag = 'output window, operand 0, single buffered']
    %23 = vsyncpa [#allocation3], 0
    %24 = vsyncpa [#allocation5], 0
    %25 = vsyncpa [#allocation8], 0
    %26 = vsyncpa [#allocation11], 0
    %27 = vsyncpa [#allocation4], 0
    // Predicated region
    $region2: #{tpu_custom_call.1} parent=1 // pred_check
      _
    $region3: #{tpu_custom_call.1} parent=1 // pred_check_branch
      %29 = sbr.rel (0) target = $region5
    $region4: #{tpu_custom_call.1} parent=1 // pred_region
      %s31 = ssub.s32 256, 256
      %32 = vsyncadd [#allocation3], %s31
      %s33 = sshll.u32 [#allocation2], 4
      %s34 = int_to_ptr.vmem [resolvable:$true] %s33
      %39 = dma.hbm_to_vmem [thread:$0]  %s0, 256, %s34, [#allocation3], 128, 128, 8
    $region5: #{tpu_custom_call.1} parent=1 // pred_fallthru
      _
    // Predicated region
    $region6: #{tpu_custom_call.1} parent=1 // pred_check
      _
    $region7: #{tpu_custom_call.1} parent=1 // pred_check_branch
      %41 = sbr.rel (0) target = $region9
    $region8: #{tpu_custom_call.1} parent=1 // pred_region
      _
    $region9: #{tpu_custom_call.1} parent=1 // pred_fallthru
      _
    // Predicated region
    $region10: #{tpu_custom_call.1} parent=1 // pred_check
      _
    $region11: #{tpu_custom_call.1} parent=1 // pred_check_branch
      %43 = sbr.rel (0) target = $region13
    $region12: #{tpu_custom_call.1} parent=1 // pred_region
      _
    $region13: #{tpu_custom_call.1} parent=1 // pred_fallthru
      _
    // Predicated region
    $region14: #{tpu_custom_call.1} parent=1 // pred_check
      _
    $region15: #{tpu_custom_call.1} parent=1 // pred_check_branch
      %45 = sbr.rel (0) target = $region17
    $region16: #{tpu_custom_call.1} parent=1 // pred_region
      _
    $region17: #{tpu_custom_call.1} parent=1 // pred_fallthru
      _
    // Predicated region
    $region18: #{tpu_custom_call.1} parent=1 // pred_check
      _
    $region19: #{tpu_custom_call.1} parent=1 // pred_check_branch
      %47 = sbr.rel (0) target = $region21
    $region20: #{tpu_custom_call.1} parent=1 // pred_region
      _
    $region21: #{tpu_custom_call.1} parent=1 // pred_fallthru
      _
    // Predicated region
    $region22: #{tpu_custom_call.1} parent=1 // pred_check
      _
    $region23: #{tpu_custom_call.1} parent=1 // pred_check_branch
      %49 = sbr.rel (0) target = $region25
    $region24: #{tpu_custom_call.1} parent=1 // pred_region
      _
    $region25: #{tpu_custom_call.1} parent=1 // pred_fallthru
      _
    // Predicated region
    $region26: #{tpu_custom_call.1} parent=1 // pred_check
      _
    $region27: #{tpu_custom_call.1} parent=1 // pred_check_branch
      %51 = sbr.rel (0) target = $region29
    $region28: #{tpu_custom_call.1} parent=1 // pred_region
      _
    $region29: #{tpu_custom_call.1} parent=1 // pred_fallthru
      _
    // Predicated region
    $region30: #{tpu_custom_call.1} parent=1 // pred_check
      _
    $region31: #{tpu_custom_call.1} parent=1 // pred_check_branch
      %53 = sbr.rel (0) target = $region33
    $region32: #{tpu_custom_call.1} parent=1 // pred_region
      _
    $region33: #{tpu_custom_call.1} parent=1 // pred_fallthru
      _
    // Predicated region
    $region34: #{tpu_custom_call.1} parent=1 // pred_check
      _
    $region35: #{tpu_custom_call.1} parent=1 // pred_check_branch
      %55 = sbr.rel (0) target = $region37
    $region36: #{tpu_custom_call.1} parent=1 // pred_region
      _
    $region37: #{tpu_custom_call.1} parent=1 // pred_fallthru
      _
    // Predicated region
    $region38: #{tpu_custom_call.1} parent=1 // pred_check
      _
    $region39: #{tpu_custom_call.1} parent=1 // pred_check_branch
      %57 = sbr.rel (0) target = $region41
    $region40: #{tpu_custom_call.1} parent=1 // pred_region
      _
    $region41: #{tpu_custom_call.1} parent=1 // pred_fallthru
      _
    // Predicated region
    $region42: #{tpu_custom_call.1} parent=1 // pred_check
      _
    $region43: #{tpu_custom_call.1} parent=1 // pred_check_branch
      %59 = sbr.rel (0) target = $region45
    $region44: #{tpu_custom_call.1} parent=1 // pred_region
      _
    $region45: #{tpu_custom_call.1} parent=1 // pred_fallthru
      _
    // Predicated region
    $region46: #{tpu_custom_call.1} parent=1 // pred_check
      _
    $region47: #{tpu_custom_call.1} parent=1 // pred_check_branch
      %61 = sbr.rel (0) target = $region49
    $region48: #{tpu_custom_call.1} parent=1 // pred_region
      _
    $region49: #{tpu_custom_call.1} parent=1 // pred_fallthru
      _
    // Predicated region
    $region50: #{tpu_custom_call.1} parent=1 // pred_check
      _
    $region51: #{tpu_custom_call.1} parent=1 // pred_check_branch
      %63 = sbr.rel (0) target = $region53
    $region52: #{tpu_custom_call.1} parent=1 // pred_region
      _
    $region53: #{tpu_custom_call.1} parent=1 // pred_fallthru
      _
    // Predicated region
    $region54: #{tpu_custom_call.1} parent=1 // pred_check
      _
    $region55: #{tpu_custom_call.1} parent=1 // pred_check_branch
      %65 = sbr.rel (0) target = $region57
    $region56: #{tpu_custom_call.1} parent=1 // pred_region
      _
    $region57: #{tpu_custom_call.1} parent=1 // pred_fallthru
      _
    // Predicated region
    $region58: #{tpu_custom_call.1} parent=1 // pred_check
      _
    $region59: #{tpu_custom_call.1} parent=1 // pred_check_branch
      %67 = sbr.rel (0) target = $region61
    $region60: #{tpu_custom_call.1} parent=1 // pred_region
      %s69 = ssub.s32 16, 16
      %70 = vsyncadd [#allocation5], %s69
      %s72 = sshll.u32 %s14, 4
      %s73 = int_to_ptr.vmem [resolvable:$true] %s72
      %75 = dma.vmem_to_smem %s73, 16, [#allocation6], [#allocation5]
    $region61: #{tpu_custom_call.1} parent=1 // pred_fallthru
      _
    // Predicated region
    $region62: #{tpu_custom_call.1} parent=1 // pred_check
      _
    $region63: #{tpu_custom_call.1} parent=1 // pred_check_branch
      %77 = sbr.rel (0) target = $region65
    $region64: #{tpu_custom_call.1} parent=1 // pred_region
      %s79 = ssub.s32 16, 16
      %80 = vsyncadd [#allocation8], %s79
      %s82 = sshll.u32 %s15, 4
      %s83 = int_to_ptr.vmem [resolvable:$true] %s82
      %85 = dma.vmem_to_smem %s83, 16, [#allocation7], [#allocation8]
    $region65: #{tpu_custom_call.1} parent=1 // pred_fallthru
      _
    // Predicated region
    $region66: #{tpu_custom_call.1} parent=1 // pred_check
      _
    $region67: #{tpu_custom_call.1} parent=1 // pred_check_branch
      %87 = sbr.rel (0) target = $region69
    $region68: #{tpu_custom_call.1} parent=1 // pred_region
      %s89 = ssub.s32 16, 16
      %90 = vsyncadd [#allocation8], %s89
      %s92 = sshll.u32 %s16, 4
      %s93 = int_to_ptr.vmem [resolvable:$true] %s92
      %95 = dma.vmem_to_smem %s93, 16, [#allocation9], [#allocation8]
    $region69: #{tpu_custom_call.1} parent=1 // pred_fallthru
      _
    // Predicated region
    $region70: #{tpu_custom_call.1} parent=1 // pred_check
      _
    $region71: #{tpu_custom_call.1} parent=1 // pred_check_branch
      %97 = sbr.rel (0) target = $region73
    $region72: #{tpu_custom_call.1} parent=1 // pred_region
      %s99 = ssub.s32 16, 16
      %100 = vsyncadd [#allocation11], %s99
      %s102 = sshll.u32 %s17, 4
      %s103 = int_to_ptr.vmem [resolvable:$true] %s102
      %105 = dma.vmem_to_smem %s103, 16, [#allocation10], [#allocation11]
    $region73: #{tpu_custom_call.1} parent=1 // pred_fallthru
      _
    // Predicated region
    $region74: #{tpu_custom_call.1} parent=1 // pred_check
      _
    $region75: #{tpu_custom_call.1} parent=1 // pred_check_branch
      %107 = sbr.rel (0) target = $region77
    $region76: #{tpu_custom_call.1} parent=1 // pred_region
      %108 = dma.done [#allocation3], 256
    $region77: #{tpu_custom_call.1} parent=1 // pred_fallthru
      _
    // Predicated region
    $region78: #{tpu_custom_call.1} parent=1 // pred_check
      _
    $region79: #{tpu_custom_call.1} parent=1 // pred_check_branch
      %110 = sbr.rel (0) target = $region81
    $region80: #{tpu_custom_call.1} parent=1 // pred_region
      %111 = dma.done [#allocation5], 16
    $region81: #{tpu_custom_call.1} parent=1 // pred_fallthru
      _
    // Predicated region
    $region82: #{tpu_custom_call.1} parent=1 // pred_check
      _
    $region83: #{tpu_custom_call.1} parent=1 // pred_check_branch
      %113 = sbr.rel (0) target = $region85
    $region84: #{tpu_custom_call.1} parent=1 // pred_region
      %114 = dma.done [#allocation8], 16
    $region85: #{tpu_custom_call.1} parent=1 // pred_fallthru
      _
    // Predicated region
    $region86: #{tpu_custom_call.1} parent=1 // pred_check
      _
    $region87: #{tpu_custom_call.1} parent=1 // pred_check_branch
      %116 = sbr.rel (0) target = $region89
    $region88: #{tpu_custom_call.1} parent=1 // pred_region
      %117 = dma.done [#allocation8], 16
    $region89: #{tpu_custom_call.1} parent=1 // pred_fallthru
      _
    // Predicated region
    $region90: #{tpu_custom_call.1} parent=1 // pred_check
      _
    $region91: #{tpu_custom_call.1} parent=1 // pred_check_branch
      %119 = sbr.rel (0) target = $region93
    $region92: #{tpu_custom_call.1} parent=1 // pred_region
      %120 = dma.done [#allocation11], 16
    $region93: #{tpu_custom_call.1} parent=1 // pred_fallthru
      _
    %121 = sfence
    %v122 = vld [vmem:[#allocation2] sm:$0xff]
    %v123 = vld [vmem:[#allocation2 + $0x8] sm:$0xff]
    %v124 = vld [vmem:[%s1] sm:$0x1]
    %v125 = vld [vmem:[%s2] sm:$0x1]
    %vm126 = vcmask 261120
    %v127 = vsel %vm126, %v122, 0.0
    %128 = vadd.xlane.f32.xlu0 %v127
    %v129 = vpop.xlane.xlu0 %128
    %v130 = vsel %vm126, %v123, 0.0
    %131 = vadd.xlane.f32.xlu0 %v130
    %v132 = vpop.xlane.xlu0 %131
    %v133 = vrcp.pop 32.0
    %v134 = vmul.f32 %v129, %v133
    %v135 = vmul.f32 %v132, %v133
    %v136 = vsub.f32 %v122, %v134
    %v137 = vsub.f32 %v123, %v135
    %v138 = vmul.f32 %v136, %v136
    %v139 = vmul.f32 %v137, %v137
    %v140 = vsel %vm126, %v138, 0.0
    %141 = vadd.xlane.f32.xlu0 %v140
    %v142 = vpop.xlane.xlu0 %141
    %v143 = vsel %vm126, %v139, 0.0
    %144 = vadd.xlane.f32.xlu0 %v143
    %v145 = vpop.xlane.xlu0 %144
    %v146 = vmul.f32 %v142, %v133
    %v147 = vmul.f32 %v145, %v133
    %v148 = vadd.f32 %v146, 1e-05
    %v149 = vadd.f32 %v147, 1e-05
    %v150 = vrsqrt.pop %v148
    %v151 = vrsqrt.pop %v149
    %v152 = vmul.f32 %v136, %v150
    %v153 = vmul.f32 %v137, %v151
    %v155 = vlaneseq
    %v156 = vshrl.u32 %v155, 7
    %v157 = vsub.s32 0, %v156
    %v158 = vrot.slane %v124, %v157
    %v160 = vmul.f32 %v152, %v158
    %v161 = vmul.f32 %v153, %v158
    %v163 = vlaneseq
    %v164 = vshrl.u32 %v163, 7
    %v165 = vsub.s32 0, %v164
    %v166 = vrot.slane %v125, %v165
    %v168 = vadd.f32 %v160, %v166
    %v169 = vadd.f32 %v161, %v166
    %v170 = vld [vmem:[%s3] sm:$0xff]
    %v171 = vld [vmem:[%s3 + $0x8] sm:$0xff]
    %v172 = vld [vmem:[%s3 + $0x10] sm:$0xff]
    %v173 = vld [vmem:[%s3 + $0x18] sm:$0xff]
    %v175 = vsel %vm126, %v168, 0
    %v178 = vsel %vm126, %v169, 0
    %180 = vmatprep.subr.mxu0 0.0
    %181 = vmatpush1.msra.mxu0 %v170
    %182 = vmatprep.subr.mxu0 0.0
    %183 = vmatpush1.msra.mxu0 %v171
    %184 = vmatprep.subr.mxu0 0.0
    %185 = vmatpush1.msra.mxu0 %v172
    %186 = vmatprep.subr.mxu0 0.0
    %187 = vmatpush1.msra.mxu0 %v173
    %188 = vmatprep.subr.mxu0 0.0
    %189 = vmatpush1.msra.mxu0 0.0
    %190 = vmatprep.subr.mxu0 0.0
    %191 = vmatpush1.msra.mxu0 0.0
    %192 = vmatprep.subr.mxu0 0.0
    %193 = vmatpush1.msra.mxu0 0.0
    %194 = vmatprep.subr.mxu0 0.0
    %195 = vmatpush1.msra.mxu0 0.0
    %196 = vmatprep.subr.mxu0 0.0
    %197 = vmatpush1.msra.mxu0 0.0
    %198 = vmatprep.subr.mxu0 0.0
    %199 = vmatpush1.msra.mxu0 0.0
    %200 = vmatprep.subr.mxu0 0.0
    %201 = vmatpush1.msra.mxu0 0.0
    %202 = vmatprep.subr.mxu0 0.0
    %203 = vmatpush1.msra.mxu0 0.0
    %204 = vmatprep.subr.mxu0 0.0
    %205 = vmatpush1.msra.mxu0 0.0
    %206 = vmatprep.subr.mxu0 0.0
    %207 = vmatpush1.msra.mxu0 0.0
    %208 = vmatprep.subr.mxu0 0.0
    %209 = vmatpush1.msra.mxu0 0.0
    %210 = vmatprep.subr.mxu0 0.0
    %211 = vmatpush1.msra.mxu0 0.0
    %212 = vmatprep.subr.mxu0 0.0
    %213 = vmatpush1.msra.mxu0 0.0
    %214 = vmatprep.subr.mxu0 0.0
    %215 = vmatpush1.msra.mxu0 0.0
    %216 = vmatprep.subr.mxu0 0.0
    %217 = vmatpush1.msra.mxu0 0.0
    %218 = vmatprep.subr.mxu0 0.0
    %219 = vmatpush1.msra.mxu0 0.0
    %220 = vmatprep.subr.mxu0 0.0
    %221 = vmatpush1.msra.mxu0 0.0
    %222 = vmatprep.subr.mxu0 0.0
    %223 = vmatpush1.msra.mxu0 0.0
    %224 = vmatprep.subr.mxu0 0.0
    %225 = vmatpush1.msra.mxu0 0.0
    %226 = vmatprep.subr.mxu0 0.0
    %227 = vmatpush1.msra.mxu0 0.0
    %228 = vmatprep.subr.mxu0 0.0
    %229 = vmatpush1.msra.mxu0 0.0
    %230 = vmatprep.subr.mxu0 0.0
    %231 = vmatpush1.msra.mxu0 0.0
    %232 = vmatprep.subr.mxu0 0.0
    %233 = vmatpush1.msra.mxu0 0.0
    %234 = vmatprep.subr.mxu0 0.0
    %235 = vmatpush1.msra.mxu0 0.0
    %236 = vmatprep.subr.mxu0 0.0
    %237 = vmatpush1.msra.mxu0 0.0
    %238 = vmatprep.subr.mxu0 0.0
    %239 = vmatpush1.msra.mxu0 0.0
    %240 = vmatprep.subr.mxu0 0.0
    %241 = vmatpush1.msra.mxu0 0.0
    %242 = vmatprep.subr.mxu0 0.0
    %243 = vmatpush1.msra.mxu0 0.0
    %244 = vmatprep.mubr.f32.mxu0 0.0
    %245 = vmatmul.mubr.f32.gmra.mrb[0].mxu0 %v175
    %v246 = vpop.f32.mrb[0].mxu0
    %v247 = vadd.f32 0.0, %v246
    %v248 = vpop.f32.mrb[0].mxu0
    %249 = vmatprep.mubr.f32.mxu0 0.0
    %250 = vmatmul.mubr.f32.gmra.mrb[0].mxu0 %v178
    %v251 = vpop.f32.mrb[0].mxu0
    %v252 = vadd.f32 0.0, %v251
    %v253 = vpop.f32.mrb[0].mxu0
    %254 = vdwg.mxu0
    %v255 = vld [vmem:[%s4] sm:$0xff]
    %v256 = vld [vmem:[%s4 + $0x8] sm:$0xff]
    %v257 = vld [vmem:[%s4 + $0x10] sm:$0xff]
    %v258 = vld [vmem:[%s4 + $0x18] sm:$0xff]
    %259 = vmatprep.subr.mxu0 0.0
    %260 = vmatpush1.msra.mxu0 %v255
    %261 = vmatprep.subr.mxu0 0.0
    %262 = vmatpush1.msra.mxu0 %v256
    %263 = vmatprep.subr.mxu0 0.0
    %264 = vmatpush1.msra.mxu0 %v257
    %265 = vmatprep.subr.mxu0 0.0
    %266 = vmatpush1.msra.mxu0 %v258
    %267 = vmatprep.subr.mxu0 0.0
    %268 = vmatpush1.msra.mxu0 0.0
    %269 = vmatprep.subr.mxu0 0.0
    %270 = vmatpush1.msra.mxu0 0.0
    %271 = vmatprep.subr.mxu0 0.0
    %272 = vmatpush1.msra.mxu0 0.0
    %273 = vmatprep.subr.mxu0 0.0
    %274 = vmatpush1.msra.mxu0 0.0
    %275 = vmatprep.subr.mxu0 0.0
    %276 = vmatpush1.msra.mxu0 0.0
    %277 = vmatprep.subr.mxu0 0.0
    %278 = vmatpush1.msra.mxu0 0.0
    %279 = vmatprep.subr.mxu0 0.0
    %280 = vmatpush1.msra.mxu0 0.0
    %281 = vmatprep.subr.mxu0 0.0
    %282 = vmatpush1.msra.mxu0 0.0
    %283 = vmatprep.subr.mxu0 0.0
    %284 = vmatpush1.msra.mxu0 0.0
    %285 = vmatprep.subr.mxu0 0.0
    %286 = vmatpush1.msra.mxu0 0.0
    %287 = vmatprep.subr.mxu0 0.0
    %288 = vmatpush1.msra.mxu0 0.0
    %289 = vmatprep.subr.mxu0 0.0
    %290 = vmatpush1.msra.mxu0 0.0
    %291 = vmatprep.subr.mxu0 0.0
    %292 = vmatpush1.msra.mxu0 0.0
    %293 = vmatprep.subr.mxu0 0.0
    %294 = vmatpush1.msra.mxu0 0.0
    %295 = vmatprep.subr.mxu0 0.0
    %296 = vmatpush1.msra.mxu0 0.0
    %297 = vmatprep.subr.mxu0 0.0
    %298 = vmatpush1.msra.mxu0 0.0
    %299 = vmatprep.subr.mxu0 0.0
    %300 = vmatpush1.msra.mxu0 0.0
    %301 = vmatprep.subr.mxu0 0.0
    %302 = vmatpush1.msra.mxu0 0.0
    %303 = vmatprep.subr.mxu0 0.0
    %304 = vmatpush1.msra.mxu0 0.0
    %305 = vmatprep.subr.mxu0 0.0
    %306 = vmatpush1.msra.mxu0 0.0
    %307 = vmatprep.subr.mxu0 0.0
    %308 = vmatpush1.msra.mxu0 0.0
    %309 = vmatprep.subr.mxu0 0.0
    %310 = vmatpush1.msra.mxu0 0.0
    %311 = vmatprep.subr.mxu0 0.0
    %312 = vmatpush1.msra.mxu0 0.0
    %313 = vmatprep.subr.mxu0 0.0
    %314 = vmatpush1.msra.mxu0 0.0
    %315 = vmatprep.subr.mxu0 0.0
    %316 = vmatpush1.msra.mxu0 0.0
    %317 = vmatprep.subr.mxu0 0.0
    %318 = vmatpush1.msra.mxu0 0.0
    %319 = vmatprep.subr.mxu0 0.0
    %320 = vmatpush1.msra.mxu0 0.0
    %321 = vmatprep.subr.mxu0 0.0
    %322 = vmatpush1.msra.mxu0 0.0
    %323 = vmatprep.mubr.f32.mxu0 0.0
    %324 = vmatmul.mubr.f32.gmra.mrb[0].mxu0 %v175
    %v325 = vpop.f32.mrb[0].mxu0
    %v326 = vadd.f32 0.0, %v325
    %v327 = vpop.f32.mrb[0].mxu0
    %328 = vmatprep.mubr.f32.mxu0 0.0
    %329 = vmatmul.mubr.f32.gmra.mrb[0].mxu0 %v178
    %v330 = vpop.f32.mrb[0].mxu0
    %v331 = vadd.f32 0.0, %v330
    %v332 = vpop.f32.mrb[0].mxu0
    %333 = vdwg.mxu0
    %v334 = vld [vmem:[%s5] sm:$0xff]
    %v335 = vld [vmem:[%s5 + $0x8] sm:$0xff]
    %v336 = vld [vmem:[%s5 + $0x10] sm:$0xff]
    %v337 = vld [vmem:[%s5 + $0x18] sm:$0xff]
    %338 = vmatprep.subr.mxu0 0.0
    %339 = vmatpush1.msra.mxu0 %v334
    %340 = vmatprep.subr.mxu0 0.0
    %341 = vmatpush1.msra.mxu0 %v335
    %342 = vmatprep.subr.mxu0 0.0
    %343 = vmatpush1.msra.mxu0 %v336
    %344 = vmatprep.subr.mxu0 0.0
    %345 = vmatpush1.msra.mxu0 %v337
    %346 = vmatprep.subr.mxu0 0.0
    %347 = vmatpush1.msra.mxu0 0.0
    %348 = vmatprep.subr.mxu0 0.0
    %349 = vmatpush1.msra.mxu0 0.0
    %350 = vmatprep.subr.mxu0 0.0
    %351 = vmatpush1.msra.mxu0 0.0
    %352 = vmatprep.subr.mxu0 0.0
    %353 = vmatpush1.msra.mxu0 0.0
    %354 = vmatprep.subr.mxu0 0.0
    %355 = vmatpush1.msra.mxu0 0.0
    %356 = vmatprep.subr.mxu0 0.0
    %357 = vmatpush1.msra.mxu0 0.0
    %358 = vmatprep.subr.mxu0 0.0
    %359 = vmatpush1.msra.mxu0 0.0
    %360 = vmatprep.subr.mxu0 0.0
    %361 = vmatpush1.msra.mxu0 0.0
    %362 = vmatprep.subr.mxu0 0.0
    %363 = vmatpush1.msra.mxu0 0.0
    %364 = vmatprep.subr.mxu0 0.0
    %365 = vmatpush1.msra.mxu0 0.0
    %366 = vmatprep.subr.mxu0 0.0
    %367 = vmatpush1.msra.mxu0 0.0
    %368 = vmatprep.subr.mxu0 0.0
    %369 = vmatpush1.msra.mxu0 0.0
    %370 = vmatprep.subr.mxu0 0.0
    %371 = vmatpush1.msra.mxu0 0.0
    %372 = vmatprep.subr.mxu0 0.0
    %373 = vmatpush1.msra.mxu0 0.0
    %374 = vmatprep.subr.mxu0 0.0
    %375 = vmatpush1.msra.mxu0 0.0
    %376 = vmatprep.subr.mxu0 0.0
    %377 = vmatpush1.msra.mxu0 0.0
    %378 = vmatprep.subr.mxu0 0.0
    %379 = vmatpush1.msra.mxu0 0.0
    %380 = vmatprep.subr.mxu0 0.0
    %381 = vmatpush1.msra.mxu0 0.0
    %382 = vmatprep.subr.mxu0 0.0
    %383 = vmatpush1.msra.mxu0 0.0
    %384 = vmatprep.subr.mxu0 0.0
    %385 = vmatpush1.msra.mxu0 0.0
    %386 = vmatprep.subr.mxu0 0.0
    %387 = vmatpush1.msra.mxu0 0.0
    %388 = vmatprep.subr.mxu0 0.0
    %389 = vmatpush1.msra.mxu0 0.0
    %390 = vmatprep.subr.mxu0 0.0
    %391 = vmatpush1.msra.mxu0 0.0
    %392 = vmatprep.subr.mxu0 0.0
    %393 = vmatpush1.msra.mxu0 0.0
    %394 = vmatprep.subr.mxu0 0.0
    %395 = vmatpush1.msra.mxu0 0.0
    %396 = vmatprep.subr.mxu0 0.0
    %397 = vmatpush1.msra.mxu0 0.0
    %398 = vmatprep.subr.mxu0 0.0
    %399 = vmatpush1.msra.mxu0 0.0
    %400 = vmatprep.subr.mxu0 0.0
    %401 = vmatpush1.msra.mxu0 0.0
    %402 = vmatprep.mubr.f32.mxu0 0.0
    %403 = vmatmul.mubr.f32.gmra.mrb[0].mxu0 %v175
    %v404 = vpop.f32.mrb[0].mxu0
    %v405 = vadd.f32 0.0, %v404
    %v406 = vpop.f32.mrb[0].mxu0
    %407 = vmatprep.mubr.f32.mxu0 0.0
    %408 = vmatmul.mubr.f32.gmra.mrb[0].mxu0 %v178
    %v409 = vpop.f32.mrb[0].mxu0
    %v410 = vadd.f32 0.0, %v409
    %v411 = vpop.f32.mrb[0].mxu0
    %412 = vdwg.mxu0
    %vm413 = vcmask 64512
    %v415 = vsel %vm413, %v247, 0
    %v418 = vsel %vm413, %v326, 0
    %420 = vmatprep.subr.mxu0 0.0
    %421 = vmatpush1.xpose.msra.mxu0 %v418
    %422 = vmatprep.subr.mxu0 0.0
    %423 = vmatpush1.xpose.msra.mxu0 0.0
    %424 = vmatprep.subr.mxu0 0.0
    %425 = vmatpush1.xpose.msra.mxu0 0.0
    %426 = vmatprep.subr.mxu0 0.0
    %427 = vmatpush1.xpose.msra.mxu0 0.0
    %428 = vmatprep.subr.mxu0 0.0
    %429 = vmatpush1.xpose.msra.mxu0 0.0
    %430 = vmatprep.subr.mxu0 0.0
    %431 = vmatpush1.xpose.msra.mxu0 0.0
    %432 = vmatprep.subr.mxu0 0.0
    %433 = vmatpush1.xpose.msra.mxu0 0.0
    %434 = vmatprep.subr.mxu0 0.0
    %435 = vmatpush1.xpose.msra.mxu0 0.0
    %436 = vmatprep.subr.mxu0 0.0
    %437 = vmatpush1.xpose.msra.mxu0 0.0
    %438 = vmatprep.subr.mxu0 0.0
    %439 = vmatpush1.xpose.msra.mxu0 0.0
    %440 = vmatprep.subr.mxu0 0.0
    %441 = vmatpush1.xpose.msra.mxu0 0.0
    %442 = vmatprep.subr.mxu0 0.0
    %443 = vmatpush1.xpose.msra.mxu0 0.0
    %444 = vmatprep.subr.mxu0 0.0
    %445 = vmatpush1.xpose.msra.mxu0 0.0
    %446 = vmatprep.subr.mxu0 0.0
    %447 = vmatpush1.xpose.msra.mxu0 0.0
    %448 = vmatprep.subr.mxu0 0.0
    %449 = vmatpush1.xpose.msra.mxu0 0.0
    %450 = vmatprep.subr.mxu0 0.0
    %451 = vmatpush1.xpose.msra.mxu0 0.0
    %452 = vmatprep.subr.mxu0 0.0
    %453 = vmatpush1.xpose.msra.mxu0 0.0
    %454 = vmatprep.subr.mxu0 0.0
    %455 = vmatpush1.xpose.msra.mxu0 0.0
    %456 = vmatprep.subr.mxu0 0.0
    %457 = vmatpush1.xpose.msra.mxu0 0.0
    %458 = vmatprep.subr.mxu0 0.0
    %459 = vmatpush1.xpose.msra.mxu0 0.0
    %460 = vmatprep.subr.mxu0 0.0
    %461 = vmatpush1.xpose.msra.mxu0 0.0
    %462 = vmatprep.subr.mxu0 0.0
    %463 = vmatpush1.xpose.msra.mxu0 0.0
    %464 = vmatprep.subr.mxu0 0.0
    %465 = vmatpush1.xpose.msra.mxu0 0.0
    %466 = vmatprep.subr.mxu0 0.0
    %467 = vmatpush1.xpose.msra.mxu0 0.0
    %468 = vmatprep.subr.mxu0 0.0
    %469 = vmatpush1.xpose.msra.mxu0 0.0
    %470 = vmatprep.subr.mxu0 0.0
    %471 = vmatpush1.xpose.msra.mxu0 0.0
    %472 = vmatprep.subr.mxu0 0.0
    %473 = vmatpush1.xpose.msra.mxu0 0.0
    %474 = vmatprep.subr.mxu0 0.0
    %475 = vmatpush1.xpose.msra.mxu0 0.0
    %476 = vmatprep.subr.mxu0 0.0
    %477 = vmatpush1.xpose.msra.mxu0 0.0
    %478 = vmatprep.subr.mxu0 0.0
    %479 = vmatpush1.xpose.msra.mxu0 0.0
    %480 = vmatprep.subr.mxu0 0.0
    %481 = vmatpush1.xpose.msra.mxu0 0.0
    %482 = vmatprep.subr.mxu0 0.0
    %483 = vmatpush1.xpose.msra.mxu0 0.0
    %484 = vmatprep.mubr.f32.mxu0 0.0
    %485 = vmatmul.mubr.f32.gmra.mrb[0].mxu0 %v415
    %v486 = vpop.f32.mrb[0].mxu0
    %v487 = vadd.f32 0.0, %v486
    %v488 = vpop.f32.mrb[0].mxu0
    %489 = vdwg.mxu0
    %v491 = vsel %vm413, %v252, 0
    %v494 = vsel %vm413, %v331, 0
    %496 = vmatprep.subr.mxu0 0.0
    %497 = vmatpush1.xpose.msra.mxu0 %v494
    %498 = vmatprep.subr.mxu0 0.0
    %499 = vmatpush1.xpose.msra.mxu0 0.0
    %500 = vmatprep.subr.mxu0 0.0
    %501 = vmatpush1.xpose.msra.mxu0 0.0
    %502 = vmatprep.subr.mxu0 0.0
    %503 = vmatpush1.xpose.msra.mxu0 0.0
    %504 = vmatprep.subr.mxu0 0.0
    %505 = vmatpush1.xpose.msra.mxu0 0.0
    %506 = vmatprep.subr.mxu0 0.0
    %507 = vmatpush1.xpose.msra.mxu0 0.0
    %508 = vmatprep.subr.mxu0 0.0
    %509 = vmatpush1.xpose.msra.mxu0 0.0
    %510 = vmatprep.subr.mxu0 0.0
    %511 = vmatpush1.xpose.msra.mxu0 0.0
    %512 = vmatprep.subr.mxu0 0.0
    %513 = vmatpush1.xpose.msra.mxu0 0.0
    %514 = vmatprep.subr.mxu0 0.0
    %515 = vmatpush1.xpose.msra.mxu0 0.0
    %516 = vmatprep.subr.mxu0 0.0
    %517 = vmatpush1.xpose.msra.mxu0 0.0
    %518 = vmatprep.subr.mxu0 0.0
    %519 = vmatpush1.xpose.msra.mxu0 0.0
    %520 = vmatprep.subr.mxu0 0.0
    %521 = vmatpush1.xpose.msra.mxu0 0.0
    %522 = vmatprep.subr.mxu0 0.0
    %523 = vmatpush1.xpose.msra.mxu0 0.0
    %524 = vmatprep.subr.mxu0 0.0
    %525 = vmatpush1.xpose.msra.mxu0 0.0
    %526 = vmatprep.subr.mxu0 0.0
    %527 = vmatpush1.xpose.msra.mxu0 0.0
    %528 = vmatprep.subr.mxu0 0.0
    %529 = vmatpush1.xpose.msra.mxu0 0.0
    %530 = vmatprep.subr.mxu0 0.0
    %531 = vmatpush1.xpose.msra.mxu0 0.0
    %532 = vmatprep.subr.mxu0 0.0
    %533 = vmatpush1.xpose.msra.mxu0 0.0
    %534 = vmatprep.subr.mxu0 0.0
    %535 = vmatpush1.xpose.msra.mxu0 0.0
    %536 = vmatprep.subr.mxu0 0.0
    %537 = vmatpush1.xpose.msra.mxu0 0.0
    %538 = vmatprep.subr.mxu0 0.0
    %539 = vmatpush1.xpose.msra.mxu0 0.0
    %540 = vmatprep.subr.mxu0 0.0
    %541 = vmatpush1.xpose.msra.mxu0 0.0
    %542 = vmatprep.subr.mxu0 0.0
    %543 = vmatpush1.xpose.msra.mxu0 0.0
    %544 = vmatprep.subr.mxu0 0.0
    %545 = vmatpush1.xpose.msra.mxu0 0.0
    %546 = vmatprep.subr.mxu0 0.0
    %547 = vmatpush1.xpose.msra.mxu0 0.0
    %548 = vmatprep.subr.mxu0 0.0
    %549 = vmatpush1.xpose.msra.mxu0 0.0
    %550 = vmatprep.subr.mxu0 0.0
    %551 = vmatpush1.xpose.msra.mxu0 0.0
    %552 = vmatprep.subr.mxu0 0.0
    %553 = vmatpush1.xpose.msra.mxu0 0.0
    %554 = vmatprep.subr.mxu0 0.0
    %555 = vmatpush1.xpose.msra.mxu0 0.0
    %556 = vmatprep.subr.mxu0 0.0
    %557 = vmatpush1.xpose.msra.mxu0 0.0
    %558 = vmatprep.subr.mxu0 0.0
    %559 = vmatpush1.xpose.msra.mxu0 0.0
    %560 = vmatprep.mubr.f32.mxu0 0.0
    %561 = vmatmul.mubr.f32.gmra.mrb[0].mxu0 %v491
    %v562 = vpop.f32.mrb[0].mxu0
    %v563 = vadd.f32 0.0, %v562
    %v564 = vpop.f32.mrb[0].mxu0
    %565 = vdwg.mxu0
    %v566 = vsel %vm413, %v487, -inf
    %567 = vmax.xlane.f32.xlu0 %v566
    %v568 = vpop.xlane.xlu0 %567
    %v569 = vsel %vm413, %v563, -inf
    %570 = vmax.xlane.f32.xlu0 %v569
    %v571 = vpop.xlane.xlu0 %570
    %v572 = vsub.f32 %v487, %v568
    %v573 = vsub.f32 %v563, %v571
    %v574 = vmul.f32 %v572, 1.442695
    %v575 = vpow.pop %v574
    %v576 = vmul.f32 %v573, 1.442695
    %v577 = vpow.pop %v576
    %v578 = vsel %vm413, %v575, 0.0
    %579 = vadd.xlane.f32.xlu0 %v578
    %v580 = vpop.xlane.xlu0 %579
    %v581 = vsel %vm413, %v577, 0.0
    %582 = vadd.xlane.f32.xlu0 %v581
    %v583 = vpop.xlane.xlu0 %582
    %v584 = vrcp.pop %v580
    %v585 = vmul.f32 %v575, %v584
    %v586 = vrcp.pop %v583
    %v587 = vmul.f32 %v577, %v586
    %s588 = scalar_lea.vmem %s3, 32
    %v589 = vld [vmem:[%s588] sm:$0xff]
    %v590 = vld [vmem:[%s588 + $0x8] sm:$0xff]
    %v591 = vld [vmem:[%s588 + $0x10] sm:$0xff]
    %v592 = vld [vmem:[%s588 + $0x18] sm:$0xff]
    %593 = vmatprep.subr.mxu0 0.0
    %594 = vmatpush1.msra.mxu0 %v589
    %595 = vmatprep.subr.mxu0 0.0
    %596 = vmatpush1.msra.mxu0 %v590
    %597 = vmatprep.subr.mxu0 0.0
    %598 = vmatpush1.msra.mxu0 %v591
    %599 = vmatprep.subr.mxu0 0.0
    %600 = vmatpush1.msra.mxu0 %v592
    %601 = vmatprep.subr.mxu0 0.0
    %602 = vmatpush1.msra.mxu0 0.0
    %603 = vmatprep.subr.mxu0 0.0
    %604 = vmatpush1.msra.mxu0 0.0
    %605 = vmatprep.subr.mxu0 0.0
    %606 = vmatpush1.msra.mxu0 0.0
    %607 = vmatprep.subr.mxu0 0.0
    %608 = vmatpush1.msra.mxu0 0.0
    %609 = vmatprep.subr.mxu0 0.0
    %610 = vmatpush1.msra.mxu0 0.0
    %611 = vmatprep.subr.mxu0 0.0
    %612 = vmatpush1.msra.mxu0 0.0
    %613 = vmatprep.subr.mxu0 0.0
    %614 = vmatpush1.msra.mxu0 0.0
    %615 = vmatprep.subr.mxu0 0.0
    %616 = vmatpush1.msra.mxu0 0.0
    %617 = vmatprep.subr.mxu0 0.0
    %618 = vmatpush1.msra.mxu0 0.0
    %619 = vmatprep.subr.mxu0 0.0
    %620 = vmatpush1.msra.mxu0 0.0
    %621 = vmatprep.subr.mxu0 0.0
    %622 = vmatpush1.msra.mxu0 0.0
    %623 = vmatprep.subr.mxu0 0.0
    %624 = vmatpush1.msra.mxu0 0.0
    %625 = vmatprep.subr.mxu0 0.0
    %626 = vmatpush1.msra.mxu0 0.0
    %627 = vmatprep.subr.mxu0 0.0
    %628 = vmatpush1.msra.mxu0 0.0
    %629 = vmatprep.subr.mxu0 0.0
    %630 = vmatpush1.msra.mxu0 0.0
    %631 = vmatprep.subr.mxu0 0.0
    %632 = vmatpush1.msra.mxu0 0.0
    %633 = vmatprep.subr.mxu0 0.0
    %634 = vmatpush1.msra.mxu0 0.0
    %635 = vmatprep.subr.mxu0 0.0
    %636 = vmatpush1.msra.mxu0 0.0
    %637 = vmatprep.subr.mxu0 0.0
    %638 = vmatpush1.msra.mxu0 0.0
    %639 = vmatprep.subr.mxu0 0.0
    %640 = vmatpush1.msra.mxu0 0.0
    %641 = vmatprep.subr.mxu0 0.0
    %642 = vmatpush1.msra.mxu0 0.0
    %643 = vmatprep.subr.mxu0 0.0
    %644 = vmatpush1.msra.mxu0 0.0
    %645 = vmatprep.subr.mxu0 0.0
    %646 = vmatpush1.msra.mxu0 0.0
    %647 = vmatprep.subr.mxu0 0.0
    %648 = vmatpush1.msra.mxu0 0.0
    %649 = vmatprep.subr.mxu0 0.0
    %650 = vmatpush1.msra.mxu0 0.0
    %651 = vmatprep.subr.mxu0 0.0
    %652 = vmatpush1.msra.mxu0 0.0
    %653 = vmatprep.subr.mxu0 0.0
    %654 = vmatpush1.msra.mxu0 0.0
    %655 = vmatprep.subr.mxu0 0.0
    %656 = vmatpush1.msra.mxu0 0.0
    %657 = vmatprep.mubr.f32.mxu0 0.0
    %658 = vmatmul.mubr.f32.gmra.mrb[0].mxu0 %v175
    %v659 = vpop.f32.mrb[0].mxu0
    %v660 = vadd.f32 0.0, %v659
    %v661 = vpop.f32.mrb[0].mxu0
    %662 = vmatprep.mubr.f32.mxu0 0.0
    %663 = vmatmul.mubr.f32.gmra.mrb[0].mxu0 %v178
    %v664 = vpop.f32.mrb[0].mxu0
    %v665 = vadd.f32 0.0, %v664
    %v666 = vpop.f32.mrb[0].mxu0
    %667 = vdwg.mxu0
    %s668 = scalar_lea.vmem %s4, 32
    %v669 = vld [vmem:[%s668] sm:$0xff]
    %v670 = vld [vmem:[%s668 + $0x8] sm:$0xff]
    %v671 = vld [vmem:[%s668 + $0x10] sm:$0xff]
    %v672 = vld [vmem:[%s668 + $0x18] sm:$0xff]
    %673 = vmatprep.subr.mxu0 0.0
    %674 = vmatpush1.msra.mxu0 %v669
    %675 = vmatprep.subr.mxu0 0.0
    %676 = vmatpush1.msra.mxu0 %v670
    %677 = vmatprep.subr.mxu0 0.0
    %678 = vmatpush1.msra.mxu0 %v671
    %679 = vmatprep.subr.mxu0 0.0
    %680 = vmatpush1.msra.mxu0 %v672
    %681 = vmatprep.subr.mxu0 0.0
    %682 = vmatpush1.msra.mxu0 0.0
    %683 = vmatprep.subr.mxu0 0.0
    %684 = vmatpush1.msra.mxu0 0.0
    %685 = vmatprep.subr.mxu0 0.0
    %686 = vmatpush1.msra.mxu0 0.0
    %687 = vmatprep.subr.mxu0 0.0
    %688 = vmatpush1.msra.mxu0 0.0
    %689 = vmatprep.subr.mxu0 0.0
    %690 = vmatpush1.msra.mxu0 0.0
    %691 = vmatprep.subr.mxu0 0.0
    %692 = vmatpush1.msra.mxu0 0.0
    %693 = vmatprep.subr.mxu0 0.0
    %694 = vmatpush1.msra.mxu0 0.0
    %695 = vmatprep.subr.mxu0 0.0
    %696 = vmatpush1.msra.mxu0 0.0
    %697 = vmatprep.subr.mxu0 0.0
    %698 = vmatpush1.msra.mxu0 0.0
    %699 = vmatprep.subr.mxu0 0.0
    %700 = vmatpush1.msra.mxu0 0.0
    %701 = vmatprep.subr.mxu0 0.0
    %702 = vmatpush1.msra.mxu0 0.0
    %703 = vmatprep.subr.mxu0 0.0
    %704 = vmatpush1.msra.mxu0 0.0
    %705 = vmatprep.subr.mxu0 0.0
    %706 = vmatpush1.msra.mxu0 0.0
    %707 = vmatprep.subr.mxu0 0.0
    %708 = vmatpush1.msra.mxu0 0.0
    %709 = vmatprep.subr.mxu0 0.0
    %710 = vmatpush1.msra.mxu0 0.0
    %711 = vmatprep.subr.mxu0 0.0
    %712 = vmatpush1.msra.mxu0 0.0
    %713 = vmatprep.subr.mxu0 0.0
    %714 = vmatpush1.msra.mxu0 0.0
    %715 = vmatprep.subr.mxu0 0.0
    %716 = vmatpush1.msra.mxu0 0.0
    %717 = vmatprep.subr.mxu0 0.0
    %718 = vmatpush1.msra.mxu0 0.0
    %719 = vmatprep.subr.mxu0 0.0
    %720 = vmatpush1.msra.mxu0 0.0
    %721 = vmatprep.subr.mxu0 0.0
    %722 = vmatpush1.msra.mxu0 0.0
    %723 = vmatprep.subr.mxu0 0.0
    %724 = vmatpush1.msra.mxu0 0.0
    %725 = vmatprep.subr.mxu0 0.0
    %726 = vmatpush1.msra.mxu0 0.0
    %727 = vmatprep.subr.mxu0 0.0
    %728 = vmatpush1.msra.mxu0 0.0
    %729 = vmatprep.subr.mxu0 0.0
    %730 = vmatpush1.msra.mxu0 0.0
    %731 = vmatprep.subr.mxu0 0.0
    %732 = vmatpush1.msra.mxu0 0.0
    %733 = vmatprep.subr.mxu0 0.0
    %734 = vmatpush1.msra.mxu0 0.0
    %735 = vmatprep.subr.mxu0 0.0
    %736 = vmatpush1.msra.mxu0 0.0
    %737 = vmatprep.mubr.f32.mxu0 0.0
    %738 = vmatmul.mubr.f32.gmra.mrb[0].mxu0 %v175
    %v739 = vpop.f32.mrb[0].mxu0
    %v740 = vadd.f32 0.0, %v739
    %v741 = vpop.f32.mrb[0].mxu0
    %742 = vmatprep.mubr.f32.mxu0 0.0
    %743 = vmatmul.mubr.f32.gmra.mrb[0].mxu0 %v178
    %v744 = vpop.f32.mrb[0].mxu0
    %v745 = vadd.f32 0.0, %v744
    %v746 = vpop.f32.mrb[0].mxu0
    %747 = vdwg.mxu0
    %s748 = scalar_lea.vmem %s5, 32
    %v749 = vld [vmem:[%s748] sm:$0xff]
    %v750 = vld [vmem:[%s748 + $0x8] sm:$0xff]
    %v751 = vld [vmem:[%s748 + $0x10] sm:$0xff]
    %v752 = vld [vmem:[%s748 + $0x18] sm:$0xff]
    %753 = vmatprep.subr.mxu0 0.0
    %754 = vmatpush1.msra.mxu0 %v749
    %755 = vmatprep.subr.mxu0 0.0
    %756 = vmatpush1.msra.mxu0 %v750
    %757 = vmatprep.subr.mxu0 0.0
    %758 = vmatpush1.msra.mxu0 %v751
    %759 = vmatprep.subr.mxu0 0.0
    %760 = vmatpush1.msra.mxu0 %v752
    %761 = vmatprep.subr.mxu0 0.0
    %762 = vmatpush1.msra.mxu0 0.0
    %763 = vmatprep.subr.mxu0 0.0
    %764 = vmatpush1.msra.mxu0 0.0
    %765 = vmatprep.subr.mxu0 0.0
    %766 = vmatpush1.msra.mxu0 0.0
    %767 = vmatprep.subr.mxu0 0.0
    %768 = vmatpush1.msra.mxu0 0.0
    %769 = vmatprep.subr.mxu0 0.0
    %770 = vmatpush1.msra.mxu0 0.0
    %771 = vmatprep.subr.mxu0 0.0
    %772 = vmatpush1.msra.mxu0 0.0
    %773 = vmatprep.subr.mxu0 0.0
    %774 = vmatpush1.msra.mxu0 0.0
    %775 = vmatprep.subr.mxu0 0.0
    %776 = vmatpush1.msra.mxu0 0.0
    %777 = vmatprep.subr.mxu0 0.0
    %778 = vmatpush1.msra.mxu0 0.0
    %779 = vmatprep.subr.mxu0 0.0
    %780 = vmatpush1.msra.mxu0 0.0
    %781 = vmatprep.subr.mxu0 0.0
    %782 = vmatpush1.msra.mxu0 0.0
    %783 = vmatprep.subr.mxu0 0.0
    %784 = vmatpush1.msra.mxu0 0.0
    %785 = vmatprep.subr.mxu0 0.0
    %786 = vmatpush1.msra.mxu0 0.0
    %787 = vmatprep.subr.mxu0 0.0
    %788 = vmatpush1.msra.mxu0 0.0
    %789 = vmatprep.subr.mxu0 0.0
    %790 = vmatpush1.msra.mxu0 0.0
    %791 = vmatprep.subr.mxu0 0.0
    %792 = vmatpush1.msra.mxu0 0.0
    %793 = vmatprep.subr.mxu0 0.0
    %794 = vmatpush1.msra.mxu0 0.0
    %795 = vmatprep.subr.mxu0 0.0
    %796 = vmatpush1.msra.mxu0 0.0
    %797 = vmatprep.subr.mxu0 0.0
    %798 = vmatpush1.msra.mxu0 0.0
    %799 = vmatprep.subr.mxu0 0.0
    %800 = vmatpush1.msra.mxu0 0.0
    %801 = vmatprep.subr.mxu0 0.0
    %802 = vmatpush1.msra.mxu0 0.0
    %803 = vmatprep.subr.mxu0 0.0
    %804 = vmatpush1.msra.mxu0 0.0
    %805 = vmatprep.subr.mxu0 0.0
    %806 = vmatpush1.msra.mxu0 0.0
    %807 = vmatprep.subr.mxu0 0.0
    %808 = vmatpush1.msra.mxu0 0.0
    %809 = vmatprep.subr.mxu0 0.0
    %810 = vmatpush1.msra.mxu0 0.0
    %811 = vmatprep.subr.mxu0 0.0
    %812 = vmatpush1.msra.mxu0 0.0
    %813 = vmatprep.subr.mxu0 0.0
    %814 = vmatpush1.msra.mxu0 0.0
    %815 = vmatprep.subr.mxu0 0.0
    %816 = vmatpush1.msra.mxu0 0.0
    %817 = vmatprep.mubr.f32.mxu0 0.0
    %818 = vmatmul.mubr.f32.gmra.mrb[0].mxu0 %v175
    %v819 = vpop.f32.mrb[0].mxu0
    %v820 = vadd.f32 0.0, %v819
    %v821 = vpop.f32.mrb[0].mxu0
    %822 = vmatprep.mubr.f32.mxu0 0.0
    %823 = vmatmul.mubr.f32.gmra.mrb[0].mxu0 %v178
    %v824 = vpop.f32.mrb[0].mxu0
    %v825 = vadd.f32 0.0, %v824
    %v826 = vpop.f32.mrb[0].mxu0
    %827 = vdwg.mxu0
    %v829 = vsel %vm413, %v660, 0
    %v832 = vsel %vm413, %v740, 0
    %834 = vmatprep.subr.mxu0 0.0
    %835 = vmatpush1.xpose.msra.mxu0 %v832
    %836 = vmatprep.subr.mxu0 0.0
    %837 = vmatpush1.xpose.msra.mxu0 0.0
    %838 = vmatprep.subr.mxu0 0.0
    %839 = vmatpush1.xpose.msra.mxu0 0.0
    %840 = vmatprep.subr.mxu0 0.0
    %841 = vmatpush1.xpose.msra.mxu0 0.0
    %842 = vmatprep.subr.mxu0 0.0
    %843 = vmatpush1.xpose.msra.mxu0 0.0
    %844 = vmatprep.subr.mxu0 0.0
    %845 = vmatpush1.xpose.msra.mxu0 0.0
    %846 = vmatprep.subr.mxu0 0.0
    %847 = vmatpush1.xpose.msra.mxu0 0.0
    %848 = vmatprep.subr.mxu0 0.0
    %849 = vmatpush1.xpose.msra.mxu0 0.0
    %850 = vmatprep.subr.mxu0 0.0
    %851 = vmatpush1.xpose.msra.mxu0 0.0
    %852 = vmatprep.subr.mxu0 0.0
    %853 = vmatpush1.xpose.msra.mxu0 0.0
    %854 = vmatprep.subr.mxu0 0.0
    %855 = vmatpush1.xpose.msra.mxu0 0.0
    %856 = vmatprep.subr.mxu0 0.0
    %857 = vmatpush1.xpose.msra.mxu0 0.0
    %858 = vmatprep.subr.mxu0 0.0
    %859 = vmatpush1.xpose.msra.mxu0 0.0
    %860 = vmatprep.subr.mxu0 0.0
    %861 = vmatpush1.xpose.msra.mxu0 0.0
    %862 = vmatprep.subr.mxu0 0.0
    %863 = vmatpush1.xpose.msra.mxu0 0.0
    %864 = vmatprep.subr.mxu0 0.0
    %865 = vmatpush1.xpose.msra.mxu0 0.0
    %866 = vmatprep.subr.mxu0 0.0
    %867 = vmatpush1.xpose.msra.mxu0 0.0
    %868 = vmatprep.subr.mxu0 0.0
    %869 = vmatpush1.xpose.msra.mxu0 0.0
    %870 = vmatprep.subr.mxu0 0.0
    %871 = vmatpush1.xpose.msra.mxu0 0.0
    %872 = vmatprep.subr.mxu0 0.0
    %873 = vmatpush1.xpose.msra.mxu0 0.0
    %874 = vmatprep.subr.mxu0 0.0
    %875 = vmatpush1.xpose.msra.mxu0 0.0
    %876 = vmatprep.subr.mxu0 0.0
    %877 = vmatpush1.xpose.msra.mxu0 0.0
    %878 = vmatprep.subr.mxu0 0.0
    %879 = vmatpush1.xpose.msra.mxu0 0.0
    %880 = vmatprep.subr.mxu0 0.0
    %881 = vmatpush1.xpose.msra.mxu0 0.0
    %882 = vmatprep.subr.mxu0 0.0
    %883 = vmatpush1.xpose.msra.mxu0 0.0
    %884 = vmatprep.subr.mxu0 0.0
    %885 = vmatpush1.xpose.msra.mxu0 0.0
    %886 = vmatprep.subr.mxu0 0.0
    %887 = vmatpush1.xpose.msra.mxu0 0.0
    %888 = vmatprep.subr.mxu0 0.0
    %889 = vmatpush1.xpose.msra.mxu0 0.0
    %890 = vmatprep.subr.mxu0 0.0
    %891 = vmatpush1.xpose.msra.mxu0 0.0
    %892 = vmatprep.subr.mxu0 0.0
    %893 = vmatpush1.xpose.msra.mxu0 0.0
    %894 = vmatprep.subr.mxu0 0.0
    %895 = vmatpush1.xpose.msra.mxu0 0.0
    %896 = vmatprep.subr.mxu0 0.0
    %897 = vmatpush1.xpose.msra.mxu0 0.0
    %898 = vmatprep.mubr.f32.mxu0 0.0
    %899 = vmatmul.mubr.f32.gmra.mrb[0].mxu0 %v829
    %v900 = vpop.f32.mrb[0].mxu0
    %v901 = vadd.f32 0.0, %v900
    %v902 = vpop.f32.mrb[0].mxu0
    %903 = vdwg.mxu0
    %v905 = vsel %vm413, %v665, 0
    %v908 = vsel %vm413, %v745, 0
    %910 = vmatprep.subr.mxu0 0.0
    %911 = vmatpush1.xpose.msra.mxu0 %v908
    %912 = vmatprep.subr.mxu0 0.0
    %913 = vmatpush1.xpose.msra.mxu0 0.0
    %914 = vmatprep.subr.mxu0 0.0
    %915 = vmatpush1.xpose.msra.mxu0 0.0
    %916 = vmatprep.subr.mxu0 0.0
    %917 = vmatpush1.xpose.msra.mxu0 0.0
    %918 = vmatprep.subr.mxu0 0.0
    %919 = vmatpush1.xpose.msra.mxu0 0.0
    %920 = vmatprep.subr.mxu0 0.0
    %921 = vmatpush1.xpose.msra.mxu0 0.0
    %922 = vmatprep.subr.mxu0 0.0
    %923 = vmatpush1.xpose.msra.mxu0 0.0
    %924 = vmatprep.subr.mxu0 0.0
    %925 = vmatpush1.xpose.msra.mxu0 0.0
    %926 = vmatprep.subr.mxu0 0.0
    %927 = vmatpush1.xpose.msra.mxu0 0.0
    %928 = vmatprep.subr.mxu0 0.0
    %929 = vmatpush1.xpose.msra.mxu0 0.0
    %930 = vmatprep.subr.mxu0 0.0
    %931 = vmatpush1.xpose.msra.mxu0 0.0
    %932 = vmatprep.subr.mxu0 0.0
    %933 = vmatpush1.xpose.msra.mxu0 0.0
    %934 = vmatprep.subr.mxu0 0.0
    %935 = vmatpush1.xpose.msra.mxu0 0.0
    %936 = vmatprep.subr.mxu0 0.0
    %937 = vmatpush1.xpose.msra.mxu0 0.0
    %938 = vmatprep.subr.mxu0 0.0
    %939 = vmatpush1.xpose.msra.mxu0 0.0
    %940 = vmatprep.subr.mxu0 0.0
    %941 = vmatpush1.xpose.msra.mxu0 0.0
    %942 = vmatprep.subr.mxu0 0.0
    %943 = vmatpush1.xpose.msra.mxu0 0.0
    %944 = vmatprep.subr.mxu0 0.0
    %945 = vmatpush1.xpose.msra.mxu0 0.0
    %946 = vmatprep.subr.mxu0 0.0
    %947 = vmatpush1.xpose.msra.mxu0 0.0
    %948 = vmatprep.subr.mxu0 0.0
    %949 = vmatpush1.xpose.msra.mxu0 0.0
    %950 = vmatprep.subr.mxu0 0.0
    %951 = vmatpush1.xpose.msra.mxu0 0.0
    %952 = vmatprep.subr.mxu0 0.0
    %953 = vmatpush1.xpose.msra.mxu0 0.0
    %954 = vmatprep.subr.mxu0 0.0
    %955 = vmatpush1.xpose.msra.mxu0 0.0
    %956 = vmatprep.subr.mxu0 0.0
    %957 = vmatpush1.xpose.msra.mxu0 0.0
    %958 = vmatprep.subr.mxu0 0.0
    %959 = vmatpush1.xpose.msra.mxu0 0.0
    %960 = vmatprep.subr.mxu0 0.0
    %961 = vmatpush1.xpose.msra.mxu0 0.0
    %962 = vmatprep.subr.mxu0 0.0
    %963 = vmatpush1.xpose.msra.mxu0 0.0
    %964 = vmatprep.subr.mxu0 0.0
    %965 = vmatpush1.xpose.msra.mxu0 0.0
    %966 = vmatprep.subr.mxu0 0.0
    %967 = vmatpush1.xpose.msra.mxu0 0.0
    %968 = vmatprep.subr.mxu0 0.0
    %969 = vmatpush1.xpose.msra.mxu0 0.0
    %970 = vmatprep.subr.mxu0 0.0
    %971 = vmatpush1.xpose.msra.mxu0 0.0
    %972 = vmatprep.subr.mxu0 0.0
    %973 = vmatpush1.xpose.msra.mxu0 0.0
    %974 = vmatprep.mubr.f32.mxu0 0.0
    %975 = vmatmul.mubr.f32.gmra.mrb[0].mxu0 %v905
    %v976 = vpop.f32.mrb[0].mxu0
    %v977 = vadd.f32 0.0, %v976
    %v978 = vpop.f32.mrb[0].mxu0
    %979 = vdwg.mxu0
    %v980 = vsel %vm413, %v901, -inf
    %981 = vmax.xlane.f32.xlu0 %v980
    %v982 = vpop.xlane.xlu0 %981
    %v983 = vsel %vm413, %v977, -inf
    %984 = vmax.xlane.f32.xlu0 %v983
    %v985 = vpop.xlane.xlu0 %984
    %v986 = vsub.f32 %v901, %v982
    %v987 = vsub.f32 %v977, %v985
    %v988 = vmul.f32 %v986, 1.442695
    %v989 = vpow.pop %v988
    %v990 = vmul.f32 %v987, 1.442695
    %v991 = vpow.pop %v990
    %v992 = vsel %vm413, %v989, 0.0
    %993 = vadd.xlane.f32.xlu0 %v992
    %v994 = vpop.xlane.xlu0 %993
    %v995 = vsel %vm413, %v991, 0.0
    %996 = vadd.xlane.f32.xlu0 %v995
    %v997 = vpop.xlane.xlu0 %996
    %v998 = vrcp.pop %v994
    %v999 = vmul.f32 %v989, %v998
    %v1000 = vrcp.pop %v997
    %v1001 = vmul.f32 %v991, %v1000
    %s1002 = scalar_lea.vmem %s3, 64
    %v1003 = vld [vmem:[%s1002] sm:$0xff]
    %v1004 = vld [vmem:[%s1002 + $0x8] sm:$0xff]
    %v1005 = vld [vmem:[%s1002 + $0x10] sm:$0xff]
    %v1006 = vld [vmem:[%s1002 + $0x18] sm:$0xff]
    %1007 = vmatprep.subr.mxu0 0.0
    %1008 = vmatpush1.msra.mxu0 %v1003
    %1009 = vmatprep.subr.mxu0 0.0
    %1010 = vmatpush1.msra.mxu0 %v1004
    %1011 = vmatprep.subr.mxu0 0.0
    %1012 = vmatpush1.msra.mxu0 %v1005
    %1013 = vmatprep.subr.mxu0 0.0
    %1014 = vmatpush1.msra.mxu0 %v1006
    %1015 = vmatprep.subr.mxu0 0.0
    %1016 = vmatpush1.msra.mxu0 0.0
    %1017 = vmatprep.subr.mxu0 0.0
    %1018 = vmatpush1.msra.mxu0 0.0
    %1019 = vmatprep.subr.mxu0 0.0
    %1020 = vmatpush1.msra.mxu0 0.0
    %1021 = vmatprep.subr.mxu0 0.0
    %1022 = vmatpush1.msra.mxu0 0.0
    %1023 = vmatprep.subr.mxu0 0.0
    %1024 = vmatpush1.msra.mxu0 0.0
    %1025 = vmatprep.subr.mxu0 0.0
    %1026 = vmatpush1.msra.mxu0 0.0
    %1027 = vmatprep.subr.mxu0 0.0
    %1028 = vmatpush1.msra.mxu0 0.0
    %1029 = vmatprep.subr.mxu0 0.0
    %1030 = vmatpush1.msra.mxu0 0.0
    %1031 = vmatprep.subr.mxu0 0.0
    %1032 = vmatpush1.msra.mxu0 0.0
    %1033 = vmatprep.subr.mxu0 0.0
    %1034 = vmatpush1.msra.mxu0 0.0
    %1035 = vmatprep.subr.mxu0 0.0
    %1036 = vmatpush1.msra.mxu0 0.0
    %1037 = vmatprep.subr.mxu0 0.0
    %1038 = vmatpush1.msra.mxu0 0.0
    %1039 = vmatprep.subr.mxu0 0.0
    %1040 = vmatpush1.msra.mxu0 0.0
    %1041 = vmatprep.subr.mxu0 0.0
    %1042 = vmatpush1.msra.mxu0 0.0
    %1043 = vmatprep.subr.mxu0 0.0
    %1044 = vmatpush1.msra.mxu0 0.0
    %1045 = vmatprep.subr.mxu0 0.0
    %1046 = vmatpush1.msra.mxu0 0.0
    %1047 = vmatprep.subr.mxu0 0.0
    %1048 = vmatpush1.msra.mxu0 0.0
    %1049 = vmatprep.subr.mxu0 0.0
    %1050 = vmatpush1.msra.mxu0 0.0
    %1051 = vmatprep.subr.mxu0 0.0
    %1052 = vmatpush1.msra.mxu0 0.0
    %1053 = vmatprep.subr.mxu0 0.0
    %1054 = vmatpush1.msra.mxu0 0.0
    %1055 = vmatprep.subr.mxu0 0.0
    %1056 = vmatpush1.msra.mxu0 0.0
    %1057 = vmatprep.subr.mxu0 0.0
    %1058 = vmatpush1.msra.mxu0 0.0
    %1059 = vmatprep.subr.mxu0 0.0
    %1060 = vmatpush1.msra.mxu0 0.0
    %1061 = vmatprep.subr.mxu0 0.0
    %1062 = vmatpush1.msra.mxu0 0.0
    %1063 = vmatprep.subr.mxu0 0.0
    %1064 = vmatpush1.msra.mxu0 0.0
    %1065 = vmatprep.subr.mxu0 0.0
    %1066 = vmatpush1.msra.mxu0 0.0
    %1067 = vmatprep.subr.mxu0 0.0
    %1068 = vmatpush1.msra.mxu0 0.0
    %1069 = vmatprep.subr.mxu0 0.0
    %1070 = vmatpush1.msra.mxu0 0.0
    %1071 = vmatprep.mubr.f32.mxu0 0.0
    %1072 = vmatmul.mubr.f32.gmra.mrb[0].mxu0 %v175
    %v1073 = vpop.f32.mrb[0].mxu0
    %v1074 = vadd.f32 0.0, %v1073
    %v1075 = vpop.f32.mrb[0].mxu0
    %1076 = vmatprep.mubr.f32.mxu0 0.0
    %1077 = vmatmul.mubr.f32.gmra.mrb[0].mxu0 %v178
    %v1078 = vpop.f32.mrb[0].mxu0
    %v1079 = vadd.f32 0.0, %v1078
    %v1080 = vpop.f32.mrb[0].mxu0
    %1081 = vdwg.mxu0
    %s1082 = scalar_lea.vmem %s4, 64
    %v1083 = vld [vmem:[%s1082] sm:$0xff]
    %v1084 = vld [vmem:[%s1082 + $0x8] sm:$0xff]
    %v1085 = vld [vmem:[%s1082 + $0x10] sm:$0xff]
    %v1086 = vld [vmem:[%s1082 + $0x18] sm:$0xff]
    %1087 = vmatprep.subr.mxu0 0.0
    %1088 = vmatpush1.msra.mxu0 %v1083
    %1089 = vmatprep.subr.mxu0 0.0
    %1090 = vmatpush1.msra.mxu0 %v1084
    %1091 = vmatprep.subr.mxu0 0.0
    %1092 = vmatpush1.msra.mxu0 %v1085
    %1093 = vmatprep.subr.mxu0 0.0
    %1094 = vmatpush1.msra.mxu0 %v1086
    %1095 = vmatprep.subr.mxu0 0.0
    %1096 = vmatpush1.msra.mxu0 0.0
    %1097 = vmatprep.subr.mxu0 0.0
    %1098 = vmatpush1.msra.mxu0 0.0
    %1099 = vmatprep.subr.mxu0 0.0
    %1100 = vmatpush1.msra.mxu0 0.0
    %1101 = vmatprep.subr.mxu0 0.0
    %1102 = vmatpush1.msra.mxu0 0.0
    %1103 = vmatprep.subr.mxu0 0.0
    %1104 = vmatpush1.msra.mxu0 0.0
    %1105 = vmatprep.subr.mxu0 0.0
    %1106 = vmatpush1.msra.mxu0 0.0
    %1107 = vmatprep.subr.mxu0 0.0
    %1108 = vmatpush1.msra.mxu0 0.0
    %1109 = vmatprep.subr.mxu0 0.0
    %1110 = vmatpush1.msra.mxu0 0.0
    %1111 = vmatprep.subr.mxu0 0.0
    %1112 = vmatpush1.msra.mxu0 0.0
    %1113 = vmatprep.subr.mxu0 0.0
    %1114 = vmatpush1.msra.mxu0 0.0
    %1115 = vmatprep.subr.mxu0 0.0
    %1116 = vmatpush1.msra.mxu0 0.0
    %1117 = vmatprep.subr.mxu0 0.0
    %1118 = vmatpush1.msra.mxu0 0.0
    %1119 = vmatprep.subr.mxu0 0.0
    %1120 = vmatpush1.msra.mxu0 0.0
    %1121 = vmatprep.subr.mxu0 0.0
    %1122 = vmatpush1.msra.mxu0 0.0
    %1123 = vmatprep.subr.mxu0 0.0
    %1124 = vmatpush1.msra.mxu0 0.0
    %1125 = vmatprep.subr.mxu0 0.0
    %1126 = vmatpush1.msra.mxu0 0.0
    %1127 = vmatprep.subr.mxu0 0.0
    %1128 = vmatpush1.msra.mxu0 0.0
    %1129 = vmatprep.subr.mxu0 0.0
    %1130 = vmatpush1.msra.mxu0 0.0
    %1131 = vmatprep.subr.mxu0 0.0
    %1132 = vmatpush1.msra.mxu0 0.0
    %1133 = vmatprep.subr.mxu0 0.0
    %1134 = vmatpush1.msra.mxu0 0.0
    %1135 = vmatprep.subr.mxu0 0.0
    %1136 = vmatpush1.msra.mxu0 0.0
    %1137 = vmatprep.subr.mxu0 0.0
    %1138 = vmatpush1.msra.mxu0 0.0
    %1139 = vmatprep.subr.mxu0 0.0
    %1140 = vmatpush1.msra.mxu0 0.0
    %1141 = vmatprep.subr.mxu0 0.0
    %1142 = vmatpush1.msra.mxu0 0.0
    %1143 = vmatprep.subr.mxu0 0.0
    %1144 = vmatpush1.msra.mxu0 0.0
    %1145 = vmatprep.subr.mxu0 0.0
    %1146 = vmatpush1.msra.mxu0 0.0
    %1147 = vmatprep.subr.mxu0 0.0
    %1148 = vmatpush1.msra.mxu0 0.0
    %1149 = vmatprep.subr.mxu0 0.0
    %1150 = vmatpush1.msra.mxu0 0.0
    %1151 = vmatprep.mubr.f32.mxu0 0.0
    %1152 = vmatmul.mubr.f32.gmra.mrb[0].mxu0 %v175
    %v1153 = vpop.f32.mrb[0].mxu0
    %v1154 = vadd.f32 0.0, %v1153
    %v1155 = vpop.f32.mrb[0].mxu0
    %1156 = vmatprep.mubr.f32.mxu0 0.0
    %1157 = vmatmul.mubr.f32.gmra.mrb[0].mxu0 %v178
    %v1158 = vpop.f32.mrb[0].mxu0
    %v1159 = vadd.f32 0.0, %v1158
    %v1160 = vpop.f32.mrb[0].mxu0
    %1161 = vdwg.mxu0
    %s1162 = scalar_lea.vmem %s5, 64
    %v1163 = vld [vmem:[%s1162] sm:$0xff]
    %v1164 = vld [vmem:[%s1162 + $0x8] sm:$0xff]
    %v1165 = vld [vmem:[%s1162 + $0x10] sm:$0xff]
    %v1166 = vld [vmem:[%s1162 + $0x18] sm:$0xff]
    %1167 = vmatprep.subr.mxu0 0.0
    %1168 = vmatpush1.msra.mxu0 %v1163
    %1169 = vmatprep.subr.mxu0 0.0
    %1170 = vmatpush1.msra.mxu0 %v1164
    %1171 = vmatprep.subr.mxu0 0.0
    %1172 = vmatpush1.msra.mxu0 %v1165
    %1173 = vmatprep.subr.mxu0 0.0
    %1174 = vmatpush1.msra.mxu0 %v1166
    %1175 = vmatprep.subr.mxu0 0.0
    %1176 = vmatpush1.msra.mxu0 0.0
    %1177 = vmatprep.subr.mxu0 0.0
    %1178 = vmatpush1.msra.mxu0 0.0
    %1179 = vmatprep.subr.mxu0 0.0
    %1180 = vmatpush1.msra.mxu0 0.0
    %1181 = vmatprep.subr.mxu0 0.0
    %1182 = vmatpush1.msra.mxu0 0.0
    %1183 = vmatprep.subr.mxu0 0.0
    %1184 = vmatpush1.msra.mxu0 0.0
    %1185 = vmatprep.subr.mxu0 0.0
    %1186 = vmatpush1.msra.mxu0 0.0
    %1187 = vmatprep.subr.mxu0 0.0
    %1188 = vmatpush1.msra.mxu0 0.0
    %1189 = vmatprep.subr.mxu0 0.0
    %1190 = vmatpush1.msra.mxu0 0.0
    %1191 = vmatprep.subr.mxu0 0.0
    %1192 = vmatpush1.msra.mxu0 0.0
    %1193 = vmatprep.subr.mxu0 0.0
    %1194 = vmatpush1.msra.mxu0 0.0
    %1195 = vmatprep.subr.mxu0 0.0
    %1196 = vmatpush1.msra.mxu0 0.0
    %1197 = vmatprep.subr.mxu0 0.0
    %1198 = vmatpush1.msra.mxu0 0.0
    %1199 = vmatprep.subr.mxu0 0.0
    %1200 = vmatpush1.msra.mxu0 0.0
    %1201 = vmatprep.subr.mxu0 0.0
    %1202 = vmatpush1.msra.mxu0 0.0
    %1203 = vmatprep.subr.mxu0 0.0
    %1204 = vmatpush1.msra.mxu0 0.0
    %1205 = vmatprep.subr.mxu0 0.0
    %1206 = vmatpush1.msra.mxu0 0.0
    %1207 = vmatprep.subr.mxu0 0.0
    %1208 = vmatpush1.msra.mxu0 0.0
    %1209 = vmatprep.subr.mxu0 0.0
    %1210 = vmatpush1.msra.mxu0 0.0
    %1211 = vmatprep.subr.mxu0 0.0
    %1212 = vmatpush1.msra.mxu0 0.0
    %1213 = vmatprep.subr.mxu0 0.0
    %1214 = vmatpush1.msra.mxu0 0.0
    %1215 = vmatprep.subr.mxu0 0.0
    %1216 = vmatpush1.msra.mxu0 0.0
    %1217 = vmatprep.subr.mxu0 0.0
    %1218 = vmatpush1.msra.mxu0 0.0
    %1219 = vmatprep.subr.mxu0 0.0
    %1220 = vmatpush1.msra.mxu0 0.0
    %1221 = vmatprep.subr.mxu0 0.0
    %1222 = vmatpush1.msra.mxu0 0.0
    %1223 = vmatprep.subr.mxu0 0.0
    %1224 = vmatpush1.msra.mxu0 0.0
    %1225 = vmatprep.subr.mxu0 0.0
    %1226 = vmatpush1.msra.mxu0 0.0
    %1227 = vmatprep.subr.mxu0 0.0
    %1228 = vmatpush1.msra.mxu0 0.0
    %1229 = vmatprep.subr.mxu0 0.0
    %1230 = vmatpush1.msra.mxu0 0.0
    %1231 = vmatprep.mubr.f32.mxu0 0.0
    %1232 = vmatmul.mubr.f32.gmra.mrb[0].mxu0 %v175
    %v1233 = vpop.f32.mrb[0].mxu0
    %v1234 = vadd.f32 0.0, %v1233
    %v1235 = vpop.f32.mrb[0].mxu0
    %1236 = vmatprep.mubr.f32.mxu0 0.0
    %1237 = vmatmul.mubr.f32.gmra.mrb[0].mxu0 %v178
    %v1238 = vpop.f32.mrb[0].mxu0
    %v1239 = vadd.f32 0.0, %v1238
    %v1240 = vpop.f32.mrb[0].mxu0
    %1241 = vdwg.mxu0
    %v1243 = vsel %vm413, %v1074, 0
    %v1246 = vsel %vm413, %v1154, 0
    %1248 = vmatprep.subr.mxu0 0.0
    %1249 = vmatpush1.xpose.msra.mxu0 %v1246
    %1250 = vmatprep.subr.mxu0 0.0
    %1251 = vmatpush1.xpose.msra.mxu0 0.0
    %1252 = vmatprep.subr.mxu0 0.0
    %1253 = vmatpush1.xpose.msra.mxu0 0.0
    %1254 = vmatprep.subr.mxu0 0.0
    %1255 = vmatpush1.xpose.msra.mxu0 0.0
    %1256 = vmatprep.subr.mxu0 0.0
    %1257 = vmatpush1.xpose.msra.mxu0 0.0
    %1258 = vmatprep.subr.mxu0 0.0
    %1259 = vmatpush1.xpose.msra.mxu0 0.0
    %1260 = vmatprep.subr.mxu0 0.0
    %1261 = vmatpush1.xpose.msra.mxu0 0.0
    %1262 = vmatprep.subr.mxu0 0.0
    %1263 = vmatpush1.xpose.msra.mxu0 0.0
    %1264 = vmatprep.subr.mxu0 0.0
    %1265 = vmatpush1.xpose.msra.mxu0 0.0
    %1266 = vmatprep.subr.mxu0 0.0
    %1267 = vmatpush1.xpose.msra.mxu0 0.0
    %1268 = vmatprep.subr.mxu0 0.0
    %1269 = vmatpush1.xpose.msra.mxu0 0.0
    %1270 = vmatprep.subr.mxu0 0.0
    %1271 = vmatpush1.xpose.msra.mxu0 0.0
    %1272 = vmatprep.subr.mxu0 0.0
    %1273 = vmatpush1.xpose.msra.mxu0 0.0
    %1274 = vmatprep.subr.mxu0 0.0
    %1275 = vmatpush1.xpose.msra.mxu0 0.0
    %1276 = vmatprep.subr.mxu0 0.0
    %1277 = vmatpush1.xpose.msra.mxu0 0.0
    %1278 = vmatprep.subr.mxu0 0.0
    %1279 = vmatpush1.xpose.msra.mxu0 0.0
    %1280 = vmatprep.subr.mxu0 0.0
    %1281 = vmatpush1.xpose.msra.mxu0 0.0
    %1282 = vmatprep.subr.mxu0 0.0
    %1283 = vmatpush1.xpose.msra.mxu0 0.0
    %1284 = vmatprep.subr.mxu0 0.0
    %1285 = vmatpush1.xpose.msra.mxu0 0.0
    %1286 = vmatprep.subr.mxu0 0.0
    %1287 = vmatpush1.xpose.msra.mxu0 0.0
    %1288 = vmatprep.subr.mxu0 0.0
    %1289 = vmatpush1.xpose.msra.mxu0 0.0
    %1290 = vmatprep.subr.mxu0 0.0
    %1291 = vmatpush1.xpose.msra.mxu0 0.0
    %1292 = vmatprep.subr.mxu0 0.0
    %1293 = vmatpush1.xpose.msra.mxu0 0.0
    %1294 = vmatprep.subr.mxu0 0.0
    %1295 = vmatpush1.xpose.msra.mxu0 0.0
    %1296 = vmatprep.subr.mxu0 0.0
    %1297 = vmatpush1.xpose.msra.mxu0 0.0
    %1298 = vmatprep.subr.mxu0 0.0
    %1299 = vmatpush1.xpose.msra.mxu0 0.0
    %1300 = vmatprep.subr.mxu0 0.0
    %1301 = vmatpush1.xpose.msra.mxu0 0.0
    %1302 = vmatprep.subr.mxu0 0.0
    %1303 = vmatpush1.xpose.msra.mxu0 0.0
    %1304 = vmatprep.subr.mxu0 0.0
    %1305 = vmatpush1.xpose.msra.mxu0 0.0
    %1306 = vmatprep.subr.mxu0 0.0
    %1307 = vmatpush1.xpose.msra.mxu0 0.0
    %1308 = vmatprep.subr.mxu0 0.0
    %1309 = vmatpush1.xpose.msra.mxu0 0.0
    %1310 = vmatprep.subr.mxu0 0.0
    %1311 = vmatpush1.xpose.msra.mxu0 0.0
    %1312 = vmatprep.mubr.f32.mxu0 0.0
    %1313 = vmatmul.mubr.f32.gmra.mrb[0].mxu0 %v1243
    %v1314 = vpop.f32.mrb[0].mxu0
    %v1315 = vadd.f32 0.0, %v1314
    %v1316 = vpop.f32.mrb[0].mxu0
    %1317 = vdwg.mxu0
    %v1319 = vsel %vm413, %v1079, 0
    %v1322 = vsel %vm413, %v1159, 0
    %1324 = vmatprep.subr.mxu0 0.0
    %1325 = vmatpush1.xpose.msra.mxu0 %v1322
    %1326 = vmatprep.subr.mxu0 0.0
    %1327 = vmatpush1.xpose.msra.mxu0 0.0
    %1328 = vmatprep.subr.mxu0 0.0
    %1329 = vmatpush1.xpose.msra.mxu0 0.0
    %1330 = vmatprep.subr.mxu0 0.0
    %1331 = vmatpush1.xpose.msra.mxu0 0.0
    %1332 = vmatprep.subr.mxu0 0.0
    %1333 = vmatpush1.xpose.msra.mxu0 0.0
    %1334 = vmatprep.subr.mxu0 0.0
    %1335 = vmatpush1.xpose.msra.mxu0 0.0
    %1336 = vmatprep.subr.mxu0 0.0
    %1337 = vmatpush1.xpose.msra.mxu0 0.0
    %1338 = vmatprep.subr.mxu0 0.0
    %1339 = vmatpush1.xpose.msra.mxu0 0.0
    %1340 = vmatprep.subr.mxu0 0.0
    %1341 = vmatpush1.xpose.msra.mxu0 0.0
    %1342 = vmatprep.subr.mxu0 0.0
    %1343 = vmatpush1.xpose.msra.mxu0 0.0
    %1344 = vmatprep.subr.mxu0 0.0
    %1345 = vmatpush1.xpose.msra.mxu0 0.0
    %1346 = vmatprep.subr.mxu0 0.0
    %1347 = vmatpush1.xpose.msra.mxu0 0.0
    %1348 = vmatprep.subr.mxu0 0.0
    %1349 = vmatpush1.xpose.msra.mxu0 0.0
    %1350 = vmatprep.subr.mxu0 0.0
    %1351 = vmatpush1.xpose.msra.mxu0 0.0
    %1352 = vmatprep.subr.mxu0 0.0
    %1353 = vmatpush1.xpose.msra.mxu0 0.0
    %1354 = vmatprep.subr.mxu0 0.0
    %1355 = vmatpush1.xpose.msra.mxu0 0.0
    %1356 = vmatprep.subr.mxu0 0.0
    %1357 = vmatpush1.xpose.msra.mxu0 0.0
    %1358 = vmatprep.subr.mxu0 0.0
    %1359 = vmatpush1.xpose.msra.mxu0 0.0
    %1360 = vmatprep.subr.mxu0 0.0
    %1361 = vmatpush1.xpose.msra.mxu0 0.0
    %1362 = vmatprep.subr.mxu0 0.0
    %1363 = vmatpush1.xpose.msra.mxu0 0.0
    %1364 = vmatprep.subr.mxu0 0.0
    %1365 = vmatpush1.xpose.msra.mxu0 0.0
    %1366 = vmatprep.subr.mxu0 0.0
    %1367 = vmatpush1.xpose.msra.mxu0 0.0
    %1368 = vmatprep.subr.mxu0 0.0
    %1369 = vmatpush1.xpose.msra.mxu0 0.0
    %1370 = vmatprep.subr.mxu0 0.0
    %1371 = vmatpush1.xpose.msra.mxu0 0.0
    %1372 = vmatprep.subr.mxu0 0.0
    %1373 = vmatpush1.xpose.msra.mxu0 0.0
    %1374 = vmatprep.subr.mxu0 0.0
    %1375 = vmatpush1.xpose.msra.mxu0 0.0
    %1376 = vmatprep.subr.mxu0 0.0
    %1377 = vmatpush1.xpose.msra.mxu0 0.0
    %1378 = vmatprep.subr.mxu0 0.0
    %1379 = vmatpush1.xpose.msra.mxu0 0.0
    %1380 = vmatprep.subr.mxu0 0.0
    %1381 = vmatpush1.xpose.msra.mxu0 0.0
    %1382 = vmatprep.subr.mxu0 0.0
    %1383 = vmatpush1.xpose.msra.mxu0 0.0
    %1384 = vmatprep.subr.mxu0 0.0
    %1385 = vmatpush1.xpose.msra.mxu0 0.0
    %1386 = vmatprep.subr.mxu0 0.0
    %1387 = vmatpush1.xpose.msra.mxu0 0.0
    %1388 = vmatprep.mubr.f32.mxu0 0.0
    %1389 = vmatmul.mubr.f32.gmra.mrb[0].mxu0 %v1319
    %v1390 = vpop.f32.mrb[0].mxu0
    %v1391 = vadd.f32 0.0, %v1390
    %v1392 = vpop.f32.mrb[0].mxu0
    %1393 = vdwg.mxu0
    %v1394 = vsel %vm413, %v1315, -inf
    %1395 = vmax.xlane.f32.xlu0 %v1394
    %v1396 = vpop.xlane.xlu0 %1395
    %v1397 = vsel %vm413, %v1391, -inf
    %1398 = vmax.xlane.f32.xlu0 %v1397
    %v1399 = vpop.xlane.xlu0 %1398
    %v1400 = vsub.f32 %v1315, %v1396
    %v1401 = vsub.f32 %v1391, %v1399
    %v1402 = vmul.f32 %v1400, 1.442695
    %v1403 = vpow.pop %v1402
    %v1404 = vmul.f32 %v1401, 1.442695
    %v1405 = vpow.pop %v1404
    %v1406 = vsel %vm413, %v1403, 0.0
    %1407 = vadd.xlane.f32.xlu0 %v1406
    %v1408 = vpop.xlane.xlu0 %1407
    %v1409 = vsel %vm413, %v1405, 0.0
    %1410 = vadd.xlane.f32.xlu0 %v1409
    %v1411 = vpop.xlane.xlu0 %1410
    %v1412 = vrcp.pop %v1408
    %v1413 = vmul.f32 %v1403, %v1412
    %v1414 = vrcp.pop %v1411
    %v1415 = vmul.f32 %v1405, %v1414
    %s1416 = scalar_lea.vmem %s3, 96
    %v1417 = vld [vmem:[%s1416] sm:$0xff]
    %v1418 = vld [vmem:[%s1416 + $0x8] sm:$0xff]
    %v1419 = vld [vmem:[%s1416 + $0x10] sm:$0xff]
    %v1420 = vld [vmem:[%s1416 + $0x18] sm:$0xff]
    %1421 = vmatprep.subr.mxu0 0.0
    %1422 = vmatpush1.msra.mxu0 %v1417
    %1423 = vmatprep.subr.mxu0 0.0
    %1424 = vmatpush1.msra.mxu0 %v1418
    %1425 = vmatprep.subr.mxu0 0.0
    %1426 = vmatpush1.msra.mxu0 %v1419
    %1427 = vmatprep.subr.mxu0 0.0
    %1428 = vmatpush1.msra.mxu0 %v1420
    %1429 = vmatprep.subr.mxu0 0.0
    %1430 = vmatpush1.msra.mxu0 0.0
    %1431 = vmatprep.subr.mxu0 0.0
    %1432 = vmatpush1.msra.mxu0 0.0
    %1433 = vmatprep.subr.mxu0 0.0
    %1434 = vmatpush1.msra.mxu0 0.0
    %1435 = vmatprep.subr.mxu0 0.0
    %1436 = vmatpush1.msra.mxu0 0.0
    %1437 = vmatprep.subr.mxu0 0.0
    %1438 = vmatpush1.msra.mxu0 0.0
    %1439 = vmatprep.subr.mxu0 0.0
    %1440 = vmatpush1.msra.mxu0 0.0
    %1441 = vmatprep.subr.mxu0 0.0
    %1442 = vmatpush1.msra.mxu0 0.0
    %1443 = vmatprep.subr.mxu0 0.0
    %1444 = vmatpush1.msra.mxu0 0.0
    %1445 = vmatprep.subr.mxu0 0.0
    %1446 = vmatpush1.msra.mxu0 0.0
    %1447 = vmatprep.subr.mxu0 0.0
    %1448 = vmatpush1.msra.mxu0 0.0
    %1449 = vmatprep.subr.mxu0 0.0
    %1450 = vmatpush1.msra.mxu0 0.0
    %1451 = vmatprep.subr.mxu0 0.0
    %1452 = vmatpush1.msra.mxu0 0.0
    %1453 = vmatprep.subr.mxu0 0.0
    %1454 = vmatpush1.msra.mxu0 0.0
    %1455 = vmatprep.subr.mxu0 0.0
    %1456 = vmatpush1.msra.mxu0 0.0
    %1457 = vmatprep.subr.mxu0 0.0
    %1458 = vmatpush1.msra.mxu0 0.0
    %1459 = vmatprep.subr.mxu0 0.0
    %1460 = vmatpush1.msra.mxu0 0.0
    %1461 = vmatprep.subr.mxu0 0.0
    %1462 = vmatpush1.msra.mxu0 0.0
    %1463 = vmatprep.subr.mxu0 0.0
    %1464 = vmatpush1.msra.mxu0 0.0
    %1465 = vmatprep.subr.mxu0 0.0
    %1466 = vmatpush1.msra.mxu0 0.0
    %1467 = vmatprep.subr.mxu0 0.0
    %1468 = vmatpush1.msra.mxu0 0.0
    %1469 = vmatprep.subr.mxu0 0.0
    %1470 = vmatpush1.msra.mxu0 0.0
    %1471 = vmatprep.subr.mxu0 0.0
    %1472 = vmatpush1.msra.mxu0 0.0
    %1473 = vmatprep.subr.mxu0 0.0
    %1474 = vmatpush1.msra.mxu0 0.0
    %1475 = vmatprep.subr.mxu0 0.0
    %1476 = vmatpush1.msra.mxu0 0.0
    %1477 = vmatprep.subr.mxu0 0.0
    %1478 = vmatpush1.msra.mxu0 0.0
    %1479 = vmatprep.subr.mxu0 0.0
    %1480 = vmatpush1.msra.mxu0 0.0
    %1481 = vmatprep.subr.mxu0 0.0
    %1482 = vmatpush1.msra.mxu0 0.0
    %1483 = vmatprep.subr.mxu0 0.0
    %1484 = vmatpush1.msra.mxu0 0.0
    %1485 = vmatprep.mubr.f32.mxu0 0.0
    %1486 = vmatmul.mubr.f32.gmra.mrb[0].mxu0 %v175
    %v1487 = vpop.f32.mrb[0].mxu0
    %v1488 = vadd.f32 0.0, %v1487
    %v1489 = vpop.f32.mrb[0].mxu0
    %1490 = vmatprep.mubr.f32.mxu0 0.0
    %1491 = vmatmul.mubr.f32.gmra.mrb[0].mxu0 %v178
    %v1492 = vpop.f32.mrb[0].mxu0
    %v1493 = vadd.f32 0.0, %v1492
    %v1494 = vpop.f32.mrb[0].mxu0
    %1495 = vdwg.mxu0
    %s1496 = scalar_lea.vmem %s4, 96
    %v1497 = vld [vmem:[%s1496] sm:$0xff]
    %v1498 = vld [vmem:[%s1496 + $0x8] sm:$0xff]
    %v1499 = vld [vmem:[%s1496 + $0x10] sm:$0xff]
    %v1500 = vld [vmem:[%s1496 + $0x18] sm:$0xff]
    %1501 = vmatprep.subr.mxu0 0.0
    %1502 = vmatpush1.msra.mxu0 %v1497
    %1503 = vmatprep.subr.mxu0 0.0
    %1504 = vmatpush1.msra.mxu0 %v1498
    %1505 = vmatprep.subr.mxu0 0.0
    %1506 = vmatpush1.msra.mxu0 %v1499
    %1507 = vmatprep.subr.mxu0 0.0
    %1508 = vmatpush1.msra.mxu0 %v1500
    %1509 = vmatprep.subr.mxu0 0.0
    %1510 = vmatpush1.msra.mxu0 0.0
    %1511 = vmatprep.subr.mxu0 0.0
    %1512 = vmatpush1.msra.mxu0 0.0
    %1513 = vmatprep.subr.mxu0 0.0
    %1514 = vmatpush1.msra.mxu0 0.0
    %1515 = vmatprep.subr.mxu0 0.0
    %1516 = vmatpush1.msra.mxu0 0.0
    %1517 = vmatprep.subr.mxu0 0.0
    %1518 = vmatpush1.msra.mxu0 0.0
    %1519 = vmatprep.subr.mxu0 0.0
    %1520 = vmatpush1.msra.mxu0 0.0
    %1521 = vmatprep.subr.mxu0 0.0
    %1522 = vmatpush1.msra.mxu0 0.0
    %1523 = vmatprep.subr.mxu0 0.0
    %1524 = vmatpush1.msra.mxu0 0.0
    %1525 = vmatprep.subr.mxu0 0.0
    %1526 = vmatpush1.msra.mxu0 0.0
    %1527 = vmatprep.subr.mxu0 0.0
    %1528 = vmatpush1.msra.mxu0 0.0
    %1529 = vmatprep.subr.mxu0 0.0
    %1530 = vmatpush1.msra.mxu0 0.0
    %1531 = vmatprep.subr.mxu0 0.0
    %1532 = vmatpush1.msra.mxu0 0.0
    %1533 = vmatprep.subr.mxu0 0.0
    %1534 = vmatpush1.msra.mxu0 0.0
    %1535 = vmatprep.subr.mxu0 0.0
    %1536 = vmatpush1.msra.mxu0 0.0
    %1537 = vmatprep.subr.mxu0 0.0
    %1538 = vmatpush1.msra.mxu0 0.0
    %1539 = vmatprep.subr.mxu0 0.0
    %1540 = vmatpush1.msra.mxu0 0.0
    %1541 = vmatprep.subr.mxu0 0.0
    %1542 = vmatpush1.msra.mxu0 0.0
    %1543 = vmatprep.subr.mxu0 0.0
    %1544 = vmatpush1.msra.mxu0 0.0
    %1545 = vmatprep.subr.mxu0 0.0
    %1546 = vmatpush1.msra.mxu0 0.0
    %1547 = vmatprep.subr.mxu0 0.0
    %1548 = vmatpush1.msra.mxu0 0.0
    %1549 = vmatprep.subr.mxu0 0.0
    %1550 = vmatpush1.msra.mxu0 0.0
    %1551 = vmatprep.subr.mxu0 0.0
    %1552 = vmatpush1.msra.mxu0 0.0
    %1553 = vmatprep.subr.mxu0 0.0
    %1554 = vmatpush1.msra.mxu0 0.0
    %1555 = vmatprep.subr.mxu0 0.0
    %1556 = vmatpush1.msra.mxu0 0.0
    %1557 = vmatprep.subr.mxu0 0.0
    %1558 = vmatpush1.msra.mxu0 0.0
    %1559 = vmatprep.subr.mxu0 0.0
    %1560 = vmatpush1.msra.mxu0 0.0
    %1561 = vmatprep.subr.mxu0 0.0
    %1562 = vmatpush1.msra.mxu0 0.0
    %1563 = vmatprep.subr.mxu0 0.0
    %1564 = vmatpush1.msra.mxu0 0.0
    %1565 = vmatprep.mubr.f32.mxu0 0.0
    %1566 = vmatmul.mubr.f32.gmra.mrb[0].mxu0 %v175
    %v1567 = vpop.f32.mrb[0].mxu0
    %v1568 = vadd.f32 0.0, %v1567
    %v1569 = vpop.f32.mrb[0].mxu0
    %1570 = vmatprep.mubr.f32.mxu0 0.0
    %1571 = vmatmul.mubr.f32.gmra.mrb[0].mxu0 %v178
    %v1572 = vpop.f32.mrb[0].mxu0
    %v1573 = vadd.f32 0.0, %v1572
    %v1574 = vpop.f32.mrb[0].mxu0
    %1575 = vdwg.mxu0
    %s1576 = scalar_lea.vmem %s5, 96
    %v1577 = vld [vmem:[%s1576] sm:$0xff]
    %v1578 = vld [vmem:[%s1576 + $0x8] sm:$0xff]
    %v1579 = vld [vmem:[%s1576 + $0x10] sm:$0xff]
    %v1580 = vld [vmem:[%s1576 + $0x18] sm:$0xff]
    %1581 = vmatprep.subr.mxu0 0.0
    %1582 = vmatpush1.msra.mxu0 %v1577
    %1583 = vmatprep.subr.mxu0 0.0
    %1584 = vmatpush1.msra.mxu0 %v1578
    %1585 = vmatprep.subr.mxu0 0.0
    %1586 = vmatpush1.msra.mxu0 %v1579
    %1587 = vmatprep.subr.mxu0 0.0
    %1588 = vmatpush1.msra.mxu0 %v1580
    %1589 = vmatprep.subr.mxu0 0.0
    %1590 = vmatpush1.msra.mxu0 0.0
    %1591 = vmatprep.subr.mxu0 0.0
    %1592 = vmatpush1.msra.mxu0 0.0
    %1593 = vmatprep.subr.mxu0 0.0
    %1594 = vmatpush1.msra.mxu0 0.0
    %1595 = vmatprep.subr.mxu0 0.0
    %1596 = vmatpush1.msra.mxu0 0.0
    %1597 = vmatprep.subr.mxu0 0.0
    %1598 = vmatpush1.msra.mxu0 0.0
    %1599 = vmatprep.subr.mxu0 0.0
    %1600 = vmatpush1.msra.mxu0 0.0
    %1601 = vmatprep.subr.mxu0 0.0
    %1602 = vmatpush1.msra.mxu0 0.0
    %1603 = vmatprep.subr.mxu0 0.0
    %1604 = vmatpush1.msra.mxu0 0.0
    %1605 = vmatprep.subr.mxu0 0.0
    %1606 = vmatpush1.msra.mxu0 0.0
    %1607 = vmatprep.subr.mxu0 0.0
    %1608 = vmatpush1.msra.mxu0 0.0
    %1609 = vmatprep.subr.mxu0 0.0
    %1610 = vmatpush1.msra.mxu0 0.0
    %1611 = vmatprep.subr.mxu0 0.0
    %1612 = vmatpush1.msra.mxu0 0.0
    %1613 = vmatprep.subr.mxu0 0.0
    %1614 = vmatpush1.msra.mxu0 0.0
    %1615 = vmatprep.subr.mxu0 0.0
    %1616 = vmatpush1.msra.mxu0 0.0
    %1617 = vmatprep.subr.mxu0 0.0
    %1618 = vmatpush1.msra.mxu0 0.0
    %1619 = vmatprep.subr.mxu0 0.0
    %1620 = vmatpush1.msra.mxu0 0.0
    %1621 = vmatprep.subr.mxu0 0.0
    %1622 = vmatpush1.msra.mxu0 0.0
    %1623 = vmatprep.subr.mxu0 0.0
    %1624 = vmatpush1.msra.mxu0 0.0
    %1625 = vmatprep.subr.mxu0 0.0
    %1626 = vmatpush1.msra.mxu0 0.0
    %1627 = vmatprep.subr.mxu0 0.0
    %1628 = vmatpush1.msra.mxu0 0.0
    %1629 = vmatprep.subr.mxu0 0.0
    %1630 = vmatpush1.msra.mxu0 0.0
    %1631 = vmatprep.subr.mxu0 0.0
    %1632 = vmatpush1.msra.mxu0 0.0
    %1633 = vmatprep.subr.mxu0 0.0
    %1634 = vmatpush1.msra.mxu0 0.0
    %1635 = vmatprep.subr.mxu0 0.0
    %1636 = vmatpush1.msra.mxu0 0.0
    %1637 = vmatprep.subr.mxu0 0.0
    %1638 = vmatpush1.msra.mxu0 0.0
    %1639 = vmatprep.subr.mxu0 0.0
    %1640 = vmatpush1.msra.mxu0 0.0
    %1641 = vmatprep.subr.mxu0 0.0
    %1642 = vmatpush1.msra.mxu0 0.0
    %1643 = vmatprep.subr.mxu0 0.0
    %1644 = vmatpush1.msra.mxu0 0.0
    %1645 = vmatprep.mubr.f32.mxu0 0.0
    %1646 = vmatmul.mubr.f32.gmra.mrb[0].mxu0 %v175
    %v1647 = vpop.f32.mrb[0].mxu0
    %v1648 = vadd.f32 0.0, %v1647
    %v1649 = vpop.f32.mrb[0].mxu0
    %1650 = vmatprep.mubr.f32.mxu0 0.0
    %1651 = vmatmul.mubr.f32.gmra.mrb[0].mxu0 %v178
    %v1652 = vpop.f32.mrb[0].mxu0
    %v1653 = vadd.f32 0.0, %v1652
    %v1654 = vpop.f32.mrb[0].mxu0
    %1655 = vdwg.mxu0
    %v1657 = vsel %vm413, %v1488, 0
    %v1660 = vsel %vm413, %v1568, 0
    %1662 = vmatprep.subr.mxu0 0.0
    %1663 = vmatpush1.xpose.msra.mxu0 %v1660
    %1664 = vmatprep.subr.mxu0 0.0
    %1665 = vmatpush1.xpose.msra.mxu0 0.0
    %1666 = vmatprep.subr.mxu0 0.0
    %1667 = vmatpush1.xpose.msra.mxu0 0.0
    %1668 = vmatprep.subr.mxu0 0.0
    %1669 = vmatpush1.xpose.msra.mxu0 0.0
    %1670 = vmatprep.subr.mxu0 0.0
    %1671 = vmatpush1.xpose.msra.mxu0 0.0
    %1672 = vmatprep.subr.mxu0 0.0
    %1673 = vmatpush1.xpose.msra.mxu0 0.0
    %1674 = vmatprep.subr.mxu0 0.0
    %1675 = vmatpush1.xpose.msra.mxu0 0.0
    %1676 = vmatprep.subr.mxu0 0.0
    %1677 = vmatpush1.xpose.msra.mxu0 0.0
    %1678 = vmatprep.subr.mxu0 0.0
    %1679 = vmatpush1.xpose.msra.mxu0 0.0
    %1680 = vmatprep.subr.mxu0 0.0
    %1681 = vmatpush1.xpose.msra.mxu0 0.0
    %1682 = vmatprep.subr.mxu0 0.0
    %1683 = vmatpush1.xpose.msra.mxu0 0.0
    %1684 = vmatprep.subr.mxu0 0.0
    %1685 = vmatpush1.xpose.msra.mxu0 0.0
    %1686 = vmatprep.subr.mxu0 0.0
    %1687 = vmatpush1.xpose.msra.mxu0 0.0
    %1688 = vmatprep.subr.mxu0 0.0
    %1689 = vmatpush1.xpose.msra.mxu0 0.0
    %1690 = vmatprep.subr.mxu0 0.0
    %1691 = vmatpush1.xpose.msra.mxu0 0.0
    %1692 = vmatprep.subr.mxu0 0.0
    %1693 = vmatpush1.xpose.msra.mxu0 0.0
    %1694 = vmatprep.subr.mxu0 0.0
    %1695 = vmatpush1.xpose.msra.mxu0 0.0
    %1696 = vmatprep.subr.mxu0 0.0
    %1697 = vmatpush1.xpose.msra.mxu0 0.0
    %1698 = vmatprep.subr.mxu0 0.0
    %1699 = vmatpush1.xpose.msra.mxu0 0.0
    %1700 = vmatprep.subr.mxu0 0.0
    %1701 = vmatpush1.xpose.msra.mxu0 0.0
    %1702 = vmatprep.subr.mxu0 0.0
    %1703 = vmatpush1.xpose.msra.mxu0 0.0
    %1704 = vmatprep.subr.mxu0 0.0
    %1705 = vmatpush1.xpose.msra.mxu0 0.0
    %1706 = vmatprep.subr.mxu0 0.0
    %1707 = vmatpush1.xpose.msra.mxu0 0.0
    %1708 = vmatprep.subr.mxu0 0.0
    %1709 = vmatpush1.xpose.msra.mxu0 0.0
    %1710 = vmatprep.subr.mxu0 0.0
    %1711 = vmatpush1.xpose.msra.mxu0 0.0
    %1712 = vmatprep.subr.mxu0 0.0
    %1713 = vmatpush1.xpose.msra.mxu0 0.0
    %1714 = vmatprep.subr.mxu0 0.0
    %1715 = vmatpush1.xpose.msra.mxu0 0.0
    %1716 = vmatprep.subr.mxu0 0.0
    %1717 = vmatpush1.xpose.msra.mxu0 0.0
    %1718 = vmatprep.subr.mxu0 0.0
    %1719 = vmatpush1.xpose.msra.mxu0 0.0
    %1720 = vmatprep.subr.mxu0 0.0
    %1721 = vmatpush1.xpose.msra.mxu0 0.0
    %1722 = vmatprep.subr.mxu0 0.0
    %1723 = vmatpush1.xpose.msra.mxu0 0.0
    %1724 = vmatprep.subr.mxu0 0.0
    %1725 = vmatpush1.xpose.msra.mxu0 0.0
    %1726 = vmatprep.mubr.f32.mxu0 0.0
    %1727 = vmatmul.mubr.f32.gmra.mrb[0].mxu0 %v1657
    %v1728 = vpop.f32.mrb[0].mxu0
    %v1729 = vadd.f32 0.0, %v1728
    %v1730 = vpop.f32.mrb[0].mxu0
    %1731 = vdwg.mxu0
    %v1733 = vsel %vm413, %v1493, 0
    %v1736 = vsel %vm413, %v1573, 0
    %1738 = vmatprep.subr.mxu0 0.0
    %1739 = vmatpush1.xpose.msra.mxu0 %v1736
    %1740 = vmatprep.subr.mxu0 0.0
    %1741 = vmatpush1.xpose.msra.mxu0 0.0
    %1742 = vmatprep.subr.mxu0 0.0
    %1743 = vmatpush1.xpose.msra.mxu0 0.0
    %1744 = vmatprep.subr.mxu0 0.0
    %1745 = vmatpush1.xpose.msra.mxu0 0.0
    %1746 = vmatprep.subr.mxu0 0.0
    %1747 = vmatpush1.xpose.msra.mxu0 0.0
    %1748 = vmatprep.subr.mxu0 0.0
    %1749 = vmatpush1.xpose.msra.mxu0 0.0
    %1750 = vmatprep.subr.mxu0 0.0
    %1751 = vmatpush1.xpose.msra.mxu0 0.0
    %1752 = vmatprep.subr.mxu0 0.0
    %1753 = vmatpush1.xpose.msra.mxu0 0.0
    %1754 = vmatprep.subr.mxu0 0.0
    %1755 = vmatpush1.xpose.msra.mxu0 0.0
    %1756 = vmatprep.subr.mxu0 0.0
    %1757 = vmatpush1.xpose.msra.mxu0 0.0
    %1758 = vmatprep.subr.mxu0 0.0
    %1759 = vmatpush1.xpose.msra.mxu0 0.0
    %1760 = vmatprep.subr.mxu0 0.0
    %1761 = vmatpush1.xpose.msra.mxu0 0.0
    %1762 = vmatprep.subr.mxu0 0.0
    %1763 = vmatpush1.xpose.msra.mxu0 0.0
    %1764 = vmatprep.subr.mxu0 0.0
    %1765 = vmatpush1.xpose.msra.mxu0 0.0
    %1766 = vmatprep.subr.mxu0 0.0
    %1767 = vmatpush1.xpose.msra.mxu0 0.0
    %1768 = vmatprep.subr.mxu0 0.0
    %1769 = vmatpush1.xpose.msra.mxu0 0.0
    %1770 = vmatprep.subr.mxu0 0.0
    %1771 = vmatpush1.xpose.msra.mxu0 0.0
    %1772 = vmatprep.subr.mxu0 0.0
    %1773 = vmatpush1.xpose.msra.mxu0 0.0
    %1774 = vmatprep.subr.mxu0 0.0
    %1775 = vmatpush1.xpose.msra.mxu0 0.0
    %1776 = vmatprep.subr.mxu0 0.0
    %1777 = vmatpush1.xpose.msra.mxu0 0.0
    %1778 = vmatprep.subr.mxu0 0.0
    %1779 = vmatpush1.xpose.msra.mxu0 0.0
    %1780 = vmatprep.subr.mxu0 0.0
    %1781 = vmatpush1.xpose.msra.mxu0 0.0
    %1782 = vmatprep.subr.mxu0 0.0
    %1783 = vmatpush1.xpose.msra.mxu0 0.0
    %1784 = vmatprep.subr.mxu0 0.0
    %1785 = vmatpush1.xpose.msra.mxu0 0.0
    %1786 = vmatprep.subr.mxu0 0.0
    %1787 = vmatpush1.xpose.msra.mxu0 0.0
    %1788 = vmatprep.subr.mxu0 0.0
    %1789 = vmatpush1.xpose.msra.mxu0 0.0
    %1790 = vmatprep.subr.mxu0 0.0
    %1791 = vmatpush1.xpose.msra.mxu0 0.0
    %1792 = vmatprep.subr.mxu0 0.0
    %1793 = vmatpush1.xpose.msra.mxu0 0.0
    %1794 = vmatprep.subr.mxu0 0.0
    %1795 = vmatpush1.xpose.msra.mxu0 0.0
    %1796 = vmatprep.subr.mxu0 0.0
    %1797 = vmatpush1.xpose.msra.mxu0 0.0
    %1798 = vmatprep.subr.mxu0 0.0
    %1799 = vmatpush1.xpose.msra.mxu0 0.0
    %1800 = vmatprep.subr.mxu0 0.0
    %1801 = vmatpush1.xpose.msra.mxu0 0.0
    %1802 = vmatprep.mubr.f32.mxu0 0.0
    %1803 = vmatmul.mubr.f32.gmra.mrb[0].mxu0 %v1733
    %v1804 = vpop.f32.mrb[0].mxu0
    %v1805 = vadd.f32 0.0, %v1804
    %v1806 = vpop.f32.mrb[0].mxu0
    %1807 = vdwg.mxu0
    %v1808 = vsel %vm413, %v1729, -inf
    %1809 = vmax.xlane.f32.xlu0 %v1808
    %v1810 = vpop.xlane.xlu0 %1809
    %v1811 = vsel %vm413, %v1805, -inf
    %1812 = vmax.xlane.f32.xlu0 %v1811
    %v1813 = vpop.xlane.xlu0 %1812
    %v1814 = vsub.f32 %v1729, %v1810
    %v1815 = vsub.f32 %v1805, %v1813
    %v1816 = vmul.f32 %v1814, 1.442695
    %v1817 = vpow.pop %v1816
    %v1818 = vmul.f32 %v1815, 1.442695
    %v1819 = vpow.pop %v1818
    %v1820 = vsel %vm413, %v1817, 0.0
    %1821 = vadd.xlane.f32.xlu0 %v1820
    %v1822 = vpop.xlane.xlu0 %1821
    %v1823 = vsel %vm413, %v1819, 0.0
    %1824 = vadd.xlane.f32.xlu0 %v1823
    %v1825 = vpop.xlane.xlu0 %1824
    %v1826 = vrcp.pop %v1822
    %v1827 = vmul.f32 %v1817, %v1826
    %v1828 = vrcp.pop %v1825
    %v1829 = vmul.f32 %v1819, %v1828
    %s1830 = sld [smem:[#allocation7]]
    %s1831 = sld [smem:[#allocation6]]
    %v1832 = vstv %s1831
    %v1833 = vmul.f32 %v1832, %v585
    %v1834 = vmul.f32 %v1832, %v587
    %v1835 = vstv %s1830
    %v1836 = vadd.f32 %v1835, %v1833
    %v1837 = vadd.f32 %v1835, %v1834
    %s1838 = sld [smem:[#allocation6 + $0x1]]
    %v1839 = vstv %s1838
    %v1840 = vmul.f32 %v1839, %v999
    %v1841 = vmul.f32 %v1839, %v1001
    %v1842 = vadd.f32 %v1836, %v1840
    %v1843 = vadd.f32 %v1837, %v1841
    %s1844 = sld [smem:[#allocation6 + $0x2]]
    %v1845 = vstv %s1844
    %v1846 = vmul.f32 %v1845, %v1413
    %v1847 = vmul.f32 %v1845, %v1415
    %v1848 = vadd.f32 %v1842, %v1846
    %v1849 = vadd.f32 %v1843, %v1847
    %s1850 = sld [smem:[#allocation6 + $0x3]]
    %v1851 = vstv %s1850
    %v1852 = vmul.f32 %v1851, %v1827
    %v1853 = vmul.f32 %v1851, %v1829
    %v1854 = vadd.f32 %v1848, %v1852
    %v1855 = vadd.f32 %v1849, %v1853
    %v1856 = vsel %vm413, %v1854, 0.0
    %v1857 = vsel %vm413, %v1855, 0.0
    %v1858 = vadd.f32 %v1856, %v1857
    %1859 = vadd.xlane.f32.xlu0 %v1858
    %v1860 = vpop.xlane.xlu0 %1859
    %v1861 = vrot.slane %v1860, 4
    %v1862 = vadd.f32 %v1860, %v1861
    %v1863 = vrot.slane %v1862, 2
    %v1864 = vadd.f32 %v1862, %v1863
    %v1865 = vrot.slane %v1864, 1
    %v1866 = vadd.f32 %v1864, %v1865
    %s1867 = vtos %v1866
    %v1868 = vrcp.pop 128.0
    %s1869 = vtos %v1868
    %s1870 = smul.f32 %s1867, %s1869
    %v1871 = vstv %s1870
    %v1872 = vsub.f32 %v1854, %v1871
    %v1873 = vsub.f32 %v1855, %v1871
    %v1874 = vmul.f32 %v1872, %v1872
    %v1875 = vmul.f32 %v1873, %v1873
    %v1876 = vsel %vm413, %v1874, 0.0
    %v1877 = vsel %vm413, %v1875, 0.0
    %v1878 = vadd.f32 %v1876, %v1877
    %1879 = vadd.xlane.f32.xlu0 %v1878
    %v1880 = vpop.xlane.xlu0 %1879
    %v1881 = vrot.slane %v1880, 4
    %v1882 = vadd.f32 %v1880, %v1881
    %v1883 = vrot.slane %v1882, 2
    %v1884 = vadd.f32 %v1882, %v1883
    %v1885 = vrot.slane %v1884, 1
    %v1886 = vadd.f32 %v1884, %v1885
    %s1887 = vtos %v1886
    %v1888 = vrcp.pop 128.0
    %s1889 = vtos %v1888
    %s1890 = smul.f32 %s1887, %s1889
    %s1891 = sadd.f32 %s1890, 1e-05
    %v1892 = vstv %s1891
    %v1893 = vrsqrt.pop %v1892
    %s1894 = vtos %v1893
    %v1895 = vstv %s1894
    %v1896 = vmul.f32 %v1872, %v1895
    %v1897 = vmul.f32 %v1873, %v1895
    %s1898 = sld [smem:[#allocation9]]
    %v1899 = vstv %s1898
    %v1900 = vmul.f32 %v1896, %v1899
    %v1901 = vmul.f32 %v1897, %v1899
    %s1902 = sld [smem:[#allocation10]]
    %v1903 = vstv %s1902
    %v1904 = vadd.f32 %v1900, %v1903
    %v1905 = vadd.f32 %v1901, %v1903
    %v1907 = vsel %vm413, %v1904, 0
    %1909 = vmatprep.subr.mxu0 0.0
    %1910 = vmatpush1.msra.mxu0 %v405
    %1911 = vmatprep.subr.mxu0 0.0
    %1912 = vmatpush1.msra.mxu0 0.0
    %1913 = vmatprep.subr.mxu0 0.0
    %1914 = vmatpush1.msra.mxu0 0.0
    %1915 = vmatprep.subr.mxu0 0.0
    %1916 = vmatpush1.msra.mxu0 0.0
    %1917 = vmatprep.subr.mxu0 0.0
    %1918 = vmatpush1.msra.mxu0 0.0
    %1919 = vmatprep.subr.mxu0 0.0
    %1920 = vmatpush1.msra.mxu0 0.0
    %1921 = vmatprep.subr.mxu0 0.0
    %1922 = vmatpush1.msra.mxu0 0.0
    %1923 = vmatprep.subr.mxu0 0.0
    %1924 = vmatpush1.msra.mxu0 0.0
    %1925 = vmatprep.subr.mxu0 0.0
    %1926 = vmatpush1.msra.mxu0 0.0
    %1927 = vmatprep.subr.mxu0 0.0
    %1928 = vmatpush1.msra.mxu0 0.0
    %1929 = vmatprep.subr.mxu0 0.0
    %1930 = vmatpush1.msra.mxu0 0.0
    %1931 = vmatprep.subr.mxu0 0.0
    %1932 = vmatpush1.msra.mxu0 0.0
    %1933 = vmatprep.subr.mxu0 0.0
    %1934 = vmatpush1.msra.mxu0 0.0
    %1935 = vmatprep.subr.mxu0 0.0
    %1936 = vmatpush1.msra.mxu0 0.0
    %1937 = vmatprep.subr.mxu0 0.0
    %1938 = vmatpush1.msra.mxu0 0.0
    %1939 = vmatprep.subr.mxu0 0.0
    %1940 = vmatpush1.msra.mxu0 0.0
    %1941 = vmatprep.subr.mxu0 0.0
    %1942 = vmatpush1.msra.mxu0 0.0
    %1943 = vmatprep.subr.mxu0 0.0
    %1944 = vmatpush1.msra.mxu0 0.0
    %1945 = vmatprep.subr.mxu0 0.0
    %1946 = vmatpush1.msra.mxu0 0.0
    %1947 = vmatprep.subr.mxu0 0.0
    %1948 = vmatpush1.msra.mxu0 0.0
    %1949 = vmatprep.subr.mxu0 0.0
    %1950 = vmatpush1.msra.mxu0 0.0
    %1951 = vmatprep.subr.mxu0 0.0
    %1952 = vmatpush1.msra.mxu0 0.0
    %1953 = vmatprep.subr.mxu0 0.0
    %1954 = vmatpush1.msra.mxu0 0.0
    %1955 = vmatprep.subr.mxu0 0.0
    %1956 = vmatpush1.msra.mxu0 0.0
    %1957 = vmatprep.subr.mxu0 0.0
    %1958 = vmatpush1.msra.mxu0 0.0
    %1959 = vmatprep.subr.mxu0 0.0
    %1960 = vmatpush1.msra.mxu0 0.0
    %1961 = vmatprep.subr.mxu0 0.0
    %1962 = vmatpush1.msra.mxu0 0.0
    %1963 = vmatprep.subr.mxu0 0.0
    %1964 = vmatpush1.msra.mxu0 0.0
    %1965 = vmatprep.subr.mxu0 0.0
    %1966 = vmatpush1.msra.mxu0 0.0
    %1967 = vmatprep.subr.mxu0 0.0
    %1968 = vmatpush1.msra.mxu0 0.0
    %1969 = vmatprep.subr.mxu0 0.0
    %1970 = vmatpush1.msra.mxu0 0.0
    %1971 = vmatprep.subr.mxu0 0.0
    %1972 = vmatpush1.msra.mxu0 0.0
    %1973 = vmatprep.mubr.f32.mxu0 0.0
    %1974 = vmatmul.mubr.f32.gmra.mrb[0].mxu0 %v1907
    %v1975 = vpop.f32.mrb[0].mxu0
    %v1976 = vadd.f32 0.0, %v1975
    %v1977 = vpop.f32.mrb[0].mxu0
    %1978 = vdwg.mxu0
    %v1980 = vsel %vm413, %v1905, 0
    %1982 = vmatprep.subr.mxu0 0.0
    %1983 = vmatpush1.msra.mxu0 %v410
    %1984 = vmatprep.subr.mxu0 0.0
    %1985 = vmatpush1.msra.mxu0 0.0
    %1986 = vmatprep.subr.mxu0 0.0
    %1987 = vmatpush1.msra.mxu0 0.0
    %1988 = vmatprep.subr.mxu0 0.0
    %1989 = vmatpush1.msra.mxu0 0.0
    %1990 = vmatprep.subr.mxu0 0.0
    %1991 = vmatpush1.msra.mxu0 0.0
    %1992 = vmatprep.subr.mxu0 0.0
    %1993 = vmatpush1.msra.mxu0 0.0
    %1994 = vmatprep.subr.mxu0 0.0
    %1995 = vmatpush1.msra.mxu0 0.0
    %1996 = vmatprep.subr.mxu0 0.0
    %1997 = vmatpush1.msra.mxu0 0.0
    %1998 = vmatprep.subr.mxu0 0.0
    %1999 = vmatpush1.msra.mxu0 0.0
    %2000 = vmatprep.subr.mxu0 0.0
    %2001 = vmatpush1.msra.mxu0 0.0
    %2002 = vmatprep.subr.mxu0 0.0
    %2003 = vmatpush1.msra.mxu0 0.0
    %2004 = vmatprep.subr.mxu0 0.0
    %2005 = vmatpush1.msra.mxu0 0.0
    %2006 = vmatprep.subr.mxu0 0.0
    %2007 = vmatpush1.msra.mxu0 0.0
    %2008 = vmatprep.subr.mxu0 0.0
    %2009 = vmatpush1.msra.mxu0 0.0
    %2010 = vmatprep.subr.mxu0 0.0
    %2011 = vmatpush1.msra.mxu0 0.0
    %2012 = vmatprep.subr.mxu0 0.0
    %2013 = vmatpush1.msra.mxu0 0.0
    %2014 = vmatprep.subr.mxu0 0.0
    %2015 = vmatpush1.msra.mxu0 0.0
    %2016 = vmatprep.subr.mxu0 0.0
    %2017 = vmatpush1.msra.mxu0 0.0
    %2018 = vmatprep.subr.mxu0 0.0
    %2019 = vmatpush1.msra.mxu0 0.0
    %2020 = vmatprep.subr.mxu0 0.0
    %2021 = vmatpush1.msra.mxu0 0.0
    %2022 = vmatprep.subr.mxu0 0.0
    %2023 = vmatpush1.msra.mxu0 0.0
    %2024 = vmatprep.subr.mxu0 0.0
    %2025 = vmatpush1.msra.mxu0 0.0
    %2026 = vmatprep.subr.mxu0 0.0
    %2027 = vmatpush1.msra.mxu0 0.0
    %2028 = vmatprep.subr.mxu0 0.0
    %2029 = vmatpush1.msra.mxu0 0.0
    %2030 = vmatprep.subr.mxu0 0.0
    %2031 = vmatpush1.msra.mxu0 0.0
    %2032 = vmatprep.subr.mxu0 0.0
    %2033 = vmatpush1.msra.mxu0 0.0
    %2034 = vmatprep.subr.mxu0 0.0
    %2035 = vmatpush1.msra.mxu0 0.0
    %2036 = vmatprep.subr.mxu0 0.0
    %2037 = vmatpush1.msra.mxu0 0.0
    %2038 = vmatprep.subr.mxu0 0.0
    %2039 = vmatpush1.msra.mxu0 0.0
    %2040 = vmatprep.subr.mxu0 0.0
    %2041 = vmatpush1.msra.mxu0 0.0
    %2042 = vmatprep.subr.mxu0 0.0
    %2043 = vmatpush1.msra.mxu0 0.0
    %2044 = vmatprep.subr.mxu0 0.0
    %2045 = vmatpush1.msra.mxu0 0.0
    %2046 = vmatprep.mubr.f32.mxu0 0.0
    %2047 = vmatmul.mubr.f32.gmra.mrb[0].mxu0 %v1980
    %v2048 = vpop.f32.mrb[0].mxu0
    %v2049 = vadd.f32 0.0, %v2048
    %v2050 = vpop.f32.mrb[0].mxu0
    %2051 = vdwg.mxu0
    %v2052 = vld [vmem:[%s6] sm:$0xff]
    %s2053 = sld [smem:[#allocation7 + $0x1]]
    %s2054 = sld [smem:[#allocation6 + $0x4]]
    %v2055 = vstv %s2054
    %v2056 = vmul.f32 %v2055, %v585
    %v2057 = vmul.f32 %v2055, %v587
    %v2058 = vstv %s2053
    %v2059 = vadd.f32 %v2058, %v2056
    %v2060 = vadd.f32 %v2058, %v2057
    %s2061 = sld [smem:[#allocation6 + $0x5]]
    %v2062 = vstv %s2061
    %v2063 = vmul.f32 %v2062, %v999
    %v2064 = vmul.f32 %v2062, %v1001
    %v2065 = vadd.f32 %v2059, %v2063
    %v2066 = vadd.f32 %v2060, %v2064
    %s2067 = sld [smem:[#allocation6 + $0x6]]
    %v2068 = vstv %s2067
    %v2069 = vmul.f32 %v2068, %v1413
    %v2070 = vmul.f32 %v2068, %v1415
    %v2071 = vadd.f32 %v2065, %v2069
    %v2072 = vadd.f32 %v2066, %v2070
    %s2073 = sld [smem:[#allocation6 + $0x7]]
    %v2074 = vstv %s2073
    %v2075 = vmul.f32 %v2074, %v1827
    %v2076 = vmul.f32 %v2074, %v1829
    %v2077 = vadd.f32 %v2071, %v2075
    %v2078 = vadd.f32 %v2072, %v2076
    %v2079 = vsel %vm413, %v2077, 0.0
    %v2080 = vsel %vm413, %v2078, 0.0
    %v2081 = vadd.f32 %v2079, %v2080
    %2082 = vadd.xlane.f32.xlu0 %v2081
    %v2083 = vpop.xlane.xlu0 %2082
    %v2084 = vrot.slane %v2083, 4
    %v2085 = vadd.f32 %v2083, %v2084
    %v2086 = vrot.slane %v2085, 2
    %v2087 = vadd.f32 %v2085, %v2086
    %v2088 = vrot.slane %v2087, 1
    %v2089 = vadd.f32 %v2087, %v2088
    %s2090 = vtos %v2089
    %v2091 = vrcp.pop 128.0
    %s2092 = vtos %v2091
    %s2093 = smul.f32 %s2090, %s2092
    %v2094 = vstv %s2093
    %v2095 = vsub.f32 %v2077, %v2094
    %v2096 = vsub.f32 %v2078, %v2094
    %v2097 = vmul.f32 %v2095, %v2095
    %v2098 = vmul.f32 %v2096, %v2096
    %v2099 = vsel %vm413, %v2097, 0.0
    %v2100 = vsel %vm413, %v2098, 0.0
    %v2101 = vadd.f32 %v2099, %v2100
    %2102 = vadd.xlane.f32.xlu0 %v2101
    %v2103 = vpop.xlane.xlu0 %2102
    %v2104 = vrot.slane %v2103, 4
    %v2105 = vadd.f32 %v2103, %v2104
    %v2106 = vrot.slane %v2105, 2
    %v2107 = vadd.f32 %v2105, %v2106
    %v2108 = vrot.slane %v2107, 1
    %v2109 = vadd.f32 %v2107, %v2108
    %s2110 = vtos %v2109
    %v2111 = vrcp.pop 128.0
    %s2112 = vtos %v2111
    %s2113 = smul.f32 %s2110, %s2112
    %s2114 = sadd.f32 %s2113, 1e-05
    %v2115 = vstv %s2114
    %v2116 = vrsqrt.pop %v2115
    %s2117 = vtos %v2116
    %v2118 = vstv %s2117
    %v2119 = vmul.f32 %v2095, %v2118
    %v2120 = vmul.f32 %v2096, %v2118
    %s2121 = sld [smem:[#allocation9 + $0x1]]
    %v2122 = vstv %s2121
    %v2123 = vmul.f32 %v2119, %v2122
    %v2124 = vmul.f32 %v2120, %v2122
    %s2125 = sld [smem:[#allocation10 + $0x1]]
    %v2126 = vstv %s2125
    %v2127 = vadd.f32 %v2123, %v2126
    %v2128 = vadd.f32 %v2124, %v2126
    %v2130 = vsel %vm413, %v2127, 0
    %2132 = vmatprep.subr.mxu0 0.0
    %2133 = vmatpush1.msra.mxu0 %v820
    %2134 = vmatprep.subr.mxu0 0.0
    %2135 = vmatpush1.msra.mxu0 0.0
    %2136 = vmatprep.subr.mxu0 0.0
    %2137 = vmatpush1.msra.mxu0 0.0
    %2138 = vmatprep.subr.mxu0 0.0
    %2139 = vmatpush1.msra.mxu0 0.0
    %2140 = vmatprep.subr.mxu0 0.0
    %2141 = vmatpush1.msra.mxu0 0.0
    %2142 = vmatprep.subr.mxu0 0.0
    %2143 = vmatpush1.msra.mxu0 0.0
    %2144 = vmatprep.subr.mxu0 0.0
    %2145 = vmatpush1.msra.mxu0 0.0
    %2146 = vmatprep.subr.mxu0 0.0
    %2147 = vmatpush1.msra.mxu0 0.0
    %2148 = vmatprep.subr.mxu0 0.0
    %2149 = vmatpush1.msra.mxu0 0.0
    %2150 = vmatprep.subr.mxu0 0.0
    %2151 = vmatpush1.msra.mxu0 0.0
    %2152 = vmatprep.subr.mxu0 0.0
    %2153 = vmatpush1.msra.mxu0 0.0
    %2154 = vmatprep.subr.mxu0 0.0
    %2155 = vmatpush1.msra.mxu0 0.0
    %2156 = vmatprep.subr.mxu0 0.0
    %2157 = vmatpush1.msra.mxu0 0.0
    %2158 = vmatprep.subr.mxu0 0.0
    %2159 = vmatpush1.msra.mxu0 0.0
    %2160 = vmatprep.subr.mxu0 0.0
    %2161 = vmatpush1.msra.mxu0 0.0
    %2162 = vmatprep.subr.mxu0 0.0
    %2163 = vmatpush1.msra.mxu0 0.0
    %2164 = vmatprep.subr.mxu0 0.0
    %2165 = vmatpush1.msra.mxu0 0.0
    %2166 = vmatprep.subr.mxu0 0.0
    %2167 = vmatpush1.msra.mxu0 0.0
    %2168 = vmatprep.subr.mxu0 0.0
    %2169 = vmatpush1.msra.mxu0 0.0
    %2170 = vmatprep.subr.mxu0 0.0
    %2171 = vmatpush1.msra.mxu0 0.0
    %2172 = vmatprep.subr.mxu0 0.0
    %2173 = vmatpush1.msra.mxu0 0.0
    %2174 = vmatprep.subr.mxu0 0.0
    %2175 = vmatpush1.msra.mxu0 0.0
    %2176 = vmatprep.subr.mxu0 0.0
    %2177 = vmatpush1.msra.mxu0 0.0
    %2178 = vmatprep.subr.mxu0 0.0
    %2179 = vmatpush1.msra.mxu0 0.0
    %2180 = vmatprep.subr.mxu0 0.0
    %2181 = vmatpush1.msra.mxu0 0.0
    %2182 = vmatprep.subr.mxu0 0.0
    %2183 = vmatpush1.msra.mxu0 0.0
    %2184 = vmatprep.subr.mxu0 0.0
    %2185 = vmatpush1.msra.mxu0 0.0
    %2186 = vmatprep.subr.mxu0 0.0
    %2187 = vmatpush1.msra.mxu0 0.0
    %2188 = vmatprep.subr.mxu0 0.0
    %2189 = vmatpush1.msra.mxu0 0.0
    %2190 = vmatprep.subr.mxu0 0.0
    %2191 = vmatpush1.msra.mxu0 0.0
    %2192 = vmatprep.subr.mxu0 0.0
    %2193 = vmatpush1.msra.mxu0 0.0
    %2194 = vmatprep.subr.mxu0 0.0
    %2195 = vmatpush1.msra.mxu0 0.0
    %2196 = vmatprep.mubr.f32.mxu0 0.0
    %2197 = vmatmul.mubr.f32.gmra.mrb[0].mxu0 %v2130
    %v2198 = vpop.f32.mrb[0].mxu0
    %v2199 = vadd.f32 0.0, %v2198
    %v2200 = vpop.f32.mrb[0].mxu0
    %2201 = vdwg.mxu0
    %v2203 = vsel %vm413, %v2128, 0
    %2205 = vmatprep.subr.mxu0 0.0
    %2206 = vmatpush1.msra.mxu0 %v825
    %2207 = vmatprep.subr.mxu0 0.0
    %2208 = vmatpush1.msra.mxu0 0.0
    %2209 = vmatprep.subr.mxu0 0.0
    %2210 = vmatpush1.msra.mxu0 0.0
    %2211 = vmatprep.subr.mxu0 0.0
    %2212 = vmatpush1.msra.mxu0 0.0
    %2213 = vmatprep.subr.mxu0 0.0
    %2214 = vmatpush1.msra.mxu0 0.0
    %2215 = vmatprep.subr.mxu0 0.0
    %2216 = vmatpush1.msra.mxu0 0.0
    %2217 = vmatprep.subr.mxu0 0.0
    %2218 = vmatpush1.msra.mxu0 0.0
    %2219 = vmatprep.subr.mxu0 0.0
    %2220 = vmatpush1.msra.mxu0 0.0
    %2221 = vmatprep.subr.mxu0 0.0
    %2222 = vmatpush1.msra.mxu0 0.0
    %2223 = vmatprep.subr.mxu0 0.0
    %2224 = vmatpush1.msra.mxu0 0.0
    %2225 = vmatprep.subr.mxu0 0.0
    %2226 = vmatpush1.msra.mxu0 0.0
    %2227 = vmatprep.subr.mxu0 0.0
    %2228 = vmatpush1.msra.mxu0 0.0
    %2229 = vmatprep.subr.mxu0 0.0
    %2230 = vmatpush1.msra.mxu0 0.0
    %2231 = vmatprep.subr.mxu0 0.0
    %2232 = vmatpush1.msra.mxu0 0.0
    %2233 = vmatprep.subr.mxu0 0.0
    %2234 = vmatpush1.msra.mxu0 0.0
    %2235 = vmatprep.subr.mxu0 0.0
    %2236 = vmatpush1.msra.mxu0 0.0
    %2237 = vmatprep.subr.mxu0 0.0
    %2238 = vmatpush1.msra.mxu0 0.0
    %2239 = vmatprep.subr.mxu0 0.0
    %2240 = vmatpush1.msra.mxu0 0.0
    %2241 = vmatprep.subr.mxu0 0.0
    %2242 = vmatpush1.msra.mxu0 0.0
    %2243 = vmatprep.subr.mxu0 0.0
    %2244 = vmatpush1.msra.mxu0 0.0
    %2245 = vmatprep.subr.mxu0 0.0
    %2246 = vmatpush1.msra.mxu0 0.0
    %2247 = vmatprep.subr.mxu0 0.0
    %2248 = vmatpush1.msra.mxu0 0.0
    %2249 = vmatprep.subr.mxu0 0.0
    %2250 = vmatpush1.msra.mxu0 0.0
    %2251 = vmatprep.subr.mxu0 0.0
    %2252 = vmatpush1.msra.mxu0 0.0
    %2253 = vmatprep.subr.mxu0 0.0
    %2254 = vmatpush1.msra.mxu0 0.0
    %2255 = vmatprep.subr.mxu0 0.0
    %2256 = vmatpush1.msra.mxu0 0.0
    %2257 = vmatprep.subr.mxu0 0.0
    %2258 = vmatpush1.msra.mxu0 0.0
    %2259 = vmatprep.subr.mxu0 0.0
    %2260 = vmatpush1.msra.mxu0 0.0
    %2261 = vmatprep.subr.mxu0 0.0
    %2262 = vmatpush1.msra.mxu0 0.0
    %2263 = vmatprep.subr.mxu0 0.0
    %2264 = vmatpush1.msra.mxu0 0.0
    %2265 = vmatprep.subr.mxu0 0.0
    %2266 = vmatpush1.msra.mxu0 0.0
    %2267 = vmatprep.subr.mxu0 0.0
    %2268 = vmatpush1.msra.mxu0 0.0
    %2269 = vmatprep.mubr.f32.mxu0 0.0
    %2270 = vmatmul.mubr.f32.gmra.mrb[0].mxu0 %v2203
    %v2271 = vpop.f32.mrb[0].mxu0
    %v2272 = vadd.f32 0.0, %v2271
    %v2273 = vpop.f32.mrb[0].mxu0
    %2274 = vdwg.mxu0
    %s2275 = scalar_lea.vmem %s6, 8
    %v2276 = vld [vmem:[%s2275] sm:$0xff]
    %v2278 = vsel %vm413, %v2199, 0
    %v2281 = vsel %vm413, %v2272, 0
    %2283 = vmatprep.subr.mxu0 0.0
    %2284 = vmatpush1.msra.mxu0 %v2276
    %2285 = vmatprep.subr.mxu0 0.0
    %2286 = vmatpush1.msra.mxu0 0.0
    %2287 = vmatprep.subr.mxu0 0.0
    %2288 = vmatpush1.msra.mxu0 0.0
    %2289 = vmatprep.subr.mxu0 0.0
    %2290 = vmatpush1.msra.mxu0 0.0
    %2291 = vmatprep.subr.mxu0 0.0
    %2292 = vmatpush1.msra.mxu0 0.0
    %2293 = vmatprep.subr.mxu0 0.0
    %2294 = vmatpush1.msra.mxu0 0.0
    %2295 = vmatprep.subr.mxu0 0.0
    %2296 = vmatpush1.msra.mxu0 0.0
    %2297 = vmatprep.subr.mxu0 0.0
    %2298 = vmatpush1.msra.mxu0 0.0
    %2299 = vmatprep.subr.mxu0 0.0
    %2300 = vmatpush1.msra.mxu0 0.0
    %2301 = vmatprep.subr.mxu0 0.0
    %2302 = vmatpush1.msra.mxu0 0.0
    %2303 = vmatprep.subr.mxu0 0.0
    %2304 = vmatpush1.msra.mxu0 0.0
    %2305 = vmatprep.subr.mxu0 0.0
    %2306 = vmatpush1.msra.mxu0 0.0
    %2307 = vmatprep.subr.mxu0 0.0
    %2308 = vmatpush1.msra.mxu0 0.0
    %2309 = vmatprep.subr.mxu0 0.0
    %2310 = vmatpush1.msra.mxu0 0.0
    %2311 = vmatprep.subr.mxu0 0.0
    %2312 = vmatpush1.msra.mxu0 0.0
    %2313 = vmatprep.subr.mxu0 0.0
    %2314 = vmatpush1.msra.mxu0 0.0
    %2315 = vmatprep.subr.mxu0 0.0
    %2316 = vmatpush1.msra.mxu0 0.0
    %2317 = vmatprep.subr.mxu0 0.0
    %2318 = vmatpush1.msra.mxu0 0.0
    %2319 = vmatprep.subr.mxu0 0.0
    %2320 = vmatpush1.msra.mxu0 0.0
    %2321 = vmatprep.subr.mxu0 0.0
    %2322 = vmatpush1.msra.mxu0 0.0
    %2323 = vmatprep.subr.mxu0 0.0
    %2324 = vmatpush1.msra.mxu0 0.0
    %2325 = vmatprep.subr.mxu0 0.0
    %2326 = vmatpush1.msra.mxu0 0.0
    %2327 = vmatprep.subr.mxu0 0.0
    %2328 = vmatpush1.msra.mxu0 0.0
    %2329 = vmatprep.subr.mxu0 0.0
    %2330 = vmatpush1.msra.mxu0 0.0
    %2331 = vmatprep.subr.mxu0 0.0
    %2332 = vmatpush1.msra.mxu0 0.0
    %2333 = vmatprep.subr.mxu0 0.0
    %2334 = vmatpush1.msra.mxu0 0.0
    %2335 = vmatprep.subr.mxu0 0.0
    %2336 = vmatpush1.msra.mxu0 0.0
    %2337 = vmatprep.subr.mxu0 0.0
    %2338 = vmatpush1.msra.mxu0 0.0
    %2339 = vmatprep.subr.mxu0 0.0
    %2340 = vmatpush1.msra.mxu0 0.0
    %2341 = vmatprep.subr.mxu0 0.0
    %2342 = vmatpush1.msra.mxu0 0.0
    %2343 = vmatprep.subr.mxu0 0.0
    %2344 = vmatpush1.msra.mxu0 0.0
    %2345 = vmatprep.subr.mxu0 0.0
    %2346 = vmatpush1.msra.mxu0 0.0
    %2347 = vmatprep.mubr.f32.mxu0 0.0
    %2348 = vmatmul.mubr.f32.gmra.mrb[0].mxu0 %v2278
    %v2349 = vpop.f32.mrb[0].mxu0
    %v2350 = vadd.f32 0.0, %v2349
    %v2351 = vpop.f32.mrb[0].mxu0
    %2352 = vmatprep.mubr.f32.mxu0 0.0
    %2353 = vmatmul.mubr.f32.gmra.mrb[0].mxu0 %v2281
    %v2354 = vpop.f32.mrb[0].mxu0
    %v2355 = vadd.f32 0.0, %v2354
    %v2356 = vpop.f32.mrb[0].mxu0
    %2357 = vdwg.mxu0
    %v2359 = vsel %vm413, %v1976, 0
    %v2362 = vsel %vm413, %v2049, 0
    %2364 = vmatprep.subr.mxu0 0.0
    %2365 = vmatpush1.msra.mxu0 %v2052
    %2366 = vmatprep.subr.mxu0 0.0
    %2367 = vmatpush1.msra.mxu0 0.0
    %2368 = vmatprep.subr.mxu0 0.0
    %2369 = vmatpush1.msra.mxu0 0.0
    %2370 = vmatprep.subr.mxu0 0.0
    %2371 = vmatpush1.msra.mxu0 0.0
    %2372 = vmatprep.subr.mxu0 0.0
    %2373 = vmatpush1.msra.mxu0 0.0
    %2374 = vmatprep.subr.mxu0 0.0
    %2375 = vmatpush1.msra.mxu0 0.0
    %2376 = vmatprep.subr.mxu0 0.0
    %2377 = vmatpush1.msra.mxu0 0.0
    %2378 = vmatprep.subr.mxu0 0.0
    %2379 = vmatpush1.msra.mxu0 0.0
    %2380 = vmatprep.subr.mxu0 0.0
    %2381 = vmatpush1.msra.mxu0 0.0
    %2382 = vmatprep.subr.mxu0 0.0
    %2383 = vmatpush1.msra.mxu0 0.0
    %2384 = vmatprep.subr.mxu0 0.0
    %2385 = vmatpush1.msra.mxu0 0.0
    %2386 = vmatprep.subr.mxu0 0.0
    %2387 = vmatpush1.msra.mxu0 0.0
    %2388 = vmatprep.subr.mxu0 0.0
    %2389 = vmatpush1.msra.mxu0 0.0
    %2390 = vmatprep.subr.mxu0 0.0
    %2391 = vmatpush1.msra.mxu0 0.0
    %2392 = vmatprep.subr.mxu0 0.0
    %2393 = vmatpush1.msra.mxu0 0.0
    %2394 = vmatprep.subr.mxu0 0.0
    %2395 = vmatpush1.msra.mxu0 0.0
    %2396 = vmatprep.subr.mxu0 0.0
    %2397 = vmatpush1.msra.mxu0 0.0
    %2398 = vmatprep.subr.mxu0 0.0
    %2399 = vmatpush1.msra.mxu0 0.0
    %2400 = vmatprep.subr.mxu0 0.0
    %2401 = vmatpush1.msra.mxu0 0.0
    %2402 = vmatprep.subr.mxu0 0.0
    %2403 = vmatpush1.msra.mxu0 0.0
    %2404 = vmatprep.subr.mxu0 0.0
    %2405 = vmatpush1.msra.mxu0 0.0
    %2406 = vmatprep.subr.mxu0 0.0
    %2407 = vmatpush1.msra.mxu0 0.0
    %2408 = vmatprep.subr.mxu0 0.0
    %2409 = vmatpush1.msra.mxu0 0.0
    %2410 = vmatprep.subr.mxu0 0.0
    %2411 = vmatpush1.msra.mxu0 0.0
    %2412 = vmatprep.subr.mxu0 0.0
    %2413 = vmatpush1.msra.mxu0 0.0
    %2414 = vmatprep.subr.mxu0 0.0
    %2415 = vmatpush1.msra.mxu0 0.0
    %2416 = vmatprep.subr.mxu0 0.0
    %2417 = vmatpush1.msra.mxu0 0.0
    %2418 = vmatprep.subr.mxu0 0.0
    %2419 = vmatpush1.msra.mxu0 0.0
    %2420 = vmatprep.subr.mxu0 0.0
    %2421 = vmatpush1.msra.mxu0 0.0
    %2422 = vmatprep.subr.mxu0 0.0
    %2423 = vmatpush1.msra.mxu0 0.0
    %2424 = vmatprep.subr.mxu0 0.0
    %2425 = vmatpush1.msra.mxu0 0.0
    %2426 = vmatprep.subr.mxu0 0.0
    %2427 = vmatpush1.msra.mxu0 0.0
    %2428 = vmatprep.mubr.f32.mxu0 0.0
    %2429 = vmatmul.mubr.f32.gmra.mrb[0].mxu0 %v2359
    %v2430 = vpop.f32.mrb[0].mxu0
    %v2431 = vadd.f32 %v2350, %v2430
    %v2432 = vpop.f32.mrb[0].mxu0
    %2433 = vmatprep.mubr.f32.mxu0 0.0
    %2434 = vmatmul.mubr.f32.gmra.mrb[0].mxu0 %v2362
    %v2435 = vpop.f32.mrb[0].mxu0
    %v2436 = vadd.f32 %v2355, %v2435
    %v2437 = vpop.f32.mrb[0].mxu0
    %2438 = vdwg.mxu0
    %s2439 = sld [smem:[#allocation7 + $0x2]]
    %s2440 = sld [smem:[#allocation6 + $0x8]]
    %v2441 = vstv %s2440
    %v2442 = vmul.f32 %v2441, %v585
    %v2443 = vmul.f32 %v2441, %v587
    %v2444 = vstv %s2439
    %v2445 = vadd.f32 %v2444, %v2442
    %v2446 = vadd.f32 %v2444, %v2443
    %s2447 = sld [smem:[#allocation6 + $0x9]]
    %v2448 = vstv %s2447
    %v2449 = vmul.f32 %v2448, %v999
    %v2450 = vmul.f32 %v2448, %v1001
    %v2451 = vadd.f32 %v2445, %v2449
    %v2452 = vadd.f32 %v2446, %v2450
    %s2453 = sld [smem:[#allocation6 + $0xa]]
    %v2454 = vstv %s2453
    %v2455 = vmul.f32 %v2454, %v1413
    %v2456 = vmul.f32 %v2454, %v1415
    %v2457 = vadd.f32 %v2451, %v2455
    %v2458 = vadd.f32 %v2452, %v2456
    %s2459 = sld [smem:[#allocation6 + $0xb]]
    %v2460 = vstv %s2459
    %v2461 = vmul.f32 %v2460, %v1827
    %v2462 = vmul.f32 %v2460, %v1829
    %v2463 = vadd.f32 %v2457, %v2461
    %v2464 = vadd.f32 %v2458, %v2462
    %v2465 = vsel %vm413, %v2463, 0.0
    %v2466 = vsel %vm413, %v2464, 0.0
    %v2467 = vadd.f32 %v2465, %v2466
    %2468 = vadd.xlane.f32.xlu0 %v2467
    %v2469 = vpop.xlane.xlu0 %2468
    %v2470 = vrot.slane %v2469, 4
    %v2471 = vadd.f32 %v2469, %v2470
    %v2472 = vrot.slane %v2471, 2
    %v2473 = vadd.f32 %v2471, %v2472
    %v2474 = vrot.slane %v2473, 1
    %v2475 = vadd.f32 %v2473, %v2474
    %s2476 = vtos %v2475
    %v2477 = vrcp.pop 128.0
    %s2478 = vtos %v2477
    %s2479 = smul.f32 %s2476, %s2478
    %v2480 = vstv %s2479
    %v2481 = vsub.f32 %v2463, %v2480
    %v2482 = vsub.f32 %v2464, %v2480
    %v2483 = vmul.f32 %v2481, %v2481
    %v2484 = vmul.f32 %v2482, %v2482
    %v2485 = vsel %vm413, %v2483, 0.0
    %v2486 = vsel %vm413, %v2484, 0.0
    %v2487 = vadd.f32 %v2485, %v2486
    %2488 = vadd.xlane.f32.xlu0 %v2487
    %v2489 = vpop.xlane.xlu0 %2488
    %v2490 = vrot.slane %v2489, 4
    %v2491 = vadd.f32 %v2489, %v2490
    %v2492 = vrot.slane %v2491, 2
    %v2493 = vadd.f32 %v2491, %v2492
    %v2494 = vrot.slane %v2493, 1
    %v2495 = vadd.f32 %v2493, %v2494
    %s2496 = vtos %v2495
    %v2497 = vrcp.pop 128.0
    %s2498 = vtos %v2497
    %s2499 = smul.f32 %s2496, %s2498
    %s2500 = sadd.f32 %s2499, 1e-05
    %v2501 = vstv %s2500
    %v2502 = vrsqrt.pop %v2501
    %s2503 = vtos %v2502
    %v2504 = vstv %s2503
    %v2505 = vmul.f32 %v2481, %v2504
    %v2506 = vmul.f32 %v2482, %v2504
    %s2507 = sld [smem:[#allocation9 + $0x2]]
    %v2508 = vstv %s2507
    %v2509 = vmul.f32 %v2505, %v2508
    %v2510 = vmul.f32 %v2506, %v2508
    %s2511 = sld [smem:[#allocation10 + $0x2]]
    %v2512 = vstv %s2511
    %v2513 = vadd.f32 %v2509, %v2512
    %v2514 = vadd.f32 %v2510, %v2512
    %v2516 = vsel %vm413, %v2513, 0
    %2518 = vmatprep.subr.mxu0 0.0
    %2519 = vmatpush1.msra.mxu0 %v1234
    %2520 = vmatprep.subr.mxu0 0.0
    %2521 = vmatpush1.msra.mxu0 0.0
    %2522 = vmatprep.subr.mxu0 0.0
    %2523 = vmatpush1.msra.mxu0 0.0
    %2524 = vmatprep.subr.mxu0 0.0
    %2525 = vmatpush1.msra.mxu0 0.0
    %2526 = vmatprep.subr.mxu0 0.0
    %2527 = vmatpush1.msra.mxu0 0.0
    %2528 = vmatprep.subr.mxu0 0.0
    %2529 = vmatpush1.msra.mxu0 0.0
    %2530 = vmatprep.subr.mxu0 0.0
    %2531 = vmatpush1.msra.mxu0 0.0
    %2532 = vmatprep.subr.mxu0 0.0
    %2533 = vmatpush1.msra.mxu0 0.0
    %2534 = vmatprep.subr.mxu0 0.0
    %2535 = vmatpush1.msra.mxu0 0.0
    %2536 = vmatprep.subr.mxu0 0.0
    %2537 = vmatpush1.msra.mxu0 0.0
    %2538 = vmatprep.subr.mxu0 0.0
    %2539 = vmatpush1.msra.mxu0 0.0
    %2540 = vmatprep.subr.mxu0 0.0
    %2541 = vmatpush1.msra.mxu0 0.0
    %2542 = vmatprep.subr.mxu0 0.0
    %2543 = vmatpush1.msra.mxu0 0.0
    %2544 = vmatprep.subr.mxu0 0.0
    %2545 = vmatpush1.msra.mxu0 0.0
    %2546 = vmatprep.subr.mxu0 0.0
    %2547 = vmatpush1.msra.mxu0 0.0
    %2548 = vmatprep.subr.mxu0 0.0
    %2549 = vmatpush1.msra.mxu0 0.0
    %2550 = vmatprep.subr.mxu0 0.0
    %2551 = vmatpush1.msra.mxu0 0.0
    %2552 = vmatprep.subr.mxu0 0.0
    %2553 = vmatpush1.msra.mxu0 0.0
    %2554 = vmatprep.subr.mxu0 0.0
    %2555 = vmatpush1.msra.mxu0 0.0
    %2556 = vmatprep.subr.mxu0 0.0
    %2557 = vmatpush1.msra.mxu0 0.0
    %2558 = vmatprep.subr.mxu0 0.0
    %2559 = vmatpush1.msra.mxu0 0.0
    %2560 = vmatprep.subr.mxu0 0.0
    %2561 = vmatpush1.msra.mxu0 0.0
    %2562 = vmatprep.subr.mxu0 0.0
    %2563 = vmatpush1.msra.mxu0 0.0
    %2564 = vmatprep.subr.mxu0 0.0
    %2565 = vmatpush1.msra.mxu0 0.0
    %2566 = vmatprep.subr.mxu0 0.0
    %2567 = vmatpush1.msra.mxu0 0.0
    %2568 = vmatprep.subr.mxu0 0.0
    %2569 = vmatpush1.msra.mxu0 0.0
    %2570 = vmatprep.subr.mxu0 0.0
    %2571 = vmatpush1.msra.mxu0 0.0
    %2572 = vmatprep.subr.mxu0 0.0
    %2573 = vmatpush1.msra.mxu0 0.0
    %2574 = vmatprep.subr.mxu0 0.0
    %2575 = vmatpush1.msra.mxu0 0.0
    %2576 = vmatprep.subr.mxu0 0.0
    %2577 = vmatpush1.msra.mxu0 0.0
    %2578 = vmatprep.subr.mxu0 0.0
    %2579 = vmatpush1.msra.mxu0 0.0
    %2580 = vmatprep.subr.mxu0 0.0
    %2581 = vmatpush1.msra.mxu0 0.0
    %2582 = vmatprep.mubr.f32.mxu0 0.0
    %2583 = vmatmul.mubr.f32.gmra.mrb[0].mxu0 %v2516
    %v2584 = vpop.f32.mrb[0].mxu0
    %v2585 = vadd.f32 0.0, %v2584
    %v2586 = vpop.f32.mrb[0].mxu0
    %2587 = vdwg.mxu0
    %v2589 = vsel %vm413, %v2514, 0
    %2591 = vmatprep.subr.mxu0 0.0
    %2592 = vmatpush1.msra.mxu0 %v1239
    %2593 = vmatprep.subr.mxu0 0.0
    %2594 = vmatpush1.msra.mxu0 0.0
    %2595 = vmatprep.subr.mxu0 0.0
    %2596 = vmatpush1.msra.mxu0 0.0
    %2597 = vmatprep.subr.mxu0 0.0
    %2598 = vmatpush1.msra.mxu0 0.0
    %2599 = vmatprep.subr.mxu0 0.0
    %2600 = vmatpush1.msra.mxu0 0.0
    %2601 = vmatprep.subr.mxu0 0.0
    %2602 = vmatpush1.msra.mxu0 0.0
    %2603 = vmatprep.subr.mxu0 0.0
    %2604 = vmatpush1.msra.mxu0 0.0
    %2605 = vmatprep.subr.mxu0 0.0
    %2606 = vmatpush1.msra.mxu0 0.0
    %2607 = vmatprep.subr.mxu0 0.0
    %2608 = vmatpush1.msra.mxu0 0.0
    %2609 = vmatprep.subr.mxu0 0.0
    %2610 = vmatpush1.msra.mxu0 0.0
    %2611 = vmatprep.subr.mxu0 0.0
    %2612 = vmatpush1.msra.mxu0 0.0
    %2613 = vmatprep.subr.mxu0 0.0
    %2614 = vmatpush1.msra.mxu0 0.0
    %2615 = vmatprep.subr.mxu0 0.0
    %2616 = vmatpush1.msra.mxu0 0.0
    %2617 = vmatprep.subr.mxu0 0.0
    %2618 = vmatpush1.msra.mxu0 0.0
    %2619 = vmatprep.subr.mxu0 0.0
    %2620 = vmatpush1.msra.mxu0 0.0
    %2621 = vmatprep.subr.mxu0 0.0
    %2622 = vmatpush1.msra.mxu0 0.0
    %2623 = vmatprep.subr.mxu0 0.0
    %2624 = vmatpush1.msra.mxu0 0.0
    %2625 = vmatprep.subr.mxu0 0.0
    %2626 = vmatpush1.msra.mxu0 0.0
    %2627 = vmatprep.subr.mxu0 0.0
    %2628 = vmatpush1.msra.mxu0 0.0
    %2629 = vmatprep.subr.mxu0 0.0
    %2630 = vmatpush1.msra.mxu0 0.0
    %2631 = vmatprep.subr.mxu0 0.0
    %2632 = vmatpush1.msra.mxu0 0.0
    %2633 = vmatprep.subr.mxu0 0.0
    %2634 = vmatpush1.msra.mxu0 0.0
    %2635 = vmatprep.subr.mxu0 0.0
    %2636 = vmatpush1.msra.mxu0 0.0
    %2637 = vmatprep.subr.mxu0 0.0
    %2638 = vmatpush1.msra.mxu0 0.0
    %2639 = vmatprep.subr.mxu0 0.0
    %2640 = vmatpush1.msra.mxu0 0.0
    %2641 = vmatprep.subr.mxu0 0.0
    %2642 = vmatpush1.msra.mxu0 0.0
    %2643 = vmatprep.subr.mxu0 0.0
    %2644 = vmatpush1.msra.mxu0 0.0
    %2645 = vmatprep.subr.mxu0 0.0
    %2646 = vmatpush1.msra.mxu0 0.0
    %2647 = vmatprep.subr.mxu0 0.0
    %2648 = vmatpush1.msra.mxu0 0.0
    %2649 = vmatprep.subr.mxu0 0.0
    %2650 = vmatpush1.msra.mxu0 0.0
    %2651 = vmatprep.subr.mxu0 0.0
    %2652 = vmatpush1.msra.mxu0 0.0
    %2653 = vmatprep.subr.mxu0 0.0
    %2654 = vmatpush1.msra.mxu0 0.0
    %2655 = vmatprep.mubr.f32.mxu0 0.0
    %2656 = vmatmul.mubr.f32.gmra.mrb[0].mxu0 %v2589
    %v2657 = vpop.f32.mrb[0].mxu0
    %v2658 = vadd.f32 0.0, %v2657
    %v2659 = vpop.f32.mrb[0].mxu0
    %2660 = vdwg.mxu0
    %s2661 = scalar_lea.vmem %s6, 16
    %v2662 = vld [vmem:[%s2661] sm:$0xff]
    %v2664 = vsel %vm413, %v2585, 0
    %v2667 = vsel %vm413, %v2658, 0
    %2669 = vmatprep.subr.mxu0 0.0
    %2670 = vmatpush1.msra.mxu0 %v2662
    %2671 = vmatprep.subr.mxu0 0.0
    %2672 = vmatpush1.msra.mxu0 0.0
    %2673 = vmatprep.subr.mxu0 0.0
    %2674 = vmatpush1.msra.mxu0 0.0
    %2675 = vmatprep.subr.mxu0 0.0
    %2676 = vmatpush1.msra.mxu0 0.0
    %2677 = vmatprep.subr.mxu0 0.0
    %2678 = vmatpush1.msra.mxu0 0.0
    %2679 = vmatprep.subr.mxu0 0.0
    %2680 = vmatpush1.msra.mxu0 0.0
    %2681 = vmatprep.subr.mxu0 0.0
    %2682 = vmatpush1.msra.mxu0 0.0
    %2683 = vmatprep.subr.mxu0 0.0
    %2684 = vmatpush1.msra.mxu0 0.0
    %2685 = vmatprep.subr.mxu0 0.0
    %2686 = vmatpush1.msra.mxu0 0.0
    %2687 = vmatprep.subr.mxu0 0.0
    %2688 = vmatpush1.msra.mxu0 0.0
    %2689 = vmatprep.subr.mxu0 0.0
    %2690 = vmatpush1.msra.mxu0 0.0
    %2691 = vmatprep.subr.mxu0 0.0
    %2692 = vmatpush1.msra.mxu0 0.0
    %2693 = vmatprep.subr.mxu0 0.0
    %2694 = vmatpush1.msra.mxu0 0.0
    %2695 = vmatprep.subr.mxu0 0.0
    %2696 = vmatpush1.msra.mxu0 0.0
    %2697 = vmatprep.subr.mxu0 0.0
    %2698 = vmatpush1.msra.mxu0 0.0
    %2699 = vmatprep.subr.mxu0 0.0
    %2700 = vmatpush1.msra.mxu0 0.0
    %2701 = vmatprep.subr.mxu0 0.0
    %2702 = vmatpush1.msra.mxu0 0.0
    %2703 = vmatprep.subr.mxu0 0.0
    %2704 = vmatpush1.msra.mxu0 0.0
    %2705 = vmatprep.subr.mxu0 0.0
    %2706 = vmatpush1.msra.mxu0 0.0
    %2707 = vmatprep.subr.mxu0 0.0
    %2708 = vmatpush1.msra.mxu0 0.0
    %2709 = vmatprep.subr.mxu0 0.0
    %2710 = vmatpush1.msra.mxu0 0.0
    %2711 = vmatprep.subr.mxu0 0.0
    %2712 = vmatpush1.msra.mxu0 0.0
    %2713 = vmatprep.subr.mxu0 0.0
    %2714 = vmatpush1.msra.mxu0 0.0
    %2715 = vmatprep.subr.mxu0 0.0
    %2716 = vmatpush1.msra.mxu0 0.0
    %2717 = vmatprep.subr.mxu0 0.0
    %2718 = vmatpush1.msra.mxu0 0.0
    %2719 = vmatprep.subr.mxu0 0.0
    %2720 = vmatpush1.msra.mxu0 0.0
    %2721 = vmatprep.subr.mxu0 0.0
    %2722 = vmatpush1.msra.mxu0 0.0
    %2723 = vmatprep.subr.mxu0 0.0
    %2724 = vmatpush1.msra.mxu0 0.0
    %2725 = vmatprep.subr.mxu0 0.0
    %2726 = vmatpush1.msra.mxu0 0.0
    %2727 = vmatprep.subr.mxu0 0.0
    %2728 = vmatpush1.msra.mxu0 0.0
    %2729 = vmatprep.subr.mxu0 0.0
    %2730 = vmatpush1.msra.mxu0 0.0
    %2731 = vmatprep.subr.mxu0 0.0
    %2732 = vmatpush1.msra.mxu0 0.0
    %2733 = vmatprep.mubr.f32.mxu0 0.0
    %2734 = vmatmul.mubr.f32.gmra.mrb[0].mxu0 %v2664
    %v2735 = vpop.f32.mrb[0].mxu0
    %v2736 = vadd.f32 0.0, %v2735
    %v2737 = vpop.f32.mrb[0].mxu0
    %2738 = vmatprep.mubr.f32.mxu0 0.0
    %2739 = vmatmul.mubr.f32.gmra.mrb[0].mxu0 %v2667
    %v2740 = vpop.f32.mrb[0].mxu0
    %v2741 = vadd.f32 0.0, %v2740
    %v2742 = vpop.f32.mrb[0].mxu0
    %2743 = vdwg.mxu0
    %v2744 = vadd.f32 %v2431, %v2736
    %v2745 = vadd.f32 %v2436, %v2741
    %s2746 = sld [smem:[#allocation7 + $0x3]]
    %s2747 = sld [smem:[#allocation6 + $0xc]]
    %v2748 = vstv %s2747
    %v2749 = vmul.f32 %v2748, %v585
    %v2750 = vmul.f32 %v2748, %v587
    %v2751 = vstv %s2746
    %v2752 = vadd.f32 %v2751, %v2749
    %v2753 = vadd.f32 %v2751, %v2750
    %s2754 = sld [smem:[#allocation6 + $0xd]]
    %v2755 = vstv %s2754
    %v2756 = vmul.f32 %v2755, %v999
    %v2757 = vmul.f32 %v2755, %v1001
    %v2758 = vadd.f32 %v2752, %v2756
    %v2759 = vadd.f32 %v2753, %v2757
    %s2760 = sld [smem:[#allocation6 + $0xe]]
    %v2761 = vstv %s2760
    %v2762 = vmul.f32 %v2761, %v1413
    %v2763 = vmul.f32 %v2761, %v1415
    %v2764 = vadd.f32 %v2758, %v2762
    %v2765 = vadd.f32 %v2759, %v2763
    %s2766 = sld [smem:[#allocation6 + $0xf]]
    %v2767 = vstv %s2766
    %v2768 = vmul.f32 %v2767, %v1827
    %v2769 = vmul.f32 %v2767, %v1829
    %v2770 = vadd.f32 %v2764, %v2768
    %v2771 = vadd.f32 %v2765, %v2769
    %v2772 = vsel %vm413, %v2770, 0.0
    %v2773 = vsel %vm413, %v2771, 0.0
    %v2774 = vadd.f32 %v2772, %v2773
    %2775 = vadd.xlane.f32.xlu0 %v2774
    %v2776 = vpop.xlane.xlu0 %2775
    %v2777 = vrot.slane %v2776, 4
    %v2778 = vadd.f32 %v2776, %v2777
    %v2779 = vrot.slane %v2778, 2
    %v2780 = vadd.f32 %v2778, %v2779
    %v2781 = vrot.slane %v2780, 1
    %v2782 = vadd.f32 %v2780, %v2781
    %s2783 = vtos %v2782
    %v2784 = vrcp.pop 128.0
    %s2785 = vtos %v2784
    %s2786 = smul.f32 %s2783, %s2785
    %v2787 = vstv %s2786
    %v2788 = vsub.f32 %v2770, %v2787
    %v2789 = vsub.f32 %v2771, %v2787
    %v2790 = vmul.f32 %v2788, %v2788
    %v2791 = vmul.f32 %v2789, %v2789
    %v2792 = vsel %vm413, %v2790, 0.0
    %v2793 = vsel %vm413, %v2791, 0.0
    %v2794 = vadd.f32 %v2792, %v2793
    %2795 = vadd.xlane.f32.xlu0 %v2794
    %v2796 = vpop.xlane.xlu0 %2795
    %v2797 = vrot.slane %v2796, 4
    %v2798 = vadd.f32 %v2796, %v2797
    %v2799 = vrot.slane %v2798, 2
    %v2800 = vadd.f32 %v2798, %v2799
    %v2801 = vrot.slane %v2800, 1
    %v2802 = vadd.f32 %v2800, %v2801
    %s2803 = vtos %v2802
    %v2804 = vrcp.pop 128.0
    %s2805 = vtos %v2804
    %s2806 = smul.f32 %s2803, %s2805
    %s2807 = sadd.f32 %s2806, 1e-05
    %v2808 = vstv %s2807
    %v2809 = vrsqrt.pop %v2808
    %s2810 = vtos %v2809
    %v2811 = vstv %s2810
    %v2812 = vmul.f32 %v2788, %v2811
    %v2813 = vmul.f32 %v2789, %v2811
    %s2814 = sld [smem:[#allocation9 + $0x3]]
    %v2815 = vstv %s2814
    %v2816 = vmul.f32 %v2812, %v2815
    %v2817 = vmul.f32 %v2813, %v2815
    %s2818 = sld [smem:[#allocation10 + $0x3]]
    %v2819 = vstv %s2818
    %v2820 = vadd.f32 %v2816, %v2819
    %v2821 = vadd.f32 %v2817, %v2819
    %v2823 = vsel %vm413, %v2820, 0
    %2825 = vmatprep.subr.mxu0 0.0
    %2826 = vmatpush1.msra.mxu0 %v1648
    %2827 = vmatprep.subr.mxu0 0.0
    %2828 = vmatpush1.msra.mxu0 0.0
    %2829 = vmatprep.subr.mxu0 0.0
    %2830 = vmatpush1.msra.mxu0 0.0
    %2831 = vmatprep.subr.mxu0 0.0
    %2832 = vmatpush1.msra.mxu0 0.0
    %2833 = vmatprep.subr.mxu0 0.0
    %2834 = vmatpush1.msra.mxu0 0.0
    %2835 = vmatprep.subr.mxu0 0.0
    %2836 = vmatpush1.msra.mxu0 0.0
    %2837 = vmatprep.subr.mxu0 0.0
    %2838 = vmatpush1.msra.mxu0 0.0
    %2839 = vmatprep.subr.mxu0 0.0
    %2840 = vmatpush1.msra.mxu0 0.0
    %2841 = vmatprep.subr.mxu0 0.0
    %2842 = vmatpush1.msra.mxu0 0.0
    %2843 = vmatprep.subr.mxu0 0.0
    %2844 = vmatpush1.msra.mxu0 0.0
    %2845 = vmatprep.subr.mxu0 0.0
    %2846 = vmatpush1.msra.mxu0 0.0
    %2847 = vmatprep.subr.mxu0 0.0
    %2848 = vmatpush1.msra.mxu0 0.0
    %2849 = vmatprep.subr.mxu0 0.0
    %2850 = vmatpush1.msra.mxu0 0.0
    %2851 = vmatprep.subr.mxu0 0.0
    %2852 = vmatpush1.msra.mxu0 0.0
    %2853 = vmatprep.subr.mxu0 0.0
    %2854 = vmatpush1.msra.mxu0 0.0
    %2855 = vmatprep.subr.mxu0 0.0
    %2856 = vmatpush1.msra.mxu0 0.0
    %2857 = vmatprep.subr.mxu0 0.0
    %2858 = vmatpush1.msra.mxu0 0.0
    %2859 = vmatprep.subr.mxu0 0.0
    %2860 = vmatpush1.msra.mxu0 0.0
    %2861 = vmatprep.subr.mxu0 0.0
    %2862 = vmatpush1.msra.mxu0 0.0
    %2863 = vmatprep.subr.mxu0 0.0
    %2864 = vmatpush1.msra.mxu0 0.0
    %2865 = vmatprep.subr.mxu0 0.0
    %2866 = vmatpush1.msra.mxu0 0.0
    %2867 = vmatprep.subr.mxu0 0.0
    %2868 = vmatpush1.msra.mxu0 0.0
    %2869 = vmatprep.subr.mxu0 0.0
    %2870 = vmatpush1.msra.mxu0 0.0
    %2871 = vmatprep.subr.mxu0 0.0
    %2872 = vmatpush1.msra.mxu0 0.0
    %2873 = vmatprep.subr.mxu0 0.0
    %2874 = vmatpush1.msra.mxu0 0.0
    %2875 = vmatprep.subr.mxu0 0.0
    %2876 = vmatpush1.msra.mxu0 0.0
    %2877 = vmatprep.subr.mxu0 0.0
    %2878 = vmatpush1.msra.mxu0 0.0
    %2879 = vmatprep.subr.mxu0 0.0
    %2880 = vmatpush1.msra.mxu0 0.0
    %2881 = vmatprep.subr.mxu0 0.0
    %2882 = vmatpush1.msra.mxu0 0.0
    %2883 = vmatprep.subr.mxu0 0.0
    %2884 = vmatpush1.msra.mxu0 0.0
    %2885 = vmatprep.subr.mxu0 0.0
    %2886 = vmatpush1.msra.mxu0 0.0
    %2887 = vmatprep.subr.mxu0 0.0
    %2888 = vmatpush1.msra.mxu0 0.0
    %2889 = vmatprep.mubr.f32.mxu0 0.0
    %2890 = vmatmul.mubr.f32.gmra.mrb[0].mxu0 %v2823
    %v2891 = vpop.f32.mrb[0].mxu0
    %v2892 = vadd.f32 0.0, %v2891
    %v2893 = vpop.f32.mrb[0].mxu0
    %2894 = vdwg.mxu0
    %v2896 = vsel %vm413, %v2821, 0
    %2898 = vmatprep.subr.mxu0 0.0
    %2899 = vmatpush1.msra.mxu0 %v1653
    %2900 = vmatprep.subr.mxu0 0.0
    %2901 = vmatpush1.msra.mxu0 0.0
    %2902 = vmatprep.subr.mxu0 0.0
    %2903 = vmatpush1.msra.mxu0 0.0
    %2904 = vmatprep.subr.mxu0 0.0
    %2905 = vmatpush1.msra.mxu0 0.0
    %2906 = vmatprep.subr.mxu0 0.0
    %2907 = vmatpush1.msra.mxu0 0.0
    %2908 = vmatprep.subr.mxu0 0.0
    %2909 = vmatpush1.msra.mxu0 0.0
    %2910 = vmatprep.subr.mxu0 0.0
    %2911 = vmatpush1.msra.mxu0 0.0
    %2912 = vmatprep.subr.mxu0 0.0
    %2913 = vmatpush1.msra.mxu0 0.0
    %2914 = vmatprep.subr.mxu0 0.0
    %2915 = vmatpush1.msra.mxu0 0.0
    %2916 = vmatprep.subr.mxu0 0.0
    %2917 = vmatpush1.msra.mxu0 0.0
    %2918 = vmatprep.subr.mxu0 0.0
    %2919 = vmatpush1.msra.mxu0 0.0
    %2920 = vmatprep.subr.mxu0 0.0
    %2921 = vmatpush1.msra.mxu0 0.0
    %2922 = vmatprep.subr.mxu0 0.0
    %2923 = vmatpush1.msra.mxu0 0.0
    %2924 = vmatprep.subr.mxu0 0.0
    %2925 = vmatpush1.msra.mxu0 0.0
    %2926 = vmatprep.subr.mxu0 0.0
    %2927 = vmatpush1.msra.mxu0 0.0
    %2928 = vmatprep.subr.mxu0 0.0
    %2929 = vmatpush1.msra.mxu0 0.0
    %2930 = vmatprep.subr.mxu0 0.0
    %2931 = vmatpush1.msra.mxu0 0.0
    %2932 = vmatprep.subr.mxu0 0.0
    %2933 = vmatpush1.msra.mxu0 0.0
    %2934 = vmatprep.subr.mxu0 0.0
    %2935 = vmatpush1.msra.mxu0 0.0
    %2936 = vmatprep.subr.mxu0 0.0
    %2937 = vmatpush1.msra.mxu0 0.0
    %2938 = vmatprep.subr.mxu0 0.0
    %2939 = vmatpush1.msra.mxu0 0.0
    %2940 = vmatprep.subr.mxu0 0.0
    %2941 = vmatpush1.msra.mxu0 0.0
    %2942 = vmatprep.subr.mxu0 0.0
    %2943 = vmatpush1.msra.mxu0 0.0
    %2944 = vmatprep.subr.mxu0 0.0
    %2945 = vmatpush1.msra.mxu0 0.0
    %2946 = vmatprep.subr.mxu0 0.0
    %2947 = vmatpush1.msra.mxu0 0.0
    %2948 = vmatprep.subr.mxu0 0.0
    %2949 = vmatpush1.msra.mxu0 0.0
    %2950 = vmatprep.subr.mxu0 0.0
    %2951 = vmatpush1.msra.mxu0 0.0
    %2952 = vmatprep.subr.mxu0 0.0
    %2953 = vmatpush1.msra.mxu0 0.0
    %2954 = vmatprep.subr.mxu0 0.0
    %2955 = vmatpush1.msra.mxu0 0.0
    %2956 = vmatprep.subr.mxu0 0.0
    %2957 = vmatpush1.msra.mxu0 0.0
    %2958 = vmatprep.subr.mxu0 0.0
    %2959 = vmatpush1.msra.mxu0 0.0
    %2960 = vmatprep.subr.mxu0 0.0
    %2961 = vmatpush1.msra.mxu0 0.0
    %2962 = vmatprep.mubr.f32.mxu0 0.0
    %2963 = vmatmul.mubr.f32.gmra.mrb[0].mxu0 %v2896
    %v2964 = vpop.f32.mrb[0].mxu0
    %v2965 = vadd.f32 0.0, %v2964
    %v2966 = vpop.f32.mrb[0].mxu0
    %2967 = vdwg.mxu0
    %s2968 = scalar_lea.vmem %s6, 24
    %v2969 = vld [vmem:[%s2968] sm:$0xff]
    %v2971 = vsel %vm413, %v2892, 0
    %v2974 = vsel %vm413, %v2965, 0
    %2976 = vmatprep.subr.mxu0 0.0
    %2977 = vmatpush1.msra.mxu0 %v2969
    %2978 = vmatprep.subr.mxu0 0.0
    %2979 = vmatpush1.msra.mxu0 0.0
    %2980 = vmatprep.subr.mxu0 0.0
    %2981 = vmatpush1.msra.mxu0 0.0
    %2982 = vmatprep.subr.mxu0 0.0
    %2983 = vmatpush1.msra.mxu0 0.0
    %2984 = vmatprep.subr.mxu0 0.0
    %2985 = vmatpush1.msra.mxu0 0.0
    %2986 = vmatprep.subr.mxu0 0.0
    %2987 = vmatpush1.msra.mxu0 0.0
    %2988 = vmatprep.subr.mxu0 0.0
    %2989 = vmatpush1.msra.mxu0 0.0
    %2990 = vmatprep.subr.mxu0 0.0
    %2991 = vmatpush1.msra.mxu0 0.0
    %2992 = vmatprep.subr.mxu0 0.0
    %2993 = vmatpush1.msra.mxu0 0.0
    %2994 = vmatprep.subr.mxu0 0.0
    %2995 = vmatpush1.msra.mxu0 0.0
    %2996 = vmatprep.subr.mxu0 0.0
    %2997 = vmatpush1.msra.mxu0 0.0
    %2998 = vmatprep.subr.mxu0 0.0
    %2999 = vmatpush1.msra.mxu0 0.0
    %3000 = vmatprep.subr.mxu0 0.0
    %3001 = vmatpush1.msra.mxu0 0.0
    %3002 = vmatprep.subr.mxu0 0.0
    %3003 = vmatpush1.msra.mxu0 0.0
    %3004 = vmatprep.subr.mxu0 0.0
    %3005 = vmatpush1.msra.mxu0 0.0
    %3006 = vmatprep.subr.mxu0 0.0
    %3007 = vmatpush1.msra.mxu0 0.0
    %3008 = vmatprep.subr.mxu0 0.0
    %3009 = vmatpush1.msra.mxu0 0.0
    %3010 = vmatprep.subr.mxu0 0.0
    %3011 = vmatpush1.msra.mxu0 0.0
    %3012 = vmatprep.subr.mxu0 0.0
    %3013 = vmatpush1.msra.mxu0 0.0
    %3014 = vmatprep.subr.mxu0 0.0
    %3015 = vmatpush1.msra.mxu0 0.0
    %3016 = vmatprep.subr.mxu0 0.0
    %3017 = vmatpush1.msra.mxu0 0.0
    %3018 = vmatprep.subr.mxu0 0.0
    %3019 = vmatpush1.msra.mxu0 0.0
    %3020 = vmatprep.subr.mxu0 0.0
    %3021 = vmatpush1.msra.mxu0 0.0
    %3022 = vmatprep.subr.mxu0 0.0
    %3023 = vmatpush1.msra.mxu0 0.0
    %3024 = vmatprep.subr.mxu0 0.0
    %3025 = vmatpush1.msra.mxu0 0.0
    %3026 = vmatprep.subr.mxu0 0.0
    %3027 = vmatpush1.msra.mxu0 0.0
    %3028 = vmatprep.subr.mxu0 0.0
    %3029 = vmatpush1.msra.mxu0 0.0
    %3030 = vmatprep.subr.mxu0 0.0
    %3031 = vmatpush1.msra.mxu0 0.0
    %3032 = vmatprep.subr.mxu0 0.0
    %3033 = vmatpush1.msra.mxu0 0.0
    %3034 = vmatprep.subr.mxu0 0.0
    %3035 = vmatpush1.msra.mxu0 0.0
    %3036 = vmatprep.subr.mxu0 0.0
    %3037 = vmatpush1.msra.mxu0 0.0
    %3038 = vmatprep.subr.mxu0 0.0
    %3039 = vmatpush1.msra.mxu0 0.0
    %3040 = vmatprep.mubr.f32.mxu0 0.0
    %3041 = vmatmul.mubr.f32.gmra.mrb[0].mxu0 %v2971
    %v3042 = vpop.f32.mrb[0].mxu0
    %v3043 = vadd.f32 0.0, %v3042
    %v3044 = vpop.f32.mrb[0].mxu0
    %3045 = vmatprep.mubr.f32.mxu0 0.0
    %3046 = vmatmul.mubr.f32.gmra.mrb[0].mxu0 %v2974
    %v3047 = vpop.f32.mrb[0].mxu0
    %v3048 = vadd.f32 0.0, %v3047
    %v3049 = vpop.f32.mrb[0].mxu0
    %3050 = vdwg.mxu0
    %v3051 = vadd.f32 %v2744, %v3043
    %v3052 = vadd.f32 %v2745, %v3048
    %v3053 = vadd.f32 %v122, %v3051
    %v3054 = vadd.f32 %v123, %v3052
    %v3055 = vld [vmem:[%s7] sm:$0x1]
    %v3057 = vlaneseq
    %v3058 = vshrl.u32 %v3057, 7
    %v3059 = vsub.s32 0, %v3058
    %v3060 = vrot.slane %v3055, %v3059
    %v3062 = vadd.f32 %v3053, %v3060
    %v3063 = vadd.f32 %v3054, %v3060
    %v3064 = vld [vmem:[%s8] sm:$0x1]
    %v3065 = vld [vmem:[%s9] sm:$0x1]
    %v3066 = vsel %vm126, %v3062, 0.0
    %3067 = vadd.xlane.f32.xlu0 %v3066
    %v3068 = vpop.xlane.xlu0 %3067
    %v3069 = vsel %vm126, %v3063, 0.0
    %3070 = vadd.xlane.f32.xlu0 %v3069
    %v3071 = vpop.xlane.xlu0 %3070
    %v3072 = vmul.f32 %v3068, %v133
    %v3073 = vmul.f32 %v3071, %v133
    %v3074 = vsub.f32 %v3062, %v3072
    %v3075 = vsub.f32 %v3063, %v3073
    %v3076 = vmul.f32 %v3074, %v3074
    %v3077 = vmul.f32 %v3075, %v3075
    %v3078 = vsel %vm126, %v3076, 0.0
    %3079 = vadd.xlane.f32.xlu0 %v3078
    %v3080 = vpop.xlane.xlu0 %3079
    %v3081 = vsel %vm126, %v3077, 0.0
    %3082 = vadd.xlane.f32.xlu0 %v3081
    %v3083 = vpop.xlane.xlu0 %3082
    %v3084 = vmul.f32 %v3080, %v133
    %v3085 = vmul.f32 %v3083, %v133
    %v3086 = vadd.f32 %v3084, 1e-05
    %v3087 = vadd.f32 %v3085, 1e-05
    %v3088 = vrsqrt.pop %v3086
    %v3089 = vrsqrt.pop %v3087
    %v3090 = vmul.f32 %v3074, %v3088
    %v3091 = vmul.f32 %v3075, %v3089
    %v3093 = vlaneseq
    %v3094 = vshrl.u32 %v3093, 7
    %v3095 = vsub.s32 0, %v3094
    %v3096 = vrot.slane %v3064, %v3095
    %v3098 = vmul.f32 %v3090, %v3096
    %v3099 = vmul.f32 %v3091, %v3096
    %v3101 = vlaneseq
    %v3102 = vshrl.u32 %v3101, 7
    %v3103 = vsub.s32 0, %v3102
    %v3104 = vrot.slane %v3065, %v3103
    %v3106 = vadd.f32 %v3098, %v3104
    %v3107 = vadd.f32 %v3099, %v3104
    %v3108 = vld [vmem:[%s10] sm:$0xff]
    %v3109 = vld [vmem:[%s10 + $0x8] sm:$0xff]
    %v3110 = vld [vmem:[%s10 + $0x10] sm:$0xff]
    %v3111 = vld [vmem:[%s10 + $0x18] sm:$0xff]
    %v3112 = vld [vmem:[%s11] sm:$0x1]
    %v3114 = vlaneseq
    %v3115 = vshrl.u32 %v3114, 7
    %v3116 = vsub.s32 0, %v3115
    %v3117 = vrot.slane %v3112, %v3116
    %v3120 = vsel %vm126, %v3106, 0
    %v3123 = vsel %vm126, %v3107, 0
    %3125 = vmatprep.subr.mxu0 0.0
    %3126 = vmatpush1.msra.mxu0 %v3108
    %3127 = vmatprep.subr.mxu0 0.0
    %3128 = vmatpush1.msra.mxu0 %v3109
    %3129 = vmatprep.subr.mxu0 0.0
    %3130 = vmatpush1.msra.mxu0 %v3110
    %3131 = vmatprep.subr.mxu0 0.0
    %3132 = vmatpush1.msra.mxu0 %v3111
    %3133 = vmatprep.subr.mxu0 0.0
    %3134 = vmatpush1.msra.mxu0 0.0
    %3135 = vmatprep.subr.mxu0 0.0
    %3136 = vmatpush1.msra.mxu0 0.0
    %3137 = vmatprep.subr.mxu0 0.0
    %3138 = vmatpush1.msra.mxu0 0.0
    %3139 = vmatprep.subr.mxu0 0.0
    %3140 = vmatpush1.msra.mxu0 0.0
    %3141 = vmatprep.subr.mxu0 0.0
    %3142 = vmatpush1.msra.mxu0 0.0
    %3143 = vmatprep.subr.mxu0 0.0
    %3144 = vmatpush1.msra.mxu0 0.0
    %3145 = vmatprep.subr.mxu0 0.0
    %3146 = vmatpush1.msra.mxu0 0.0
    %3147 = vmatprep.subr.mxu0 0.0
    %3148 = vmatpush1.msra.mxu0 0.0
    %3149 = vmatprep.subr.mxu0 0.0
    %3150 = vmatpush1.msra.mxu0 0.0
    %3151 = vmatprep.subr.mxu0 0.0
    %3152 = vmatpush1.msra.mxu0 0.0
    %3153 = vmatprep.subr.mxu0 0.0
    %3154 = vmatpush1.msra.mxu0 0.0
    %3155 = vmatprep.subr.mxu0 0.0
    %3156 = vmatpush1.msra.mxu0 0.0
    %3157 = vmatprep.subr.mxu0 0.0
    %3158 = vmatpush1.msra.mxu0 0.0
    %3159 = vmatprep.subr.mxu0 0.0
    %3160 = vmatpush1.msra.mxu0 0.0
    %3161 = vmatprep.subr.mxu0 0.0
    %3162 = vmatpush1.msra.mxu0 0.0
    %3163 = vmatprep.subr.mxu0 0.0
    %3164 = vmatpush1.msra.mxu0 0.0
    %3165 = vmatprep.subr.mxu0 0.0
    %3166 = vmatpush1.msra.mxu0 0.0
    %3167 = vmatprep.subr.mxu0 0.0
    %3168 = vmatpush1.msra.mxu0 0.0
    %3169 = vmatprep.subr.mxu0 0.0
    %3170 = vmatpush1.msra.mxu0 0.0
    %3171 = vmatprep.subr.mxu0 0.0
    %3172 = vmatpush1.msra.mxu0 0.0
    %3173 = vmatprep.subr.mxu0 0.0
    %3174 = vmatpush1.msra.mxu0 0.0
    %3175 = vmatprep.subr.mxu0 0.0
    %3176 = vmatpush1.msra.mxu0 0.0
    %3177 = vmatprep.subr.mxu0 0.0
    %3178 = vmatpush1.msra.mxu0 0.0
    %3179 = vmatprep.subr.mxu0 0.0
    %3180 = vmatpush1.msra.mxu0 0.0
    %3181 = vmatprep.subr.mxu0 0.0
    %3182 = vmatpush1.msra.mxu0 0.0
    %3183 = vmatprep.subr.mxu0 0.0
    %3184 = vmatpush1.msra.mxu0 0.0
    %3185 = vmatprep.subr.mxu0 0.0
    %3186 = vmatpush1.msra.mxu0 0.0
    %3187 = vmatprep.subr.mxu0 0.0
    %3188 = vmatpush1.msra.mxu0 0.0
    %3189 = vmatprep.mubr.f32.mxu0 0.0
    %3190 = vmatmul.mubr.f32.gmra.mrb[0].mxu0 %v3120
    %v3191 = vpop.f32.mrb[0].mxu0
    %v3192 = vadd.f32 %v3117, %v3191
    %v3193 = vpop.f32.mrb[0].mxu0
    %3194 = vmatprep.mubr.f32.mxu0 0.0
    %3195 = vmatmul.mubr.f32.gmra.mrb[0].mxu0 %v3123
    %v3196 = vpop.f32.mrb[0].mxu0
    %v3197 = vadd.f32 %v3117, %v3196
    %v3198 = vpop.f32.mrb[0].mxu0
    %3199 = vdwg.mxu0
    %v3200 = vmax.f32 %v3192, 0.0
    %v3201 = vmax.f32 %v3197, 0.0
    %v3202 = vld [vmem:[%s12] sm:$0xff]
    %v3203 = vld [vmem:[%s12 + $0x8] sm:$0xff]
    %v3204 = vld [vmem:[%s12 + $0x10] sm:$0xff]
    %v3205 = vld [vmem:[%s12 + $0x18] sm:$0xff]
    %v3206 = vld [vmem:[%s12 + $0x20] sm:$0xff]
    %v3207 = vld [vmem:[%s12 + $0x28] sm:$0xff]
    %v3208 = vld [vmem:[%s12 + $0x30] sm:$0xff]
    %v3209 = vld [vmem:[%s12 + $0x38] sm:$0xff]
    %vm3210 = vcmask 523264
    %v3212 = vsel %vm3210, %v3200, 0
    %v3215 = vsel %vm3210, %v3201, 0
    %3217 = vmatprep.subr.mxu0 0.0
    %3218 = vmatpush1.msra.mxu0 %v3202
    %3219 = vmatprep.subr.mxu0 0.0
    %3220 = vmatpush1.msra.mxu0 %v3203
    %3221 = vmatprep.subr.mxu0 0.0
    %3222 = vmatpush1.msra.mxu0 %v3204
    %3223 = vmatprep.subr.mxu0 0.0
    %3224 = vmatpush1.msra.mxu0 %v3205
    %3225 = vmatprep.subr.mxu0 0.0
    %3226 = vmatpush1.msra.mxu0 %v3206
    %3227 = vmatprep.subr.mxu0 0.0
    %3228 = vmatpush1.msra.mxu0 %v3207
    %3229 = vmatprep.subr.mxu0 0.0
    %3230 = vmatpush1.msra.mxu0 %v3208
    %3231 = vmatprep.subr.mxu0 0.0
    %3232 = vmatpush1.msra.mxu0 %v3209
    %3233 = vmatprep.subr.mxu0 0.0
    %3234 = vmatpush1.msra.mxu0 0.0
    %3235 = vmatprep.subr.mxu0 0.0
    %3236 = vmatpush1.msra.mxu0 0.0
    %3237 = vmatprep.subr.mxu0 0.0
    %3238 = vmatpush1.msra.mxu0 0.0
    %3239 = vmatprep.subr.mxu0 0.0
    %3240 = vmatpush1.msra.mxu0 0.0
    %3241 = vmatprep.subr.mxu0 0.0
    %3242 = vmatpush1.msra.mxu0 0.0
    %3243 = vmatprep.subr.mxu0 0.0
    %3244 = vmatpush1.msra.mxu0 0.0
    %3245 = vmatprep.subr.mxu0 0.0
    %3246 = vmatpush1.msra.mxu0 0.0
    %3247 = vmatprep.subr.mxu0 0.0
    %3248 = vmatpush1.msra.mxu0 0.0
    %3249 = vmatprep.subr.mxu0 0.0
    %3250 = vmatpush1.msra.mxu0 0.0
    %3251 = vmatprep.subr.mxu0 0.0
    %3252 = vmatpush1.msra.mxu0 0.0
    %3253 = vmatprep.subr.mxu0 0.0
    %3254 = vmatpush1.msra.mxu0 0.0
    %3255 = vmatprep.subr.mxu0 0.0
    %3256 = vmatpush1.msra.mxu0 0.0
    %3257 = vmatprep.subr.mxu0 0.0
    %3258 = vmatpush1.msra.mxu0 0.0
    %3259 = vmatprep.subr.mxu0 0.0
    %3260 = vmatpush1.msra.mxu0 0.0
    %3261 = vmatprep.subr.mxu0 0.0
    %3262 = vmatpush1.msra.mxu0 0.0
    %3263 = vmatprep.subr.mxu0 0.0
    %3264 = vmatpush1.msra.mxu0 0.0
    %3265 = vmatprep.subr.mxu0 0.0
    %3266 = vmatpush1.msra.mxu0 0.0
    %3267 = vmatprep.subr.mxu0 0.0
    %3268 = vmatpush1.msra.mxu0 0.0
    %3269 = vmatprep.subr.mxu0 0.0
    %3270 = vmatpush1.msra.mxu0 0.0
    %3271 = vmatprep.subr.mxu0 0.0
    %3272 = vmatpush1.msra.mxu0 0.0
    %3273 = vmatprep.subr.mxu0 0.0
    %3274 = vmatpush1.msra.mxu0 0.0
    %3275 = vmatprep.subr.mxu0 0.0
    %3276 = vmatpush1.msra.mxu0 0.0
    %3277 = vmatprep.subr.mxu0 0.0
    %3278 = vmatpush1.msra.mxu0 0.0
    %3279 = vmatprep.subr.mxu0 0.0
    %3280 = vmatpush1.msra.mxu0 0.0
    %3281 = vmatprep.mubr.f32.mxu0 0.0
    %3282 = vmatmul.mubr.f32.gmra.mrb[0].mxu0 %v3212
    %v3283 = vpop.f32.mrb[0].mxu0
    %v3284 = vadd.f32 0.0, %v3283
    %v3285 = vpop.f32.mrb[0].mxu0
    %3286 = vmatprep.mubr.f32.mxu0 0.0
    %3287 = vmatmul.mubr.f32.gmra.mrb[0].mxu0 %v3215
    %v3288 = vpop.f32.mrb[0].mxu0
    %v3289 = vadd.f32 0.0, %v3288
    %v3290 = vpop.f32.mrb[0].mxu0
    %3291 = vdwg.mxu0
    %v3292 = vadd.f32 %v3062, %v3284
    %v3293 = vadd.f32 %v3063, %v3289
    %v3294 = vld [vmem:[%s13] sm:$0x1]
    %v3296 = vlaneseq
    %v3297 = vshrl.u32 %v3296, 7
    %v3298 = vsub.s32 0, %v3297
    %v3299 = vrot.slane %v3294, %v3298
    %v3301 = vadd.f32 %v3292, %v3299
    %v3302 = vadd.f32 %v3293, %v3299
    %s3303 = scalar_lea.vmem %s1, 1
    %v3304 = vld [vmem:[%s3303] sm:$0x1]
    %s3305 = scalar_lea.vmem %s2, 1
    %v3306 = vld [vmem:[%s3305] sm:$0x1]
    %v3307 = vsel %vm126, %v3301, 0.0
    %3308 = vadd.xlane.f32.xlu0 %v3307
    %v3309 = vpop.xlane.xlu0 %3308
    %v3310 = vsel %vm126, %v3302, 0.0
    %3311 = vadd.xlane.f32.xlu0 %v3310
    %v3312 = vpop.xlane.xlu0 %3311
    %v3313 = vmul.f32 %v3309, %v133
    %v3314 = vmul.f32 %v3312, %v133
    %v3315 = vsub.f32 %v3301, %v3313
    %v3316 = vsub.f32 %v3302, %v3314
    %v3317 = vmul.f32 %v3315, %v3315
    %v3318 = vmul.f32 %v3316, %v3316
    %v3319 = vsel %vm126, %v3317, 0.0
    %3320 = vadd.xlane.f32.xlu0 %v3319
    %v3321 = vpop.xlane.xlu0 %3320
    %v3322 = vsel %vm126, %v3318, 0.0
    %3323 = vadd.xlane.f32.xlu0 %v3322
    %v3324 = vpop.xlane.xlu0 %3323
    %v3325 = vmul.f32 %v3321, %v133
    %v3326 = vmul.f32 %v3324, %v133
    %v3327 = vadd.f32 %v3325, 1e-05
    %v3328 = vadd.f32 %v3326, 1e-05
    %v3329 = vrsqrt.pop %v3327
    %v3330 = vrsqrt.pop %v3328
    %v3331 = vmul.f32 %v3315, %v3329
    %v3332 = vmul.f32 %v3316, %v3330
    %v3334 = vlaneseq
    %v3335 = vshrl.u32 %v3334, 7
    %v3336 = vsub.s32 0, %v3335
    %v3337 = vrot.slane %v3304, %v3336
    %v3339 = vmul.f32 %v3331, %v3337
    %v3340 = vmul.f32 %v3332, %v3337
    %v3342 = vlaneseq
    %v3343 = vshrl.u32 %v3342, 7
    %v3344 = vsub.s32 0, %v3343
    %v3345 = vrot.slane %v3306, %v3344
    %v3347 = vadd.f32 %v3339, %v3345
    %v3348 = vadd.f32 %v3340, %v3345
    %s3349 = scalar_lea.vmem %s3, 128
    %v3350 = vld [vmem:[%s3349] sm:$0xff]
    %v3351 = vld [vmem:[%s3349 + $0x8] sm:$0xff]
    %v3352 = vld [vmem:[%s3349 + $0x10] sm:$0xff]
    %v3353 = vld [vmem:[%s3349 + $0x18] sm:$0xff]
    %v3355 = vsel %vm126, %v3347, 0
    %v3358 = vsel %vm126, %v3348, 0
    %3360 = vmatprep.subr.mxu0 0.0
    %3361 = vmatpush1.msra.mxu0 %v3350
    %3362 = vmatprep.subr.mxu0 0.0
    %3363 = vmatpush1.msra.mxu0 %v3351
    %3364 = vmatprep.subr.mxu0 0.0
    %3365 = vmatpush1.msra.mxu0 %v3352
    %3366 = vmatprep.subr.mxu0 0.0
    %3367 = vmatpush1.msra.mxu0 %v3353
    %3368 = vmatprep.subr.mxu0 0.0
    %3369 = vmatpush1.msra.mxu0 0.0
    %3370 = vmatprep.subr.mxu0 0.0
    %3371 = vmatpush1.msra.mxu0 0.0
    %3372 = vmatprep.subr.mxu0 0.0
    %3373 = vmatpush1.msra.mxu0 0.0
    %3374 = vmatprep.subr.mxu0 0.0
    %3375 = vmatpush1.msra.mxu0 0.0
    %3376 = vmatprep.subr.mxu0 0.0
    %3377 = vmatpush1.msra.mxu0 0.0
    %3378 = vmatprep.subr.mxu0 0.0
    %3379 = vmatpush1.msra.mxu0 0.0
    %3380 = vmatprep.subr.mxu0 0.0
    %3381 = vmatpush1.msra.mxu0 0.0
    %3382 = vmatprep.subr.mxu0 0.0
    %3383 = vmatpush1.msra.mxu0 0.0
    %3384 = vmatprep.subr.mxu0 0.0
    %3385 = vmatpush1.msra.mxu0 0.0
    %3386 = vmatprep.subr.mxu0 0.0
    %3387 = vmatpush1.msra.mxu0 0.0
    %3388 = vmatprep.subr.mxu0 0.0
    %3389 = vmatpush1.msra.mxu0 0.0
    %3390 = vmatprep.subr.mxu0 0.0
    %3391 = vmatpush1.msra.mxu0 0.0
    %3392 = vmatprep.subr.mxu0 0.0
    %3393 = vmatpush1.msra.mxu0 0.0
    %3394 = vmatprep.subr.mxu0 0.0
    %3395 = vmatpush1.msra.mxu0 0.0
    %3396 = vmatprep.subr.mxu0 0.0
    %3397 = vmatpush1.msra.mxu0 0.0
    %3398 = vmatprep.subr.mxu0 0.0
    %3399 = vmatpush1.msra.mxu0 0.0
    %3400 = vmatprep.subr.mxu0 0.0
    %3401 = vmatpush1.msra.mxu0 0.0
    %3402 = vmatprep.subr.mxu0 0.0
    %3403 = vmatpush1.msra.mxu0 0.0
    %3404 = vmatprep.subr.mxu0 0.0
    %3405 = vmatpush1.msra.mxu0 0.0
    %3406 = vmatprep.subr.mxu0 0.0
    %3407 = vmatpush1.msra.mxu0 0.0
    %3408 = vmatprep.subr.mxu0 0.0
    %3409 = vmatpush1.msra.mxu0 0.0
    %3410 = vmatprep.subr.mxu0 0.0
    %3411 = vmatpush1.msra.mxu0 0.0
    %3412 = vmatprep.subr.mxu0 0.0
    %3413 = vmatpush1.msra.mxu0 0.0
    %3414 = vmatprep.subr.mxu0 0.0
    %3415 = vmatpush1.msra.mxu0 0.0
    %3416 = vmatprep.subr.mxu0 0.0
    %3417 = vmatpush1.msra.mxu0 0.0
    %3418 = vmatprep.subr.mxu0 0.0
    %3419 = vmatpush1.msra.mxu0 0.0
    %3420 = vmatprep.subr.mxu0 0.0
    %3421 = vmatpush1.msra.mxu0 0.0
    %3422 = vmatprep.subr.mxu0 0.0
    %3423 = vmatpush1.msra.mxu0 0.0
    %3424 = vmatprep.mubr.f32.mxu0 0.0
    %3425 = vmatmul.mubr.f32.gmra.mrb[0].mxu0 %v3355
    %v3426 = vpop.f32.mrb[0].mxu0
    %v3427 = vadd.f32 0.0, %v3426
    %v3428 = vpop.f32.mrb[0].mxu0
    %3429 = vmatprep.mubr.f32.mxu0 0.0
    %3430 = vmatmul.mubr.f32.gmra.mrb[0].mxu0 %v3358
    %v3431 = vpop.f32.mrb[0].mxu0
    %v3432 = vadd.f32 0.0, %v3431
    %v3433 = vpop.f32.mrb[0].mxu0
    %3434 = vdwg.mxu0
    %s3435 = scalar_lea.vmem %s4, 128
    %v3436 = vld [vmem:[%s3435] sm:$0xff]
    %v3437 = vld [vmem:[%s3435 + $0x8] sm:$0xff]
    %v3438 = vld [vmem:[%s3435 + $0x10] sm:$0xff]
    %v3439 = vld [vmem:[%s3435 + $0x18] sm:$0xff]
    %3440 = vmatprep.subr.mxu0 0.0
    %3441 = vmatpush1.msra.mxu0 %v3436
    %3442 = vmatprep.subr.mxu0 0.0
    %3443 = vmatpush1.msra.mxu0 %v3437
    %3444 = vmatprep.subr.mxu0 0.0
    %3445 = vmatpush1.msra.mxu0 %v3438
    %3446 = vmatprep.subr.mxu0 0.0
    %3447 = vmatpush1.msra.mxu0 %v3439
    %3448 = vmatprep.subr.mxu0 0.0
    %3449 = vmatpush1.msra.mxu0 0.0
    %3450 = vmatprep.subr.mxu0 0.0
    %3451 = vmatpush1.msra.mxu0 0.0
    %3452 = vmatprep.subr.mxu0 0.0
    %3453 = vmatpush1.msra.mxu0 0.0
    %3454 = vmatprep.subr.mxu0 0.0
    %3455 = vmatpush1.msra.mxu0 0.0
    %3456 = vmatprep.subr.mxu0 0.0
    %3457 = vmatpush1.msra.mxu0 0.0
    %3458 = vmatprep.subr.mxu0 0.0
    %3459 = vmatpush1.msra.mxu0 0.0
    %3460 = vmatprep.subr.mxu0 0.0
    %3461 = vmatpush1.msra.mxu0 0.0
    %3462 = vmatprep.subr.mxu0 0.0
    %3463 = vmatpush1.msra.mxu0 0.0
    %3464 = vmatprep.subr.mxu0 0.0
    %3465 = vmatpush1.msra.mxu0 0.0
    %3466 = vmatprep.subr.mxu0 0.0
    %3467 = vmatpush1.msra.mxu0 0.0
    %3468 = vmatprep.subr.mxu0 0.0
    %3469 = vmatpush1.msra.mxu0 0.0
    %3470 = vmatprep.subr.mxu0 0.0
    %3471 = vmatpush1.msra.mxu0 0.0
    %3472 = vmatprep.subr.mxu0 0.0
    %3473 = vmatpush1.msra.mxu0 0.0
    %3474 = vmatprep.subr.mxu0 0.0
    %3475 = vmatpush1.msra.mxu0 0.0
    %3476 = vmatprep.subr.mxu0 0.0
    %3477 = vmatpush1.msra.mxu0 0.0
    %3478 = vmatprep.subr.mxu0 0.0
    %3479 = vmatpush1.msra.mxu0 0.0
    %3480 = vmatprep.subr.mxu0 0.0
    %3481 = vmatpush1.msra.mxu0 0.0
    %3482 = vmatprep.subr.mxu0 0.0
    %3483 = vmatpush1.msra.mxu0 0.0
    %3484 = vmatprep.subr.mxu0 0.0
    %3485 = vmatpush1.msra.mxu0 0.0
    %3486 = vmatprep.subr.mxu0 0.0
    %3487 = vmatpush1.msra.mxu0 0.0
    %3488 = vmatprep.subr.mxu0 0.0
    %3489 = vmatpush1.msra.mxu0 0.0
    %3490 = vmatprep.subr.mxu0 0.0
    %3491 = vmatpush1.msra.mxu0 0.0
    %3492 = vmatprep.subr.mxu0 0.0
    %3493 = vmatpush1.msra.mxu0 0.0
    %3494 = vmatprep.subr.mxu0 0.0
    %3495 = vmatpush1.msra.mxu0 0.0
    %3496 = vmatprep.subr.mxu0 0.0
    %3497 = vmatpush1.msra.mxu0 0.0
    %3498 = vmatprep.subr.mxu0 0.0
    %3499 = vmatpush1.msra.mxu0 0.0
    %3500 = vmatprep.subr.mxu0 0.0
    %3501 = vmatpush1.msra.mxu0 0.0
    %3502 = vmatprep.subr.mxu0 0.0
    %3503 = vmatpush1.msra.mxu0 0.0
    %3504 = vmatprep.mubr.f32.mxu0 0.0
    %3505 = vmatmul.mubr.f32.gmra.mrb[0].mxu0 %v3355
    %v3506 = vpop.f32.mrb[0].mxu0
    %v3507 = vadd.f32 0.0, %v3506
    %v3508 = vpop.f32.mrb[0].mxu0
    %3509 = vmatprep.mubr.f32.mxu0 0.0
    %3510 = vmatmul.mubr.f32.gmra.mrb[0].mxu0 %v3358
    %v3511 = vpop.f32.mrb[0].mxu0
    %v3512 = vadd.f32 0.0, %v3511
    %v3513 = vpop.f32.mrb[0].mxu0
    %3514 = vdwg.mxu0
    %s3515 = scalar_lea.vmem %s5, 128
    %v3516 = vld [vmem:[%s3515] sm:$0xff]
    %v3517 = vld [vmem:[%s3515 + $0x8] sm:$0xff]
    %v3518 = vld [vmem:[%s3515 + $0x10] sm:$0xff]
    %v3519 = vld [vmem:[%s3515 + $0x18] sm:$0xff]
    %3520 = vmatprep.subr.mxu0 0.0
    %3521 = vmatpush1.msra.mxu0 %v3516
    %3522 = vmatprep.subr.mxu0 0.0
    %3523 = vmatpush1.msra.mxu0 %v3517
    %3524 = vmatprep.subr.mxu0 0.0
    %3525 = vmatpush1.msra.mxu0 %v3518
    %3526 = vmatprep.subr.mxu0 0.0
    %3527 = vmatpush1.msra.mxu0 %v3519
    %3528 = vmatprep.subr.mxu0 0.0
    %3529 = vmatpush1.msra.mxu0 0.0
    %3530 = vmatprep.subr.mxu0 0.0
    %3531 = vmatpush1.msra.mxu0 0.0
    %3532 = vmatprep.subr.mxu0 0.0
    %3533 = vmatpush1.msra.mxu0 0.0
    %3534 = vmatprep.subr.mxu0 0.0
    %3535 = vmatpush1.msra.mxu0 0.0
    %3536 = vmatprep.subr.mxu0 0.0
    %3537 = vmatpush1.msra.mxu0 0.0
    %3538 = vmatprep.subr.mxu0 0.0
    %3539 = vmatpush1.msra.mxu0 0.0
    %3540 = vmatprep.subr.mxu0 0.0
    %3541 = vmatpush1.msra.mxu0 0.0
    %3542 = vmatprep.subr.mxu0 0.0
    %3543 = vmatpush1.msra.mxu0 0.0
    %3544 = vmatprep.subr.mxu0 0.0
    %3545 = vmatpush1.msra.mxu0 0.0
    %3546 = vmatprep.subr.mxu0 0.0
    %3547 = vmatpush1.msra.mxu0 0.0
    %3548 = vmatprep.subr.mxu0 0.0
    %3549 = vmatpush1.msra.mxu0 0.0
    %3550 = vmatprep.subr.mxu0 0.0
    %3551 = vmatpush1.msra.mxu0 0.0
    %3552 = vmatprep.subr.mxu0 0.0
    %3553 = vmatpush1.msra.mxu0 0.0
    %3554 = vmatprep.subr.mxu0 0.0
    %3555 = vmatpush1.msra.mxu0 0.0
    %3556 = vmatprep.subr.mxu0 0.0
    %3557 = vmatpush1.msra.mxu0 0.0
    %3558 = vmatprep.subr.mxu0 0.0
    %3559 = vmatpush1.msra.mxu0 0.0
    %3560 = vmatprep.subr.mxu0 0.0
    %3561 = vmatpush1.msra.mxu0 0.0
    %3562 = vmatprep.subr.mxu0 0.0
    %3563 = vmatpush1.msra.mxu0 0.0
    %3564 = vmatprep.subr.mxu0 0.0
    %3565 = vmatpush1.msra.mxu0 0.0
    %3566 = vmatprep.subr.mxu0 0.0
    %3567 = vmatpush1.msra.mxu0 0.0
    %3568 = vmatprep.subr.mxu0 0.0
    %3569 = vmatpush1.msra.mxu0 0.0
    %3570 = vmatprep.subr.mxu0 0.0
    %3571 = vmatpush1.msra.mxu0 0.0
    %3572 = vmatprep.subr.mxu0 0.0
    %3573 = vmatpush1.msra.mxu0 0.0
    %3574 = vmatprep.subr.mxu0 0.0
    %3575 = vmatpush1.msra.mxu0 0.0
    %3576 = vmatprep.subr.mxu0 0.0
    %3577 = vmatpush1.msra.mxu0 0.0
    %3578 = vmatprep.subr.mxu0 0.0
    %3579 = vmatpush1.msra.mxu0 0.0
    %3580 = vmatprep.subr.mxu0 0.0
    %3581 = vmatpush1.msra.mxu0 0.0
    %3582 = vmatprep.subr.mxu0 0.0
    %3583 = vmatpush1.msra.mxu0 0.0
    %3584 = vmatprep.mubr.f32.mxu0 0.0
    %3585 = vmatmul.mubr.f32.gmra.mrb[0].mxu0 %v3355
    %v3586 = vpop.f32.mrb[0].mxu0
    %v3587 = vadd.f32 0.0, %v3586
    %v3588 = vpop.f32.mrb[0].mxu0
    %3589 = vmatprep.mubr.f32.mxu0 0.0
    %3590 = vmatmul.mubr.f32.gmra.mrb[0].mxu0 %v3358
    %v3591 = vpop.f32.mrb[0].mxu0
    %v3592 = vadd.f32 0.0, %v3591
    %v3593 = vpop.f32.mrb[0].mxu0
    %3594 = vdwg.mxu0
    %v3596 = vsel %vm413, %v3427, 0
    %v3599 = vsel %vm413, %v3507, 0
    %3601 = vmatprep.subr.mxu0 0.0
    %3602 = vmatpush1.xpose.msra.mxu0 %v3599
    %3603 = vmatprep.subr.mxu0 0.0
    %3604 = vmatpush1.xpose.msra.mxu0 0.0
    %3605 = vmatprep.subr.mxu0 0.0
    %3606 = vmatpush1.xpose.msra.mxu0 0.0
    %3607 = vmatprep.subr.mxu0 0.0
    %3608 = vmatpush1.xpose.msra.mxu0 0.0
    %3609 = vmatprep.subr.mxu0 0.0
    %3610 = vmatpush1.xpose.msra.mxu0 0.0
    %3611 = vmatprep.subr.mxu0 0.0
    %3612 = vmatpush1.xpose.msra.mxu0 0.0
    %3613 = vmatprep.subr.mxu0 0.0
    %3614 = vmatpush1.xpose.msra.mxu0 0.0
    %3615 = vmatprep.subr.mxu0 0.0
    %3616 = vmatpush1.xpose.msra.mxu0 0.0
    %3617 = vmatprep.subr.mxu0 0.0
    %3618 = vmatpush1.xpose.msra.mxu0 0.0
    %3619 = vmatprep.subr.mxu0 0.0
    %3620 = vmatpush1.xpose.msra.mxu0 0.0
    %3621 = vmatprep.subr.mxu0 0.0
    %3622 = vmatpush1.xpose.msra.mxu0 0.0
    %3623 = vmatprep.subr.mxu0 0.0
    %3624 = vmatpush1.xpose.msra.mxu0 0.0
    %3625 = vmatprep.subr.mxu0 0.0
    %3626 = vmatpush1.xpose.msra.mxu0 0.0
    %3627 = vmatprep.subr.mxu0 0.0
    %3628 = vmatpush1.xpose.msra.mxu0 0.0
    %3629 = vmatprep.subr.mxu0 0.0
    %3630 = vmatpush1.xpose.msra.mxu0 0.0
    %3631 = vmatprep.subr.mxu0 0.0
    %3632 = vmatpush1.xpose.msra.mxu0 0.0
    %3633 = vmatprep.subr.mxu0 0.0
    %3634 = vmatpush1.xpose.msra.mxu0 0.0
    %3635 = vmatprep.subr.mxu0 0.0
    %3636 = vmatpush1.xpose.msra.mxu0 0.0
    %3637 = vmatprep.subr.mxu0 0.0
    %3638 = vmatpush1.xpose.msra.mxu0 0.0
    %3639 = vmatprep.subr.mxu0 0.0
    %3640 = vmatpush1.xpose.msra.mxu0 0.0
    %3641 = vmatprep.subr.mxu0 0.0
    %3642 = vmatpush1.xpose.msra.mxu0 0.0
    %3643 = vmatprep.subr.mxu0 0.0
    %3644 = vmatpush1.xpose.msra.mxu0 0.0
    %3645 = vmatprep.subr.mxu0 0.0
    %3646 = vmatpush1.xpose.msra.mxu0 0.0
    %3647 = vmatprep.subr.mxu0 0.0
    %3648 = vmatpush1.xpose.msra.mxu0 0.0
    %3649 = vmatprep.subr.mxu0 0.0
    %3650 = vmatpush1.xpose.msra.mxu0 0.0
    %3651 = vmatprep.subr.mxu0 0.0
    %3652 = vmatpush1.xpose.msra.mxu0 0.0
    %3653 = vmatprep.subr.mxu0 0.0
    %3654 = vmatpush1.xpose.msra.mxu0 0.0
    %3655 = vmatprep.subr.mxu0 0.0
    %3656 = vmatpush1.xpose.msra.mxu0 0.0
    %3657 = vmatprep.subr.mxu0 0.0
    %3658 = vmatpush1.xpose.msra.mxu0 0.0
    %3659 = vmatprep.subr.mxu0 0.0
    %3660 = vmatpush1.xpose.msra.mxu0 0.0
    %3661 = vmatprep.subr.mxu0 0.0
    %3662 = vmatpush1.xpose.msra.mxu0 0.0
    %3663 = vmatprep.subr.mxu0 0.0
    %3664 = vmatpush1.xpose.msra.mxu0 0.0
    %3665 = vmatprep.mubr.f32.mxu0 0.0
    %3666 = vmatmul.mubr.f32.gmra.mrb[0].mxu0 %v3596
    %v3667 = vpop.f32.mrb[0].mxu0
    %v3668 = vadd.f32 0.0, %v3667
    %v3669 = vpop.f32.mrb[0].mxu0
    %3670 = vdwg.mxu0
    %v3672 = vsel %vm413, %v3432, 0
    %v3675 = vsel %vm413, %v3512, 0
    %3677 = vmatprep.subr.mxu0 0.0
    %3678 = vmatpush1.xpose.msra.mxu0 %v3675
    %3679 = vmatprep.subr.mxu0 0.0
    %3680 = vmatpush1.xpose.msra.mxu0 0.0
    %3681 = vmatprep.subr.mxu0 0.0
    %3682 = vmatpush1.xpose.msra.mxu0 0.0
    %3683 = vmatprep.subr.mxu0 0.0
    %3684 = vmatpush1.xpose.msra.mxu0 0.0
    %3685 = vmatprep.subr.mxu0 0.0
    %3686 = vmatpush1.xpose.msra.mxu0 0.0
    %3687 = vmatprep.subr.mxu0 0.0
    %3688 = vmatpush1.xpose.msra.mxu0 0.0
    %3689 = vmatprep.subr.mxu0 0.0
    %3690 = vmatpush1.xpose.msra.mxu0 0.0
    %3691 = vmatprep.subr.mxu0 0.0
    %3692 = vmatpush1.xpose.msra.mxu0 0.0
    %3693 = vmatprep.subr.mxu0 0.0
    %3694 = vmatpush1.xpose.msra.mxu0 0.0
    %3695 = vmatprep.subr.mxu0 0.0
    %3696 = vmatpush1.xpose.msra.mxu0 0.0
    %3697 = vmatprep.subr.mxu0 0.0
    %3698 = vmatpush1.xpose.msra.mxu0 0.0
    %3699 = vmatprep.subr.mxu0 0.0
    %3700 = vmatpush1.xpose.msra.mxu0 0.0
    %3701 = vmatprep.subr.mxu0 0.0
    %3702 = vmatpush1.xpose.msra.mxu0 0.0
    %3703 = vmatprep.subr.mxu0 0.0
    %3704 = vmatpush1.xpose.msra.mxu0 0.0
    %3705 = vmatprep.subr.mxu0 0.0
    %3706 = vmatpush1.xpose.msra.mxu0 0.0
    %3707 = vmatprep.subr.mxu0 0.0
    %3708 = vmatpush1.xpose.msra.mxu0 0.0
    %3709 = vmatprep.subr.mxu0 0.0
    %3710 = vmatpush1.xpose.msra.mxu0 0.0
    %3711 = vmatprep.subr.mxu0 0.0
    %3712 = vmatpush1.xpose.msra.mxu0 0.0
    %3713 = vmatprep.subr.mxu0 0.0
    %3714 = vmatpush1.xpose.msra.mxu0 0.0
    %3715 = vmatprep.subr.mxu0 0.0
    %3716 = vmatpush1.xpose.msra.mxu0 0.0
    %3717 = vmatprep.subr.mxu0 0.0
    %3718 = vmatpush1.xpose.msra.mxu0 0.0
    %3719 = vmatprep.subr.mxu0 0.0
    %3720 = vmatpush1.xpose.msra.mxu0 0.0
    %3721 = vmatprep.subr.mxu0 0.0
    %3722 = vmatpush1.xpose.msra.mxu0 0.0
    %3723 = vmatprep.subr.mxu0 0.0
    %3724 = vmatpush1.xpose.msra.mxu0 0.0
    %3725 = vmatprep.subr.mxu0 0.0
    %3726 = vmatpush1.xpose.msra.mxu0 0.0
    %3727 = vmatprep.subr.mxu0 0.0
    %3728 = vmatpush1.xpose.msra.mxu0 0.0
    %3729 = vmatprep.subr.mxu0 0.0
    %3730 = vmatpush1.xpose.msra.mxu0 0.0
    %3731 = vmatprep.subr.mxu0 0.0
    %3732 = vmatpush1.xpose.msra.mxu0 0.0
    %3733 = vmatprep.subr.mxu0 0.0
    %3734 = vmatpush1.xpose.msra.mxu0 0.0
    %3735 = vmatprep.subr.mxu0 0.0
    %3736 = vmatpush1.xpose.msra.mxu0 0.0
    %3737 = vmatprep.subr.mxu0 0.0
    %3738 = vmatpush1.xpose.msra.mxu0 0.0
    %3739 = vmatprep.subr.mxu0 0.0
    %3740 = vmatpush1.xpose.msra.mxu0 0.0
    %3741 = vmatprep.mubr.f32.mxu0 0.0
    %3742 = vmatmul.mubr.f32.gmra.mrb[0].mxu0 %v3672
    %v3743 = vpop.f32.mrb[0].mxu0
    %v3744 = vadd.f32 0.0, %v3743
    %v3745 = vpop.f32.mrb[0].mxu0
    %3746 = vdwg.mxu0
    %v3747 = vsel %vm413, %v3668, -inf
    %3748 = vmax.xlane.f32.xlu0 %v3747
    %v3749 = vpop.xlane.xlu0 %3748
    %v3750 = vsel %vm413, %v3744, -inf
    %3751 = vmax.xlane.f32.xlu0 %v3750
    %v3752 = vpop.xlane.xlu0 %3751
    %v3753 = vsub.f32 %v3668, %v3749
    %v3754 = vsub.f32 %v3744, %v3752
    %v3755 = vmul.f32 %v3753, 1.442695
    %v3756 = vpow.pop %v3755
    %v3757 = vmul.f32 %v3754, 1.442695
    %v3758 = vpow.pop %v3757
    %v3759 = vsel %vm413, %v3756, 0.0
    %3760 = vadd.xlane.f32.xlu0 %v3759
    %v3761 = vpop.xlane.xlu0 %3760
    %v3762 = vsel %vm413, %v3758, 0.0
    %3763 = vadd.xlane.f32.xlu0 %v3762
    %v3764 = vpop.xlane.xlu0 %3763
    %v3765 = vrcp.pop %v3761
    %v3766 = vmul.f32 %v3756, %v3765
    %v3767 = vrcp.pop %v3764
    %v3768 = vmul.f32 %v3758, %v3767
    %s3769 = scalar_lea.vmem %s3, 160
    %v3770 = vld [vmem:[%s3769] sm:$0xff]
    %v3771 = vld [vmem:[%s3769 + $0x8] sm:$0xff]
    %v3772 = vld [vmem:[%s3769 + $0x10] sm:$0xff]
    %v3773 = vld [vmem:[%s3769 + $0x18] sm:$0xff]
    %3774 = vmatprep.subr.mxu0 0.0
    %3775 = vmatpush1.msra.mxu0 %v3770
    %3776 = vmatprep.subr.mxu0 0.0
    %3777 = vmatpush1.msra.mxu0 %v3771
    %3778 = vmatprep.subr.mxu0 0.0
    %3779 = vmatpush1.msra.mxu0 %v3772
    %3780 = vmatprep.subr.mxu0 0.0
    %3781 = vmatpush1.msra.mxu0 %v3773
    %3782 = vmatprep.subr.mxu0 0.0
    %3783 = vmatpush1.msra.mxu0 0.0
    %3784 = vmatprep.subr.mxu0 0.0
    %3785 = vmatpush1.msra.mxu0 0.0
    %3786 = vmatprep.subr.mxu0 0.0
    %3787 = vmatpush1.msra.mxu0 0.0
    %3788 = vmatprep.subr.mxu0 0.0
    %3789 = vmatpush1.msra.mxu0 0.0
    %3790 = vmatprep.subr.mxu0 0.0
    %3791 = vmatpush1.msra.mxu0 0.0
    %3792 = vmatprep.subr.mxu0 0.0
    %3793 = vmatpush1.msra.mxu0 0.0
    %3794 = vmatprep.subr.mxu0 0.0
    %3795 = vmatpush1.msra.mxu0 0.0
    %3796 = vmatprep.subr.mxu0 0.0
    %3797 = vmatpush1.msra.mxu0 0.0
    %3798 = vmatprep.subr.mxu0 0.0
    %3799 = vmatpush1.msra.mxu0 0.0
    %3800 = vmatprep.subr.mxu0 0.0
    %3801 = vmatpush1.msra.mxu0 0.0
    %3802 = vmatprep.subr.mxu0 0.0
    %3803 = vmatpush1.msra.mxu0 0.0
    %3804 = vmatprep.subr.mxu0 0.0
    %3805 = vmatpush1.msra.mxu0 0.0
    %3806 = vmatprep.subr.mxu0 0.0
    %3807 = vmatpush1.msra.mxu0 0.0
    %3808 = vmatprep.subr.mxu0 0.0
    %3809 = vmatpush1.msra.mxu0 0.0
    %3810 = vmatprep.subr.mxu0 0.0
    %3811 = vmatpush1.msra.mxu0 0.0
    %3812 = vmatprep.subr.mxu0 0.0
    %3813 = vmatpush1.msra.mxu0 0.0
    %3814 = vmatprep.subr.mxu0 0.0
    %3815 = vmatpush1.msra.mxu0 0.0
    %3816 = vmatprep.subr.mxu0 0.0
    %3817 = vmatpush1.msra.mxu0 0.0
    %3818 = vmatprep.subr.mxu0 0.0
    %3819 = vmatpush1.msra.mxu0 0.0
    %3820 = vmatprep.subr.mxu0 0.0
    %3821 = vmatpush1.msra.mxu0 0.0
    %3822 = vmatprep.subr.mxu0 0.0
    %3823 = vmatpush1.msra.mxu0 0.0
    %3824 = vmatprep.subr.mxu0 0.0
    %3825 = vmatpush1.msra.mxu0 0.0
    %3826 = vmatprep.subr.mxu0 0.0
    %3827 = vmatpush1.msra.mxu0 0.0
    %3828 = vmatprep.subr.mxu0 0.0
    %3829 = vmatpush1.msra.mxu0 0.0
    %3830 = vmatprep.subr.mxu0 0.0
    %3831 = vmatpush1.msra.mxu0 0.0
    %3832 = vmatprep.subr.mxu0 0.0
    %3833 = vmatpush1.msra.mxu0 0.0
    %3834 = vmatprep.subr.mxu0 0.0
    %3835 = vmatpush1.msra.mxu0 0.0
    %3836 = vmatprep.subr.mxu0 0.0
    %3837 = vmatpush1.msra.mxu0 0.0
    %3838 = vmatprep.mubr.f32.mxu0 0.0
    %3839 = vmatmul.mubr.f32.gmra.mrb[0].mxu0 %v3355
    %v3840 = vpop.f32.mrb[0].mxu0
    %v3841 = vadd.f32 0.0, %v3840
    %v3842 = vpop.f32.mrb[0].mxu0
    %3843 = vmatprep.mubr.f32.mxu0 0.0
    %3844 = vmatmul.mubr.f32.gmra.mrb[0].mxu0 %v3358
    %v3845 = vpop.f32.mrb[0].mxu0
    %v3846 = vadd.f32 0.0, %v3845
    %v3847 = vpop.f32.mrb[0].mxu0
    %3848 = vdwg.mxu0
    %s3849 = scalar_lea.vmem %s4, 160
    %v3850 = vld [vmem:[%s3849] sm:$0xff]
    %v3851 = vld [vmem:[%s3849 + $0x8] sm:$0xff]
    %v3852 = vld [vmem:[%s3849 + $0x10] sm:$0xff]
    %v3853 = vld [vmem:[%s3849 + $0x18] sm:$0xff]
    %3854 = vmatprep.subr.mxu0 0.0
    %3855 = vmatpush1.msra.mxu0 %v3850
    %3856 = vmatprep.subr.mxu0 0.0
    %3857 = vmatpush1.msra.mxu0 %v3851
    %3858 = vmatprep.subr.mxu0 0.0
    %3859 = vmatpush1.msra.mxu0 %v3852
    %3860 = vmatprep.subr.mxu0 0.0
    %3861 = vmatpush1.msra.mxu0 %v3853
    %3862 = vmatprep.subr.mxu0 0.0
    %3863 = vmatpush1.msra.mxu0 0.0
    %3864 = vmatprep.subr.mxu0 0.0
    %3865 = vmatpush1.msra.mxu0 0.0
    %3866 = vmatprep.subr.mxu0 0.0
    %3867 = vmatpush1.msra.mxu0 0.0
    %3868 = vmatprep.subr.mxu0 0.0
    %3869 = vmatpush1.msra.mxu0 0.0
    %3870 = vmatprep.subr.mxu0 0.0
    %3871 = vmatpush1.msra.mxu0 0.0
    %3872 = vmatprep.subr.mxu0 0.0
    %3873 = vmatpush1.msra.mxu0 0.0
    %3874 = vmatprep.subr.mxu0 0.0
    %3875 = vmatpush1.msra.mxu0 0.0
    %3876 = vmatprep.subr.mxu0 0.0
    %3877 = vmatpush1.msra.mxu0 0.0
    %3878 = vmatprep.subr.mxu0 0.0
    %3879 = vmatpush1.msra.mxu0 0.0
    %3880 = vmatprep.subr.mxu0 0.0
    %3881 = vmatpush1.msra.mxu0 0.0
    %3882 = vmatprep.subr.mxu0 0.0
    %3883 = vmatpush1.msra.mxu0 0.0
    %3884 = vmatprep.subr.mxu0 0.0
    %3885 = vmatpush1.msra.mxu0 0.0
    %3886 = vmatprep.subr.mxu0 0.0
    %3887 = vmatpush1.msra.mxu0 0.0
    %3888 = vmatprep.subr.mxu0 0.0
    %3889 = vmatpush1.msra.mxu0 0.0
    %3890 = vmatprep.subr.mxu0 0.0
    %3891 = vmatpush1.msra.mxu0 0.0
    %3892 = vmatprep.subr.mxu0 0.0
    %3893 = vmatpush1.msra.mxu0 0.0
    %3894 = vmatprep.subr.mxu0 0.0
    %3895 = vmatpush1.msra.mxu0 0.0
    %3896 = vmatprep.subr.mxu0 0.0
    %3897 = vmatpush1.msra.mxu0 0.0
    %3898 = vmatprep.subr.mxu0 0.0
    %3899 = vmatpush1.msra.mxu0 0.0
    %3900 = vmatprep.subr.mxu0 0.0
    %3901 = vmatpush1.msra.mxu0 0.0
    %3902 = vmatprep.subr.mxu0 0.0
    %3903 = vmatpush1.msra.mxu0 0.0
    %3904 = vmatprep.subr.mxu0 0.0
    %3905 = vmatpush1.msra.mxu0 0.0
    %3906 = vmatprep.subr.mxu0 0.0
    %3907 = vmatpush1.msra.mxu0 0.0
    %3908 = vmatprep.subr.mxu0 0.0
    %3909 = vmatpush1.msra.mxu0 0.0
    %3910 = vmatprep.subr.mxu0 0.0
    %3911 = vmatpush1.msra.mxu0 0.0
    %3912 = vmatprep.subr.mxu0 0.0
    %3913 = vmatpush1.msra.mxu0 0.0
    %3914 = vmatprep.subr.mxu0 0.0
    %3915 = vmatpush1.msra.mxu0 0.0
    %3916 = vmatprep.subr.mxu0 0.0
    %3917 = vmatpush1.msra.mxu0 0.0
    %3918 = vmatprep.mubr.f32.mxu0 0.0
    %3919 = vmatmul.mubr.f32.gmra.mrb[0].mxu0 %v3355
    %v3920 = vpop.f32.mrb[0].mxu0
    %v3921 = vadd.f32 0.0, %v3920
    %v3922 = vpop.f32.mrb[0].mxu0
    %3923 = vmatprep.mubr.f32.mxu0 0.0
    %3924 = vmatmul.mubr.f32.gmra.mrb[0].mxu0 %v3358
    %v3925 = vpop.f32.mrb[0].mxu0
    %v3926 = vadd.f32 0.0, %v3925
    %v3927 = vpop.f32.mrb[0].mxu0
    %3928 = vdwg.mxu0
    %s3929 = scalar_lea.vmem %s5, 160
    %v3930 = vld [vmem:[%s3929] sm:$0xff]
    %v3931 = vld [vmem:[%s3929 + $0x8] sm:$0xff]
    %v3932 = vld [vmem:[%s3929 + $0x10] sm:$0xff]
    %v3933 = vld [vmem:[%s3929 + $0x18] sm:$0xff]
    %3934 = vmatprep.subr.mxu0 0.0
    %3935 = vmatpush1.msra.mxu0 %v3930
    %3936 = vmatprep.subr.mxu0 0.0
    %3937 = vmatpush1.msra.mxu0 %v3931
    %3938 = vmatprep.subr.mxu0 0.0
    %3939 = vmatpush1.msra.mxu0 %v3932
    %3940 = vmatprep.subr.mxu0 0.0
    %3941 = vmatpush1.msra.mxu0 %v3933
    %3942 = vmatprep.subr.mxu0 0.0
    %3943 = vmatpush1.msra.mxu0 0.0
    %3944 = vmatprep.subr.mxu0 0.0
    %3945 = vmatpush1.msra.mxu0 0.0
    %3946 = vmatprep.subr.mxu0 0.0
    %3947 = vmatpush1.msra.mxu0 0.0
    %3948 = vmatprep.subr.mxu0 0.0
    %3949 = vmatpush1.msra.mxu0 0.0
    %3950 = vmatprep.subr.mxu0 0.0
    %3951 = vmatpush1.msra.mxu0 0.0
    %3952 = vmatprep.subr.mxu0 0.0
    %3953 = vmatpush1.msra.mxu0 0.0
    %3954 = vmatprep.subr.mxu0 0.0
    %3955 = vmatpush1.msra.mxu0 0.0
    %3956 = vmatprep.subr.mxu0 0.0
    %3957 = vmatpush1.msra.mxu0 0.0
    %3958 = vmatprep.subr.mxu0 0.0
    %3959 = vmatpush1.msra.mxu0 0.0
    %3960 = vmatprep.subr.mxu0 0.0
    %3961 = vmatpush1.msra.mxu0 0.0
    %3962 = vmatprep.subr.mxu0 0.0
    %3963 = vmatpush1.msra.mxu0 0.0
    %3964 = vmatprep.subr.mxu0 0.0
    %3965 = vmatpush1.msra.mxu0 0.0
    %3966 = vmatprep.subr.mxu0 0.0
    %3967 = vmatpush1.msra.mxu0 0.0
    %3968 = vmatprep.subr.mxu0 0.0
    %3969 = vmatpush1.msra.mxu0 0.0
    %3970 = vmatprep.subr.mxu0 0.0
    %3971 = vmatpush1.msra.mxu0 0.0
    %3972 = vmatprep.subr.mxu0 0.0
    %3973 = vmatpush1.msra.mxu0 0.0
    %3974 = vmatprep.subr.mxu0 0.0
    %3975 = vmatpush1.msra.mxu0 0.0
    %3976 = vmatprep.subr.mxu0 0.0
    %3977 = vmatpush1.msra.mxu0 0.0
    %3978 = vmatprep.subr.mxu0 0.0
    %3979 = vmatpush1.msra.mxu0 0.0
    %3980 = vmatprep.subr.mxu0 0.0
    %3981 = vmatpush1.msra.mxu0 0.0
    %3982 = vmatprep.subr.mxu0 0.0
    %3983 = vmatpush1.msra.mxu0 0.0
    %3984 = vmatprep.subr.mxu0 0.0
    %3985 = vmatpush1.msra.mxu0 0.0
    %3986 = vmatprep.subr.mxu0 0.0
    %3987 = vmatpush1.msra.mxu0 0.0
    %3988 = vmatprep.subr.mxu0 0.0
    %3989 = vmatpush1.msra.mxu0 0.0
    %3990 = vmatprep.subr.mxu0 0.0
    %3991 = vmatpush1.msra.mxu0 0.0
    %3992 = vmatprep.subr.mxu0 0.0
    %3993 = vmatpush1.msra.mxu0 0.0
    %3994 = vmatprep.subr.mxu0 0.0
    %3995 = vmatpush1.msra.mxu0 0.0
    %3996 = vmatprep.subr.mxu0 0.0
    %3997 = vmatpush1.msra.mxu0 0.0
    %3998 = vmatprep.mubr.f32.mxu0 0.0
    %3999 = vmatmul.mubr.f32.gmra.mrb[0].mxu0 %v3355
    %v4000 = vpop.f32.mrb[0].mxu0
    %v4001 = vadd.f32 0.0, %v4000
    %v4002 = vpop.f32.mrb[0].mxu0
    %4003 = vmatprep.mubr.f32.mxu0 0.0
    %4004 = vmatmul.mubr.f32.gmra.mrb[0].mxu0 %v3358
    %v4005 = vpop.f32.mrb[0].mxu0
    %v4006 = vadd.f32 0.0, %v4005
    %v4007 = vpop.f32.mrb[0].mxu0
    %4008 = vdwg.mxu0
    %v4010 = vsel %vm413, %v3841, 0
    %v4013 = vsel %vm413, %v3921, 0
    %4015 = vmatprep.subr.mxu0 0.0
    %4016 = vmatpush1.xpose.msra.mxu0 %v4013
    %4017 = vmatprep.subr.mxu0 0.0
    %4018 = vmatpush1.xpose.msra.mxu0 0.0
    %4019 = vmatprep.subr.mxu0 0.0
    %4020 = vmatpush1.xpose.msra.mxu0 0.0
    %4021 = vmatprep.subr.mxu0 0.0
    %4022 = vmatpush1.xpose.msra.mxu0 0.0
    %4023 = vmatprep.subr.mxu0 0.0
    %4024 = vmatpush1.xpose.msra.mxu0 0.0
    %4025 = vmatprep.subr.mxu0 0.0
    %4026 = vmatpush1.xpose.msra.mxu0 0.0
    %4027 = vmatprep.subr.mxu0 0.0
    %4028 = vmatpush1.xpose.msra.mxu0 0.0
    %4029 = vmatprep.subr.mxu0 0.0
    %4030 = vmatpush1.xpose.msra.mxu0 0.0
    %4031 = vmatprep.subr.mxu0 0.0
    %4032 = vmatpush1.xpose.msra.mxu0 0.0
    %4033 = vmatprep.subr.mxu0 0.0
    %4034 = vmatpush1.xpose.msra.mxu0 0.0
    %4035 = vmatprep.subr.mxu0 0.0
    %4036 = vmatpush1.xpose.msra.mxu0 0.0
    %4037 = vmatprep.subr.mxu0 0.0
    %4038 = vmatpush1.xpose.msra.mxu0 0.0
    %4039 = vmatprep.subr.mxu0 0.0
    %4040 = vmatpush1.xpose.msra.mxu0 0.0
    %4041 = vmatprep.subr.mxu0 0.0
    %4042 = vmatpush1.xpose.msra.mxu0 0.0
    %4043 = vmatprep.subr.mxu0 0.0
    %4044 = vmatpush1.xpose.msra.mxu0 0.0
    %4045 = vmatprep.subr.mxu0 0.0
    %4046 = vmatpush1.xpose.msra.mxu0 0.0
    %4047 = vmatprep.subr.mxu0 0.0
    %4048 = vmatpush1.xpose.msra.mxu0 0.0
    %4049 = vmatprep.subr.mxu0 0.0
    %4050 = vmatpush1.xpose.msra.mxu0 0.0
    %4051 = vmatprep.subr.mxu0 0.0
    %4052 = vmatpush1.xpose.msra.mxu0 0.0
    %4053 = vmatprep.subr.mxu0 0.0
    %4054 = vmatpush1.xpose.msra.mxu0 0.0
    %4055 = vmatprep.subr.mxu0 0.0
    %4056 = vmatpush1.xpose.msra.mxu0 0.0
    %4057 = vmatprep.subr.mxu0 0.0
    %4058 = vmatpush1.xpose.msra.mxu0 0.0
    %4059 = vmatprep.subr.mxu0 0.0
    %4060 = vmatpush1.xpose.msra.mxu0 0.0
    %4061 = vmatprep.subr.mxu0 0.0
    %4062 = vmatpush1.xpose.msra.mxu0 0.0
    %4063 = vmatprep.subr.mxu0 0.0
    %4064 = vmatpush1.xpose.msra.mxu0 0.0
    %4065 = vmatprep.subr.mxu0 0.0
    %4066 = vmatpush1.xpose.msra.mxu0 0.0
    %4067 = vmatprep.subr.mxu0 0.0
    %4068 = vmatpush1.xpose.msra.mxu0 0.0
    %4069 = vmatprep.subr.mxu0 0.0
    %4070 = vmatpush1.xpose.msra.mxu0 0.0
    %4071 = vmatprep.subr.mxu0 0.0
    %4072 = vmatpush1.xpose.msra.mxu0 0.0
    %4073 = vmatprep.subr.mxu0 0.0
    %4074 = vmatpush1.xpose.msra.mxu0 0.0
    %4075 = vmatprep.subr.mxu0 0.0
    %4076 = vmatpush1.xpose.msra.mxu0 0.0
    %4077 = vmatprep.subr.mxu0 0.0
    %4078 = vmatpush1.xpose.msra.mxu0 0.0
    %4079 = vmatprep.mubr.f32.mxu0 0.0
    %4080 = vmatmul.mubr.f32.gmra.mrb[0].mxu0 %v4010
    %v4081 = vpop.f32.mrb[0].mxu0
    %v4082 = vadd.f32 0.0, %v4081
    %v4083 = vpop.f32.mrb[0].mxu0
    %4084 = vdwg.mxu0
    %v4086 = vsel %vm413, %v3846, 0
    %v4089 = vsel %vm413, %v3926, 0
    %4091 = vmatprep.subr.mxu0 0.0
    %4092 = vmatpush1.xpose.msra.mxu0 %v4089
    %4093 = vmatprep.subr.mxu0 0.0
    %4094 = vmatpush1.xpose.msra.mxu0 0.0
    %4095 = vmatprep.subr.mxu0 0.0
    %4096 = vmatpush1.xpose.msra.mxu0 0.0
    %4097 = vmatprep.subr.mxu0 0.0
    %4098 = vmatpush1.xpose.msra.mxu0 0.0
    %4099 = vmatprep.subr.mxu0 0.0
    %4100 = vmatpush1.xpose.msra.mxu0 0.0
    %4101 = vmatprep.subr.mxu0 0.0
    %4102 = vmatpush1.xpose.msra.mxu0 0.0
    %4103 = vmatprep.subr.mxu0 0.0
    %4104 = vmatpush1.xpose.msra.mxu0 0.0
    %4105 = vmatprep.subr.mxu0 0.0
    %4106 = vmatpush1.xpose.msra.mxu0 0.0
    %4107 = vmatprep.subr.mxu0 0.0
    %4108 = vmatpush1.xpose.msra.mxu0 0.0
    %4109 = vmatprep.subr.mxu0 0.0
    %4110 = vmatpush1.xpose.msra.mxu0 0.0
    %4111 = vmatprep.subr.mxu0 0.0
    %4112 = vmatpush1.xpose.msra.mxu0 0.0
    %4113 = vmatprep.subr.mxu0 0.0
    %4114 = vmatpush1.xpose.msra.mxu0 0.0
    %4115 = vmatprep.subr.mxu0 0.0
    %4116 = vmatpush1.xpose.msra.mxu0 0.0
    %4117 = vmatprep.subr.mxu0 0.0
    %4118 = vmatpush1.xpose.msra.mxu0 0.0
    %4119 = vmatprep.subr.mxu0 0.0
    %4120 = vmatpush1.xpose.msra.mxu0 0.0
    %4121 = vmatprep.subr.mxu0 0.0
    %4122 = vmatpush1.xpose.msra.mxu0 0.0
    %4123 = vmatprep.subr.mxu0 0.0
    %4124 = vmatpush1.xpose.msra.mxu0 0.0
    %4125 = vmatprep.subr.mxu0 0.0
    %4126 = vmatpush1.xpose.msra.mxu0 0.0
    %4127 = vmatprep.subr.mxu0 0.0
    %4128 = vmatpush1.xpose.msra.mxu0 0.0
    %4129 = vmatprep.subr.mxu0 0.0
    %4130 = vmatpush1.xpose.msra.mxu0 0.0
    %4131 = vmatprep.subr.mxu0 0.0
    %4132 = vmatpush1.xpose.msra.mxu0 0.0
    %4133 = vmatprep.subr.mxu0 0.0
    %4134 = vmatpush1.xpose.msra.mxu0 0.0
    %4135 = vmatprep.subr.mxu0 0.0
    %4136 = vmatpush1.xpose.msra.mxu0 0.0
    %4137 = vmatprep.subr.mxu0 0.0
    %4138 = vmatpush1.xpose.msra.mxu0 0.0
    %4139 = vmatprep.subr.mxu0 0.0
    %4140 = vmatpush1.xpose.msra.mxu0 0.0
    %4141 = vmatprep.subr.mxu0 0.0
    %4142 = vmatpush1.xpose.msra.mxu0 0.0
    %4143 = vmatprep.subr.mxu0 0.0
    %4144 = vmatpush1.xpose.msra.mxu0 0.0
    %4145 = vmatprep.subr.mxu0 0.0
    %4146 = vmatpush1.xpose.msra.mxu0 0.0
    %4147 = vmatprep.subr.mxu0 0.0
    %4148 = vmatpush1.xpose.msra.mxu0 0.0
    %4149 = vmatprep.subr.mxu0 0.0
    %4150 = vmatpush1.xpose.msra.mxu0 0.0
    %4151 = vmatprep.subr.mxu0 0.0
    %4152 = vmatpush1.xpose.msra.mxu0 0.0
    %4153 = vmatprep.subr.mxu0 0.0
    %4154 = vmatpush1.xpose.msra.mxu0 0.0
    %4155 = vmatprep.mubr.f32.mxu0 0.0
    %4156 = vmatmul.mubr.f32.gmra.mrb[0].mxu0 %v4086
    %v4157 = vpop.f32.mrb[0].mxu0
    %v4158 = vadd.f32 0.0, %v4157
    %v4159 = vpop.f32.mrb[0].mxu0
    %4160 = vdwg.mxu0
    %v4161 = vsel %vm413, %v4082, -inf
    %4162 = vmax.xlane.f32.xlu0 %v4161
    %v4163 = vpop.xlane.xlu0 %4162
    %v4164 = vsel %vm413, %v4158, -inf
    %4165 = vmax.xlane.f32.xlu0 %v4164
    %v4166 = vpop.xlane.xlu0 %4165
    %v4167 = vsub.f32 %v4082, %v4163
    %v4168 = vsub.f32 %v4158, %v4166
    %v4169 = vmul.f32 %v4167, 1.442695
    %v4170 = vpow.pop %v4169
    %v4171 = vmul.f32 %v4168, 1.442695
    %v4172 = vpow.pop %v4171
    %v4173 = vsel %vm413, %v4170, 0.0
    %4174 = vadd.xlane.f32.xlu0 %v4173
    %v4175 = vpop.xlane.xlu0 %4174
    %v4176 = vsel %vm413, %v4172, 0.0
    %4177 = vadd.xlane.f32.xlu0 %v4176
    %v4178 = vpop.xlane.xlu0 %4177
    %v4179 = vrcp.pop %v4175
    %v4180 = vmul.f32 %v4170, %v4179
    %v4181 = vrcp.pop %v4178
    %v4182 = vmul.f32 %v4172, %v4181
    %s4183 = scalar_lea.vmem %s3, 192
    %v4184 = vld [vmem:[%s4183] sm:$0xff]
    %v4185 = vld [vmem:[%s4183 + $0x8] sm:$0xff]
    %v4186 = vld [vmem:[%s4183 + $0x10] sm:$0xff]
    %v4187 = vld [vmem:[%s4183 + $0x18] sm:$0xff]
    %4188 = vmatprep.subr.mxu0 0.0
    %4189 = vmatpush1.msra.mxu0 %v4184
    %4190 = vmatprep.subr.mxu0 0.0
    %4191 = vmatpush1.msra.mxu0 %v4185
    %4192 = vmatprep.subr.mxu0 0.0
    %4193 = vmatpush1.msra.mxu0 %v4186
    %4194 = vmatprep.subr.mxu0 0.0
    %4195 = vmatpush1.msra.mxu0 %v4187
    %4196 = vmatprep.subr.mxu0 0.0
    %4197 = vmatpush1.msra.mxu0 0.0
    %4198 = vmatprep.subr.mxu0 0.0
    %4199 = vmatpush1.msra.mxu0 0.0
    %4200 = vmatprep.subr.mxu0 0.0
    %4201 = vmatpush1.msra.mxu0 0.0
    %4202 = vmatprep.subr.mxu0 0.0
    %4203 = vmatpush1.msra.mxu0 0.0
    %4204 = vmatprep.subr.mxu0 0.0
    %4205 = vmatpush1.msra.mxu0 0.0
    %4206 = vmatprep.subr.mxu0 0.0
    %4207 = vmatpush1.msra.mxu0 0.0
    %4208 = vmatprep.subr.mxu0 0.0
    %4209 = vmatpush1.msra.mxu0 0.0
    %4210 = vmatprep.subr.mxu0 0.0
    %4211 = vmatpush1.msra.mxu0 0.0
    %4212 = vmatprep.subr.mxu0 0.0
    %4213 = vmatpush1.msra.mxu0 0.0
    %4214 = vmatprep.subr.mxu0 0.0
    %4215 = vmatpush1.msra.mxu0 0.0
    %4216 = vmatprep.subr.mxu0 0.0
    %4217 = vmatpush1.msra.mxu0 0.0
    %4218 = vmatprep.subr.mxu0 0.0
    %4219 = vmatpush1.msra.mxu0 0.0
    %4220 = vmatprep.subr.mxu0 0.0
    %4221 = vmatpush1.msra.mxu0 0.0
    %4222 = vmatprep.subr.mxu0 0.0
    %4223 = vmatpush1.msra.mxu0 0.0
    %4224 = vmatprep.subr.mxu0 0.0
    %4225 = vmatpush1.msra.mxu0 0.0
    %4226 = vmatprep.subr.mxu0 0.0
    %4227 = vmatpush1.msra.mxu0 0.0
    %4228 = vmatprep.subr.mxu0 0.0
    %4229 = vmatpush1.msra.mxu0 0.0
    %4230 = vmatprep.subr.mxu0 0.0
    %4231 = vmatpush1.msra.mxu0 0.0
    %4232 = vmatprep.subr.mxu0 0.0
    %4233 = vmatpush1.msra.mxu0 0.0
    %4234 = vmatprep.subr.mxu0 0.0
    %4235 = vmatpush1.msra.mxu0 0.0
    %4236 = vmatprep.subr.mxu0 0.0
    %4237 = vmatpush1.msra.mxu0 0.0
    %4238 = vmatprep.subr.mxu0 0.0
    %4239 = vmatpush1.msra.mxu0 0.0
    %4240 = vmatprep.subr.mxu0 0.0
    %4241 = vmatpush1.msra.mxu0 0.0
    %4242 = vmatprep.subr.mxu0 0.0
    %4243 = vmatpush1.msra.mxu0 0.0
    %4244 = vmatprep.subr.mxu0 0.0
    %4245 = vmatpush1.msra.mxu0 0.0
    %4246 = vmatprep.subr.mxu0 0.0
    %4247 = vmatpush1.msra.mxu0 0.0
    %4248 = vmatprep.subr.mxu0 0.0
    %4249 = vmatpush1.msra.mxu0 0.0
    %4250 = vmatprep.subr.mxu0 0.0
    %4251 = vmatpush1.msra.mxu0 0.0
    %4252 = vmatprep.mubr.f32.mxu0 0.0
    %4253 = vmatmul.mubr.f32.gmra.mrb[0].mxu0 %v3355
    %v4254 = vpop.f32.mrb[0].mxu0
    %v4255 = vadd.f32 0.0, %v4254
    %v4256 = vpop.f32.mrb[0].mxu0
    %4257 = vmatprep.mubr.f32.mxu0 0.0
    %4258 = vmatmul.mubr.f32.gmra.mrb[0].mxu0 %v3358
    %v4259 = vpop.f32.mrb[0].mxu0
    %v4260 = vadd.f32 0.0, %v4259
    %v4261 = vpop.f32.mrb[0].mxu0
    %4262 = vdwg.mxu0
    %s4263 = scalar_lea.vmem %s4, 192
    %v4264 = vld [vmem:[%s4263] sm:$0xff]
    %v4265 = vld [vmem:[%s4263 + $0x8] sm:$0xff]
    %v4266 = vld [vmem:[%s4263 + $0x10] sm:$0xff]
    %v4267 = vld [vmem:[%s4263 + $0x18] sm:$0xff]
    %4268 = vmatprep.subr.mxu0 0.0
    %4269 = vmatpush1.msra.mxu0 %v4264
    %4270 = vmatprep.subr.mxu0 0.0
    %4271 = vmatpush1.msra.mxu0 %v4265
    %4272 = vmatprep.subr.mxu0 0.0
    %4273 = vmatpush1.msra.mxu0 %v4266
    %4274 = vmatprep.subr.mxu0 0.0
    %4275 = vmatpush1.msra.mxu0 %v4267
    %4276 = vmatprep.subr.mxu0 0.0
    %4277 = vmatpush1.msra.mxu0 0.0
    %4278 = vmatprep.subr.mxu0 0.0
    %4279 = vmatpush1.msra.mxu0 0.0
    %4280 = vmatprep.subr.mxu0 0.0
    %4281 = vmatpush1.msra.mxu0 0.0
    %4282 = vmatprep.subr.mxu0 0.0
    %4283 = vmatpush1.msra.mxu0 0.0
    %4284 = vmatprep.subr.mxu0 0.0
    %4285 = vmatpush1.msra.mxu0 0.0
    %4286 = vmatprep.subr.mxu0 0.0
    %4287 = vmatpush1.msra.mxu0 0.0
    %4288 = vmatprep.subr.mxu0 0.0
    %4289 = vmatpush1.msra.mxu0 0.0
    %4290 = vmatprep.subr.mxu0 0.0
    %4291 = vmatpush1.msra.mxu0 0.0
    %4292 = vmatprep.subr.mxu0 0.0
    %4293 = vmatpush1.msra.mxu0 0.0
    %4294 = vmatprep.subr.mxu0 0.0
    %4295 = vmatpush1.msra.mxu0 0.0
    %4296 = vmatprep.subr.mxu0 0.0
    %4297 = vmatpush1.msra.mxu0 0.0
    %4298 = vmatprep.subr.mxu0 0.0
    %4299 = vmatpush1.msra.mxu0 0.0
    %4300 = vmatprep.subr.mxu0 0.0
    %4301 = vmatpush1.msra.mxu0 0.0
    %4302 = vmatprep.subr.mxu0 0.0
    %4303 = vmatpush1.msra.mxu0 0.0
    %4304 = vmatprep.subr.mxu0 0.0
    %4305 = vmatpush1.msra.mxu0 0.0
    %4306 = vmatprep.subr.mxu0 0.0
    %4307 = vmatpush1.msra.mxu0 0.0
    %4308 = vmatprep.subr.mxu0 0.0
    %4309 = vmatpush1.msra.mxu0 0.0
    %4310 = vmatprep.subr.mxu0 0.0
    %4311 = vmatpush1.msra.mxu0 0.0
    %4312 = vmatprep.subr.mxu0 0.0
    %4313 = vmatpush1.msra.mxu0 0.0
    %4314 = vmatprep.subr.mxu0 0.0
    %4315 = vmatpush1.msra.mxu0 0.0
    %4316 = vmatprep.subr.mxu0 0.0
    %4317 = vmatpush1.msra.mxu0 0.0
    %4318 = vmatprep.subr.mxu0 0.0
    %4319 = vmatpush1.msra.mxu0 0.0
    %4320 = vmatprep.subr.mxu0 0.0
    %4321 = vmatpush1.msra.mxu0 0.0
    %4322 = vmatprep.subr.mxu0 0.0
    %4323 = vmatpush1.msra.mxu0 0.0
    %4324 = vmatprep.subr.mxu0 0.0
    %4325 = vmatpush1.msra.mxu0 0.0
    %4326 = vmatprep.subr.mxu0 0.0
    %4327 = vmatpush1.msra.mxu0 0.0
    %4328 = vmatprep.subr.mxu0 0.0
    %4329 = vmatpush1.msra.mxu0 0.0
    %4330 = vmatprep.subr.mxu0 0.0
    %4331 = vmatpush1.msra.mxu0 0.0
    %4332 = vmatprep.mubr.f32.mxu0 0.0
    %4333 = vmatmul.mubr.f32.gmra.mrb[0].mxu0 %v3355
    %v4334 = vpop.f32.mrb[0].mxu0
    %v4335 = vadd.f32 0.0, %v4334
    %v4336 = vpop.f32.mrb[0].mxu0
    %4337 = vmatprep.mubr.f32.mxu0 0.0
    %4338 = vmatmul.mubr.f32.gmra.mrb[0].mxu0 %v3358
    %v4339 = vpop.f32.mrb[0].mxu0
    %v4340 = vadd.f32 0.0, %v4339
    %v4341 = vpop.f32.mrb[0].mxu0
    %4342 = vdwg.mxu0
    %s4343 = scalar_lea.vmem %s5, 192
    %v4344 = vld [vmem:[%s4343] sm:$0xff]
    %v4345 = vld [vmem:[%s4343 + $0x8] sm:$0xff]
    %v4346 = vld [vmem:[%s4343 + $0x10] sm:$0xff]
    %v4347 = vld [vmem:[%s4343 + $0x18] sm:$0xff]
    %4348 = vmatprep.subr.mxu0 0.0
    %4349 = vmatpush1.msra.mxu0 %v4344
    %4350 = vmatprep.subr.mxu0 0.0
    %4351 = vmatpush1.msra.mxu0 %v4345
    %4352 = vmatprep.subr.mxu0 0.0
    %4353 = vmatpush1.msra.mxu0 %v4346
    %4354 = vmatprep.subr.mxu0 0.0
    %4355 = vmatpush1.msra.mxu0 %v4347
    %4356 = vmatprep.subr.mxu0 0.0
    %4357 = vmatpush1.msra.mxu0 0.0
    %4358 = vmatprep.subr.mxu0 0.0
    %4359 = vmatpush1.msra.mxu0 0.0
    %4360 = vmatprep.subr.mxu0 0.0
    %4361 = vmatpush1.msra.mxu0 0.0
    %4362 = vmatprep.subr.mxu0 0.0
    %4363 = vmatpush1.msra.mxu0 0.0
    %4364 = vmatprep.subr.mxu0 0.0
    %4365 = vmatpush1.msra.mxu0 0.0
    %4366 = vmatprep.subr.mxu0 0.0
    %4367 = vmatpush1.msra.mxu0 0.0
    %4368 = vmatprep.subr.mxu0 0.0
    %4369 = vmatpush1.msra.mxu0 0.0
    %4370 = vmatprep.subr.mxu0 0.0
    %4371 = vmatpush1.msra.mxu0 0.0
    %4372 = vmatprep.subr.mxu0 0.0
    %4373 = vmatpush1.msra.mxu0 0.0
    %4374 = vmatprep.subr.mxu0 0.0
    %4375 = vmatpush1.msra.mxu0 0.0
    %4376 = vmatprep.subr.mxu0 0.0
    %4377 = vmatpush1.msra.mxu0 0.0
    %4378 = vmatprep.subr.mxu0 0.0
    %4379 = vmatpush1.msra.mxu0 0.0
    %4380 = vmatprep.subr.mxu0 0.0
    %4381 = vmatpush1.msra.mxu0 0.0
    %4382 = vmatprep.subr.mxu0 0.0
    %4383 = vmatpush1.msra.mxu0 0.0
    %4384 = vmatprep.subr.mxu0 0.0
    %4385 = vmatpush1.msra.mxu0 0.0
    %4386 = vmatprep.subr.mxu0 0.0
    %4387 = vmatpush1.msra.mxu0 0.0
    %4388 = vmatprep.subr.mxu0 0.0
    %4389 = vmatpush1.msra.mxu0 0.0
    %4390 = vmatprep.subr.mxu0 0.0
    %4391 = vmatpush1.msra.mxu0 0.0
    %4392 = vmatprep.subr.mxu0 0.0
    %4393 = vmatpush1.msra.mxu0 0.0
    %4394 = vmatprep.subr.mxu0 0.0
    %4395 = vmatpush1.msra.mxu0 0.0
    %4396 = vmatprep.subr.mxu0 0.0
    %4397 = vmatpush1.msra.mxu0 0.0
    %4398 = vmatprep.subr.mxu0 0.0
    %4399 = vmatpush1.msra.mxu0 0.0
    %4400 = vmatprep.subr.mxu0 0.0
    %4401 = vmatpush1.msra.mxu0 0.0
    %4402 = vmatprep.subr.mxu0 0.0
    %4403 = vmatpush1.msra.mxu0 0.0
    %4404 = vmatprep.subr.mxu0 0.0
    %4405 = vmatpush1.msra.mxu0 0.0
    %4406 = vmatprep.subr.mxu0 0.0
    %4407 = vmatpush1.msra.mxu0 0.0
    %4408 = vmatprep.subr.mxu0 0.0
    %4409 = vmatpush1.msra.mxu0 0.0
    %4410 = vmatprep.subr.mxu0 0.0
    %4411 = vmatpush1.msra.mxu0 0.0
    %4412 = vmatprep.mubr.f32.mxu0 0.0
    %4413 = vmatmul.mubr.f32.gmra.mrb[0].mxu0 %v3355
    %v4414 = vpop.f32.mrb[0].mxu0
    %v4415 = vadd.f32 0.0, %v4414
    %v4416 = vpop.f32.mrb[0].mxu0
    %4417 = vmatprep.mubr.f32.mxu0 0.0
    %4418 = vmatmul.mubr.f32.gmra.mrb[0].mxu0 %v3358
    %v4419 = vpop.f32.mrb[0].mxu0
    %v4420 = vadd.f32 0.0, %v4419
    %v4421 = vpop.f32.mrb[0].mxu0
    %4422 = vdwg.mxu0
    %v4424 = vsel %vm413, %v4255, 0
    %v4427 = vsel %vm413, %v4335, 0
    %4429 = vmatprep.subr.mxu0 0.0
    %4430 = vmatpush1.xpose.msra.mxu0 %v4427
    %4431 = vmatprep.subr.mxu0 0.0
    %4432 = vmatpush1.xpose.msra.mxu0 0.0
    %4433 = vmatprep.subr.mxu0 0.0
    %4434 = vmatpush1.xpose.msra.mxu0 0.0
    %4435 = vmatprep.subr.mxu0 0.0
    %4436 = vmatpush1.xpose.msra.mxu0 0.0
    %4437 = vmatprep.subr.mxu0 0.0
    %4438 = vmatpush1.xpose.msra.mxu0 0.0
    %4439 = vmatprep.subr.mxu0 0.0
    %4440 = vmatpush1.xpose.msra.mxu0 0.0
    %4441 = vmatprep.subr.mxu0 0.0
    %4442 = vmatpush1.xpose.msra.mxu0 0.0
    %4443 = vmatprep.subr.mxu0 0.0
    %4444 = vmatpush1.xpose.msra.mxu0 0.0
    %4445 = vmatprep.subr.mxu0 0.0
    %4446 = vmatpush1.xpose.msra.mxu0 0.0
    %4447 = vmatprep.subr.mxu0 0.0
    %4448 = vmatpush1.xpose.msra.mxu0 0.0
    %4449 = vmatprep.subr.mxu0 0.0
    %4450 = vmatpush1.xpose.msra.mxu0 0.0
    %4451 = vmatprep.subr.mxu0 0.0
    %4452 = vmatpush1.xpose.msra.mxu0 0.0
    %4453 = vmatprep.subr.mxu0 0.0
    %4454 = vmatpush1.xpose.msra.mxu0 0.0
    %4455 = vmatprep.subr.mxu0 0.0
    %4456 = vmatpush1.xpose.msra.mxu0 0.0
    %4457 = vmatprep.subr.mxu0 0.0
    %4458 = vmatpush1.xpose.msra.mxu0 0.0
    %4459 = vmatprep.subr.mxu0 0.0
    %4460 = vmatpush1.xpose.msra.mxu0 0.0
    %4461 = vmatprep.subr.mxu0 0.0
    %4462 = vmatpush1.xpose.msra.mxu0 0.0
    %4463 = vmatprep.subr.mxu0 0.0
    %4464 = vmatpush1.xpose.msra.mxu0 0.0
    %4465 = vmatprep.subr.mxu0 0.0
    %4466 = vmatpush1.xpose.msra.mxu0 0.0
    %4467 = vmatprep.subr.mxu0 0.0
    %4468 = vmatpush1.xpose.msra.mxu0 0.0
    %4469 = vmatprep.subr.mxu0 0.0
    %4470 = vmatpush1.xpose.msra.mxu0 0.0
    %4471 = vmatprep.subr.mxu0 0.0
    %4472 = vmatpush1.xpose.msra.mxu0 0.0
    %4473 = vmatprep.subr.mxu0 0.0
    %4474 = vmatpush1.xpose.msra.mxu0 0.0
    %4475 = vmatprep.subr.mxu0 0.0
    %4476 = vmatpush1.xpose.msra.mxu0 0.0
    %4477 = vmatprep.subr.mxu0 0.0
    %4478 = vmatpush1.xpose.msra.mxu0 0.0
    %4479 = vmatprep.subr.mxu0 0.0
    %4480 = vmatpush1.xpose.msra.mxu0 0.0
    %4481 = vmatprep.subr.mxu0 0.0
    %4482 = vmatpush1.xpose.msra.mxu0 0.0
    %4483 = vmatprep.subr.mxu0 0.0
    %4484 = vmatpush1.xpose.msra.mxu0 0.0
    %4485 = vmatprep.subr.mxu0 0.0
    %4486 = vmatpush1.xpose.msra.mxu0 0.0
    %4487 = vmatprep.subr.mxu0 0.0
    %4488 = vmatpush1.xpose.msra.mxu0 0.0
    %4489 = vmatprep.subr.mxu0 0.0
    %4490 = vmatpush1.xpose.msra.mxu0 0.0
    %4491 = vmatprep.subr.mxu0 0.0
    %4492 = vmatpush1.xpose.msra.mxu0 0.0
    %4493 = vmatprep.mubr.f32.mxu0 0.0
    %4494 = vmatmul.mubr.f32.gmra.mrb[0].mxu0 %v4424
    %v4495 = vpop.f32.mrb[0].mxu0
    %v4496 = vadd.f32 0.0, %v4495
    %v4497 = vpop.f32.mrb[0].mxu0
    %4498 = vdwg.mxu0
    %v4500 = vsel %vm413, %v4260, 0
    %v4503 = vsel %vm413, %v4340, 0
    %4505 = vmatprep.subr.mxu0 0.0
    %4506 = vmatpush1.xpose.msra.mxu0 %v4503
    %4507 = vmatprep.subr.mxu0 0.0
    %4508 = vmatpush1.xpose.msra.mxu0 0.0
    %4509 = vmatprep.subr.mxu0 0.0
    %4510 = vmatpush1.xpose.msra.mxu0 0.0
    %4511 = vmatprep.subr.mxu0 0.0
    %4512 = vmatpush1.xpose.msra.mxu0 0.0
    %4513 = vmatprep.subr.mxu0 0.0
    %4514 = vmatpush1.xpose.msra.mxu0 0.0
    %4515 = vmatprep.subr.mxu0 0.0
    %4516 = vmatpush1.xpose.msra.mxu0 0.0
    %4517 = vmatprep.subr.mxu0 0.0
    %4518 = vmatpush1.xpose.msra.mxu0 0.0
    %4519 = vmatprep.subr.mxu0 0.0
    %4520 = vmatpush1.xpose.msra.mxu0 0.0
    %4521 = vmatprep.subr.mxu0 0.0
    %4522 = vmatpush1.xpose.msra.mxu0 0.0
    %4523 = vmatprep.subr.mxu0 0.0
    %4524 = vmatpush1.xpose.msra.mxu0 0.0
    %4525 = vmatprep.subr.mxu0 0.0
    %4526 = vmatpush1.xpose.msra.mxu0 0.0
    %4527 = vmatprep.subr.mxu0 0.0
    %4528 = vmatpush1.xpose.msra.mxu0 0.0
    %4529 = vmatprep.subr.mxu0 0.0
    %4530 = vmatpush1.xpose.msra.mxu0 0.0
    %4531 = vmatprep.subr.mxu0 0.0
    %4532 = vmatpush1.xpose.msra.mxu0 0.0
    %4533 = vmatprep.subr.mxu0 0.0
    %4534 = vmatpush1.xpose.msra.mxu0 0.0
    %4535 = vmatprep.subr.mxu0 0.0
    %4536 = vmatpush1.xpose.msra.mxu0 0.0
    %4537 = vmatprep.subr.mxu0 0.0
    %4538 = vmatpush1.xpose.msra.mxu0 0.0
    %4539 = vmatprep.subr.mxu0 0.0
    %4540 = vmatpush1.xpose.msra.mxu0 0.0
    %4541 = vmatprep.subr.mxu0 0.0
    %4542 = vmatpush1.xpose.msra.mxu0 0.0
    %4543 = vmatprep.subr.mxu0 0.0
    %4544 = vmatpush1.xpose.msra.mxu0 0.0
    %4545 = vmatprep.subr.mxu0 0.0
    %4546 = vmatpush1.xpose.msra.mxu0 0.0
    %4547 = vmatprep.subr.mxu0 0.0
    %4548 = vmatpush1.xpose.msra.mxu0 0.0
    %4549 = vmatprep.subr.mxu0 0.0
    %4550 = vmatpush1.xpose.msra.mxu0 0.0
    %4551 = vmatprep.subr.mxu0 0.0
    %4552 = vmatpush1.xpose.msra.mxu0 0.0
    %4553 = vmatprep.subr.mxu0 0.0
    %4554 = vmatpush1.xpose.msra.mxu0 0.0
    %4555 = vmatprep.subr.mxu0 0.0
    %4556 = vmatpush1.xpose.msra.mxu0 0.0
    %4557 = vmatprep.subr.mxu0 0.0
    %4558 = vmatpush1.xpose.msra.mxu0 0.0
    %4559 = vmatprep.subr.mxu0 0.0
    %4560 = vmatpush1.xpose.msra.mxu0 0.0
    %4561 = vmatprep.subr.mxu0 0.0
    %4562 = vmatpush1.xpose.msra.mxu0 0.0
    %4563 = vmatprep.subr.mxu0 0.0
    %4564 = vmatpush1.xpose.msra.mxu0 0.0
    %4565 = vmatprep.subr.mxu0 0.0
    %4566 = vmatpush1.xpose.msra.mxu0 0.0
    %4567 = vmatprep.subr.mxu0 0.0
    %4568 = vmatpush1.xpose.msra.mxu0 0.0
    %4569 = vmatprep.mubr.f32.mxu0 0.0
    %4570 = vmatmul.mubr.f32.gmra.mrb[0].mxu0 %v4500
    %v4571 = vpop.f32.mrb[0].mxu0
    %v4572 = vadd.f32 0.0, %v4571
    %v4573 = vpop.f32.mrb[0].mxu0
    %4574 = vdwg.mxu0
    %v4575 = vsel %vm413, %v4496, -inf
    %4576 = vmax.xlane.f32.xlu0 %v4575
    %v4577 = vpop.xlane.xlu0 %4576
    %v4578 = vsel %vm413, %v4572, -inf
    %4579 = vmax.xlane.f32.xlu0 %v4578
    %v4580 = vpop.xlane.xlu0 %4579
    %v4581 = vsub.f32 %v4496, %v4577
    %v4582 = vsub.f32 %v4572, %v4580
    %v4583 = vmul.f32 %v4581, 1.442695
    %v4584 = vpow.pop %v4583
    %v4585 = vmul.f32 %v4582, 1.442695
    %v4586 = vpow.pop %v4585
    %v4587 = vsel %vm413, %v4584, 0.0
    %4588 = vadd.xlane.f32.xlu0 %v4587
    %v4589 = vpop.xlane.xlu0 %4588
    %v4590 = vsel %vm413, %v4586, 0.0
    %4591 = vadd.xlane.f32.xlu0 %v4590
    %v4592 = vpop.xlane.xlu0 %4591
    %v4593 = vrcp.pop %v4589
    %v4594 = vmul.f32 %v4584, %v4593
    %v4595 = vrcp.pop %v4592
    %v4596 = vmul.f32 %v4586, %v4595
    %s4597 = scalar_lea.vmem %s3, 224
    %v4598 = vld [vmem:[%s4597] sm:$0xff]
    %v4599 = vld [vmem:[%s4597 + $0x8] sm:$0xff]
    %v4600 = vld [vmem:[%s4597 + $0x10] sm:$0xff]
    %v4601 = vld [vmem:[%s4597 + $0x18] sm:$0xff]
    %4602 = vmatprep.subr.mxu0 0.0
    %4603 = vmatpush1.msra.mxu0 %v4598
    %4604 = vmatprep.subr.mxu0 0.0
    %4605 = vmatpush1.msra.mxu0 %v4599
    %4606 = vmatprep.subr.mxu0 0.0
    %4607 = vmatpush1.msra.mxu0 %v4600
    %4608 = vmatprep.subr.mxu0 0.0
    %4609 = vmatpush1.msra.mxu0 %v4601
    %4610 = vmatprep.subr.mxu0 0.0
    %4611 = vmatpush1.msra.mxu0 0.0
    %4612 = vmatprep.subr.mxu0 0.0
    %4613 = vmatpush1.msra.mxu0 0.0
    %4614 = vmatprep.subr.mxu0 0.0
    %4615 = vmatpush1.msra.mxu0 0.0
    %4616 = vmatprep.subr.mxu0 0.0
    %4617 = vmatpush1.msra.mxu0 0.0
    %4618 = vmatprep.subr.mxu0 0.0
    %4619 = vmatpush1.msra.mxu0 0.0
    %4620 = vmatprep.subr.mxu0 0.0
    %4621 = vmatpush1.msra.mxu0 0.0
    %4622 = vmatprep.subr.mxu0 0.0
    %4623 = vmatpush1.msra.mxu0 0.0
    %4624 = vmatprep.subr.mxu0 0.0
    %4625 = vmatpush1.msra.mxu0 0.0
    %4626 = vmatprep.subr.mxu0 0.0
    %4627 = vmatpush1.msra.mxu0 0.0
    %4628 = vmatprep.subr.mxu0 0.0
    %4629 = vmatpush1.msra.mxu0 0.0
    %4630 = vmatprep.subr.mxu0 0.0
    %4631 = vmatpush1.msra.mxu0 0.0
    %4632 = vmatprep.subr.mxu0 0.0
    %4633 = vmatpush1.msra.mxu0 0.0
    %4634 = vmatprep.subr.mxu0 0.0
    %4635 = vmatpush1.msra.mxu0 0.0
    %4636 = vmatprep.subr.mxu0 0.0
    %4637 = vmatpush1.msra.mxu0 0.0
    %4638 = vmatprep.subr.mxu0 0.0
    %4639 = vmatpush1.msra.mxu0 0.0
    %4640 = vmatprep.subr.mxu0 0.0
    %4641 = vmatpush1.msra.mxu0 0.0
    %4642 = vmatprep.subr.mxu0 0.0
    %4643 = vmatpush1.msra.mxu0 0.0
    %4644 = vmatprep.subr.mxu0 0.0
    %4645 = vmatpush1.msra.mxu0 0.0
    %4646 = vmatprep.subr.mxu0 0.0
    %4647 = vmatpush1.msra.mxu0 0.0
    %4648 = vmatprep.subr.mxu0 0.0
    %4649 = vmatpush1.msra.mxu0 0.0
    %4650 = vmatprep.subr.mxu0 0.0
    %4651 = vmatpush1.msra.mxu0 0.0
    %4652 = vmatprep.subr.mxu0 0.0
    %4653 = vmatpush1.msra.mxu0 0.0
    %4654 = vmatprep.subr.mxu0 0.0
    %4655 = vmatpush1.msra.mxu0 0.0
    %4656 = vmatprep.subr.mxu0 0.0
    %4657 = vmatpush1.msra.mxu0 0.0
    %4658 = vmatprep.subr.mxu0 0.0
    %4659 = vmatpush1.msra.mxu0 0.0
    %4660 = vmatprep.subr.mxu0 0.0
    %4661 = vmatpush1.msra.mxu0 0.0
    %4662 = vmatprep.subr.mxu0 0.0
    %4663 = vmatpush1.msra.mxu0 0.0
    %4664 = vmatprep.subr.mxu0 0.0
    %4665 = vmatpush1.msra.mxu0 0.0
    %4666 = vmatprep.mubr.f32.mxu0 0.0
    %4667 = vmatmul.mubr.f32.gmra.mrb[0].mxu0 %v3355
    %v4668 = vpop.f32.mrb[0].mxu0
    %v4669 = vadd.f32 0.0, %v4668
    %v4670 = vpop.f32.mrb[0].mxu0
    %4671 = vmatprep.mubr.f32.mxu0 0.0
    %4672 = vmatmul.mubr.f32.gmra.mrb[0].mxu0 %v3358
    %v4673 = vpop.f32.mrb[0].mxu0
    %v4674 = vadd.f32 0.0, %v4673
    %v4675 = vpop.f32.mrb[0].mxu0
    %4676 = vdwg.mxu0
    %s4677 = scalar_lea.vmem %s4, 224
    %v4678 = vld [vmem:[%s4677] sm:$0xff]
    %v4679 = vld [vmem:[%s4677 + $0x8] sm:$0xff]
    %v4680 = vld [vmem:[%s4677 + $0x10] sm:$0xff]
    %v4681 = vld [vmem:[%s4677 + $0x18] sm:$0xff]
    %4682 = vmatprep.subr.mxu0 0.0
    %4683 = vmatpush1.msra.mxu0 %v4678
    %4684 = vmatprep.subr.mxu0 0.0
    %4685 = vmatpush1.msra.mxu0 %v4679
    %4686 = vmatprep.subr.mxu0 0.0
    %4687 = vmatpush1.msra.mxu0 %v4680
    %4688 = vmatprep.subr.mxu0 0.0
    %4689 = vmatpush1.msra.mxu0 %v4681
    %4690 = vmatprep.subr.mxu0 0.0
    %4691 = vmatpush1.msra.mxu0 0.0
    %4692 = vmatprep.subr.mxu0 0.0
    %4693 = vmatpush1.msra.mxu0 0.0
    %4694 = vmatprep.subr.mxu0 0.0
    %4695 = vmatpush1.msra.mxu0 0.0
    %4696 = vmatprep.subr.mxu0 0.0
    %4697 = vmatpush1.msra.mxu0 0.0
    %4698 = vmatprep.subr.mxu0 0.0
    %4699 = vmatpush1.msra.mxu0 0.0
    %4700 = vmatprep.subr.mxu0 0.0
    %4701 = vmatpush1.msra.mxu0 0.0
    %4702 = vmatprep.subr.mxu0 0.0
    %4703 = vmatpush1.msra.mxu0 0.0
    %4704 = vmatprep.subr.mxu0 0.0
    %4705 = vmatpush1.msra.mxu0 0.0
    %4706 = vmatprep.subr.mxu0 0.0
    %4707 = vmatpush1.msra.mxu0 0.0
    %4708 = vmatprep.subr.mxu0 0.0
    %4709 = vmatpush1.msra.mxu0 0.0
    %4710 = vmatprep.subr.mxu0 0.0
    %4711 = vmatpush1.msra.mxu0 0.0
    %4712 = vmatprep.subr.mxu0 0.0
    %4713 = vmatpush1.msra.mxu0 0.0
    %4714 = vmatprep.subr.mxu0 0.0
    %4715 = vmatpush1.msra.mxu0 0.0
    %4716 = vmatprep.subr.mxu0 0.0
    %4717 = vmatpush1.msra.mxu0 0.0
    %4718 = vmatprep.subr.mxu0 0.0
    %4719 = vmatpush1.msra.mxu0 0.0
    %4720 = vmatprep.subr.mxu0 0.0
    %4721 = vmatpush1.msra.mxu0 0.0
    %4722 = vmatprep.subr.mxu0 0.0
    %4723 = vmatpush1.msra.mxu0 0.0
    %4724 = vmatprep.subr.mxu0 0.0
    %4725 = vmatpush1.msra.mxu0 0.0
    %4726 = vmatprep.subr.mxu0 0.0
    %4727 = vmatpush1.msra.mxu0 0.0
    %4728 = vmatprep.subr.mxu0 0.0
    %4729 = vmatpush1.msra.mxu0 0.0
    %4730 = vmatprep.subr.mxu0 0.0
    %4731 = vmatpush1.msra.mxu0 0.0
    %4732 = vmatprep.subr.mxu0 0.0
    %4733 = vmatpush1.msra.mxu0 0.0
    %4734 = vmatprep.subr.mxu0 0.0
    %4735 = vmatpush1.msra.mxu0 0.0
    %4736 = vmatprep.subr.mxu0 0.0
    %4737 = vmatpush1.msra.mxu0 0.0
    %4738 = vmatprep.subr.mxu0 0.0
    %4739 = vmatpush1.msra.mxu0 0.0
    %4740 = vmatprep.subr.mxu0 0.0
    %4741 = vmatpush1.msra.mxu0 0.0
    %4742 = vmatprep.subr.mxu0 0.0
    %4743 = vmatpush1.msra.mxu0 0.0
    %4744 = vmatprep.subr.mxu0 0.0
    %4745 = vmatpush1.msra.mxu0 0.0
    %4746 = vmatprep.mubr.f32.mxu0 0.0
    %4747 = vmatmul.mubr.f32.gmra.mrb[0].mxu0 %v3355
    %v4748 = vpop.f32.mrb[0].mxu0
    %v4749 = vadd.f32 0.0, %v4748
    %v4750 = vpop.f32.mrb[0].mxu0
    %4751 = vmatprep.mubr.f32.mxu0 0.0
    %4752 = vmatmul.mubr.f32.gmra.mrb[0].mxu0 %v3358
    %v4753 = vpop.f32.mrb[0].mxu0
    %v4754 = vadd.f32 0.0, %v4753
    %v4755 = vpop.f32.mrb[0].mxu0
    %4756 = vdwg.mxu0
    %s4757 = scalar_lea.vmem %s5, 224
    %v4758 = vld [vmem:[%s4757] sm:$0xff]
    %v4759 = vld [vmem:[%s4757 + $0x8] sm:$0xff]
    %v4760 = vld [vmem:[%s4757 + $0x10] sm:$0xff]
    %v4761 = vld [vmem:[%s4757 + $0x18] sm:$0xff]
    %4762 = vmatprep.subr.mxu0 0.0
    %4763 = vmatpush1.msra.mxu0 %v4758
    %4764 = vmatprep.subr.mxu0 0.0
    %4765 = vmatpush1.msra.mxu0 %v4759
    %4766 = vmatprep.subr.mxu0 0.0
    %4767 = vmatpush1.msra.mxu0 %v4760
    %4768 = vmatprep.subr.mxu0 0.0
    %4769 = vmatpush1.msra.mxu0 %v4761
    %4770 = vmatprep.subr.mxu0 0.0
    %4771 = vmatpush1.msra.mxu0 0.0
    %4772 = vmatprep.subr.mxu0 0.0
    %4773 = vmatpush1.msra.mxu0 0.0
    %4774 = vmatprep.subr.mxu0 0.0
    %4775 = vmatpush1.msra.mxu0 0.0
    %4776 = vmatprep.subr.mxu0 0.0
    %4777 = vmatpush1.msra.mxu0 0.0
    %4778 = vmatprep.subr.mxu0 0.0
    %4779 = vmatpush1.msra.mxu0 0.0
    %4780 = vmatprep.subr.mxu0 0.0
    %4781 = vmatpush1.msra.mxu0 0.0
    %4782 = vmatprep.subr.mxu0 0.0
    %4783 = vmatpush1.msra.mxu0 0.0
    %4784 = vmatprep.subr.mxu0 0.0
    %4785 = vmatpush1.msra.mxu0 0.0
    %4786 = vmatprep.subr.mxu0 0.0
    %4787 = vmatpush1.msra.mxu0 0.0
    %4788 = vmatprep.subr.mxu0 0.0
    %4789 = vmatpush1.msra.mxu0 0.0
    %4790 = vmatprep.subr.mxu0 0.0
    %4791 = vmatpush1.msra.mxu0 0.0
    %4792 = vmatprep.subr.mxu0 0.0
    %4793 = vmatpush1.msra.mxu0 0.0
    %4794 = vmatprep.subr.mxu0 0.0
    %4795 = vmatpush1.msra.mxu0 0.0
    %4796 = vmatprep.subr.mxu0 0.0
    %4797 = vmatpush1.msra.mxu0 0.0
    %4798 = vmatprep.subr.mxu0 0.0
    %4799 = vmatpush1.msra.mxu0 0.0
    %4800 = vmatprep.subr.mxu0 0.0
    %4801 = vmatpush1.msra.mxu0 0.0
    %4802 = vmatprep.subr.mxu0 0.0
    %4803 = vmatpush1.msra.mxu0 0.0
    %4804 = vmatprep.subr.mxu0 0.0
    %4805 = vmatpush1.msra.mxu0 0.0
    %4806 = vmatprep.subr.mxu0 0.0
    %4807 = vmatpush1.msra.mxu0 0.0
    %4808 = vmatprep.subr.mxu0 0.0
    %4809 = vmatpush1.msra.mxu0 0.0
    %4810 = vmatprep.subr.mxu0 0.0
    %4811 = vmatpush1.msra.mxu0 0.0
    %4812 = vmatprep.subr.mxu0 0.0
    %4813 = vmatpush1.msra.mxu0 0.0
    %4814 = vmatprep.subr.mxu0 0.0
    %4815 = vmatpush1.msra.mxu0 0.0
    %4816 = vmatprep.subr.mxu0 0.0
    %4817 = vmatpush1.msra.mxu0 0.0
    %4818 = vmatprep.subr.mxu0 0.0
    %4819 = vmatpush1.msra.mxu0 0.0
    %4820 = vmatprep.subr.mxu0 0.0
    %4821 = vmatpush1.msra.mxu0 0.0
    %4822 = vmatprep.subr.mxu0 0.0
    %4823 = vmatpush1.msra.mxu0 0.0
    %4824 = vmatprep.subr.mxu0 0.0
    %4825 = vmatpush1.msra.mxu0 0.0
    %4826 = vmatprep.mubr.f32.mxu0 0.0
    %4827 = vmatmul.mubr.f32.gmra.mrb[0].mxu0 %v3355
    %v4828 = vpop.f32.mrb[0].mxu0
    %v4829 = vadd.f32 0.0, %v4828
    %v4830 = vpop.f32.mrb[0].mxu0
    %4831 = vmatprep.mubr.f32.mxu0 0.0
    %4832 = vmatmul.mubr.f32.gmra.mrb[0].mxu0 %v3358
    %v4833 = vpop.f32.mrb[0].mxu0
    %v4834 = vadd.f32 0.0, %v4833
    %v4835 = vpop.f32.mrb[0].mxu0
    %4836 = vdwg.mxu0
    %v4838 = vsel %vm413, %v4669, 0
    %v4841 = vsel %vm413, %v4749, 0
    %4843 = vmatprep.subr.mxu0 0.0
    %4844 = vmatpush1.xpose.msra.mxu0 %v4841
    %4845 = vmatprep.subr.mxu0 0.0
    %4846 = vmatpush1.xpose.msra.mxu0 0.0
    %4847 = vmatprep.subr.mxu0 0.0
    %4848 = vmatpush1.xpose.msra.mxu0 0.0
    %4849 = vmatprep.subr.mxu0 0.0
    %4850 = vmatpush1.xpose.msra.mxu0 0.0
    %4851 = vmatprep.subr.mxu0 0.0
    %4852 = vmatpush1.xpose.msra.mxu0 0.0
    %4853 = vmatprep.subr.mxu0 0.0
    %4854 = vmatpush1.xpose.msra.mxu0 0.0
    %4855 = vmatprep.subr.mxu0 0.0
    %4856 = vmatpush1.xpose.msra.mxu0 0.0
    %4857 = vmatprep.subr.mxu0 0.0
    %4858 = vmatpush1.xpose.msra.mxu0 0.0
    %4859 = vmatprep.subr.mxu0 0.0
    %4860 = vmatpush1.xpose.msra.mxu0 0.0
    %4861 = vmatprep.subr.mxu0 0.0
    %4862 = vmatpush1.xpose.msra.mxu0 0.0
    %4863 = vmatprep.subr.mxu0 0.0
    %4864 = vmatpush1.xpose.msra.mxu0 0.0
    %4865 = vmatprep.subr.mxu0 0.0
    %4866 = vmatpush1.xpose.msra.mxu0 0.0
    %4867 = vmatprep.subr.mxu0 0.0
    %4868 = vmatpush1.xpose.msra.mxu0 0.0
    %4869 = vmatprep.subr.mxu0 0.0
    %4870 = vmatpush1.xpose.msra.mxu0 0.0
    %4871 = vmatprep.subr.mxu0 0.0
    %4872 = vmatpush1.xpose.msra.mxu0 0.0
    %4873 = vmatprep.subr.mxu0 0.0
    %4874 = vmatpush1.xpose.msra.mxu0 0.0
    %4875 = vmatprep.subr.mxu0 0.0
    %4876 = vmatpush1.xpose.msra.mxu0 0.0
    %4877 = vmatprep.subr.mxu0 0.0
    %4878 = vmatpush1.xpose.msra.mxu0 0.0
    %4879 = vmatprep.subr.mxu0 0.0
    %4880 = vmatpush1.xpose.msra.mxu0 0.0
    %4881 = vmatprep.subr.mxu0 0.0
    %4882 = vmatpush1.xpose.msra.mxu0 0.0
    %4883 = vmatprep.subr.mxu0 0.0
    %4884 = vmatpush1.xpose.msra.mxu0 0.0
    %4885 = vmatprep.subr.mxu0 0.0
    %4886 = vmatpush1.xpose.msra.mxu0 0.0
    %4887 = vmatprep.subr.mxu0 0.0
    %4888 = vmatpush1.xpose.msra.mxu0 0.0
    %4889 = vmatprep.subr.mxu0 0.0
    %4890 = vmatpush1.xpose.msra.mxu0 0.0
    %4891 = vmatprep.subr.mxu0 0.0
    %4892 = vmatpush1.xpose.msra.mxu0 0.0
    %4893 = vmatprep.subr.mxu0 0.0
    %4894 = vmatpush1.xpose.msra.mxu0 0.0
    %4895 = vmatprep.subr.mxu0 0.0
    %4896 = vmatpush1.xpose.msra.mxu0 0.0
    %4897 = vmatprep.subr.mxu0 0.0
    %4898 = vmatpush1.xpose.msra.mxu0 0.0
    %4899 = vmatprep.subr.mxu0 0.0
    %4900 = vmatpush1.xpose.msra.mxu0 0.0
    %4901 = vmatprep.subr.mxu0 0.0
    %4902 = vmatpush1.xpose.msra.mxu0 0.0
    %4903 = vmatprep.subr.mxu0 0.0
    %4904 = vmatpush1.xpose.msra.mxu0 0.0
    %4905 = vmatprep.subr.mxu0 0.0
    %4906 = vmatpush1.xpose.msra.mxu0 0.0
    %4907 = vmatprep.mubr.f32.mxu0 0.0
    %4908 = vmatmul.mubr.f32.gmra.mrb[0].mxu0 %v4838
    %v4909 = vpop.f32.mrb[0].mxu0
    %v4910 = vadd.f32 0.0, %v4909
    %v4911 = vpop.f32.mrb[0].mxu0
    %4912 = vdwg.mxu0
    %v4914 = vsel %vm413, %v4674, 0
    %v4917 = vsel %vm413, %v4754, 0
    %4919 = vmatprep.subr.mxu0 0.0
    %4920 = vmatpush1.xpose.msra.mxu0 %v4917
    %4921 = vmatprep.subr.mxu0 0.0
    %4922 = vmatpush1.xpose.msra.mxu0 0.0
    %4923 = vmatprep.subr.mxu0 0.0
    %4924 = vmatpush1.xpose.msra.mxu0 0.0
    %4925 = vmatprep.subr.mxu0 0.0
    %4926 = vmatpush1.xpose.msra.mxu0 0.0
    %4927 = vmatprep.subr.mxu0 0.0
    %4928 = vmatpush1.xpose.msra.mxu0 0.0
    %4929 = vmatprep.subr.mxu0 0.0
    %4930 = vmatpush1.xpose.msra.mxu0 0.0
    %4931 = vmatprep.subr.mxu0 0.0
    %4932 = vmatpush1.xpose.msra.mxu0 0.0
    %4933 = vmatprep.subr.mxu0 0.0
    %4934 = vmatpush1.xpose.msra.mxu0 0.0
    %4935 = vmatprep.subr.mxu0 0.0
    %4936 = vmatpush1.xpose.msra.mxu0 0.0
    %4937 = vmatprep.subr.mxu0 0.0
    %4938 = vmatpush1.xpose.msra.mxu0 0.0
    %4939 = vmatprep.subr.mxu0 0.0
    %4940 = vmatpush1.xpose.msra.mxu0 0.0
    %4941 = vmatprep.subr.mxu0 0.0
    %4942 = vmatpush1.xpose.msra.mxu0 0.0
    %4943 = vmatprep.subr.mxu0 0.0
    %4944 = vmatpush1.xpose.msra.mxu0 0.0
    %4945 = vmatprep.subr.mxu0 0.0
    %4946 = vmatpush1.xpose.msra.mxu0 0.0
    %4947 = vmatprep.subr.mxu0 0.0
    %4948 = vmatpush1.xpose.msra.mxu0 0.0
    %4949 = vmatprep.subr.mxu0 0.0
    %4950 = vmatpush1.xpose.msra.mxu0 0.0
    %4951 = vmatprep.subr.mxu0 0.0
    %4952 = vmatpush1.xpose.msra.mxu0 0.0
    %4953 = vmatprep.subr.mxu0 0.0
    %4954 = vmatpush1.xpose.msra.mxu0 0.0
    %4955 = vmatprep.subr.mxu0 0.0
    %4956 = vmatpush1.xpose.msra.mxu0 0.0
    %4957 = vmatprep.subr.mxu0 0.0
    %4958 = vmatpush1.xpose.msra.mxu0 0.0
    %4959 = vmatprep.subr.mxu0 0.0
    %4960 = vmatpush1.xpose.msra.mxu0 0.0
    %4961 = vmatprep.subr.mxu0 0.0
    %4962 = vmatpush1.xpose.msra.mxu0 0.0
    %4963 = vmatprep.subr.mxu0 0.0
    %4964 = vmatpush1.xpose.msra.mxu0 0.0
    %4965 = vmatprep.subr.mxu0 0.0
    %4966 = vmatpush1.xpose.msra.mxu0 0.0
    %4967 = vmatprep.subr.mxu0 0.0
    %4968 = vmatpush1.xpose.msra.mxu0 0.0
    %4969 = vmatprep.subr.mxu0 0.0
    %4970 = vmatpush1.xpose.msra.mxu0 0.0
    %4971 = vmatprep.subr.mxu0 0.0
    %4972 = vmatpush1.xpose.msra.mxu0 0.0
    %4973 = vmatprep.subr.mxu0 0.0
    %4974 = vmatpush1.xpose.msra.mxu0 0.0
    %4975 = vmatprep.subr.mxu0 0.0
    %4976 = vmatpush1.xpose.msra.mxu0 0.0
    %4977 = vmatprep.subr.mxu0 0.0
    %4978 = vmatpush1.xpose.msra.mxu0 0.0
    %4979 = vmatprep.subr.mxu0 0.0
    %4980 = vmatpush1.xpose.msra.mxu0 0.0
    %4981 = vmatprep.subr.mxu0 0.0
    %4982 = vmatpush1.xpose.msra.mxu0 0.0
    %4983 = vmatprep.mubr.f32.mxu0 0.0
    %4984 = vmatmul.mubr.f32.gmra.mrb[0].mxu0 %v4914
    %v4985 = vpop.f32.mrb[0].mxu0
    %v4986 = vadd.f32 0.0, %v4985
    %v4987 = vpop.f32.mrb[0].mxu0
    %4988 = vdwg.mxu0
    %v4989 = vsel %vm413, %v4910, -inf
    %4990 = vmax.xlane.f32.xlu0 %v4989
    %v4991 = vpop.xlane.xlu0 %4990
    %v4992 = vsel %vm413, %v4986, -inf
    %4993 = vmax.xlane.f32.xlu0 %v4992
    %v4994 = vpop.xlane.xlu0 %4993
    %v4995 = vsub.f32 %v4910, %v4991
    %v4996 = vsub.f32 %v4986, %v4994
    %v4997 = vmul.f32 %v4995, 1.442695
    %v4998 = vpow.pop %v4997
    %v4999 = vmul.f32 %v4996, 1.442695
    %v5000 = vpow.pop %v4999
    %v5001 = vsel %vm413, %v4998, 0.0
    %5002 = vadd.xlane.f32.xlu0 %v5001
    %v5003 = vpop.xlane.xlu0 %5002
    %v5004 = vsel %vm413, %v5000, 0.0
    %5005 = vadd.xlane.f32.xlu0 %v5004
    %v5006 = vpop.xlane.xlu0 %5005
    %v5007 = vrcp.pop %v5003
    %v5008 = vmul.f32 %v4998, %v5007
    %v5009 = vrcp.pop %v5006
    %v5010 = vmul.f32 %v5000, %v5009
    %s5011 = sld [smem:[#allocation7 + $0x4]]
    %s5012 = sld [smem:[#allocation6 + $0x10]]
    %v5013 = vstv %s5012
    %v5014 = vmul.f32 %v5013, %v3766
    %v5015 = vmul.f32 %v5013, %v3768
    %v5016 = vstv %s5011
    %v5017 = vadd.f32 %v5016, %v5014
    %v5018 = vadd.f32 %v5016, %v5015
    %s5019 = sld [smem:[#allocation6 + $0x11]]
    %v5020 = vstv %s5019
    %v5021 = vmul.f32 %v5020, %v4180
    %v5022 = vmul.f32 %v5020, %v4182
    %v5023 = vadd.f32 %v5017, %v5021
    %v5024 = vadd.f32 %v5018, %v5022
    %s5025 = sld [smem:[#allocation6 + $0x12]]
    %v5026 = vstv %s5025
    %v5027 = vmul.f32 %v5026, %v4594
    %v5028 = vmul.f32 %v5026, %v4596
    %v5029 = vadd.f32 %v5023, %v5027
    %v5030 = vadd.f32 %v5024, %v5028
    %s5031 = sld [smem:[#allocation6 + $0x13]]
    %v5032 = vstv %s5031
    %v5033 = vmul.f32 %v5032, %v5008
    %v5034 = vmul.f32 %v5032, %v5010
    %v5035 = vadd.f32 %v5029, %v5033
    %v5036 = vadd.f32 %v5030, %v5034
    %v5037 = vsel %vm413, %v5035, 0.0
    %v5038 = vsel %vm413, %v5036, 0.0
    %v5039 = vadd.f32 %v5037, %v5038
    %5040 = vadd.xlane.f32.xlu0 %v5039
    %v5041 = vpop.xlane.xlu0 %5040
    %v5042 = vrot.slane %v5041, 4
    %v5043 = vadd.f32 %v5041, %v5042
    %v5044 = vrot.slane %v5043, 2
    %v5045 = vadd.f32 %v5043, %v5044
    %v5046 = vrot.slane %v5045, 1
    %v5047 = vadd.f32 %v5045, %v5046
    %s5048 = vtos %v5047
    %v5049 = vrcp.pop 128.0
    %s5050 = vtos %v5049
    %s5051 = smul.f32 %s5048, %s5050
    %v5052 = vstv %s5051
    %v5053 = vsub.f32 %v5035, %v5052
    %v5054 = vsub.f32 %v5036, %v5052
    %v5055 = vmul.f32 %v5053, %v5053
    %v5056 = vmul.f32 %v5054, %v5054
    %v5057 = vsel %vm413, %v5055, 0.0
    %v5058 = vsel %vm413, %v5056, 0.0
    %v5059 = vadd.f32 %v5057, %v5058
    %5060 = vadd.xlane.f32.xlu0 %v5059
    %v5061 = vpop.xlane.xlu0 %5060
    %v5062 = vrot.slane %v5061, 4
    %v5063 = vadd.f32 %v5061, %v5062
    %v5064 = vrot.slane %v5063, 2
    %v5065 = vadd.f32 %v5063, %v5064
    %v5066 = vrot.slane %v5065, 1
    %v5067 = vadd.f32 %v5065, %v5066
    %s5068 = vtos %v5067
    %v5069 = vrcp.pop 128.0
    %s5070 = vtos %v5069
    %s5071 = smul.f32 %s5068, %s5070
    %s5072 = sadd.f32 %s5071, 1e-05
    %v5073 = vstv %s5072
    %v5074 = vrsqrt.pop %v5073
    %s5075 = vtos %v5074
    %v5076 = vstv %s5075
    %v5077 = vmul.f32 %v5053, %v5076
    %v5078 = vmul.f32 %v5054, %v5076
    %s5079 = sld [smem:[#allocation9 + $0x4]]
    %v5080 = vstv %s5079
    %v5081 = vmul.f32 %v5077, %v5080
    %v5082 = vmul.f32 %v5078, %v5080
    %s5083 = sld [smem:[#allocation10 + $0x4]]
    %v5084 = vstv %s5083
    %v5085 = vadd.f32 %v5081, %v5084
    %v5086 = vadd.f32 %v5082, %v5084
    %v5088 = vsel %vm413, %v5085, 0
    %5090 = vmatprep.subr.mxu0 0.0
    %5091 = vmatpush1.msra.mxu0 %v3587
    %5092 = vmatprep.subr.mxu0 0.0
    %5093 = vmatpush1.msra.mxu0 0.0
    %5094 = vmatprep.subr.mxu0 0.0
    %5095 = vmatpush1.msra.mxu0 0.0
    %5096 = vmatprep.subr.mxu0 0.0
    %5097 = vmatpush1.msra.mxu0 0.0
    %5098 = vmatprep.subr.mxu0 0.0
    %5099 = vmatpush1.msra.mxu0 0.0
    %5100 = vmatprep.subr.mxu0 0.0
    %5101 = vmatpush1.msra.mxu0 0.0
    %5102 = vmatprep.subr.mxu0 0.0
    %5103 = vmatpush1.msra.mxu0 0.0
    %5104 = vmatprep.subr.mxu0 0.0
    %5105 = vmatpush1.msra.mxu0 0.0
    %5106 = vmatprep.subr.mxu0 0.0
    %5107 = vmatpush1.msra.mxu0 0.0
    %5108 = vmatprep.subr.mxu0 0.0
    %5109 = vmatpush1.msra.mxu0 0.0
    %5110 = vmatprep.subr.mxu0 0.0
    %5111 = vmatpush1.msra.mxu0 0.0
    %5112 = vmatprep.subr.mxu0 0.0
    %5113 = vmatpush1.msra.mxu0 0.0
    %5114 = vmatprep.subr.mxu0 0.0
    %5115 = vmatpush1.msra.mxu0 0.0
    %5116 = vmatprep.subr.mxu0 0.0
    %5117 = vmatpush1.msra.mxu0 0.0
    %5118 = vmatprep.subr.mxu0 0.0
    %5119 = vmatpush1.msra.mxu0 0.0
    %5120 = vmatprep.subr.mxu0 0.0
    %5121 = vmatpush1.msra.mxu0 0.0
    %5122 = vmatprep.subr.mxu0 0.0
    %5123 = vmatpush1.msra.mxu0 0.0
    %5124 = vmatprep.subr.mxu0 0.0
    %5125 = vmatpush1.msra.mxu0 0.0
    %5126 = vmatprep.subr.mxu0 0.0
    %5127 = vmatpush1.msra.mxu0 0.0
    %5128 = vmatprep.subr.mxu0 0.0
    %5129 = vmatpush1.msra.mxu0 0.0
    %5130 = vmatprep.subr.mxu0 0.0
    %5131 = vmatpush1.msra.mxu0 0.0
    %5132 = vmatprep.subr.mxu0 0.0
    %5133 = vmatpush1.msra.mxu0 0.0
    %5134 = vmatprep.subr.mxu0 0.0
    %5135 = vmatpush1.msra.mxu0 0.0
    %5136 = vmatprep.subr.mxu0 0.0
    %5137 = vmatpush1.msra.mxu0 0.0
    %5138 = vmatprep.subr.mxu0 0.0
    %5139 = vmatpush1.msra.mxu0 0.0
    %5140 = vmatprep.subr.mxu0 0.0
    %5141 = vmatpush1.msra.mxu0 0.0
    %5142 = vmatprep.subr.mxu0 0.0
    %5143 = vmatpush1.msra.mxu0 0.0
    %5144 = vmatprep.subr.mxu0 0.0
    %5145 = vmatpush1.msra.mxu0 0.0
    %5146 = vmatprep.subr.mxu0 0.0
    %5147 = vmatpush1.msra.mxu0 0.0
    %5148 = vmatprep.subr.mxu0 0.0
    %5149 = vmatpush1.msra.mxu0 0.0
    %5150 = vmatprep.subr.mxu0 0.0
    %5151 = vmatpush1.msra.mxu0 0.0
    %5152 = vmatprep.subr.mxu0 0.0
    %5153 = vmatpush1.msra.mxu0 0.0
    %5154 = vmatprep.mubr.f32.mxu0 0.0
    %5155 = vmatmul.mubr.f32.gmra.mrb[0].mxu0 %v5088
    %v5156 = vpop.f32.mrb[0].mxu0
    %v5157 = vadd.f32 0.0, %v5156
    %v5158 = vpop.f32.mrb[0].mxu0
    %5159 = vdwg.mxu0
    %v5161 = vsel %vm413, %v5086, 0
    %5163 = vmatprep.subr.mxu0 0.0
    %5164 = vmatpush1.msra.mxu0 %v3592
    %5165 = vmatprep.subr.mxu0 0.0
    %5166 = vmatpush1.msra.mxu0 0.0
    %5167 = vmatprep.subr.mxu0 0.0
    %5168 = vmatpush1.msra.mxu0 0.0
    %5169 = vmatprep.subr.mxu0 0.0
    %5170 = vmatpush1.msra.mxu0 0.0
    %5171 = vmatprep.subr.mxu0 0.0
    %5172 = vmatpush1.msra.mxu0 0.0
    %5173 = vmatprep.subr.mxu0 0.0
    %5174 = vmatpush1.msra.mxu0 0.0
    %5175 = vmatprep.subr.mxu0 0.0
    %5176 = vmatpush1.msra.mxu0 0.0
    %5177 = vmatprep.subr.mxu0 0.0
    %5178 = vmatpush1.msra.mxu0 0.0
    %5179 = vmatprep.subr.mxu0 0.0
    %5180 = vmatpush1.msra.mxu0 0.0
    %5181 = vmatprep.subr.mxu0 0.0
    %5182 = vmatpush1.msra.mxu0 0.0
    %5183 = vmatprep.subr.mxu0 0.0
    %5184 = vmatpush1.msra.mxu0 0.0
    %5185 = vmatprep.subr.mxu0 0.0
    %5186 = vmatpush1.msra.mxu0 0.0
    %5187 = vmatprep.subr.mxu0 0.0
    %5188 = vmatpush1.msra.mxu0 0.0
    %5189 = vmatprep.subr.mxu0 0.0
    %5190 = vmatpush1.msra.mxu0 0.0
    %5191 = vmatprep.subr.mxu0 0.0
    %5192 = vmatpush1.msra.mxu0 0.0
    %5193 = vmatprep.subr.mxu0 0.0
    %5194 = vmatpush1.msra.mxu0 0.0
    %5195 = vmatprep.subr.mxu0 0.0
    %5196 = vmatpush1.msra.mxu0 0.0
    %5197 = vmatprep.subr.mxu0 0.0
    %5198 = vmatpush1.msra.mxu0 0.0
    %5199 = vmatprep.subr.mxu0 0.0
    %5200 = vmatpush1.msra.mxu0 0.0
    %5201 = vmatprep.subr.mxu0 0.0
    %5202 = vmatpush1.msra.mxu0 0.0
    %5203 = vmatprep.subr.mxu0 0.0
    %5204 = vmatpush1.msra.mxu0 0.0
    %5205 = vmatprep.subr.mxu0 0.0
    %5206 = vmatpush1.msra.mxu0 0.0
    %5207 = vmatprep.subr.mxu0 0.0
    %5208 = vmatpush1.msra.mxu0 0.0
    %5209 = vmatprep.subr.mxu0 0.0
    %5210 = vmatpush1.msra.mxu0 0.0
    %5211 = vmatprep.subr.mxu0 0.0
    %5212 = vmatpush1.msra.mxu0 0.0
    %5213 = vmatprep.subr.mxu0 0.0
    %5214 = vmatpush1.msra.mxu0 0.0
    %5215 = vmatprep.subr.mxu0 0.0
    %5216 = vmatpush1.msra.mxu0 0.0
    %5217 = vmatprep.subr.mxu0 0.0
    %5218 = vmatpush1.msra.mxu0 0.0
    %5219 = vmatprep.subr.mxu0 0.0
    %5220 = vmatpush1.msra.mxu0 0.0
    %5221 = vmatprep.subr.mxu0 0.0
    %5222 = vmatpush1.msra.mxu0 0.0
    %5223 = vmatprep.subr.mxu0 0.0
    %5224 = vmatpush1.msra.mxu0 0.0
    %5225 = vmatprep.subr.mxu0 0.0
    %5226 = vmatpush1.msra.mxu0 0.0
    %5227 = vmatprep.mubr.f32.mxu0 0.0
    %5228 = vmatmul.mubr.f32.gmra.mrb[0].mxu0 %v5161
    %v5229 = vpop.f32.mrb[0].mxu0
    %v5230 = vadd.f32 0.0, %v5229
    %v5231 = vpop.f32.mrb[0].mxu0
    %5232 = vdwg.mxu0
    %s5233 = scalar_lea.vmem %s6, 32
    %v5234 = vld [vmem:[%s5233] sm:$0xff]
    %s5235 = sld [smem:[#allocation7 + $0x5]]
    %s5236 = sld [smem:[#allocation6 + $0x14]]
    %v5237 = vstv %s5236
    %v5238 = vmul.f32 %v5237, %v3766
    %v5239 = vmul.f32 %v5237, %v3768
    %v5240 = vstv %s5235
    %v5241 = vadd.f32 %v5240, %v5238
    %v5242 = vadd.f32 %v5240, %v5239
    %s5243 = sld [smem:[#allocation6 + $0x15]]
    %v5244 = vstv %s5243
    %v5245 = vmul.f32 %v5244, %v4180
    %v5246 = vmul.f32 %v5244, %v4182
    %v5247 = vadd.f32 %v5241, %v5245
    %v5248 = vadd.f32 %v5242, %v5246
    %s5249 = sld [smem:[#allocation6 + $0x16]]
    %v5250 = vstv %s5249
    %v5251 = vmul.f32 %v5250, %v4594
    %v5252 = vmul.f32 %v5250, %v4596
    %v5253 = vadd.f32 %v5247, %v5251
    %v5254 = vadd.f32 %v5248, %v5252
    %s5255 = sld [smem:[#allocation6 + $0x17]]
    %v5256 = vstv %s5255
    %v5257 = vmul.f32 %v5256, %v5008
    %v5258 = vmul.f32 %v5256, %v5010
    %v5259 = vadd.f32 %v5253, %v5257
    %v5260 = vadd.f32 %v5254, %v5258
    %v5261 = vsel %vm413, %v5259, 0.0
    %v5262 = vsel %vm413, %v5260, 0.0
    %v5263 = vadd.f32 %v5261, %v5262
    %5264 = vadd.xlane.f32.xlu0 %v5263
    %v5265 = vpop.xlane.xlu0 %5264
    %v5266 = vrot.slane %v5265, 4
    %v5267 = vadd.f32 %v5265, %v5266
    %v5268 = vrot.slane %v5267, 2
    %v5269 = vadd.f32 %v5267, %v5268
    %v5270 = vrot.slane %v5269, 1
    %v5271 = vadd.f32 %v5269, %v5270
    %s5272 = vtos %v5271
    %v5273 = vrcp.pop 128.0
    %s5274 = vtos %v5273
    %s5275 = smul.f32 %s5272, %s5274
    %v5276 = vstv %s5275
    %v5277 = vsub.f32 %v5259, %v5276
    %v5278 = vsub.f32 %v5260, %v5276
    %v5279 = vmul.f32 %v5277, %v5277
    %v5280 = vmul.f32 %v5278, %v5278
    %v5281 = vsel %vm413, %v5279, 0.0
    %v5282 = vsel %vm413, %v5280, 0.0
    %v5283 = vadd.f32 %v5281, %v5282
    %5284 = vadd.xlane.f32.xlu0 %v5283
    %v5285 = vpop.xlane.xlu0 %5284
    %v5286 = vrot.slane %v5285, 4
    %v5287 = vadd.f32 %v5285, %v5286
    %v5288 = vrot.slane %v5287, 2
    %v5289 = vadd.f32 %v5287, %v5288
    %v5290 = vrot.slane %v5289, 1
    %v5291 = vadd.f32 %v5289, %v5290
    %s5292 = vtos %v5291
    %v5293 = vrcp.pop 128.0
    %s5294 = vtos %v5293
    %s5295 = smul.f32 %s5292, %s5294
    %s5296 = sadd.f32 %s5295, 1e-05
    %v5297 = vstv %s5296
    %v5298 = vrsqrt.pop %v5297
    %s5299 = vtos %v5298
    %v5300 = vstv %s5299
    %v5301 = vmul.f32 %v5277, %v5300
    %v5302 = vmul.f32 %v5278, %v5300
    %s5303 = sld [smem:[#allocation9 + $0x5]]
    %v5304 = vstv %s5303
    %v5305 = vmul.f32 %v5301, %v5304
    %v5306 = vmul.f32 %v5302, %v5304
    %s5307 = sld [smem:[#allocation10 + $0x5]]
    %v5308 = vstv %s5307
    %v5309 = vadd.f32 %v5305, %v5308
    %v5310 = vadd.f32 %v5306, %v5308
    %v5312 = vsel %vm413, %v5309, 0
    %5314 = vmatprep.subr.mxu0 0.0
    %5315 = vmatpush1.msra.mxu0 %v4001
    %5316 = vmatprep.subr.mxu0 0.0
    %5317 = vmatpush1.msra.mxu0 0.0
    %5318 = vmatprep.subr.mxu0 0.0
    %5319 = vmatpush1.msra.mxu0 0.0
    %5320 = vmatprep.subr.mxu0 0.0
    %5321 = vmatpush1.msra.mxu0 0.0
    %5322 = vmatprep.subr.mxu0 0.0
    %5323 = vmatpush1.msra.mxu0 0.0
    %5324 = vmatprep.subr.mxu0 0.0
    %5325 = vmatpush1.msra.mxu0 0.0
    %5326 = vmatprep.subr.mxu0 0.0
    %5327 = vmatpush1.msra.mxu0 0.0
    %5328 = vmatprep.subr.mxu0 0.0
    %5329 = vmatpush1.msra.mxu0 0.0
    %5330 = vmatprep.subr.mxu0 0.0
    %5331 = vmatpush1.msra.mxu0 0.0
    %5332 = vmatprep.subr.mxu0 0.0
    %5333 = vmatpush1.msra.mxu0 0.0
    %5334 = vmatprep.subr.mxu0 0.0
    %5335 = vmatpush1.msra.mxu0 0.0
    %5336 = vmatprep.subr.mxu0 0.0
    %5337 = vmatpush1.msra.mxu0 0.0
    %5338 = vmatprep.subr.mxu0 0.0
    %5339 = vmatpush1.msra.mxu0 0.0
    %5340 = vmatprep.subr.mxu0 0.0
    %5341 = vmatpush1.msra.mxu0 0.0
    %5342 = vmatprep.subr.mxu0 0.0
    %5343 = vmatpush1.msra.mxu0 0.0
    %5344 = vmatprep.subr.mxu0 0.0
    %5345 = vmatpush1.msra.mxu0 0.0
    %5346 = vmatprep.subr.mxu0 0.0
    %5347 = vmatpush1.msra.mxu0 0.0
    %5348 = vmatprep.subr.mxu0 0.0
    %5349 = vmatpush1.msra.mxu0 0.0
    %5350 = vmatprep.subr.mxu0 0.0
    %5351 = vmatpush1.msra.mxu0 0.0
    %5352 = vmatprep.subr.mxu0 0.0
    %5353 = vmatpush1.msra.mxu0 0.0
    %5354 = vmatprep.subr.mxu0 0.0
    %5355 = vmatpush1.msra.mxu0 0.0
    %5356 = vmatprep.subr.mxu0 0.0
    %5357 = vmatpush1.msra.mxu0 0.0
    %5358 = vmatprep.subr.mxu0 0.0
    %5359 = vmatpush1.msra.mxu0 0.0
    %5360 = vmatprep.subr.mxu0 0.0
    %5361 = vmatpush1.msra.mxu0 0.0
    %5362 = vmatprep.subr.mxu0 0.0
    %5363 = vmatpush1.msra.mxu0 0.0
    %5364 = vmatprep.subr.mxu0 0.0
    %5365 = vmatpush1.msra.mxu0 0.0
    %5366 = vmatprep.subr.mxu0 0.0
    %5367 = vmatpush1.msra.mxu0 0.0
    %5368 = vmatprep.subr.mxu0 0.0
    %5369 = vmatpush1.msra.mxu0 0.0
    %5370 = vmatprep.subr.mxu0 0.0
    %5371 = vmatpush1.msra.mxu0 0.0
    %5372 = vmatprep.subr.mxu0 0.0
    %5373 = vmatpush1.msra.mxu0 0.0
    %5374 = vmatprep.subr.mxu0 0.0
    %5375 = vmatpush1.msra.mxu0 0.0
    %5376 = vmatprep.subr.mxu0 0.0
    %5377 = vmatpush1.msra.mxu0 0.0
    %5378 = vmatprep.mubr.f32.mxu0 0.0
    %5379 = vmatmul.mubr.f32.gmra.mrb[0].mxu0 %v5312
    %v5380 = vpop.f32.mrb[0].mxu0
    %v5381 = vadd.f32 0.0, %v5380
    %v5382 = vpop.f32.mrb[0].mxu0
    %5383 = vdwg.mxu0
    %v5385 = vsel %vm413, %v5310, 0
    %5387 = vmatprep.subr.mxu0 0.0
    %5388 = vmatpush1.msra.mxu0 %v4006
    %5389 = vmatprep.subr.mxu0 0.0
    %5390 = vmatpush1.msra.mxu0 0.0
    %5391 = vmatprep.subr.mxu0 0.0
    %5392 = vmatpush1.msra.mxu0 0.0
    %5393 = vmatprep.subr.mxu0 0.0
    %5394 = vmatpush1.msra.mxu0 0.0
    %5395 = vmatprep.subr.mxu0 0.0
    %5396 = vmatpush1.msra.mxu0 0.0
    %5397 = vmatprep.subr.mxu0 0.0
    %5398 = vmatpush1.msra.mxu0 0.0
    %5399 = vmatprep.subr.mxu0 0.0
    %5400 = vmatpush1.msra.mxu0 0.0
    %5401 = vmatprep.subr.mxu0 0.0
    %5402 = vmatpush1.msra.mxu0 0.0
    %5403 = vmatprep.subr.mxu0 0.0
    %5404 = vmatpush1.msra.mxu0 0.0
    %5405 = vmatprep.subr.mxu0 0.0
    %5406 = vmatpush1.msra.mxu0 0.0
    %5407 = vmatprep.subr.mxu0 0.0
    %5408 = vmatpush1.msra.mxu0 0.0
    %5409 = vmatprep.subr.mxu0 0.0
    %5410 = vmatpush1.msra.mxu0 0.0
    %5411 = vmatprep.subr.mxu0 0.0
    %5412 = vmatpush1.msra.mxu0 0.0
    %5413 = vmatprep.subr.mxu0 0.0
    %5414 = vmatpush1.msra.mxu0 0.0
    %5415 = vmatprep.subr.mxu0 0.0
    %5416 = vmatpush1.msra.mxu0 0.0
    %5417 = vmatprep.subr.mxu0 0.0
    %5418 = vmatpush1.msra.mxu0 0.0
    %5419 = vmatprep.subr.mxu0 0.0
    %5420 = vmatpush1.msra.mxu0 0.0
    %5421 = vmatprep.subr.mxu0 0.0
    %5422 = vmatpush1.msra.mxu0 0.0
    %5423 = vmatprep.subr.mxu0 0.0
    %5424 = vmatpush1.msra.mxu0 0.0
    %5425 = vmatprep.subr.mxu0 0.0
    %5426 = vmatpush1.msra.mxu0 0.0
    %5427 = vmatprep.subr.mxu0 0.0
    %5428 = vmatpush1.msra.mxu0 0.0
    %5429 = vmatprep.subr.mxu0 0.0
    %5430 = vmatpush1.msra.mxu0 0.0
    %5431 = vmatprep.subr.mxu0 0.0
    %5432 = vmatpush1.msra.mxu0 0.0
    %5433 = vmatprep.subr.mxu0 0.0
    %5434 = vmatpush1.msra.mxu0 0.0
    %5435 = vmatprep.subr.mxu0 0.0
    %5436 = vmatpush1.msra.mxu0 0.0
    %5437 = vmatprep.subr.mxu0 0.0
    %5438 = vmatpush1.msra.mxu0 0.0
    %5439 = vmatprep.subr.mxu0 0.0
    %5440 = vmatpush1.msra.mxu0 0.0
    %5441 = vmatprep.subr.mxu0 0.0
    %5442 = vmatpush1.msra.mxu0 0.0
    %5443 = vmatprep.subr.mxu0 0.0
    %5444 = vmatpush1.msra.mxu0 0.0
    %5445 = vmatprep.subr.mxu0 0.0
    %5446 = vmatpush1.msra.mxu0 0.0
    %5447 = vmatprep.subr.mxu0 0.0
    %5448 = vmatpush1.msra.mxu0 0.0
    %5449 = vmatprep.subr.mxu0 0.0
    %5450 = vmatpush1.msra.mxu0 0.0
    %5451 = vmatprep.mubr.f32.mxu0 0.0
    %5452 = vmatmul.mubr.f32.gmra.mrb[0].mxu0 %v5385
    %v5453 = vpop.f32.mrb[0].mxu0
    %v5454 = vadd.f32 0.0, %v5453
    %v5455 = vpop.f32.mrb[0].mxu0
    %5456 = vdwg.mxu0
    %s5457 = scalar_lea.vmem %s6, 40
    %v5458 = vld [vmem:[%s5457] sm:$0xff]
    %v5460 = vsel %vm413, %v5381, 0
    %v5463 = vsel %vm413, %v5454, 0
    %5465 = vmatprep.subr.mxu0 0.0
    %5466 = vmatpush1.msra.mxu0 %v5458
    %5467 = vmatprep.subr.mxu0 0.0
    %5468 = vmatpush1.msra.mxu0 0.0
    %5469 = vmatprep.subr.mxu0 0.0
    %5470 = vmatpush1.msra.mxu0 0.0
    %5471 = vmatprep.subr.mxu0 0.0
    %5472 = vmatpush1.msra.mxu0 0.0
    %5473 = vmatprep.subr.mxu0 0.0
    %5474 = vmatpush1.msra.mxu0 0.0
    %5475 = vmatprep.subr.mxu0 0.0
    %5476 = vmatpush1.msra.mxu0 0.0
    %5477 = vmatprep.subr.mxu0 0.0
    %5478 = vmatpush1.msra.mxu0 0.0
    %5479 = vmatprep.subr.mxu0 0.0
    %5480 = vmatpush1.msra.mxu0 0.0
    %5481 = vmatprep.subr.mxu0 0.0
    %5482 = vmatpush1.msra.mxu0 0.0
    %5483 = vmatprep.subr.mxu0 0.0
    %5484 = vmatpush1.msra.mxu0 0.0
    %5485 = vmatprep.subr.mxu0 0.0
    %5486 = vmatpush1.msra.mxu0 0.0
    %5487 = vmatprep.subr.mxu0 0.0
    %5488 = vmatpush1.msra.mxu0 0.0
    %5489 = vmatprep.subr.mxu0 0.0
    %5490 = vmatpush1.msra.mxu0 0.0
    %5491 = vmatprep.subr.mxu0 0.0
    %5492 = vmatpush1.msra.mxu0 0.0
    %5493 = vmatprep.subr.mxu0 0.0
    %5494 = vmatpush1.msra.mxu0 0.0
    %5495 = vmatprep.subr.mxu0 0.0
    %5496 = vmatpush1.msra.mxu0 0.0
    %5497 = vmatprep.subr.mxu0 0.0
    %5498 = vmatpush1.msra.mxu0 0.0
    %5499 = vmatprep.subr.mxu0 0.0
    %5500 = vmatpush1.msra.mxu0 0.0
    %5501 = vmatprep.subr.mxu0 0.0
    %5502 = vmatpush1.msra.mxu0 0.0
    %5503 = vmatprep.subr.mxu0 0.0
    %5504 = vmatpush1.msra.mxu0 0.0
    %5505 = vmatprep.subr.mxu0 0.0
    %5506 = vmatpush1.msra.mxu0 0.0
    %5507 = vmatprep.subr.mxu0 0.0
    %5508 = vmatpush1.msra.mxu0 0.0
    %5509 = vmatprep.subr.mxu0 0.0
    %5510 = vmatpush1.msra.mxu0 0.0
    %5511 = vmatprep.subr.mxu0 0.0
    %5512 = vmatpush1.msra.mxu0 0.0
    %5513 = vmatprep.subr.mxu0 0.0
    %5514 = vmatpush1.msra.mxu0 0.0
    %5515 = vmatprep.subr.mxu0 0.0
    %5516 = vmatpush1.msra.mxu0 0.0
    %5517 = vmatprep.subr.mxu0 0.0
    %5518 = vmatpush1.msra.mxu0 0.0
    %5519 = vmatprep.subr.mxu0 0.0
    %5520 = vmatpush1.msra.mxu0 0.0
    %5521 = vmatprep.subr.mxu0 0.0
    %5522 = vmatpush1.msra.mxu0 0.0
    %5523 = vmatprep.subr.mxu0 0.0
    %5524 = vmatpush1.msra.mxu0 0.0
    %5525 = vmatprep.subr.mxu0 0.0
    %5526 = vmatpush1.msra.mxu0 0.0
    %5527 = vmatprep.subr.mxu0 0.0
    %5528 = vmatpush1.msra.mxu0 0.0
    %5529 = vmatprep.mubr.f32.mxu0 0.0
    %5530 = vmatmul.mubr.f32.gmra.mrb[0].mxu0 %v5460
    %v5531 = vpop.f32.mrb[0].mxu0
    %v5532 = vadd.f32 0.0, %v5531
    %v5533 = vpop.f32.mrb[0].mxu0
    %5534 = vmatprep.mubr.f32.mxu0 0.0
    %5535 = vmatmul.mubr.f32.gmra.mrb[0].mxu0 %v5463
    %v5536 = vpop.f32.mrb[0].mxu0
    %v5537 = vadd.f32 0.0, %v5536
    %v5538 = vpop.f32.mrb[0].mxu0
    %5539 = vdwg.mxu0
    %v5541 = vsel %vm413, %v5157, 0
    %v5544 = vsel %vm413, %v5230, 0
    %5546 = vmatprep.subr.mxu0 0.0
    %5547 = vmatpush1.msra.mxu0 %v5234
    %5548 = vmatprep.subr.mxu0 0.0
    %5549 = vmatpush1.msra.mxu0 0.0
    %5550 = vmatprep.subr.mxu0 0.0
    %5551 = vmatpush1.msra.mxu0 0.0
    %5552 = vmatprep.subr.mxu0 0.0
    %5553 = vmatpush1.msra.mxu0 0.0
    %5554 = vmatprep.subr.mxu0 0.0
    %5555 = vmatpush1.msra.mxu0 0.0
    %5556 = vmatprep.subr.mxu0 0.0
    %5557 = vmatpush1.msra.mxu0 0.0
    %5558 = vmatprep.subr.mxu0 0.0
    %5559 = vmatpush1.msra.mxu0 0.0
    %5560 = vmatprep.subr.mxu0 0.0
    %5561 = vmatpush1.msra.mxu0 0.0
    %5562 = vmatprep.subr.mxu0 0.0
    %5563 = vmatpush1.msra.mxu0 0.0
    %5564 = vmatprep.subr.mxu0 0.0
    %5565 = vmatpush1.msra.mxu0 0.0
    %5566 = vmatprep.subr.mxu0 0.0
    %5567 = vmatpush1.msra.mxu0 0.0
    %5568 = vmatprep.subr.mxu0 0.0
    %5569 = vmatpush1.msra.mxu0 0.0
    %5570 = vmatprep.subr.mxu0 0.0
    %5571 = vmatpush1.msra.mxu0 0.0
    %5572 = vmatprep.subr.mxu0 0.0
    %5573 = vmatpush1.msra.mxu0 0.0
    %5574 = vmatprep.subr.mxu0 0.0
    %5575 = vmatpush1.msra.mxu0 0.0
    %5576 = vmatprep.subr.mxu0 0.0
    %5577 = vmatpush1.msra.mxu0 0.0
    %5578 = vmatprep.subr.mxu0 0.0
    %5579 = vmatpush1.msra.mxu0 0.0
    %5580 = vmatprep.subr.mxu0 0.0
    %5581 = vmatpush1.msra.mxu0 0.0
    %5582 = vmatprep.subr.mxu0 0.0
    %5583 = vmatpush1.msra.mxu0 0.0
    %5584 = vmatprep.subr.mxu0 0.0
    %5585 = vmatpush1.msra.mxu0 0.0
    %5586 = vmatprep.subr.mxu0 0.0
    %5587 = vmatpush1.msra.mxu0 0.0
    %5588 = vmatprep.subr.mxu0 0.0
    %5589 = vmatpush1.msra.mxu0 0.0
    %5590 = vmatprep.subr.mxu0 0.0
    %5591 = vmatpush1.msra.mxu0 0.0
    %5592 = vmatprep.subr.mxu0 0.0
    %5593 = vmatpush1.msra.mxu0 0.0
    %5594 = vmatprep.subr.mxu0 0.0
    %5595 = vmatpush1.msra.mxu0 0.0
    %5596 = vmatprep.subr.mxu0 0.0
    %5597 = vmatpush1.msra.mxu0 0.0
    %5598 = vmatprep.subr.mxu0 0.0
    %5599 = vmatpush1.msra.mxu0 0.0
    %5600 = vmatprep.subr.mxu0 0.0
    %5601 = vmatpush1.msra.mxu0 0.0
    %5602 = vmatprep.subr.mxu0 0.0
    %5603 = vmatpush1.msra.mxu0 0.0
    %5604 = vmatprep.subr.mxu0 0.0
    %5605 = vmatpush1.msra.mxu0 0.0
    %5606 = vmatprep.subr.mxu0 0.0
    %5607 = vmatpush1.msra.mxu0 0.0
    %5608 = vmatprep.subr.mxu0 0.0
    %5609 = vmatpush1.msra.mxu0 0.0
    %5610 = vmatprep.mubr.f32.mxu0 0.0
    %5611 = vmatmul.mubr.f32.gmra.mrb[0].mxu0 %v5541
    %v5612 = vpop.f32.mrb[0].mxu0
    %v5613 = vadd.f32 %v5532, %v5612
    %v5614 = vpop.f32.mrb[0].mxu0
    %5615 = vmatprep.mubr.f32.mxu0 0.0
    %5616 = vmatmul.mubr.f32.gmra.mrb[0].mxu0 %v5544
    %v5617 = vpop.f32.mrb[0].mxu0
    %v5618 = vadd.f32 %v5537, %v5617
    %v5619 = vpop.f32.mrb[0].mxu0
    %5620 = vdwg.mxu0
    %s5621 = sld [smem:[#allocation7 + $0x6]]
    %s5622 = sld [smem:[#allocation6 + $0x18]]
    %v5623 = vstv %s5622
    %v5624 = vmul.f32 %v5623, %v3766
    %v5625 = vmul.f32 %v5623, %v3768
    %v5626 = vstv %s5621
    %v5627 = vadd.f32 %v5626, %v5624
    %v5628 = vadd.f32 %v5626, %v5625
    %s5629 = sld [smem:[#allocation6 + $0x19]]
    %v5630 = vstv %s5629
    %v5631 = vmul.f32 %v5630, %v4180
    %v5632 = vmul.f32 %v5630, %v4182
    %v5633 = vadd.f32 %v5627, %v5631
    %v5634 = vadd.f32 %v5628, %v5632
    %s5635 = sld [smem:[#allocation6 + $0x1a]]
    %v5636 = vstv %s5635
    %v5637 = vmul.f32 %v5636, %v4594
    %v5638 = vmul.f32 %v5636, %v4596
    %v5639 = vadd.f32 %v5633, %v5637
    %v5640 = vadd.f32 %v5634, %v5638
    %s5641 = sld [smem:[#allocation6 + $0x1b]]
    %v5642 = vstv %s5641
    %v5643 = vmul.f32 %v5642, %v5008
    %v5644 = vmul.f32 %v5642, %v5010
    %v5645 = vadd.f32 %v5639, %v5643
    %v5646 = vadd.f32 %v5640, %v5644
    %v5647 = vsel %vm413, %v5645, 0.0
    %v5648 = vsel %vm413, %v5646, 0.0
    %v5649 = vadd.f32 %v5647, %v5648
    %5650 = vadd.xlane.f32.xlu0 %v5649
    %v5651 = vpop.xlane.xlu0 %5650
    %v5652 = vrot.slane %v5651, 4
    %v5653 = vadd.f32 %v5651, %v5652
    %v5654 = vrot.slane %v5653, 2
    %v5655 = vadd.f32 %v5653, %v5654
    %v5656 = vrot.slane %v5655, 1
    %v5657 = vadd.f32 %v5655, %v5656
    %s5658 = vtos %v5657
    %v5659 = vrcp.pop 128.0
    %s5660 = vtos %v5659
    %s5661 = smul.f32 %s5658, %s5660
    %v5662 = vstv %s5661
    %v5663 = vsub.f32 %v5645, %v5662
    %v5664 = vsub.f32 %v5646, %v5662
    %v5665 = vmul.f32 %v5663, %v5663
    %v5666 = vmul.f32 %v5664, %v5664
    %v5667 = vsel %vm413, %v5665, 0.0
    %v5668 = vsel %vm413, %v5666, 0.0
    %v5669 = vadd.f32 %v5667, %v5668
    %5670 = vadd.xlane.f32.xlu0 %v5669
    %v5671 = vpop.xlane.xlu0 %5670
    %v5672 = vrot.slane %v5671, 4
    %v5673 = vadd.f32 %v5671, %v5672
    %v5674 = vrot.slane %v5673, 2
    %v5675 = vadd.f32 %v5673, %v5674
    %v5676 = vrot.slane %v5675, 1
    %v5677 = vadd.f32 %v5675, %v5676
    %s5678 = vtos %v5677
    %v5679 = vrcp.pop 128.0
    %s5680 = vtos %v5679
    %s5681 = smul.f32 %s5678, %s5680
    %s5682 = sadd.f32 %s5681, 1e-05
    %v5683 = vstv %s5682
    %v5684 = vrsqrt.pop %v5683
    %s5685 = vtos %v5684
    %v5686 = vstv %s5685
    %v5687 = vmul.f32 %v5663, %v5686
    %v5688 = vmul.f32 %v5664, %v5686
    %s5689 = sld [smem:[#allocation9 + $0x6]]
    %v5690 = vstv %s5689
    %v5691 = vmul.f32 %v5687, %v5690
    %v5692 = vmul.f32 %v5688, %v5690
    %s5693 = sld [smem:[#allocation10 + $0x6]]
    %v5694 = vstv %s5693
    %v5695 = vadd.f32 %v5691, %v5694
    %v5696 = vadd.f32 %v5692, %v5694
    %v5698 = vsel %vm413, %v5695, 0
    %5700 = vmatprep.subr.mxu0 0.0
    %5701 = vmatpush1.msra.mxu0 %v4415
    %5702 = vmatprep.subr.mxu0 0.0
    %5703 = vmatpush1.msra.mxu0 0.0
    %5704 = vmatprep.subr.mxu0 0.0
    %5705 = vmatpush1.msra.mxu0 0.0
    %5706 = vmatprep.subr.mxu0 0.0
    %5707 = vmatpush1.msra.mxu0 0.0
    %5708 = vmatprep.subr.mxu0 0.0
    %5709 = vmatpush1.msra.mxu0 0.0
    %5710 = vmatprep.subr.mxu0 0.0
    %5711 = vmatpush1.msra.mxu0 0.0
    %5712 = vmatprep.subr.mxu0 0.0
    %5713 = vmatpush1.msra.mxu0 0.0
    %5714 = vmatprep.subr.mxu0 0.0
    %5715 = vmatpush1.msra.mxu0 0.0
    %5716 = vmatprep.subr.mxu0 0.0
    %5717 = vmatpush1.msra.mxu0 0.0
    %5718 = vmatprep.subr.mxu0 0.0
    %5719 = vmatpush1.msra.mxu0 0.0
    %5720 = vmatprep.subr.mxu0 0.0
    %5721 = vmatpush1.msra.mxu0 0.0
    %5722 = vmatprep.subr.mxu0 0.0
    %5723 = vmatpush1.msra.mxu0 0.0
    %5724 = vmatprep.subr.mxu0 0.0
    %5725 = vmatpush1.msra.mxu0 0.0
    %5726 = vmatprep.subr.mxu0 0.0
    %5727 = vmatpush1.msra.mxu0 0.0
    %5728 = vmatprep.subr.mxu0 0.0
    %5729 = vmatpush1.msra.mxu0 0.0
    %5730 = vmatprep.subr.mxu0 0.0
    %5731 = vmatpush1.msra.mxu0 0.0
    %5732 = vmatprep.subr.mxu0 0.0
    %5733 = vmatpush1.msra.mxu0 0.0
    %5734 = vmatprep.subr.mxu0 0.0
    %5735 = vmatpush1.msra.mxu0 0.0
    %5736 = vmatprep.subr.mxu0 0.0
    %5737 = vmatpush1.msra.mxu0 0.0
    %5738 = vmatprep.subr.mxu0 0.0
    %5739 = vmatpush1.msra.mxu0 0.0
    %5740 = vmatprep.subr.mxu0 0.0
    %5741 = vmatpush1.msra.mxu0 0.0
    %5742 = vmatprep.subr.mxu0 0.0
    %5743 = vmatpush1.msra.mxu0 0.0
    %5744 = vmatprep.subr.mxu0 0.0
    %5745 = vmatpush1.msra.mxu0 0.0
    %5746 = vmatprep.subr.mxu0 0.0
    %5747 = vmatpush1.msra.mxu0 0.0
    %5748 = vmatprep.subr.mxu0 0.0
    %5749 = vmatpush1.msra.mxu0 0.0
    %5750 = vmatprep.subr.mxu0 0.0
    %5751 = vmatpush1.msra.mxu0 0.0
    %5752 = vmatprep.subr.mxu0 0.0
    %5753 = vmatpush1.msra.mxu0 0.0
    %5754 = vmatprep.subr.mxu0 0.0
    %5755 = vmatpush1.msra.mxu0 0.0
    %5756 = vmatprep.subr.mxu0 0.0
    %5757 = vmatpush1.msra.mxu0 0.0
    %5758 = vmatprep.subr.mxu0 0.0
    %5759 = vmatpush1.msra.mxu0 0.0
    %5760 = vmatprep.subr.mxu0 0.0
    %5761 = vmatpush1.msra.mxu0 0.0
    %5762 = vmatprep.subr.mxu0 0.0
    %5763 = vmatpush1.msra.mxu0 0.0
    %5764 = vmatprep.mubr.f32.mxu0 0.0
    %5765 = vmatmul.mubr.f32.gmra.mrb[0].mxu0 %v5698
    %v5766 = vpop.f32.mrb[0].mxu0
    %v5767 = vadd.f32 0.0, %v5766
    %v5768 = vpop.f32.mrb[0].mxu0
    %5769 = vdwg.mxu0
    %v5771 = vsel %vm413, %v5696, 0
    %5773 = vmatprep.subr.mxu0 0.0
    %5774 = vmatpush1.msra.mxu0 %v4420
    %5775 = vmatprep.subr.mxu0 0.0
    %5776 = vmatpush1.msra.mxu0 0.0
    %5777 = vmatprep.subr.mxu0 0.0
    %5778 = vmatpush1.msra.mxu0 0.0
    %5779 = vmatprep.subr.mxu0 0.0
    %5780 = vmatpush1.msra.mxu0 0.0
    %5781 = vmatprep.subr.mxu0 0.0
    %5782 = vmatpush1.msra.mxu0 0.0
    %5783 = vmatprep.subr.mxu0 0.0
    %5784 = vmatpush1.msra.mxu0 0.0
    %5785 = vmatprep.subr.mxu0 0.0
    %5786 = vmatpush1.msra.mxu0 0.0
    %5787 = vmatprep.subr.mxu0 0.0
    %5788 = vmatpush1.msra.mxu0 0.0
    %5789 = vmatprep.subr.mxu0 0.0
    %5790 = vmatpush1.msra.mxu0 0.0
    %5791 = vmatprep.subr.mxu0 0.0
    %5792 = vmatpush1.msra.mxu0 0.0
    %5793 = vmatprep.subr.mxu0 0.0
    %5794 = vmatpush1.msra.mxu0 0.0
    %5795 = vmatprep.subr.mxu0 0.0
    %5796 = vmatpush1.msra.mxu0 0.0
    %5797 = vmatprep.subr.mxu0 0.0
    %5798 = vmatpush1.msra.mxu0 0.0
    %5799 = vmatprep.subr.mxu0 0.0
    %5800 = vmatpush1.msra.mxu0 0.0
    %5801 = vmatprep.subr.mxu0 0.0
    %5802 = vmatpush1.msra.mxu0 0.0
    %5803 = vmatprep.subr.mxu0 0.0
    %5804 = vmatpush1.msra.mxu0 0.0
    %5805 = vmatprep.subr.mxu0 0.0
    %5806 = vmatpush1.msra.mxu0 0.0
    %5807 = vmatprep.subr.mxu0 0.0
    %5808 = vmatpush1.msra.mxu0 0.0
    %5809 = vmatprep.subr.mxu0 0.0
    %5810 = vmatpush1.msra.mxu0 0.0
    %5811 = vmatprep.subr.mxu0 0.0
    %5812 = vmatpush1.msra.mxu0 0.0
    %5813 = vmatprep.subr.mxu0 0.0
    %5814 = vmatpush1.msra.mxu0 0.0
    %5815 = vmatprep.subr.mxu0 0.0
    %5816 = vmatpush1.msra.mxu0 0.0
    %5817 = vmatprep.subr.mxu0 0.0
    %5818 = vmatpush1.msra.mxu0 0.0
    %5819 = vmatprep.subr.mxu0 0.0
    %5820 = vmatpush1.msra.mxu0 0.0
    %5821 = vmatprep.subr.mxu0 0.0
    %5822 = vmatpush1.msra.mxu0 0.0
    %5823 = vmatprep.subr.mxu0 0.0
    %5824 = vmatpush1.msra.mxu0 0.0
    %5825 = vmatprep.subr.mxu0 0.0
    %5826 = vmatpush1.msra.mxu0 0.0
    %5827 = vmatprep.subr.mxu0 0.0
    %5828 = vmatpush1.msra.mxu0 0.0
    %5829 = vmatprep.subr.mxu0 0.0
    %5830 = vmatpush1.msra.mxu0 0.0
    %5831 = vmatprep.subr.mxu0 0.0
    %5832 = vmatpush1.msra.mxu0 0.0
    %5833 = vmatprep.subr.mxu0 0.0
    %5834 = vmatpush1.msra.mxu0 0.0
    %5835 = vmatprep.subr.mxu0 0.0
    %5836 = vmatpush1.msra.mxu0 0.0
    %5837 = vmatprep.mubr.f32.mxu0 0.0
    %5838 = vmatmul.mubr.f32.gmra.mrb[0].mxu0 %v5771
    %v5839 = vpop.f32.mrb[0].mxu0
    %v5840 = vadd.f32 0.0, %v5839
    %v5841 = vpop.f32.mrb[0].mxu0
    %5842 = vdwg.mxu0
    %s5843 = scalar_lea.vmem %s6, 48
    %v5844 = vld [vmem:[%s5843] sm:$0xff]
    %v5846 = vsel %vm413, %v5767, 0
    %v5849 = vsel %vm413, %v5840, 0
    %5851 = vmatprep.subr.mxu0 0.0
    %5852 = vmatpush1.msra.mxu0 %v5844
    %5853 = vmatprep.subr.mxu0 0.0
    %5854 = vmatpush1.msra.mxu0 0.0
    %5855 = vmatprep.subr.mxu0 0.0
    %5856 = vmatpush1.msra.mxu0 0.0
    %5857 = vmatprep.subr.mxu0 0.0
    %5858 = vmatpush1.msra.mxu0 0.0
    %5859 = vmatprep.subr.mxu0 0.0
    %5860 = vmatpush1.msra.mxu0 0.0
    %5861 = vmatprep.subr.mxu0 0.0
    %5862 = vmatpush1.msra.mxu0 0.0
    %5863 = vmatprep.subr.mxu0 0.0
    %5864 = vmatpush1.msra.mxu0 0.0
    %5865 = vmatprep.subr.mxu0 0.0
    %5866 = vmatpush1.msra.mxu0 0.0
    %5867 = vmatprep.subr.mxu0 0.0
    %5868 = vmatpush1.msra.mxu0 0.0
    %5869 = vmatprep.subr.mxu0 0.0
    %5870 = vmatpush1.msra.mxu0 0.0
    %5871 = vmatprep.subr.mxu0 0.0
    %5872 = vmatpush1.msra.mxu0 0.0
    %5873 = vmatprep.subr.mxu0 0.0
    %5874 = vmatpush1.msra.mxu0 0.0
    %5875 = vmatprep.subr.mxu0 0.0
    %5876 = vmatpush1.msra.mxu0 0.0
    %5877 = vmatprep.subr.mxu0 0.0
    %5878 = vmatpush1.msra.mxu0 0.0
    %5879 = vmatprep.subr.mxu0 0.0
    %5880 = vmatpush1.msra.mxu0 0.0
    %5881 = vmatprep.subr.mxu0 0.0
    %5882 = vmatpush1.msra.mxu0 0.0
    %5883 = vmatprep.subr.mxu0 0.0
    %5884 = vmatpush1.msra.mxu0 0.0
    %5885 = vmatprep.subr.mxu0 0.0
    %5886 = vmatpush1.msra.mxu0 0.0
    %5887 = vmatprep.subr.mxu0 0.0
    %5888 = vmatpush1.msra.mxu0 0.0
    %5889 = vmatprep.subr.mxu0 0.0
    %5890 = vmatpush1.msra.mxu0 0.0
    %5891 = vmatprep.subr.mxu0 0.0
    %5892 = vmatpush1.msra.mxu0 0.0
    %5893 = vmatprep.subr.mxu0 0.0
    %5894 = vmatpush1.msra.mxu0 0.0
    %5895 = vmatprep.subr.mxu0 0.0
    %5896 = vmatpush1.msra.mxu0 0.0
    %5897 = vmatprep.subr.mxu0 0.0
    %5898 = vmatpush1.msra.mxu0 0.0
    %5899 = vmatprep.subr.mxu0 0.0
    %5900 = vmatpush1.msra.mxu0 0.0
    %5901 = vmatprep.subr.mxu0 0.0
    %5902 = vmatpush1.msra.mxu0 0.0
    %5903 = vmatprep.subr.mxu0 0.0
    %5904 = vmatpush1.msra.mxu0 0.0
    %5905 = vmatprep.subr.mxu0 0.0
    %5906 = vmatpush1.msra.mxu0 0.0
    %5907 = vmatprep.subr.mxu0 0.0
    %5908 = vmatpush1.msra.mxu0 0.0
    %5909 = vmatprep.subr.mxu0 0.0
    %5910 = vmatpush1.msra.mxu0 0.0
    %5911 = vmatprep.subr.mxu0 0.0
    %5912 = vmatpush1.msra.mxu0 0.0
    %5913 = vmatprep.subr.mxu0 0.0
    %5914 = vmatpush1.msra.mxu0 0.0
    %5915 = vmatprep.mubr.f32.mxu0 0.0
    %5916 = vmatmul.mubr.f32.gmra.mrb[0].mxu0 %v5846
    %v5917 = vpop.f32.mrb[0].mxu0
    %v5918 = vadd.f32 0.0, %v5917
    %v5919 = vpop.f32.mrb[0].mxu0
    %5920 = vmatprep.mubr.f32.mxu0 0.0
    %5921 = vmatmul.mubr.f32.gmra.mrb[0].mxu0 %v5849
    %v5922 = vpop.f32.mrb[0].mxu0
    %v5923 = vadd.f32 0.0, %v5922
    %v5924 = vpop.f32.mrb[0].mxu0
    %5925 = vdwg.mxu0
    %v5926 = vadd.f32 %v5613, %v5918
    %v5927 = vadd.f32 %v5618, %v5923
    %s5928 = sld [smem:[#allocation7 + $0x7]]
    %s5929 = sld [smem:[#allocation6 + $0x1c]]
    %v5930 = vstv %s5929
    %v5931 = vmul.f32 %v5930, %v3766
    %v5932 = vmul.f32 %v5930, %v3768
    %v5933 = vstv %s5928
    %v5934 = vadd.f32 %v5933, %v5931
    %v5935 = vadd.f32 %v5933, %v5932
    %s5936 = sld [smem:[#allocation6 + $0x1d]]
    %v5937 = vstv %s5936
    %v5938 = vmul.f32 %v5937, %v4180
    %v5939 = vmul.f32 %v5937, %v4182
    %v5940 = vadd.f32 %v5934, %v5938
    %v5941 = vadd.f32 %v5935, %v5939
    %s5942 = sld [smem:[#allocation6 + $0x1e]]
    %v5943 = vstv %s5942
    %v5944 = vmul.f32 %v5943, %v4594
    %v5945 = vmul.f32 %v5943, %v4596
    %v5946 = vadd.f32 %v5940, %v5944
    %v5947 = vadd.f32 %v5941, %v5945
    %s5948 = sld [smem:[#allocation6 + $0x1f]]
    %v5949 = vstv %s5948
    %v5950 = vmul.f32 %v5949, %v5008
    %v5951 = vmul.f32 %v5949, %v5010
    %v5952 = vadd.f32 %v5946, %v5950
    %v5953 = vadd.f32 %v5947, %v5951
    %v5954 = vsel %vm413, %v5952, 0.0
    %v5955 = vsel %vm413, %v5953, 0.0
    %v5956 = vadd.f32 %v5954, %v5955
    %5957 = vadd.xlane.f32.xlu0 %v5956
    %v5958 = vpop.xlane.xlu0 %5957
    %v5959 = vrot.slane %v5958, 4
    %v5960 = vadd.f32 %v5958, %v5959
    %v5961 = vrot.slane %v5960, 2
    %v5962 = vadd.f32 %v5960, %v5961
    %v5963 = vrot.slane %v5962, 1
    %v5964 = vadd.f32 %v5962, %v5963
    %s5965 = vtos %v5964
    %v5966 = vrcp.pop 128.0
    %s5967 = vtos %v5966
    %s5968 = smul.f32 %s5965, %s5967
    %v5969 = vstv %s5968
    %v5970 = vsub.f32 %v5952, %v5969
    %v5971 = vsub.f32 %v5953, %v5969
    %v5972 = vmul.f32 %v5970, %v5970
    %v5973 = vmul.f32 %v5971, %v5971
    %v5974 = vsel %vm413, %v5972, 0.0
    %v5975 = vsel %vm413, %v5973, 0.0
    %v5976 = vadd.f32 %v5974, %v5975
    %5977 = vadd.xlane.f32.xlu0 %v5976
    %v5978 = vpop.xlane.xlu0 %5977
    %v5979 = vrot.slane %v5978, 4
    %v5980 = vadd.f32 %v5978, %v5979
    %v5981 = vrot.slane %v5980, 2
    %v5982 = vadd.f32 %v5980, %v5981
    %v5983 = vrot.slane %v5982, 1
    %v5984 = vadd.f32 %v5982, %v5983
    %s5985 = vtos %v5984
    %v5986 = vrcp.pop 128.0
    %s5987 = vtos %v5986
    %s5988 = smul.f32 %s5985, %s5987
    %s5989 = sadd.f32 %s5988, 1e-05
    %v5990 = vstv %s5989
    %v5991 = vrsqrt.pop %v5990
    %s5992 = vtos %v5991
    %v5993 = vstv %s5992
    %v5994 = vmul.f32 %v5970, %v5993
    %v5995 = vmul.f32 %v5971, %v5993
    %s5996 = sld [smem:[#allocation9 + $0x7]]
    %v5997 = vstv %s5996
    %v5998 = vmul.f32 %v5994, %v5997
    %v5999 = vmul.f32 %v5995, %v5997
    %s6000 = sld [smem:[#allocation10 + $0x7]]
    %v6001 = vstv %s6000
    %v6002 = vadd.f32 %v5998, %v6001
    %v6003 = vadd.f32 %v5999, %v6001
    %v6005 = vsel %vm413, %v6002, 0
    %6007 = vmatprep.subr.mxu0 0.0
    %6008 = vmatpush1.msra.mxu0 %v4829
    %6009 = vmatprep.subr.mxu0 0.0
    %6010 = vmatpush1.msra.mxu0 0.0
    %6011 = vmatprep.subr.mxu0 0.0
    %6012 = vmatpush1.msra.mxu0 0.0
    %6013 = vmatprep.subr.mxu0 0.0
    %6014 = vmatpush1.msra.mxu0 0.0
    %6015 = vmatprep.subr.mxu0 0.0
    %6016 = vmatpush1.msra.mxu0 0.0
    %6017 = vmatprep.subr.mxu0 0.0
    %6018 = vmatpush1.msra.mxu0 0.0
    %6019 = vmatprep.subr.mxu0 0.0
    %6020 = vmatpush1.msra.mxu0 0.0
    %6021 = vmatprep.subr.mxu0 0.0
    %6022 = vmatpush1.msra.mxu0 0.0
    %6023 = vmatprep.subr.mxu0 0.0
    %6024 = vmatpush1.msra.mxu0 0.0
    %6025 = vmatprep.subr.mxu0 0.0
    %6026 = vmatpush1.msra.mxu0 0.0
    %6027 = vmatprep.subr.mxu0 0.0
    %6028 = vmatpush1.msra.mxu0 0.0
    %6029 = vmatprep.subr.mxu0 0.0
    %6030 = vmatpush1.msra.mxu0 0.0
    %6031 = vmatprep.subr.mxu0 0.0
    %6032 = vmatpush1.msra.mxu0 0.0
    %6033 = vmatprep.subr.mxu0 0.0
    %6034 = vmatpush1.msra.mxu0 0.0
    %6035 = vmatprep.subr.mxu0 0.0
    %6036 = vmatpush1.msra.mxu0 0.0
    %6037 = vmatprep.subr.mxu0 0.0
    %6038 = vmatpush1.msra.mxu0 0.0
    %6039 = vmatprep.subr.mxu0 0.0
    %6040 = vmatpush1.msra.mxu0 0.0
    %6041 = vmatprep.subr.mxu0 0.0
    %6042 = vmatpush1.msra.mxu0 0.0
    %6043 = vmatprep.subr.mxu0 0.0
    %6044 = vmatpush1.msra.mxu0 0.0
    %6045 = vmatprep.subr.mxu0 0.0
    %6046 = vmatpush1.msra.mxu0 0.0
    %6047 = vmatprep.subr.mxu0 0.0
    %6048 = vmatpush1.msra.mxu0 0.0
    %6049 = vmatprep.subr.mxu0 0.0
    %6050 = vmatpush1.msra.mxu0 0.0
    %6051 = vmatprep.subr.mxu0 0.0
    %6052 = vmatpush1.msra.mxu0 0.0
    %6053 = vmatprep.subr.mxu0 0.0
    %6054 = vmatpush1.msra.mxu0 0.0
    %6055 = vmatprep.subr.mxu0 0.0
    %6056 = vmatpush1.msra.mxu0 0.0
    %6057 = vmatprep.subr.mxu0 0.0
    %6058 = vmatpush1.msra.mxu0 0.0
    %6059 = vmatprep.subr.mxu0 0.0
    %6060 = vmatpush1.msra.mxu0 0.0
    %6061 = vmatprep.subr.mxu0 0.0
    %6062 = vmatpush1.msra.mxu0 0.0
    %6063 = vmatprep.subr.mxu0 0.0
    %6064 = vmatpush1.msra.mxu0 0.0
    %6065 = vmatprep.subr.mxu0 0.0
    %6066 = vmatpush1.msra.mxu0 0.0
    %6067 = vmatprep.subr.mxu0 0.0
    %6068 = vmatpush1.msra.mxu0 0.0
    %6069 = vmatprep.subr.mxu0 0.0
    %6070 = vmatpush1.msra.mxu0 0.0
    %6071 = vmatprep.mubr.f32.mxu0 0.0
    %6072 = vmatmul.mubr.f32.gmra.mrb[0].mxu0 %v6005
    %v6073 = vpop.f32.mrb[0].mxu0
    %v6074 = vadd.f32 0.0, %v6073
    %v6075 = vpop.f32.mrb[0].mxu0
    %6076 = vdwg.mxu0
    %v6078 = vsel %vm413, %v6003, 0
    %6080 = vmatprep.subr.mxu0 0.0
    %6081 = vmatpush1.msra.mxu0 %v4834
    %6082 = vmatprep.subr.mxu0 0.0
    %6083 = vmatpush1.msra.mxu0 0.0
    %6084 = vmatprep.subr.mxu0 0.0
    %6085 = vmatpush1.msra.mxu0 0.0
    %6086 = vmatprep.subr.mxu0 0.0
    %6087 = vmatpush1.msra.mxu0 0.0
    %6088 = vmatprep.subr.mxu0 0.0
    %6089 = vmatpush1.msra.mxu0 0.0
    %6090 = vmatprep.subr.mxu0 0.0
    %6091 = vmatpush1.msra.mxu0 0.0
    %6092 = vmatprep.subr.mxu0 0.0
    %6093 = vmatpush1.msra.mxu0 0.0
    %6094 = vmatprep.subr.mxu0 0.0
    %6095 = vmatpush1.msra.mxu0 0.0
    %6096 = vmatprep.subr.mxu0 0.0
    %6097 = vmatpush1.msra.mxu0 0.0
    %6098 = vmatprep.subr.mxu0 0.0
    %6099 = vmatpush1.msra.mxu0 0.0
    %6100 = vmatprep.subr.mxu0 0.0
    %6101 = vmatpush1.msra.mxu0 0.0
    %6102 = vmatprep.subr.mxu0 0.0
    %6103 = vmatpush1.msra.mxu0 0.0
    %6104 = vmatprep.subr.mxu0 0.0
    %6105 = vmatpush1.msra.mxu0 0.0
    %6106 = vmatprep.subr.mxu0 0.0
    %6107 = vmatpush1.msra.mxu0 0.0
    %6108 = vmatprep.subr.mxu0 0.0
    %6109 = vmatpush1.msra.mxu0 0.0
    %6110 = vmatprep.subr.mxu0 0.0
    %6111 = vmatpush1.msra.mxu0 0.0
    %6112 = vmatprep.subr.mxu0 0.0
    %6113 = vmatpush1.msra.mxu0 0.0
    %6114 = vmatprep.subr.mxu0 0.0
    %6115 = vmatpush1.msra.mxu0 0.0
    %6116 = vmatprep.subr.mxu0 0.0
    %6117 = vmatpush1.msra.mxu0 0.0
    %6118 = vmatprep.subr.mxu0 0.0
    %6119 = vmatpush1.msra.mxu0 0.0
    %6120 = vmatprep.subr.mxu0 0.0
    %6121 = vmatpush1.msra.mxu0 0.0
    %6122 = vmatprep.subr.mxu0 0.0
    %6123 = vmatpush1.msra.mxu0 0.0
    %6124 = vmatprep.subr.mxu0 0.0
    %6125 = vmatpush1.msra.mxu0 0.0
    %6126 = vmatprep.subr.mxu0 0.0
    %6127 = vmatpush1.msra.mxu0 0.0
    %6128 = vmatprep.subr.mxu0 0.0
    %6129 = vmatpush1.msra.mxu0 0.0
    %6130 = vmatprep.subr.mxu0 0.0
    %6131 = vmatpush1.msra.mxu0 0.0
    %6132 = vmatprep.subr.mxu0 0.0
    %6133 = vmatpush1.msra.mxu0 0.0
    %6134 = vmatprep.subr.mxu0 0.0
    %6135 = vmatpush1.msra.mxu0 0.0
    %6136 = vmatprep.subr.mxu0 0.0
    %6137 = vmatpush1.msra.mxu0 0.0
    %6138 = vmatprep.subr.mxu0 0.0
    %6139 = vmatpush1.msra.mxu0 0.0
    %6140 = vmatprep.subr.mxu0 0.0
    %6141 = vmatpush1.msra.mxu0 0.0
    %6142 = vmatprep.subr.mxu0 0.0
    %6143 = vmatpush1.msra.mxu0 0.0
    %6144 = vmatprep.mubr.f32.mxu0 0.0
    %6145 = vmatmul.mubr.f32.gmra.mrb[0].mxu0 %v6078
    %v6146 = vpop.f32.mrb[0].mxu0
    %v6147 = vadd.f32 0.0, %v6146
    %v6148 = vpop.f32.mrb[0].mxu0
    %6149 = vdwg.mxu0
    %s6150 = scalar_lea.vmem %s6, 56
    %v6151 = vld [vmem:[%s6150] sm:$0xff]
    %v6153 = vsel %vm413, %v6074, 0
    %v6156 = vsel %vm413, %v6147, 0
    %6158 = vmatprep.subr.mxu0 0.0
    %6159 = vmatpush1.msra.mxu0 %v6151
    %6160 = vmatprep.subr.mxu0 0.0
    %6161 = vmatpush1.msra.mxu0 0.0
    %6162 = vmatprep.subr.mxu0 0.0
    %6163 = vmatpush1.msra.mxu0 0.0
    %6164 = vmatprep.subr.mxu0 0.0
    %6165 = vmatpush1.msra.mxu0 0.0
    %6166 = vmatprep.subr.mxu0 0.0
    %6167 = vmatpush1.msra.mxu0 0.0
    %6168 = vmatprep.subr.mxu0 0.0
    %6169 = vmatpush1.msra.mxu0 0.0
    %6170 = vmatprep.subr.mxu0 0.0
    %6171 = vmatpush1.msra.mxu0 0.0
    %6172 = vmatprep.subr.mxu0 0.0
    %6173 = vmatpush1.msra.mxu0 0.0
    %6174 = vmatprep.subr.mxu0 0.0
    %6175 = vmatpush1.msra.mxu0 0.0
    %6176 = vmatprep.subr.mxu0 0.0
    %6177 = vmatpush1.msra.mxu0 0.0
    %6178 = vmatprep.subr.mxu0 0.0
    %6179 = vmatpush1.msra.mxu0 0.0
    %6180 = vmatprep.subr.mxu0 0.0
    %6181 = vmatpush1.msra.mxu0 0.0
    %6182 = vmatprep.subr.mxu0 0.0
    %6183 = vmatpush1.msra.mxu0 0.0
    %6184 = vmatprep.subr.mxu0 0.0
    %6185 = vmatpush1.msra.mxu0 0.0
    %6186 = vmatprep.subr.mxu0 0.0
    %6187 = vmatpush1.msra.mxu0 0.0
    %6188 = vmatprep.subr.mxu0 0.0
    %6189 = vmatpush1.msra.mxu0 0.0
    %6190 = vmatprep.subr.mxu0 0.0
    %6191 = vmatpush1.msra.mxu0 0.0
    %6192 = vmatprep.subr.mxu0 0.0
    %6193 = vmatpush1.msra.mxu0 0.0
    %6194 = vmatprep.subr.mxu0 0.0
    %6195 = vmatpush1.msra.mxu0 0.0
    %6196 = vmatprep.subr.mxu0 0.0
    %6197 = vmatpush1.msra.mxu0 0.0
    %6198 = vmatprep.subr.mxu0 0.0
    %6199 = vmatpush1.msra.mxu0 0.0
    %6200 = vmatprep.subr.mxu0 0.0
    %6201 = vmatpush1.msra.mxu0 0.0
    %6202 = vmatprep.subr.mxu0 0.0
    %6203 = vmatpush1.msra.mxu0 0.0
    %6204 = vmatprep.subr.mxu0 0.0
    %6205 = vmatpush1.msra.mxu0 0.0
    %6206 = vmatprep.subr.mxu0 0.0
    %6207 = vmatpush1.msra.mxu0 0.0
    %6208 = vmatprep.subr.mxu0 0.0
    %6209 = vmatpush1.msra.mxu0 0.0
    %6210 = vmatprep.subr.mxu0 0.0
    %6211 = vmatpush1.msra.mxu0 0.0
    %6212 = vmatprep.subr.mxu0 0.0
    %6213 = vmatpush1.msra.mxu0 0.0
    %6214 = vmatprep.subr.mxu0 0.0
    %6215 = vmatpush1.msra.mxu0 0.0
    %6216 = vmatprep.subr.mxu0 0.0
    %6217 = vmatpush1.msra.mxu0 0.0
    %6218 = vmatprep.subr.mxu0 0.0
    %6219 = vmatpush1.msra.mxu0 0.0
    %6220 = vmatprep.subr.mxu0 0.0
    %6221 = vmatpush1.msra.mxu0 0.0
    %6222 = vmatprep.mubr.f32.mxu0 0.0
    %6223 = vmatmul.mubr.f32.gmra.mrb[0].mxu0 %v6153
    %v6224 = vpop.f32.mrb[0].mxu0
    %v6225 = vadd.f32 0.0, %v6224
    %v6226 = vpop.f32.mrb[0].mxu0
    %6227 = vmatprep.mubr.f32.mxu0 0.0
    %6228 = vmatmul.mubr.f32.gmra.mrb[0].mxu0 %v6156
    %v6229 = vpop.f32.mrb[0].mxu0
    %v6230 = vadd.f32 0.0, %v6229
    %v6231 = vpop.f32.mrb[0].mxu0
    %6232 = vdwg.mxu0
    %v6233 = vadd.f32 %v5926, %v6225
    %v6234 = vadd.f32 %v5927, %v6230
    %v6235 = vadd.f32 %v3301, %v6233
    %v6236 = vadd.f32 %v3302, %v6234
    %s6237 = scalar_lea.vmem %s7, 1
    %v6238 = vld [vmem:[%s6237] sm:$0x1]
    %v6240 = vlaneseq
    %v6241 = vshrl.u32 %v6240, 7
    %v6242 = vsub.s32 0, %v6241
    %v6243 = vrot.slane %v6238, %v6242
    %v6245 = vadd.f32 %v6235, %v6243
    %v6246 = vadd.f32 %v6236, %v6243
    %s6247 = scalar_lea.vmem %s8, 1
    %v6248 = vld [vmem:[%s6247] sm:$0x1]
    %s6249 = scalar_lea.vmem %s9, 1
    %v6250 = vld [vmem:[%s6249] sm:$0x1]
    %v6251 = vsel %vm126, %v6245, 0.0
    %6252 = vadd.xlane.f32.xlu0 %v6251
    %v6253 = vpop.xlane.xlu0 %6252
    %v6254 = vsel %vm126, %v6246, 0.0
    %6255 = vadd.xlane.f32.xlu0 %v6254
    %v6256 = vpop.xlane.xlu0 %6255
    %v6257 = vmul.f32 %v6253, %v133
    %v6258 = vmul.f32 %v6256, %v133
    %v6259 = vsub.f32 %v6245, %v6257
    %v6260 = vsub.f32 %v6246, %v6258
    %v6261 = vmul.f32 %v6259, %v6259
    %v6262 = vmul.f32 %v6260, %v6260
    %v6263 = vsel %vm126, %v6261, 0.0
    %6264 = vadd.xlane.f32.xlu0 %v6263
    %v6265 = vpop.xlane.xlu0 %6264
    %v6266 = vsel %vm126, %v6262, 0.0
    %6267 = vadd.xlane.f32.xlu0 %v6266
    %v6268 = vpop.xlane.xlu0 %6267
    %v6269 = vmul.f32 %v6265, %v133
    %v6270 = vmul.f32 %v6268, %v133
    %v6271 = vadd.f32 %v6269, 1e-05
    %v6272 = vadd.f32 %v6270, 1e-05
    %v6273 = vrsqrt.pop %v6271
    %v6274 = vrsqrt.pop %v6272
    %v6275 = vmul.f32 %v6259, %v6273
    %v6276 = vmul.f32 %v6260, %v6274
    %v6278 = vlaneseq
    %v6279 = vshrl.u32 %v6278, 7
    %v6280 = vsub.s32 0, %v6279
    %v6281 = vrot.slane %v6248, %v6280
    %v6283 = vmul.f32 %v6275, %v6281
    %v6284 = vmul.f32 %v6276, %v6281
    %v6286 = vlaneseq
    %v6287 = vshrl.u32 %v6286, 7
    %v6288 = vsub.s32 0, %v6287
    %v6289 = vrot.slane %v6250, %v6288
    %v6291 = vadd.f32 %v6283, %v6289
    %v6292 = vadd.f32 %v6284, %v6289
    %s6293 = scalar_lea.vmem %s10, 32
    %v6294 = vld [vmem:[%s6293] sm:$0xff]
    %v6295 = vld [vmem:[%s6293 + $0x8] sm:$0xff]
    %v6296 = vld [vmem:[%s6293 + $0x10] sm:$0xff]
    %v6297 = vld [vmem:[%s6293 + $0x18] sm:$0xff]
    %s6298 = scalar_lea.vmem %s11, 1
    %v6299 = vld [vmem:[%s6298] sm:$0x1]
    %v6301 = vlaneseq
    %v6302 = vshrl.u32 %v6301, 7
    %v6303 = vsub.s32 0, %v6302
    %v6304 = vrot.slane %v6299, %v6303
    %v6307 = vsel %vm126, %v6291, 0
    %v6310 = vsel %vm126, %v6292, 0
    %6312 = vmatprep.subr.mxu0 0.0
    %6313 = vmatpush1.msra.mxu0 %v6294
    %6314 = vmatprep.subr.mxu0 0.0
    %6315 = vmatpush1.msra.mxu0 %v6295
    %6316 = vmatprep.subr.mxu0 0.0
    %6317 = vmatpush1.msra.mxu0 %v6296
    %6318 = vmatprep.subr.mxu0 0.0
    %6319 = vmatpush1.msra.mxu0 %v6297
    %6320 = vmatprep.subr.mxu0 0.0
    %6321 = vmatpush1.msra.mxu0 0.0
    %6322 = vmatprep.subr.mxu0 0.0
    %6323 = vmatpush1.msra.mxu0 0.0
    %6324 = vmatprep.subr.mxu0 0.0
    %6325 = vmatpush1.msra.mxu0 0.0
    %6326 = vmatprep.subr.mxu0 0.0
    %6327 = vmatpush1.msra.mxu0 0.0
    %6328 = vmatprep.subr.mxu0 0.0
    %6329 = vmatpush1.msra.mxu0 0.0
    %6330 = vmatprep.subr.mxu0 0.0
    %6331 = vmatpush1.msra.mxu0 0.0
    %6332 = vmatprep.subr.mxu0 0.0
    %6333 = vmatpush1.msra.mxu0 0.0
    %6334 = vmatprep.subr.mxu0 0.0
    %6335 = vmatpush1.msra.mxu0 0.0
    %6336 = vmatprep.subr.mxu0 0.0
    %6337 = vmatpush1.msra.mxu0 0.0
    %6338 = vmatprep.subr.mxu0 0.0
    %6339 = vmatpush1.msra.mxu0 0.0
    %6340 = vmatprep.subr.mxu0 0.0
    %6341 = vmatpush1.msra.mxu0 0.0
    %6342 = vmatprep.subr.mxu0 0.0
    %6343 = vmatpush1.msra.mxu0 0.0
    %6344 = vmatprep.subr.mxu0 0.0
    %6345 = vmatpush1.msra.mxu0 0.0
    %6346 = vmatprep.subr.mxu0 0.0
    %6347 = vmatpush1.msra.mxu0 0.0
    %6348 = vmatprep.subr.mxu0 0.0
    %6349 = vmatpush1.msra.mxu0 0.0
    %6350 = vmatprep.subr.mxu0 0.0
    %6351 = vmatpush1.msra.mxu0 0.0
    %6352 = vmatprep.subr.mxu0 0.0
    %6353 = vmatpush1.msra.mxu0 0.0
    %6354 = vmatprep.subr.mxu0 0.0
    %6355 = vmatpush1.msra.mxu0 0.0
    %6356 = vmatprep.subr.mxu0 0.0
    %6357 = vmatpush1.msra.mxu0 0.0
    %6358 = vmatprep.subr.mxu0 0.0
    %6359 = vmatpush1.msra.mxu0 0.0
    %6360 = vmatprep.subr.mxu0 0.0
    %6361 = vmatpush1.msra.mxu0 0.0
    %6362 = vmatprep.subr.mxu0 0.0
    %6363 = vmatpush1.msra.mxu0 0.0
    %6364 = vmatprep.subr.mxu0 0.0
    %6365 = vmatpush1.msra.mxu0 0.0
    %6366 = vmatprep.subr.mxu0 0.0
    %6367 = vmatpush1.msra.mxu0 0.0
    %6368 = vmatprep.subr.mxu0 0.0
    %6369 = vmatpush1.msra.mxu0 0.0
    %6370 = vmatprep.subr.mxu0 0.0
    %6371 = vmatpush1.msra.mxu0 0.0
    %6372 = vmatprep.subr.mxu0 0.0
    %6373 = vmatpush1.msra.mxu0 0.0
    %6374 = vmatprep.subr.mxu0 0.0
    %6375 = vmatpush1.msra.mxu0 0.0
    %6376 = vmatprep.mubr.f32.mxu0 0.0
    %6377 = vmatmul.mubr.f32.gmra.mrb[0].mxu0 %v6307
    %v6378 = vpop.f32.mrb[0].mxu0
    %v6379 = vadd.f32 %v6304, %v6378
    %v6380 = vpop.f32.mrb[0].mxu0
    %6381 = vmatprep.mubr.f32.mxu0 0.0
    %6382 = vmatmul.mubr.f32.gmra.mrb[0].mxu0 %v6310
    %v6383 = vpop.f32.mrb[0].mxu0
    %v6384 = vadd.f32 %v6304, %v6383
    %v6385 = vpop.f32.mrb[0].mxu0
    %6386 = vdwg.mxu0
    %v6387 = vmax.f32 %v6379, 0.0
    %v6388 = vmax.f32 %v6384, 0.0
    %s6389 = scalar_lea.vmem %s12, 64
    %v6390 = vld [vmem:[%s6389] sm:$0xff]
    %v6391 = vld [vmem:[%s6389 + $0x8] sm:$0xff]
    %v6392 = vld [vmem:[%s6389 + $0x10] sm:$0xff]
    %v6393 = vld [vmem:[%s6389 + $0x18] sm:$0xff]
    %v6394 = vld [vmem:[%s6389 + $0x20] sm:$0xff]
    %v6395 = vld [vmem:[%s6389 + $0x28] sm:$0xff]
    %v6396 = vld [vmem:[%s6389 + $0x30] sm:$0xff]
    %v6397 = vld [vmem:[%s6389 + $0x38] sm:$0xff]
    %v6399 = vsel %vm3210, %v6387, 0
    %v6402 = vsel %vm3210, %v6388, 0
    %6404 = vmatprep.subr.mxu0 0.0
    %6405 = vmatpush1.msra.mxu0 %v6390
    %6406 = vmatprep.subr.mxu0 0.0
    %6407 = vmatpush1.msra.mxu0 %v6391
    %6408 = vmatprep.subr.mxu0 0.0
    %6409 = vmatpush1.msra.mxu0 %v6392
    %6410 = vmatprep.subr.mxu0 0.0
    %6411 = vmatpush1.msra.mxu0 %v6393
    %6412 = vmatprep.subr.mxu0 0.0
    %6413 = vmatpush1.msra.mxu0 %v6394
    %6414 = vmatprep.subr.mxu0 0.0
    %6415 = vmatpush1.msra.mxu0 %v6395
    %6416 = vmatprep.subr.mxu0 0.0
    %6417 = vmatpush1.msra.mxu0 %v6396
    %6418 = vmatprep.subr.mxu0 0.0
    %6419 = vmatpush1.msra.mxu0 %v6397
    %6420 = vmatprep.subr.mxu0 0.0
    %6421 = vmatpush1.msra.mxu0 0.0
    %6422 = vmatprep.subr.mxu0 0.0
    %6423 = vmatpush1.msra.mxu0 0.0
    %6424 = vmatprep.subr.mxu0 0.0
    %6425 = vmatpush1.msra.mxu0 0.0
    %6426 = vmatprep.subr.mxu0 0.0
    %6427 = vmatpush1.msra.mxu0 0.0
    %6428 = vmatprep.subr.mxu0 0.0
    %6429 = vmatpush1.msra.mxu0 0.0
    %6430 = vmatprep.subr.mxu0 0.0
    %6431 = vmatpush1.msra.mxu0 0.0
    %6432 = vmatprep.subr.mxu0 0.0
    %6433 = vmatpush1.msra.mxu0 0.0
    %6434 = vmatprep.subr.mxu0 0.0
    %6435 = vmatpush1.msra.mxu0 0.0
    %6436 = vmatprep.subr.mxu0 0.0
    %6437 = vmatpush1.msra.mxu0 0.0
    %6438 = vmatprep.subr.mxu0 0.0
    %6439 = vmatpush1.msra.mxu0 0.0
    %6440 = vmatprep.subr.mxu0 0.0
    %6441 = vmatpush1.msra.mxu0 0.0
    %6442 = vmatprep.subr.mxu0 0.0
    %6443 = vmatpush1.msra.mxu0 0.0
    %6444 = vmatprep.subr.mxu0 0.0
    %6445 = vmatpush1.msra.mxu0 0.0
    %6446 = vmatprep.subr.mxu0 0.0
    %6447 = vmatpush1.msra.mxu0 0.0
    %6448 = vmatprep.subr.mxu0 0.0
    %6449 = vmatpush1.msra.mxu0 0.0
    %6450 = vmatprep.subr.mxu0 0.0
    %6451 = vmatpush1.msra.mxu0 0.0
    %6452 = vmatprep.subr.mxu0 0.0
    %6453 = vmatpush1.msra.mxu0 0.0
    %6454 = vmatprep.subr.mxu0 0.0
    %6455 = vmatpush1.msra.mxu0 0.0
    %6456 = vmatprep.subr.mxu0 0.0
    %6457 = vmatpush1.msra.mxu0 0.0
    %6458 = vmatprep.subr.mxu0 0.0
    %6459 = vmatpush1.msra.mxu0 0.0
    %6460 = vmatprep.subr.mxu0 0.0
    %6461 = vmatpush1.msra.mxu0 0.0
    %6462 = vmatprep.subr.mxu0 0.0
    %6463 = vmatpush1.msra.mxu0 0.0
    %6464 = vmatprep.subr.mxu0 0.0
    %6465 = vmatpush1.msra.mxu0 0.0
    %6466 = vmatprep.subr.mxu0 0.0
    %6467 = vmatpush1.msra.mxu0 0.0
    %6468 = vmatprep.mubr.f32.mxu0 0.0
    %6469 = vmatmul.mubr.f32.gmra.mrb[0].mxu0 %v6399
    %v6470 = vpop.f32.mrb[0].mxu0
    %v6471 = vadd.f32 0.0, %v6470
    %v6472 = vpop.f32.mrb[0].mxu0
    %6473 = vmatprep.mubr.f32.mxu0 0.0
    %6474 = vmatmul.mubr.f32.gmra.mrb[0].mxu0 %v6402
    %v6475 = vpop.f32.mrb[0].mxu0
    %v6476 = vadd.f32 0.0, %v6475
    %v6477 = vpop.f32.mrb[0].mxu0
    %6478 = vdwg.mxu0
    %v6479 = vadd.f32 %v6245, %v6471
    %v6480 = vadd.f32 %v6246, %v6476
    %s6481 = scalar_lea.vmem %s13, 1
    %v6482 = vld [vmem:[%s6481] sm:$0x1]
    %v6484 = vlaneseq
    %v6485 = vshrl.u32 %v6484, 7
    %v6486 = vsub.s32 0, %v6485
    %v6487 = vrot.slane %v6482, %v6486
    %v6489 = vadd.f32 %v6479, %v6487
    %v6490 = vadd.f32 %v6480, %v6487
    %6491 = vst.msk [vmem:[#allocation12] sm:$0xff] %vm126, %v6489
    %6492 = vst.msk [vmem:[#allocation12 + $0x8] sm:$0xff] %vm126, %v6490
    // Predicated region
    $region94: #{tpu_custom_call.1} parent=1 // pred_check
      _
    $region95: #{tpu_custom_call.1} parent=1 // pred_check_branch
      %6494 = sbr.rel (0) target = $region97
    $region96: #{tpu_custom_call.1} parent=1 // pred_region
      %s6496 = ssub.s32 256, 256
      %6497 = vsyncadd [#allocation4], %s6496
      %s6498 = sshll.u32 [#allocation12], 4
      %s6499 = int_to_ptr.vmem [resolvable:$true] %s6498
      %6504 = dma.vmem_to_hbm [thread:$0]  %s6499, 256, %s18, [#allocation4], 128, 128, 8
    $region97: #{tpu_custom_call.1} parent=1 // pred_fallthru
      _
    // Predicated region
    $region98: #{tpu_custom_call.1} parent=1 // pred_check
      _
    $region99: #{tpu_custom_call.1} parent=1 // pred_check_branch
      %6506 = sbr.rel (0) target = $region101
    $region100: #{tpu_custom_call.1} parent=1 // pred_region
      %6507 = dma.done [#allocation4], 256
    $region101: #{tpu_custom_call.1} parent=1 // pred_fallthru
      _
    %6508 = vsyncpa [#allocation3], 1
    %6509 = vsyncpa [#allocation4], 1
    %6510 = vsyncpa [#allocation5], 1
    %6511 = vsyncpa [#allocation8], 1
    %6512 = vsyncpa [#allocation11], 1

</llo_original>
